<compile_context>
chip_gen: v5e
topology: v5e:2x2
jax: 0.10.0
libtpu: 0.0.40
codegen_flags: <defaults>
</compile_context>

<pallas_src>
import jax
import jax.numpy as jnp
from jax.experimental import pallas as pl
from jax.experimental.pallas import tpu as pltpu

# ---------------- model dims (small, synthetic) ----------------
B, CIN, H, W = 2, 4, 16, 16        # input image, NCHW (PyTorch convention)
KH = KW = 3                        # conv kernel
COUT = 32                          # conv output channels
ENC_DIM = 32                       # encoder dense output
HIDDEN = 64                        # MLP hidden / network.output_dim

PH, PW = H + 2, W + 2              # zero-padded spatial dims ('same' conv)
NPIX = B * PH * PW                 # 648 rows of the flattened padded image
# flat-row shift for kernel tap (dh, dw); pairs with wc.reshape(9, CIN, COUT)[k]
SHIFTS = tuple(dh * PW + dw for dh in range(KH) for dw in range(KW))
X_ROWS = ((NPIX + SHIFTS[-1] + 7) // 8) * 8    # 688: room for the largest shift, 8-aligned
OUT_LANES = 128                    # lane-dense output slab width


# ---------------- fused Pallas kernel ----------------
def _fused_forward_kernel(x_ref, wc_ref, bc_ref, pool_ref,
                          we_ref, be_ref, w1_ref, b1_ref, w2_ref, b2_ref,
                          wo_t_ref, bo_ref, o_ref, acc_ref):
    """x_ref    : (X_ROWS, CIN)  flattened zero-padded NHWC image (+ trailing zero rows)
       wc_ref   : (9, CIN, COUT) conv weight per (dh, dw) tap
       bc_ref   : (1, COUT)      conv bias
       pool_ref : (B, NPIX)      pooling matrix (1/HW at valid pixel rows, 0 elsewhere)
       we/be, w1/b1, w2/b2       encoder dense + 2-layer MLP
       wo_t_ref : (1, HIDDEN)    output weight, pre-transposed
       bo_ref   : (1, 1)         output bias
       o_ref    : (B, OUT_LANES) lane-dense output slab (logit broadcast over lanes)
       acc_ref  : (NPIX, COUT)   VMEM scratch for the conv activation (never hits HBM)
    """
    # ---- 3x3 'same' conv as 9 accumulating matmuls over shifted row slices ----
    acc_ref[...] = jnp.dot(x_ref[pl.ds(SHIFTS[0], NPIX), :], wc_ref[0],
                           preferred_element_type=jnp.float32)
    for k in range(1, KH * KW):
        acc_ref[...] += jnp.dot(x_ref[pl.ds(SHIFTS[k], NPIX), :], wc_ref[k],
                                preferred_element_type=jnp.float32)
    act = jnp.maximum(acc_ref[...] + bc_ref[...], 0.0)                 # (NPIX, COUT)

    # ---- global average pool as a matmul; pool matrix zeroes pad/garbage rows ----
    pooled = jnp.dot(pool_ref[...], act,
                     preferred_element_type=jnp.float32)               # (B, COUT)

    # ---- encoder dense + 2-layer MLP (network) ----
    h = jnp.maximum(jnp.dot(pooled, we_ref[...],
                            preferred_element_type=jnp.float32) + be_ref[...], 0.0)
    h = jnp.maximum(jnp.dot(h, w1_ref[...],
                            preferred_element_type=jnp.float32) + b1_ref[...], 0.0)
    h = jnp.maximum(jnp.dot(h, w2_ref[...],
                            preferred_element_type=jnp.float32) + b2_ref[...], 0.0)

    # ---- output Linear(HIDDEN, 1): VPU multiply + lane reduce (no N=1 MXU pass) ----
    logit = jnp.sum(h * wo_t_ref[...], axis=-1, keepdims=True) + bo_ref[...]   # (B, 1)
    o_ref[...] = jnp.broadcast_to(logit, o_ref.shape)                  # lane-dense store


# ---------------- wrapper ----------------
def _vmem_spec():
    return pl.BlockSpec(memory_space=pltpu.MemorySpace.VMEM)


def _pool_matrix():
    """(B, NPIX) matrix: 1/(H*W) at rows that are valid (unpadded) pixels of image b."""
    r = jnp.arange(NPIX)
    bi = r // (PH * PW)
    i = (r % (PH * PW)) // PW
    j = r % PW
    valid = (i < H) & (j < W)
    sel = (bi[None, :] == jnp.arange(B)[:, None]) & valid[None, :]
    return jnp.where(sel, 1.0 / (H * W), 0.0).astype(jnp.float32)


@jax.jit
def binary_classifier_forward(x_nchw, params):
    """Full forward: NCHW image -> (B,) logits (matches output_layer(x).squeeze())."""
    wc, bc, we, be, w1, b1, w2, b2, wo, bo = params

    # Cheap layout prep on the *un-expanded* ~10 KB input (no 9x im2col blow-up).
    x_nhwc = jnp.transpose(x_nchw, (0, 2, 3, 1))                       # (B,H,W,CIN)
    xp = jnp.pad(x_nhwc, ((0, 0), (1, 1), (1, 1), (0, 0)))             # (B,PH,PW,CIN)
    xflat = xp.reshape(NPIX, CIN)
    xflat = jnp.pad(xflat, ((0, X_ROWS - NPIX), (0, 0)))               # (X_ROWS, CIN)

    pool = _pool_matrix()                                              # (B, NPIX)

    out = pl.pallas_call(
        _fused_forward_kernel,
        out_shape=jax.ShapeDtypeStruct((B, OUT_LANES), jnp.float32),
        in_specs=[_vmem_spec()] * 12,
        out_specs=_vmem_spec(),
        scratch_shapes=[pltpu.VMEM((NPIX, COUT), jnp.float32)],
    )(xflat,
      wc.reshape(KH * KW, CIN, COUT),
      bc.reshape(1, COUT),
      pool,
      we, be.reshape(1, ENC_DIM),
      w1, b1.reshape(1, HIDDEN),
      w2, b2.reshape(1, HIDDEN),
      wo.reshape(1, HIDDEN),            # (HIDDEN, 1) column vector -> (1, HIDDEN) row
      bo.reshape(1, 1))

    return out[:, 0]                                                   # (B,) logits


# ---------------- deterministic parameter init ----------------
def init_params(key):
    ks = jax.random.split(key, 10)

    def u(k, shape, fan_in):
        lim = 1.0 / jnp.sqrt(fan_in)
        return jax.random.uniform(k, shape, jnp.float32, -lim, lim)

    wc = u(ks[0], (KH, KW, CIN, COUT), KH * KW * CIN)   # conv weight (dh, dw, cin, cout)
    bc = u(ks[1], (COUT,), KH * KW * CIN)
    we = u(ks[2], (COUT, ENC_DIM), COUT)                # encoder dense
    be = u(ks[3], (ENC_DIM,), COUT)
    w1 = u(ks[4], (ENC_DIM, HIDDEN), ENC_DIM)           # network layer 1
    b1 = u(ks[5], (HIDDEN,), ENC_DIM)
    w2 = u(ks[6], (HIDDEN, HIDDEN), HIDDEN)             # network layer 2
    b2 = u(ks[7], (HIDDEN,), HIDDEN)
    wo = u(ks[8], (HIDDEN, 1), HIDDEN)                  # output_layer: Linear(output_dim, 1)
    bo = u(ks[9], (1,), HIDDEN)
    return (wc, bc, we, be, w1, b1, w2, b2, wo, bo)


# ---------------- pure-JAX reference (same math, no Pallas) ----------------
def reference_forward(x_nchw, params):
    wc, bc, we, be, w1, b1, w2, b2, wo, bo = params
    x = jnp.transpose(x_nchw, (0, 2, 3, 1))
    xp = jnp.pad(x, ((0, 0), (1, 1), (1, 1), (0, 0)))
    act = jnp.zeros((B, H, W, COUT), jnp.float32)
    for dh in range(KH):
        for dw in range(KW):
            act = act + jnp.einsum('bhwc,co->bhwo',
                                   xp[:, dh:dh + H, dw:dw + W, :], wc[dh, dw])
    act = jnp.maximum(act + bc, 0.0)
    pooled = jnp.mean(act, axis=(1, 2))
    h = jnp.maximum(pooled @ we + be, 0.0)
    h = jnp.maximum(h @ w1 + b1, 0.0)
    h = jnp.maximum(h @ w2 + b2, 0.0)
    return jnp.squeeze(h @ wo + bo)


if __name__ == "__main__":
    key = jax.random.PRNGKey(0)
    k_x, k_p = jax.random.split(key)
    x = jax.random.normal(k_x, (B, CIN, H, W), jnp.float32)            # NCHW, like PyTorch
    params = init_params(k_p)

    out = jax.block_until_ready(binary_classifier_forward(x, params))
    ref = jax.block_until_ready(reference_forward(x, params))

    assert out.shape == (B,), out.shape
    assert jnp.allclose(out, ref, rtol=1e-4, atol=1e-4), (out, ref)
    print("KERNEL_OK")
</pallas_src>

<mosaic_0001>
module attributes {stable_mosaic.version = 11 : i64} {
  func.func @_fused_forward_kernel(%arg0: memref<688x4xf32, #tpu.memory_space<vmem>>, %arg1: memref<9x4x32xf32, #tpu.memory_space<vmem>>, %arg2: memref<1x32xf32, #tpu.memory_space<vmem>>, %arg3: memref<2x648xf32, #tpu.memory_space<vmem>>, %arg4: memref<32x32xf32, #tpu.memory_space<vmem>>, %arg5: memref<1x32xf32, #tpu.memory_space<vmem>>, %arg6: memref<32x64xf32, #tpu.memory_space<vmem>>, %arg7: memref<1x64xf32, #tpu.memory_space<vmem>>, %arg8: memref<64x64xf32, #tpu.memory_space<vmem>>, %arg9: memref<1x64xf32, #tpu.memory_space<vmem>>, %arg10: memref<1x64xf32, #tpu.memory_space<vmem>>, %arg11: memref<1x1xf32, #tpu.memory_space<vmem>>, %arg12: memref<2x128xf32, #tpu.memory_space<vmem>>, %arg13: memref<648x32xf32, #tpu.memory_space<vmem>>) attributes {dimension_semantics = [], scalar_prefetch = 0 : i64, scratch_operands = 1 : i64, tpu.core_type = #tpu.core_type<tc>} {
    %c0 = arith.constant 0 : index
    %c0_0 = arith.constant 0 : index
    %0 = vector.load %arg0[%c0, %c0_0] : memref<688x4xf32, #tpu.memory_space<vmem>>, vector<648x4xf32>
    %c0_1 = arith.constant 0 : index
    %c0_2 = arith.constant 0 : index
    %c0_3 = arith.constant 0 : index
    %1 = vector.load %arg1[%c0_1, %c0_2, %c0_3] : memref<9x4x32xf32, #tpu.memory_space<vmem>>, vector<1x4x32xf32>
    %2 = vector.shape_cast %1 : vector<1x4x32xf32> to vector<4x32xf32>
    %cst = arith.constant dense<0.000000e+00> : vector<648x32xf32>
    %3 = tpu.matmul %0, %2, %cst {dimension_numbers = #tpu.dot_dimension_numbers<[1], [0], [0], [1], [0, 0, 1, 1], [], []>} : vector<648x4xf32>, vector<4x32xf32>, vector<648x32xf32> -> vector<648x32xf32>
    %c0_4 = arith.constant 0 : index
    %c0_5 = arith.constant 0 : index
    %4 = vector.load %arg13[%c0_4, %c0_5] : memref<648x32xf32, #tpu.memory_space<vmem>>, vector<648x32xf32>
    tpu.vector_store %arg13[%c0_4, %c0_5], %3 {strides = array<i32>} : memref<648x32xf32, #tpu.memory_space<vmem>>, vector<648x32xf32>,
    %c0_6 = arith.constant 0 : index
    %c0_7 = arith.constant 0 : index
    %5 = vector.load %arg13[%c0_6, %c0_7] : memref<648x32xf32, #tpu.memory_space<vmem>>, vector<648x32xf32>
    %c1 = arith.constant 1 : index
    %c0_8 = arith.constant 0 : index
    %6 = vector.load %arg0[%c1, %c0_8] : memref<688x4xf32, #tpu.memory_space<vmem>>, vector<648x4xf32>
    %c1_9 = arith.constant 1 : index
    %c0_10 = arith.constant 0 : index
    %c0_11 = arith.constant 0 : index
    %7 = vector.load %arg1[%c1_9, %c0_10, %c0_11] : memref<9x4x32xf32, #tpu.memory_space<vmem>>, vector<1x4x32xf32>
    %8 = vector.shape_cast %7 : vector<1x4x32xf32> to vector<4x32xf32>
    %cst_12 = arith.constant dense<0.000000e+00> : vector<648x32xf32>
    %9 = tpu.matmul %6, %8, %cst_12 {dimension_numbers = #tpu.dot_dimension_numbers<[1], [0], [0], [1], [0, 0, 1, 1], [], []>} : vector<648x4xf32>, vector<4x32xf32>, vector<648x32xf32> -> vector<648x32xf32>
    %10 = arith.addf %5, %9 : vector<648x32xf32>
    %c0_13 = arith.constant 0 : index
    %c0_14 = arith.constant 0 : index
    %11 = vector.load %arg13[%c0_13, %c0_14] : memref<648x32xf32, #tpu.memory_space<vmem>>, vector<648x32xf32>
    tpu.vector_store %arg13[%c0_13, %c0_14], %10 {strides = array<i32>} : memref<648x32xf32, #tpu.memory_space<vmem>>, vector<648x32xf32>,
    %c0_15 = arith.constant 0 : index
    %c0_16 = arith.constant 0 : index
    %12 = vector.load %arg13[%c0_15, %c0_16] : memref<648x32xf32, #tpu.memory_space<vmem>>, vector<648x32xf32>
    %c2 = arith.constant 2 : index
    %c0_17 = arith.constant 0 : index
    %13 = vector.load %arg0[%c2, %c0_17] : memref<688x4xf32, #tpu.memory_space<vmem>>, vector<648x4xf32>
    %c2_18 = arith.constant 2 : index
    %c0_19 = arith.constant 0 : index
    %c0_20 = arith.constant 0 : index
    %14 = vector.load %arg1[%c2_18, %c0_19, %c0_20] : memref<9x4x32xf32, #tpu.memory_space<vmem>>, vector<1x4x32xf32>
    %15 = vector.shape_cast %14 : vector<1x4x32xf32> to vector<4x32xf32>
    %cst_21 = arith.constant dense<0.000000e+00> : vector<648x32xf32>
    %16 = tpu.matmul %13, %15, %cst_21 {dimension_numbers = #tpu.dot_dimension_numbers<[1], [0], [0], [1], [0, 0, 1, 1], [], []>} : vector<648x4xf32>, vector<4x32xf32>, vector<648x32xf32> -> vector<648x32xf32>
    %17 = arith.addf %12, %16 : vector<648x32xf32>
    %c0_22 = arith.constant 0 : index
    %c0_23 = arith.constant 0 : index
    %18 = vector.load %arg13[%c0_22, %c0_23] : memref<648x32xf32, #tpu.memory_space<vmem>>, vector<648x32xf32>
    tpu.vector_store %arg13[%c0_22, %c0_23], %17 {strides = array<i32>} : memref<648x32xf32, #tpu.memory_space<vmem>>, vector<648x32xf32>,
    %c0_24 = arith.constant 0 : index
    %c0_25 = arith.constant 0 : index
    %19 = vector.load %arg13[%c0_24, %c0_25] : memref<648x32xf32, #tpu.memory_space<vmem>>, vector<648x32xf32>
    %c18 = arith.constant 18 : index
    %c0_26 = arith.constant 0 : index
    %20 = vector.load %arg0[%c18, %c0_26] : memref<688x4xf32, #tpu.memory_space<vmem>>, vector<648x4xf32>
    %c3 = arith.constant 3 : index
    %c0_27 = arith.constant 0 : index
    %c0_28 = arith.constant 0 : index
    %21 = vector.load %arg1[%c3, %c0_27, %c0_28] : memref<9x4x32xf32, #tpu.memory_space<vmem>>, vector<1x4x32xf32>
    %22 = vector.shape_cast %21 : vector<1x4x32xf32> to vector<4x32xf32>
    %cst_29 = arith.constant dense<0.000000e+00> : vector<648x32xf32>
    %23 = tpu.matmul %20, %22, %cst_29 {dimension_numbers = #tpu.dot_dimension_numbers<[1], [0], [0], [1], [0, 0, 1, 1], [], []>} : vector<648x4xf32>, vector<4x32xf32>, vector<648x32xf32> -> vector<648x32xf32>
    %24 = arith.addf %19, %23 : vector<648x32xf32>
    %c0_30 = arith.constant 0 : index
    %c0_31 = arith.constant 0 : index
    %25 = vector.load %arg13[%c0_30, %c0_31] : memref<648x32xf32, #tpu.memory_space<vmem>>, vector<648x32xf32>
    tpu.vector_store %arg13[%c0_30, %c0_31], %24 {strides = array<i32>} : memref<648x32xf32, #tpu.memory_space<vmem>>, vector<648x32xf32>,
    %c0_32 = arith.constant 0 : index
    %c0_33 = arith.constant 0 : index
    %26 = vector.load %arg13[%c0_32, %c0_33] : memref<648x32xf32, #tpu.memory_space<vmem>>, vector<648x32xf32>
    %c19 = arith.constant 19 : index
    %c0_34 = arith.constant 0 : index
    %27 = vector.load %arg0[%c19, %c0_34] : memref<688x4xf32, #tpu.memory_space<vmem>>, vector<648x4xf32>
    %c4 = arith.constant 4 : index
    %c0_35 = arith.constant 0 : index
    %c0_36 = arith.constant 0 : index
    %28 = vector.load %arg1[%c4, %c0_35, %c0_36] : memref<9x4x32xf32, #tpu.memory_space<vmem>>, vector<1x4x32xf32>
    %29 = vector.shape_cast %28 : vector<1x4x32xf32> to vector<4x32xf32>
    %cst_37 = arith.constant dense<0.000000e+00> : vector<648x32xf32>
    %30 = tpu.matmul %27, %29, %cst_37 {dimension_numbers = #tpu.dot_dimension_numbers<[1], [0], [0], [1], [0, 0, 1, 1], [], []>} : vector<648x4xf32>, vector<4x32xf32>, vector<648x32xf32> -> vector<648x32xf32>
    %31 = arith.addf %26, %30 : vector<648x32xf32>
    %c0_38 = arith.constant 0 : index
    %c0_39 = arith.constant 0 : index
    %32 = vector.load %arg13[%c0_38, %c0_39] : memref<648x32xf32, #tpu.memory_space<vmem>>, vector<648x32xf32>
    tpu.vector_store %arg13[%c0_38, %c0_39], %31 {strides = array<i32>} : memref<648x32xf32, #tpu.memory_space<vmem>>, vector<648x32xf32>,
    %c0_40 = arith.constant 0 : index
    %c0_41 = arith.constant 0 : index
    %33 = vector.load %arg13[%c0_40, %c0_41] : memref<648x32xf32, #tpu.memory_space<vmem>>, vector<648x32xf32>
    %c20 = arith.constant 20 : index
    %c0_42 = arith.constant 0 : index
    %34 = vector.load %arg0[%c20, %c0_42] : memref<688x4xf32, #tpu.memory_space<vmem>>, vector<648x4xf32>
    %c5 = arith.constant 5 : index
    %c0_43 = arith.constant 0 : index
    %c0_44 = arith.constant 0 : index
    %35 = vector.load %arg1[%c5, %c0_43, %c0_44] : memref<9x4x32xf32, #tpu.memory_space<vmem>>, vector<1x4x32xf32>
    %36 = vector.shape_cast %35 : vector<1x4x32xf32> to vector<4x32xf32>
    %cst_45 = arith.constant dense<0.000000e+00> : vector<648x32xf32>
    %37 = tpu.matmul %34, %36, %cst_45 {dimension_numbers = #tpu.dot_dimension_numbers<[1], [0], [0], [1], [0, 0, 1, 1], [], []>} : vector<648x4xf32>, vector<4x32xf32>, vector<648x32xf32> -> vector<648x32xf32>
    %38 = arith.addf %33, %37 : vector<648x32xf32>
    %c0_46 = arith.constant 0 : index
    %c0_47 = arith.constant 0 : index
    %39 = vector.load %arg13[%c0_46, %c0_47] : memref<648x32xf32, #tpu.memory_space<vmem>>, vector<648x32xf32>
    tpu.vector_store %arg13[%c0_46, %c0_47], %38 {strides = array<i32>} : memref<648x32xf32, #tpu.memory_space<vmem>>, vector<648x32xf32>,
    %c0_48 = arith.constant 0 : index
    %c0_49 = arith.constant 0 : index
    %40 = vector.load %arg13[%c0_48, %c0_49] : memref<648x32xf32, #tpu.memory_space<vmem>>, vector<648x32xf32>
    %c36 = arith.constant 36 : index
    %c0_50 = arith.constant 0 : index
    %41 = vector.load %arg0[%c36, %c0_50] : memref<688x4xf32, #tpu.memory_space<vmem>>, vector<648x4xf32>
    %c6 = arith.constant 6 : index
    %c0_51 = arith.constant 0 : index
    %c0_52 = arith.constant 0 : index
    %42 = vector.load %arg1[%c6, %c0_51, %c0_52] : memref<9x4x32xf32, #tpu.memory_space<vmem>>, vector<1x4x32xf32>
    %43 = vector.shape_cast %42 : vector<1x4x32xf32> to vector<4x32xf32>
    %cst_53 = arith.constant dense<0.000000e+00> : vector<648x32xf32>
    %44 = tpu.matmul %41, %43, %cst_53 {dimension_numbers = #tpu.dot_dimension_numbers<[1], [0], [0], [1], [0, 0, 1, 1], [], []>} : vector<648x4xf32>, vector<4x32xf32>, vector<648x32xf32> -> vector<648x32xf32>
    %45 = arith.addf %40, %44 : vector<648x32xf32>
    %c0_54 = arith.constant 0 : index
    %c0_55 = arith.constant 0 : index
    %46 = vector.load %arg13[%c0_54, %c0_55] : memref<648x32xf32, #tpu.memory_space<vmem>>, vector<648x32xf32>
    tpu.vector_store %arg13[%c0_54, %c0_55], %45 {strides = array<i32>} : memref<648x32xf32, #tpu.memory_space<vmem>>, vector<648x32xf32>,
    %c0_56 = arith.constant 0 : index
    %c0_57 = arith.constant 0 : index
    %47 = vector.load %arg13[%c0_56, %c0_57] : memref<648x32xf32, #tpu.memory_space<vmem>>, vector<648x32xf32>
    %c37 = arith.constant 37 : index
    %c0_58 = arith.constant 0 : index
    %48 = vector.load %arg0[%c37, %c0_58] : memref<688x4xf32, #tpu.memory_space<vmem>>, vector<648x4xf32>
    %c7 = arith.constant 7 : index
    %c0_59 = arith.constant 0 : index
    %c0_60 = arith.constant 0 : index
    %49 = vector.load %arg1[%c7, %c0_59, %c0_60] : memref<9x4x32xf32, #tpu.memory_space<vmem>>, vector<1x4x32xf32>
    %50 = vector.shape_cast %49 : vector<1x4x32xf32> to vector<4x32xf32>
    %cst_61 = arith.constant dense<0.000000e+00> : vector<648x32xf32>
    %51 = tpu.matmul %48, %50, %cst_61 {dimension_numbers = #tpu.dot_dimension_numbers<[1], [0], [0], [1], [0, 0, 1, 1], [], []>} : vector<648x4xf32>, vector<4x32xf32>, vector<648x32xf32> -> vector<648x32xf32>
    %52 = arith.addf %47, %51 : vector<648x32xf32>
    %c0_62 = arith.constant 0 : index
    %c0_63 = arith.constant 0 : index
    %53 = vector.load %arg13[%c0_62, %c0_63] : memref<648x32xf32, #tpu.memory_space<vmem>>, vector<648x32xf32>
    tpu.vector_store %arg13[%c0_62, %c0_63], %52 {strides = array<i32>} : memref<648x32xf32, #tpu.memory_space<vmem>>, vector<648x32xf32>,
    %c0_64 = arith.constant 0 : index
    %c0_65 = arith.constant 0 : index
    %54 = vector.load %arg13[%c0_64, %c0_65] : memref<648x32xf32, #tpu.memory_space<vmem>>, vector<648x32xf32>
    %c38 = arith.constant 38 : index
    %c0_66 = arith.constant 0 : index
    %55 = vector.load %arg0[%c38, %c0_66] : memref<688x4xf32, #tpu.memory_space<vmem>>, vector<648x4xf32>
    %c8 = arith.constant 8 : index
    %c0_67 = arith.constant 0 : index
    %c0_68 = arith.constant 0 : index
    %56 = vector.load %arg1[%c8, %c0_67, %c0_68] : memref<9x4x32xf32, #tpu.memory_space<vmem>>, vector<1x4x32xf32>
    %57 = vector.shape_cast %56 : vector<1x4x32xf32> to vector<4x32xf32>
    %cst_69 = arith.constant dense<0.000000e+00> : vector<648x32xf32>
    %58 = tpu.matmul %55, %57, %cst_69 {dimension_numbers = #tpu.dot_dimension_numbers<[1], [0], [0], [1], [0, 0, 1, 1], [], []>} : vector<648x4xf32>, vector<4x32xf32>, vector<648x32xf32> -> vector<648x32xf32>
    %59 = arith.addf %54, %58 : vector<648x32xf32>
    %c0_70 = arith.constant 0 : index
    %c0_71 = arith.constant 0 : index
    %60 = vector.load %arg13[%c0_70, %c0_71] : memref<648x32xf32, #tpu.memory_space<vmem>>, vector<648x32xf32>
    tpu.vector_store %arg13[%c0_70, %c0_71], %59 {strides = array<i32>} : memref<648x32xf32, #tpu.memory_space<vmem>>, vector<648x32xf32>,
    %c0_72 = arith.constant 0 : index
    %c0_73 = arith.constant 0 : index
    %61 = vector.load %arg13[%c0_72, %c0_73] : memref<648x32xf32, #tpu.memory_space<vmem>>, vector<648x32xf32>
    %c0_74 = arith.constant 0 : index
    %c0_75 = arith.constant 0 : index
    %62 = vector.load %arg2[%c0_74, %c0_75] : memref<1x32xf32, #tpu.memory_space<vmem>>, vector<1x32xf32>
    %63 = vector.broadcast %62 : vector<1x32xf32> to vector<648x32xf32>
    %64 = arith.addf %61, %63 : vector<648x32xf32>
    %cst_76 = arith.constant 0.000000e+00 : f32
    %65 = vector.broadcast %cst_76 : f32 to vector<648x32xf32>
    %66 = arith.maximumf %64, %65 : vector<648x32xf32>
    %c0_77 = arith.constant 0 : index
    %c0_78 = arith.constant 0 : index
    %67 = vector.load %arg3[%c0_77, %c0_78] : memref<2x648xf32, #tpu.memory_space<vmem>>, vector<2x648xf32>
    %cst_79 = arith.constant dense<0.000000e+00> : vector<2x32xf32>
    %68 = tpu.matmul %67, %66, %cst_79 {dimension_numbers = #tpu.dot_dimension_numbers<[1], [0], [0], [1], [0, 0, 1, 1], [], []>} : vector<2x648xf32>, vector<648x32xf32>, vector<2x32xf32> -> vector<2x32xf32>
    %c0_80 = arith.constant 0 : index
    %c0_81 = arith.constant 0 : index
    %69 = vector.load %arg4[%c0_80, %c0_81] : memref<32x32xf32, #tpu.memory_space<vmem>>, vector<32x32xf32>
    %cst_82 = arith.constant dense<0.000000e+00> : vector<2x32xf32>
    %70 = tpu.matmul %68, %69, %cst_82 {dimension_numbers = #tpu.dot_dimension_numbers<[1], [0], [0], [1], [0, 0, 1, 1], [], []>} : vector<2x32xf32>, vector<32x32xf32>, vector<2x32xf32> -> vector<2x32xf32>
    %c0_83 = arith.constant 0 : index
    %c0_84 = arith.constant 0 : index
    %71 = vector.load %arg5[%c0_83, %c0_84] : memref<1x32xf32, #tpu.memory_space<vmem>>, vector<1x32xf32>
    %72 = vector.broadcast %71 : vector<1x32xf32> to vector<2x32xf32>
    %73 = arith.addf %70, %72 : vector<2x32xf32>
    %cst_85 = arith.constant 0.000000e+00 : f32
    %74 = vector.broadcast %cst_85 : f32 to vector<2x32xf32>
    %75 = arith.maximumf %73, %74 : vector<2x32xf32>
    %c0_86 = arith.constant 0 : index
    %c0_87 = arith.constant 0 : index
    %76 = vector.load %arg6[%c0_86, %c0_87] : memref<32x64xf32, #tpu.memory_space<vmem>>, vector<32x64xf32>
    %cst_88 = arith.constant dense<0.000000e+00> : vector<2x64xf32>
    %77 = tpu.matmul %75, %76, %cst_88 {dimension_numbers = #tpu.dot_dimension_numbers<[1], [0], [0], [1], [0, 0, 1, 1], [], []>} : vector<2x32xf32>, vector<32x64xf32>, vector<2x64xf32> -> vector<2x64xf32>
    %c0_89 = arith.constant 0 : index
    %c0_90 = arith.constant 0 : index
    %78 = vector.load %arg7[%c0_89, %c0_90] : memref<1x64xf32, #tpu.memory_space<vmem>>, vector<1x64xf32>
    %79 = vector.broadcast %78 : vector<1x64xf32> to vector<2x64xf32>
    %80 = arith.addf %77, %79 : vector<2x64xf32>
    %cst_91 = arith.constant 0.000000e+00 : f32
    %81 = vector.broadcast %cst_91 : f32 to vector<2x64xf32>
    %82 = arith.maximumf %80, %81 : vector<2x64xf32>
    %c0_92 = arith.constant 0 : index
    %c0_93 = arith.constant 0 : index
    %83 = vector.load %arg8[%c0_92, %c0_93] : memref<64x64xf32, #tpu.memory_space<vmem>>, vector<64x64xf32>
    %cst_94 = arith.constant dense<0.000000e+00> : vector<2x64xf32>
    %84 = tpu.matmul %82, %83, %cst_94 {dimension_numbers = #tpu.dot_dimension_numbers<[1], [0], [0], [1], [0, 0, 1, 1], [], []>} : vector<2x64xf32>, vector<64x64xf32>, vector<2x64xf32> -> vector<2x64xf32>
    %c0_95 = arith.constant 0 : index
    %c0_96 = arith.constant 0 : index
    %85 = vector.load %arg9[%c0_95, %c0_96] : memref<1x64xf32, #tpu.memory_space<vmem>>, vector<1x64xf32>
    %86 = vector.broadcast %85 : vector<1x64xf32> to vector<2x64xf32>
    %87 = arith.addf %84, %86 : vector<2x64xf32>
    %cst_97 = arith.constant 0.000000e+00 : f32
    %88 = vector.broadcast %cst_97 : f32 to vector<2x64xf32>
    %89 = arith.maximumf %87, %88 : vector<2x64xf32>
    %c0_98 = arith.constant 0 : index
    %c0_99 = arith.constant 0 : index
    %90 = vector.load %arg10[%c0_98, %c0_99] : memref<1x64xf32, #tpu.memory_space<vmem>>, vector<1x64xf32>
    %91 = vector.broadcast %90 : vector<1x64xf32> to vector<2x64xf32>
    %92 = arith.mulf %89, %91 : vector<2x64xf32>
    %cst_100 = arith.constant dense<0.000000e+00> : vector<2xf32>
    %93 = vector.multi_reduction <add>, %92, %cst_100 [1] : vector<2x64xf32> to vector<2xf32>
    %94 = vector.shape_cast %93 : vector<2xf32> to vector<2x1xf32>
    %c0_101 = arith.constant 0 : index
    %c0_102 = arith.constant 0 : index
    %95 = vector.load %arg11[%c0_101, %c0_102] : memref<1x1xf32, #tpu.memory_space<vmem>>, vector<1x1xf32>
    %96 = vector.broadcast %95 : vector<1x1xf32> to vector<2x1xf32>
    %97 = arith.addf %94, %96 : vector<2x1xf32>
    %98 = vector.shape_cast %97 : vector<2x1xf32> to vector<2x1xf32>
    %99 = vector.broadcast %98 : vector<2x1xf32> to vector<2x128xf32>
    %c0_103 = arith.constant 0 : index
    %c0_104 = arith.constant 0 : index
    %100 = vector.load %arg12[%c0_103, %c0_104] : memref<2x128xf32, #tpu.memory_space<vmem>>, vector<2x128xf32>
    tpu.vector_store %arg12[%c0_103, %c0_104], %99 {strides = array<i32>} : memref<2x128xf32, #tpu.memory_space<vmem>>, vector<2x128xf32>,
    return
  }
}

</mosaic_0001>

<llo_original>
// kernel: binary_classifier_forward.1
$region0: #{binary_classifier_forward.1}
  #allocation0 [shape = 'u32[]', space=smem, size = 0x4, offset = 0x4, fixed_abs, tag = 'smem constant byte address 0x4 - core index']
  #allocation1 [shape = 'u32[72,128]{1,0:T(1,128)}', space=vmem, size = 0x9000, scoped, tag = 'internal scratch']
  #allocation2 [shape = 'f32[648,32]{1,0:T(8,128)}', space=vmem, size = 0x51000, scoped, tag = 'scratch operand']
  #allocation3 [shape = 'f32[1,1]{1,0:T(1,128)S(1)}', space=vmem, size = 0x200, scoped, tag = 'scoped memory for binary_classifier_forward.1']
  %s0 = inlined_call_operand.vmem [shape: f32[688,4], index: 0, kind: input, shape index: {}]
  %s1 = inlined_call_operand.vmem [shape: f32[9,4,32], index: 1, kind: input, shape index: {}]
  %s2 = inlined_call_operand.vmem [shape: f32[1,32], index: 2, kind: input, shape index: {}]
  %s3 = inlined_call_operand.vmem [shape: f32[2,648], index: 3, kind: input, shape index: {}]
  %s4 = inlined_call_operand.vmem [shape: f32[32,32], index: 4, kind: input, shape index: {}]
  %s5 = inlined_call_operand.vmem [shape: f32[1,32], index: 5, kind: input, shape index: {}]
  %s6 = inlined_call_operand.vmem [shape: f32[32,64], index: 6, kind: input, shape index: {}]
  %s7 = inlined_call_operand.vmem [shape: f32[1,64], index: 7, kind: input, shape index: {}]
  %s8 = inlined_call_operand.vmem [shape: f32[64,64], index: 8, kind: input, shape index: {}]
  %s9 = inlined_call_operand.vmem [shape: f32[1,64], index: 9, kind: input, shape index: {}]
  %s10 = inlined_call_operand.vmem [shape: f32[1,64], index: 10, kind: input, shape index: {}]
  %s11 = inlined_call_operand.<no memory space> [shape: f32[1,1], index: 11, kind: input, shape index: {}]
  %s12 = inlined_call_operand.vmem [shape: f32[2,128], index: 12, kind: output, shape index: {}]
  %s13 = sld [smem:[#allocation0]]
  $region58: #{binary_classifier_forward.1} parent=0
    _
  %s15 = ssub.s32 1, %s13
  %s16 = scalar_select 0, %s15, %s13
  %v17 = vstv %s11
  %18 = vst [vmem:[#allocation3] sm:$0x1] %v17
  // Predicated region
  $region2: #{binary_classifier_forward.1} parent=0 // pred_check
    _
  $region3: #{binary_classifier_forward.1} parent=0 // pred_check_branch
    %20 = sbr.rel (0) target = $region5
  $region4: #{binary_classifier_forward.1} parent=0 // pred_region
    _
  $region5: #{binary_classifier_forward.1} parent=0 // pred_fallthru
    _
  // Predicated region
  $region6: #{binary_classifier_forward.1} parent=0 // pred_check
    _
  $region7: #{binary_classifier_forward.1} parent=0 // pred_check_branch
    %22 = sbr.rel (0) target = $region9
  $region8: #{binary_classifier_forward.1} parent=0 // pred_region
    _
  $region9: #{binary_classifier_forward.1} parent=0 // pred_fallthru
    _
  // Predicated region
  $region10: #{binary_classifier_forward.1} parent=0 // pred_check
    _
  $region11: #{binary_classifier_forward.1} parent=0 // pred_check_branch
    %24 = sbr.rel (0) target = $region13
  $region12: #{binary_classifier_forward.1} parent=0 // pred_region
    _
  $region13: #{binary_classifier_forward.1} parent=0 // pred_fallthru
    _
  // Predicated region
  $region14: #{binary_classifier_forward.1} parent=0 // pred_check
    _
  $region15: #{binary_classifier_forward.1} parent=0 // pred_check_branch
    %26 = sbr.rel (0) target = $region17
  $region16: #{binary_classifier_forward.1} parent=0 // pred_region
    _
  $region17: #{binary_classifier_forward.1} parent=0 // pred_fallthru
    _
  // Predicated region
  $region18: #{binary_classifier_forward.1} parent=0 // pred_check
    _
  $region19: #{binary_classifier_forward.1} parent=0 // pred_check_branch
    %28 = sbr.rel (0) target = $region21
  $region20: #{binary_classifier_forward.1} parent=0 // pred_region
    _
  $region21: #{binary_classifier_forward.1} parent=0 // pred_fallthru
    _
  // Predicated region
  $region22: #{binary_classifier_forward.1} parent=0 // pred_check
    _
  $region23: #{binary_classifier_forward.1} parent=0 // pred_check_branch
    %30 = sbr.rel (0) target = $region25
  $region24: #{binary_classifier_forward.1} parent=0 // pred_region
    _
  $region25: #{binary_classifier_forward.1} parent=0 // pred_fallthru
    _
  // Predicated region
  $region26: #{binary_classifier_forward.1} parent=0 // pred_check
    _
  $region27: #{binary_classifier_forward.1} parent=0 // pred_check_branch
    %32 = sbr.rel (0) target = $region29
  $region28: #{binary_classifier_forward.1} parent=0 // pred_region
    _
  $region29: #{binary_classifier_forward.1} parent=0 // pred_fallthru
    _
  // Predicated region
  $region30: #{binary_classifier_forward.1} parent=0 // pred_check
    _
  $region31: #{binary_classifier_forward.1} parent=0 // pred_check_branch
    %34 = sbr.rel (0) target = $region33
  $region32: #{binary_classifier_forward.1} parent=0 // pred_region
    _
  $region33: #{binary_classifier_forward.1} parent=0 // pred_fallthru
    _
  // Predicated region
  $region34: #{binary_classifier_forward.1} parent=0 // pred_check
    _
  $region35: #{binary_classifier_forward.1} parent=0 // pred_check_branch
    %36 = sbr.rel (0) target = $region37
  $region36: #{binary_classifier_forward.1} parent=0 // pred_region
    _
  $region37: #{binary_classifier_forward.1} parent=0 // pred_fallthru
    _
  // Predicated region
  $region38: #{binary_classifier_forward.1} parent=0 // pred_check
    _
  $region39: #{binary_classifier_forward.1} parent=0 // pred_check_branch
    %38 = sbr.rel (0) target = $region41
  $region40: #{binary_classifier_forward.1} parent=0 // pred_region
    _
  $region41: #{binary_classifier_forward.1} parent=0 // pred_fallthru
    _
  // Predicated region
  $region42: #{binary_classifier_forward.1} parent=0 // pred_check
    _
  $region43: #{binary_classifier_forward.1} parent=0 // pred_check_branch
    %40 = sbr.rel (0) target = $region45
  $region44: #{binary_classifier_forward.1} parent=0 // pred_region
    _
  $region45: #{binary_classifier_forward.1} parent=0 // pred_fallthru
    _
  // Predicated region
  $region46: #{binary_classifier_forward.1} parent=0 // pred_check
    _
  $region47: #{binary_classifier_forward.1} parent=0 // pred_check_branch
    %42 = sbr.rel (0) target = $region49
  $region48: #{binary_classifier_forward.1} parent=0 // pred_region
    _
  $region49: #{binary_classifier_forward.1} parent=0 // pred_fallthru
    _
  %v43 = vld [vmem:[%s0] sm:$0xff]
  %v44 = vld [vmem:[%s0 + $0x8] sm:$0xff]
  %v45 = vld [vmem:[%s0 + $0x10] sm:$0xff]
  %v46 = vld [vmem:[%s0 + $0x18] sm:$0xff]
  %v47 = vld [vmem:[%s0 + $0x20] sm:$0xff]
  %v48 = vld [vmem:[%s0 + $0x28] sm:$0xff]
  %v49 = vld [vmem:[%s0 + $0x30] sm:$0xff]
  %v50 = vld [vmem:[%s0 + $0x38] sm:$0xff]
  %v51 = vld [vmem:[%s0 + $0x40] sm:$0xff]
  %v52 = vld [vmem:[%s0 + $0x48] sm:$0xff]
  %v53 = vld [vmem:[%s0 + $0x50] sm:$0xff]
  %v54 = vld [vmem:[%s0 + $0x58] sm:$0xff]
  %v55 = vld [vmem:[%s0 + $0x60] sm:$0xff]
  %v56 = vld [vmem:[%s0 + $0x68] sm:$0xff]
  %v57 = vld [vmem:[%s0 + $0x70] sm:$0xff]
  %v58 = vld [vmem:[%s0 + $0x78] sm:$0xff]
  %v59 = vld [vmem:[%s0 + $0x80] sm:$0xff]
  %v60 = vld [vmem:[%s0 + $0x88] sm:$0xff]
  %v61 = vld [vmem:[%s0 + $0x90] sm:$0xff]
  %v62 = vld [vmem:[%s0 + $0x98] sm:$0xff]
  %v63 = vld [vmem:[%s0 + $0xa0] sm:$0xff]
  %v64 = vld [vmem:[%s0 + $0xa8] sm:$0xff]
  %v65 = vld [vmem:[%s0 + $0xb0] sm:$0xff]
  %v66 = vld [vmem:[%s0 + $0xb8] sm:$0xff]
  %v67 = vld [vmem:[%s0 + $0xc0] sm:$0xff]
  %v68 = vld [vmem:[%s0 + $0xc8] sm:$0xff]
  %v69 = vld [vmem:[%s0 + $0xd0] sm:$0xff]
  %v70 = vld [vmem:[%s0 + $0xd8] sm:$0xff]
  %v71 = vld [vmem:[%s0 + $0xe0] sm:$0xff]
  %v72 = vld [vmem:[%s0 + $0xe8] sm:$0xff]
  %v73 = vld [vmem:[%s0 + $0xf0] sm:$0xff]
  %v74 = vld [vmem:[%s0 + $0xf8] sm:$0xff]
  %v75 = vld [vmem:[%s0 + $0x100] sm:$0xff]
  %v76 = vld [vmem:[%s0 + $0x108] sm:$0xff]
  %v77 = vld [vmem:[%s0 + $0x110] sm:$0xff]
  %v78 = vld [vmem:[%s0 + $0x118] sm:$0xff]
  %v79 = vld [vmem:[%s0 + $0x120] sm:$0xff]
  %v80 = vld [vmem:[%s0 + $0x128] sm:$0xff]
  %v81 = vld [vmem:[%s0 + $0x130] sm:$0xff]
  %v82 = vld [vmem:[%s0 + $0x138] sm:$0xff]
  %v83 = vld [vmem:[%s0 + $0x140] sm:$0xff]
  %v84 = vld [vmem:[%s0 + $0x148] sm:$0xff]
  %v85 = vld [vmem:[%s0 + $0x150] sm:$0xff]
  %v86 = vld [vmem:[%s0 + $0x158] sm:$0xff]
  %v87 = vld [vmem:[%s0 + $0x160] sm:$0xff]
  %v88 = vld [vmem:[%s0 + $0x168] sm:$0xff]
  %v89 = vld [vmem:[%s0 + $0x170] sm:$0xff]
  %v90 = vld [vmem:[%s0 + $0x178] sm:$0xff]
  %v91 = vld [vmem:[%s0 + $0x180] sm:$0xff]
  %v92 = vld [vmem:[%s0 + $0x188] sm:$0xff]
  %v93 = vld [vmem:[%s0 + $0x190] sm:$0xff]
  %v94 = vld [vmem:[%s0 + $0x198] sm:$0xff]
  %v95 = vld [vmem:[%s0 + $0x1a0] sm:$0xff]
  %v96 = vld [vmem:[%s0 + $0x1a8] sm:$0xff]
  %v97 = vld [vmem:[%s0 + $0x1b0] sm:$0xff]
  %v98 = vld [vmem:[%s0 + $0x1b8] sm:$0xff]
  %v99 = vld [vmem:[%s0 + $0x1c0] sm:$0xff]
  %v100 = vld [vmem:[%s0 + $0x1c8] sm:$0xff]
  %v101 = vld [vmem:[%s0 + $0x1d0] sm:$0xff]
  %v102 = vld [vmem:[%s0 + $0x1d8] sm:$0xff]
  %v103 = vld [vmem:[%s0 + $0x1e0] sm:$0xff]
  %v104 = vld [vmem:[%s0 + $0x1e8] sm:$0xff]
  %v105 = vld [vmem:[%s0 + $0x1f0] sm:$0xff]
  %v106 = vld [vmem:[%s0 + $0x1f8] sm:$0xff]
  %v107 = vld [vmem:[%s0 + $0x200] sm:$0xff]
  %v108 = vld [vmem:[%s0 + $0x208] sm:$0xff]
  %v109 = vld [vmem:[%s0 + $0x210] sm:$0xff]
  %v110 = vld [vmem:[%s0 + $0x218] sm:$0xff]
  %v111 = vld [vmem:[%s0 + $0x220] sm:$0xff]
  %v112 = vld [vmem:[%s0 + $0x228] sm:$0xff]
  %v113 = vld [vmem:[%s0 + $0x230] sm:$0xff]
  %v114 = vld [vmem:[%s0 + $0x238] sm:$0xff]
  %v115 = vld [vmem:[%s0 + $0x240] sm:$0xff]
  %v116 = vld [vmem:[%s0 + $0x248] sm:$0xff]
  %v117 = vld [vmem:[%s0 + $0x250] sm:$0xff]
  %v118 = vld [vmem:[%s0 + $0x258] sm:$0xff]
  %v119 = vld [vmem:[%s0 + $0x260] sm:$0xff]
  %v120 = vld [vmem:[%s0 + $0x268] sm:$0xff]
  %v121 = vld [vmem:[%s0 + $0x270] sm:$0xff]
  %v122 = vld [vmem:[%s0 + $0x278] sm:$0xff]
  %v123 = vld [vmem:[%s0 + $0x280] sm:$0xff]
  %v124 = vld [vmem:[%s1] sm:$0xf]
  %vm125 = vcmask 31744
  %v127 = vsel %vm125, %v43, 0
  %v130 = vsel %vm125, %v44, 0
  %v133 = vsel %vm125, %v45, 0
  %v136 = vsel %vm125, %v46, 0
  %v139 = vsel %vm125, %v47, 0
  %v142 = vsel %vm125, %v48, 0
  %v145 = vsel %vm125, %v49, 0
  %v148 = vsel %vm125, %v50, 0
  %v151 = vsel %vm125, %v51, 0
  %v154 = vsel %vm125, %v52, 0
  %v157 = vsel %vm125, %v53, 0
  %v160 = vsel %vm125, %v54, 0
  %v163 = vsel %vm125, %v55, 0
  %v166 = vsel %vm125, %v56, 0
  %v169 = vsel %vm125, %v57, 0
  %v172 = vsel %vm125, %v58, 0
  %v175 = vsel %vm125, %v59, 0
  %v178 = vsel %vm125, %v60, 0
  %v181 = vsel %vm125, %v61, 0
  %v184 = vsel %vm125, %v62, 0
  %v187 = vsel %vm125, %v63, 0
  %v190 = vsel %vm125, %v64, 0
  %v193 = vsel %vm125, %v65, 0
  %v196 = vsel %vm125, %v66, 0
  %v199 = vsel %vm125, %v67, 0
  %v202 = vsel %vm125, %v68, 0
  %v205 = vsel %vm125, %v69, 0
  %v208 = vsel %vm125, %v70, 0
  %v211 = vsel %vm125, %v71, 0
  %v214 = vsel %vm125, %v72, 0
  %v217 = vsel %vm125, %v73, 0
  %v220 = vsel %vm125, %v74, 0
  %v223 = vsel %vm125, %v75, 0
  %v226 = vsel %vm125, %v76, 0
  %v229 = vsel %vm125, %v77, 0
  %v232 = vsel %vm125, %v78, 0
  %v235 = vsel %vm125, %v79, 0
  %v238 = vsel %vm125, %v80, 0
  %v241 = vsel %vm125, %v81, 0
  %v244 = vsel %vm125, %v82, 0
  %v247 = vsel %vm125, %v83, 0
  %v250 = vsel %vm125, %v84, 0
  %v253 = vsel %vm125, %v85, 0
  %v256 = vsel %vm125, %v86, 0
  %v259 = vsel %vm125, %v87, 0
  %v262 = vsel %vm125, %v88, 0
  %v265 = vsel %vm125, %v89, 0
  %v268 = vsel %vm125, %v90, 0
  %v271 = vsel %vm125, %v91, 0
  %v274 = vsel %vm125, %v92, 0
  %v277 = vsel %vm125, %v93, 0
  %v280 = vsel %vm125, %v94, 0
  %v283 = vsel %vm125, %v95, 0
  %v286 = vsel %vm125, %v96, 0
  %v289 = vsel %vm125, %v97, 0
  %v292 = vsel %vm125, %v98, 0
  %v295 = vsel %vm125, %v99, 0
  %v298 = vsel %vm125, %v100, 0
  %v301 = vsel %vm125, %v101, 0
  %v304 = vsel %vm125, %v102, 0
  %v307 = vsel %vm125, %v103, 0
  %v310 = vsel %vm125, %v104, 0
  %v313 = vsel %vm125, %v105, 0
  %v316 = vsel %vm125, %v106, 0
  %v319 = vsel %vm125, %v107, 0
  %v322 = vsel %vm125, %v108, 0
  %v325 = vsel %vm125, %v109, 0
  %v328 = vsel %vm125, %v110, 0
  %v331 = vsel %vm125, %v111, 0
  %v334 = vsel %vm125, %v112, 0
  %v337 = vsel %vm125, %v113, 0
  %v340 = vsel %vm125, %v114, 0
  %v343 = vsel %vm125, %v115, 0
  %v346 = vsel %vm125, %v116, 0
  %v349 = vsel %vm125, %v117, 0
  %v352 = vsel %vm125, %v118, 0
  %v355 = vsel %vm125, %v119, 0
  %v358 = vsel %vm125, %v120, 0
  %v361 = vsel %vm125, %v121, 0
  %v364 = vsel %vm125, %v122, 0
  %v367 = vsel %vm125, %v123, 0
  %vm369 = vcmask 1043456
  %v371 = vsel %vm369, %v124, 0
  %373 = vmatpush.msra.mxu0 0.0
  %374 = vmatpush.msra.mxu0 0.0
  %375 = vmatpush.msra.mxu0 0.0
  %376 = vmatpush.msra.mxu0 0.0
  %377 = vmatpush.msra.mxu0 0.0
  %378 = vmatpush.msra.mxu0 0.0
  %379 = vmatpush.msra.mxu0 0.0
  %380 = vmatpush.msra.mxu0 0.0
  %381 = vmatpush.msra.mxu0 0.0
  %382 = vmatpush.msra.mxu0 0.0
  %383 = vmatpush.msra.mxu0 0.0
  %384 = vmatpush.msra.mxu0 0.0
  %385 = vmatpush.msra.mxu0 0.0
  %386 = vmatpush.msra.mxu0 0.0
  %387 = vmatpush.msra.mxu0 0.0
  %388 = vmatpush.msra.mxu0 %v371
  %389 = vmatmul.f32.gmra.mxu0 %v127
  %v390 = vpop.f32.mrf.mxu0
  %v391 = vadd.f32 0.0, %v390
  %392 = vmatmul.f32.gmra.mxu0 %v130
  %v393 = vpop.f32.mrf.mxu0
  %v394 = vadd.f32 0.0, %v393
  %395 = vmatmul.f32.gmra.mxu0 %v133
  %v396 = vpop.f32.mrf.mxu0
  %v397 = vadd.f32 0.0, %v396
  %398 = vmatmul.f32.gmra.mxu0 %v136
  %v399 = vpop.f32.mrf.mxu0
  %v400 = vadd.f32 0.0, %v399
  %401 = vmatmul.f32.gmra.mxu0 %v139
  %v402 = vpop.f32.mrf.mxu0
  %v403 = vadd.f32 0.0, %v402
  %404 = vmatmul.f32.gmra.mxu0 %v142
  %v405 = vpop.f32.mrf.mxu0
  %v406 = vadd.f32 0.0, %v405
  %407 = vmatmul.f32.gmra.mxu0 %v145
  %v408 = vpop.f32.mrf.mxu0
  %v409 = vadd.f32 0.0, %v408
  %410 = vmatmul.f32.gmra.mxu0 %v148
  %v411 = vpop.f32.mrf.mxu0
  %v412 = vadd.f32 0.0, %v411
  %413 = vmatmul.f32.gmra.mxu0 %v151
  %v414 = vpop.f32.mrf.mxu0
  %v415 = vadd.f32 0.0, %v414
  %416 = vmatmul.f32.gmra.mxu0 %v154
  %v417 = vpop.f32.mrf.mxu0
  %v418 = vadd.f32 0.0, %v417
  %419 = vmatmul.f32.gmra.mxu0 %v157
  %v420 = vpop.f32.mrf.mxu0
  %v421 = vadd.f32 0.0, %v420
  %422 = vmatmul.f32.gmra.mxu0 %v160
  %v423 = vpop.f32.mrf.mxu0
  %v424 = vadd.f32 0.0, %v423
  %425 = vmatmul.f32.gmra.mxu0 %v163
  %v426 = vpop.f32.mrf.mxu0
  %v427 = vadd.f32 0.0, %v426
  %428 = vmatmul.f32.gmra.mxu0 %v166
  %v429 = vpop.f32.mrf.mxu0
  %v430 = vadd.f32 0.0, %v429
  %431 = vmatmul.f32.gmra.mxu0 %v169
  %v432 = vpop.f32.mrf.mxu0
  %v433 = vadd.f32 0.0, %v432
  %434 = vmatmul.f32.gmra.mxu0 %v172
  %v435 = vpop.f32.mrf.mxu0
  %v436 = vadd.f32 0.0, %v435
  %437 = vmatmul.f32.gmra.mxu0 %v175
  %v438 = vpop.f32.mrf.mxu0
  %v439 = vadd.f32 0.0, %v438
  %440 = vmatmul.f32.gmra.mxu0 %v178
  %v441 = vpop.f32.mrf.mxu0
  %v442 = vadd.f32 0.0, %v441
  %443 = vmatmul.f32.gmra.mxu0 %v181
  %v444 = vpop.f32.mrf.mxu0
  %v445 = vadd.f32 0.0, %v444
  %446 = vmatmul.f32.gmra.mxu0 %v184
  %v447 = vpop.f32.mrf.mxu0
  %v448 = vadd.f32 0.0, %v447
  %449 = vmatmul.f32.gmra.mxu0 %v187
  %v450 = vpop.f32.mrf.mxu0
  %v451 = vadd.f32 0.0, %v450
  %452 = vmatmul.f32.gmra.mxu0 %v190
  %v453 = vpop.f32.mrf.mxu0
  %v454 = vadd.f32 0.0, %v453
  %455 = vmatmul.f32.gmra.mxu0 %v193
  %v456 = vpop.f32.mrf.mxu0
  %v457 = vadd.f32 0.0, %v456
  %458 = vmatmul.f32.gmra.mxu0 %v196
  %v459 = vpop.f32.mrf.mxu0
  %v460 = vadd.f32 0.0, %v459
  %461 = vmatmul.f32.gmra.mxu0 %v199
  %v462 = vpop.f32.mrf.mxu0
  %v463 = vadd.f32 0.0, %v462
  %464 = vmatmul.f32.gmra.mxu0 %v202
  %v465 = vpop.f32.mrf.mxu0
  %v466 = vadd.f32 0.0, %v465
  %467 = vmatmul.f32.gmra.mxu0 %v205
  %v468 = vpop.f32.mrf.mxu0
  %v469 = vadd.f32 0.0, %v468
  %470 = vmatmul.f32.gmra.mxu0 %v208
  %v471 = vpop.f32.mrf.mxu0
  %v472 = vadd.f32 0.0, %v471
  %473 = vmatmul.f32.gmra.mxu0 %v211
  %v474 = vpop.f32.mrf.mxu0
  %v475 = vadd.f32 0.0, %v474
  %476 = vmatmul.f32.gmra.mxu0 %v214
  %v477 = vpop.f32.mrf.mxu0
  %v478 = vadd.f32 0.0, %v477
  %479 = vmatmul.f32.gmra.mxu0 %v217
  %v480 = vpop.f32.mrf.mxu0
  %v481 = vadd.f32 0.0, %v480
  %482 = vmatmul.f32.gmra.mxu0 %v220
  %v483 = vpop.f32.mrf.mxu0
  %v484 = vadd.f32 0.0, %v483
  %485 = vmatmul.f32.gmra.mxu0 %v223
  %v486 = vpop.f32.mrf.mxu0
  %v487 = vadd.f32 0.0, %v486
  %488 = vmatmul.f32.gmra.mxu0 %v226
  %v489 = vpop.f32.mrf.mxu0
  %v490 = vadd.f32 0.0, %v489
  %491 = vmatmul.f32.gmra.mxu0 %v229
  %v492 = vpop.f32.mrf.mxu0
  %v493 = vadd.f32 0.0, %v492
  %494 = vmatmul.f32.gmra.mxu0 %v232
  %v495 = vpop.f32.mrf.mxu0
  %v496 = vadd.f32 0.0, %v495
  %497 = vmatmul.f32.gmra.mxu0 %v235
  %v498 = vpop.f32.mrf.mxu0
  %v499 = vadd.f32 0.0, %v498
  %500 = vmatmul.f32.gmra.mxu0 %v238
  %v501 = vpop.f32.mrf.mxu0
  %v502 = vadd.f32 0.0, %v501
  %503 = vmatmul.f32.gmra.mxu0 %v241
  %v504 = vpop.f32.mrf.mxu0
  %v505 = vadd.f32 0.0, %v504
  %506 = vmatmul.f32.gmra.mxu0 %v244
  %v507 = vpop.f32.mrf.mxu0
  %v508 = vadd.f32 0.0, %v507
  %509 = vmatmul.f32.gmra.mxu0 %v247
  %v510 = vpop.f32.mrf.mxu0
  %v511 = vadd.f32 0.0, %v510
  %512 = vmatmul.f32.gmra.mxu0 %v250
  %v513 = vpop.f32.mrf.mxu0
  %v514 = vadd.f32 0.0, %v513
  %515 = vmatmul.f32.gmra.mxu0 %v253
  %v516 = vpop.f32.mrf.mxu0
  %v517 = vadd.f32 0.0, %v516
  %518 = vmatmul.f32.gmra.mxu0 %v256
  %v519 = vpop.f32.mrf.mxu0
  %v520 = vadd.f32 0.0, %v519
  %521 = vmatmul.f32.gmra.mxu0 %v259
  %v522 = vpop.f32.mrf.mxu0
  %v523 = vadd.f32 0.0, %v522
  %524 = vmatmul.f32.gmra.mxu0 %v262
  %v525 = vpop.f32.mrf.mxu0
  %v526 = vadd.f32 0.0, %v525
  %527 = vmatmul.f32.gmra.mxu0 %v265
  %v528 = vpop.f32.mrf.mxu0
  %v529 = vadd.f32 0.0, %v528
  %530 = vmatmul.f32.gmra.mxu0 %v268
  %v531 = vpop.f32.mrf.mxu0
  %v532 = vadd.f32 0.0, %v531
  %533 = vmatmul.f32.gmra.mxu0 %v271
  %v534 = vpop.f32.mrf.mxu0
  %v535 = vadd.f32 0.0, %v534
  %536 = vmatmul.f32.gmra.mxu0 %v274
  %v537 = vpop.f32.mrf.mxu0
  %v538 = vadd.f32 0.0, %v537
  %539 = vmatmul.f32.gmra.mxu0 %v277
  %v540 = vpop.f32.mrf.mxu0
  %v541 = vadd.f32 0.0, %v540
  %542 = vmatmul.f32.gmra.mxu0 %v280
  %v543 = vpop.f32.mrf.mxu0
  %v544 = vadd.f32 0.0, %v543
  %545 = vmatmul.f32.gmra.mxu0 %v283
  %v546 = vpop.f32.mrf.mxu0
  %v547 = vadd.f32 0.0, %v546
  %548 = vmatmul.f32.gmra.mxu0 %v286
  %v549 = vpop.f32.mrf.mxu0
  %v550 = vadd.f32 0.0, %v549
  %551 = vmatmul.f32.gmra.mxu0 %v289
  %v552 = vpop.f32.mrf.mxu0
  %v553 = vadd.f32 0.0, %v552
  %554 = vmatmul.f32.gmra.mxu0 %v292
  %v555 = vpop.f32.mrf.mxu0
  %v556 = vadd.f32 0.0, %v555
  %557 = vmatmul.f32.gmra.mxu0 %v295
  %v558 = vpop.f32.mrf.mxu0
  %v559 = vadd.f32 0.0, %v558
  %560 = vmatmul.f32.gmra.mxu0 %v298
  %v561 = vpop.f32.mrf.mxu0
  %v562 = vadd.f32 0.0, %v561
  %563 = vmatmul.f32.gmra.mxu0 %v301
  %v564 = vpop.f32.mrf.mxu0
  %v565 = vadd.f32 0.0, %v564
  %566 = vmatmul.f32.gmra.mxu0 %v304
  %v567 = vpop.f32.mrf.mxu0
  %v568 = vadd.f32 0.0, %v567
  %569 = vmatmul.f32.gmra.mxu0 %v307
  %v570 = vpop.f32.mrf.mxu0
  %v571 = vadd.f32 0.0, %v570
  %572 = vmatmul.f32.gmra.mxu0 %v310
  %v573 = vpop.f32.mrf.mxu0
  %v574 = vadd.f32 0.0, %v573
  %575 = vmatmul.f32.gmra.mxu0 %v313
  %v576 = vpop.f32.mrf.mxu0
  %v577 = vadd.f32 0.0, %v576
  %578 = vmatmul.f32.gmra.mxu0 %v316
  %v579 = vpop.f32.mrf.mxu0
  %v580 = vadd.f32 0.0, %v579
  %581 = vmatmul.f32.gmra.mxu0 %v319
  %v582 = vpop.f32.mrf.mxu0
  %v583 = vadd.f32 0.0, %v582
  %584 = vmatmul.f32.gmra.mxu0 %v322
  %v585 = vpop.f32.mrf.mxu0
  %v586 = vadd.f32 0.0, %v585
  %587 = vmatmul.f32.gmra.mxu0 %v325
  %v588 = vpop.f32.mrf.mxu0
  %v589 = vadd.f32 0.0, %v588
  %590 = vmatmul.f32.gmra.mxu0 %v328
  %v591 = vpop.f32.mrf.mxu0
  %v592 = vadd.f32 0.0, %v591
  %593 = vmatmul.f32.gmra.mxu0 %v331
  %v594 = vpop.f32.mrf.mxu0
  %v595 = vadd.f32 0.0, %v594
  %596 = vmatmul.f32.gmra.mxu0 %v334
  %v597 = vpop.f32.mrf.mxu0
  %v598 = vadd.f32 0.0, %v597
  %599 = vmatmul.f32.gmra.mxu0 %v337
  %v600 = vpop.f32.mrf.mxu0
  %v601 = vadd.f32 0.0, %v600
  %602 = vmatmul.f32.gmra.mxu0 %v340
  %v603 = vpop.f32.mrf.mxu0
  %v604 = vadd.f32 0.0, %v603
  %605 = vmatmul.f32.gmra.mxu0 %v343
  %v606 = vpop.f32.mrf.mxu0
  %v607 = vadd.f32 0.0, %v606
  %608 = vmatmul.f32.gmra.mxu0 %v346
  %v609 = vpop.f32.mrf.mxu0
  %v610 = vadd.f32 0.0, %v609
  %611 = vmatmul.f32.gmra.mxu0 %v349
  %v612 = vpop.f32.mrf.mxu0
  %v613 = vadd.f32 0.0, %v612
  %614 = vmatmul.f32.gmra.mxu0 %v352
  %v615 = vpop.f32.mrf.mxu0
  %v616 = vadd.f32 0.0, %v615
  %617 = vmatmul.f32.gmra.mxu0 %v355
  %v618 = vpop.f32.mrf.mxu0
  %v619 = vadd.f32 0.0, %v618
  %620 = vmatmul.f32.gmra.mxu0 %v358
  %v621 = vpop.f32.mrf.mxu0
  %v622 = vadd.f32 0.0, %v621
  %623 = vmatmul.f32.gmra.mxu0 %v361
  %v624 = vpop.f32.mrf.mxu0
  %v625 = vadd.f32 0.0, %v624
  %626 = vmatmul.f32.gmra.mxu0 %v364
  %v627 = vpop.f32.mrf.mxu0
  %v628 = vadd.f32 0.0, %v627
  %629 = vmatmul.f32.gmra.mxu0 %v367
  %v630 = vpop.f32.mrf.mxu0
  %v631 = vadd.f32 0.0, %v630
  %632 = vdwg.mxu0
  %vm633 = vcmask 261120
  %634 = vst.msk [vmem:[#allocation2] sm:$0xff] %vm633, %v391
  %635 = vst.msk [vmem:[#allocation2 + $0x8] sm:$0xff] %vm633, %v394
  %636 = vst.msk [vmem:[#allocation2 + $0x10] sm:$0xff] %vm633, %v397
  %637 = vst.msk [vmem:[#allocation2 + $0x18] sm:$0xff] %vm633, %v400
  %638 = vst.msk [vmem:[#allocation2 + $0x20] sm:$0xff] %vm633, %v403
  %639 = vst.msk [vmem:[#allocation2 + $0x28] sm:$0xff] %vm633, %v406
  %640 = vst.msk [vmem:[#allocation2 + $0x30] sm:$0xff] %vm633, %v409
  %641 = vst.msk [vmem:[#allocation2 + $0x38] sm:$0xff] %vm633, %v412
  %642 = vst.msk [vmem:[#allocation2 + $0x40] sm:$0xff] %vm633, %v415
  %643 = vst.msk [vmem:[#allocation2 + $0x48] sm:$0xff] %vm633, %v418
  %644 = vst.msk [vmem:[#allocation2 + $0x50] sm:$0xff] %vm633, %v421
  %645 = vst.msk [vmem:[#allocation2 + $0x58] sm:$0xff] %vm633, %v424
  %646 = vst.msk [vmem:[#allocation2 + $0x60] sm:$0xff] %vm633, %v427
  %647 = vst.msk [vmem:[#allocation2 + $0x68] sm:$0xff] %vm633, %v430
  %648 = vst.msk [vmem:[#allocation2 + $0x70] sm:$0xff] %vm633, %v433
  %649 = vst.msk [vmem:[#allocation2 + $0x78] sm:$0xff] %vm633, %v436
  %650 = vst.msk [vmem:[#allocation2 + $0x80] sm:$0xff] %vm633, %v439
  %651 = vst.msk [vmem:[#allocation2 + $0x88] sm:$0xff] %vm633, %v442
  %652 = vst.msk [vmem:[#allocation2 + $0x90] sm:$0xff] %vm633, %v445
  %653 = vst.msk [vmem:[#allocation2 + $0x98] sm:$0xff] %vm633, %v448
  %654 = vst.msk [vmem:[#allocation2 + $0xa0] sm:$0xff] %vm633, %v451
  %655 = vst.msk [vmem:[#allocation2 + $0xa8] sm:$0xff] %vm633, %v454
  %656 = vst.msk [vmem:[#allocation2 + $0xb0] sm:$0xff] %vm633, %v457
  %657 = vst.msk [vmem:[#allocation2 + $0xb8] sm:$0xff] %vm633, %v460
  %658 = vst.msk [vmem:[#allocation2 + $0xc0] sm:$0xff] %vm633, %v463
  %659 = vst.msk [vmem:[#allocation2 + $0xc8] sm:$0xff] %vm633, %v466
  %660 = vst.msk [vmem:[#allocation2 + $0xd0] sm:$0xff] %vm633, %v469
  %661 = vst.msk [vmem:[#allocation2 + $0xd8] sm:$0xff] %vm633, %v472
  %662 = vst.msk [vmem:[#allocation2 + $0xe0] sm:$0xff] %vm633, %v475
  %663 = vst.msk [vmem:[#allocation2 + $0xe8] sm:$0xff] %vm633, %v478
  %664 = vst.msk [vmem:[#allocation2 + $0xf0] sm:$0xff] %vm633, %v481
  %665 = vst.msk [vmem:[#allocation2 + $0xf8] sm:$0xff] %vm633, %v484
  %666 = vst.msk [vmem:[#allocation2 + $0x100] sm:$0xff] %vm633, %v487
  %667 = vst.msk [vmem:[#allocation2 + $0x108] sm:$0xff] %vm633, %v490
  %668 = vst.msk [vmem:[#allocation2 + $0x110] sm:$0xff] %vm633, %v493
  %669 = vst.msk [vmem:[#allocation2 + $0x118] sm:$0xff] %vm633, %v496
  %670 = vst.msk [vmem:[#allocation2 + $0x120] sm:$0xff] %vm633, %v499
  %671 = vst.msk [vmem:[#allocation2 + $0x128] sm:$0xff] %vm633, %v502
  %672 = vst.msk [vmem:[#allocation2 + $0x130] sm:$0xff] %vm633, %v505
  %673 = vst.msk [vmem:[#allocation2 + $0x138] sm:$0xff] %vm633, %v508
  %674 = vst.msk [vmem:[#allocation2 + $0x140] sm:$0xff] %vm633, %v511
  %675 = vst.msk [vmem:[#allocation2 + $0x148] sm:$0xff] %vm633, %v514
  %676 = vst.msk [vmem:[#allocation2 + $0x150] sm:$0xff] %vm633, %v517
  %677 = vst.msk [vmem:[#allocation2 + $0x158] sm:$0xff] %vm633, %v520
  %678 = vst.msk [vmem:[#allocation2 + $0x160] sm:$0xff] %vm633, %v523
  %679 = vst.msk [vmem:[#allocation2 + $0x168] sm:$0xff] %vm633, %v526
  %680 = vst.msk [vmem:[#allocation2 + $0x170] sm:$0xff] %vm633, %v529
  %681 = vst.msk [vmem:[#allocation2 + $0x178] sm:$0xff] %vm633, %v532
  %682 = vst.msk [vmem:[#allocation2 + $0x180] sm:$0xff] %vm633, %v535
  %683 = vst.msk [vmem:[#allocation2 + $0x188] sm:$0xff] %vm633, %v538
  %684 = vst.msk [vmem:[#allocation2 + $0x190] sm:$0xff] %vm633, %v541
  %685 = vst.msk [vmem:[#allocation2 + $0x198] sm:$0xff] %vm633, %v544
  %686 = vst.msk [vmem:[#allocation2 + $0x1a0] sm:$0xff] %vm633, %v547
  %687 = vst.msk [vmem:[#allocation2 + $0x1a8] sm:$0xff] %vm633, %v550
  %688 = vst.msk [vmem:[#allocation2 + $0x1b0] sm:$0xff] %vm633, %v553
  %689 = vst.msk [vmem:[#allocation2 + $0x1b8] sm:$0xff] %vm633, %v556
  %690 = vst.msk [vmem:[#allocation2 + $0x1c0] sm:$0xff] %vm633, %v559
  %691 = vst.msk [vmem:[#allocation2 + $0x1c8] sm:$0xff] %vm633, %v562
  %692 = vst.msk [vmem:[#allocation2 + $0x1d0] sm:$0xff] %vm633, %v565
  %693 = vst.msk [vmem:[#allocation2 + $0x1d8] sm:$0xff] %vm633, %v568
  %694 = vst.msk [vmem:[#allocation2 + $0x1e0] sm:$0xff] %vm633, %v571
  %695 = vst.msk [vmem:[#allocation2 + $0x1e8] sm:$0xff] %vm633, %v574
  %696 = vst.msk [vmem:[#allocation2 + $0x1f0] sm:$0xff] %vm633, %v577
  %697 = vst.msk [vmem:[#allocation2 + $0x1f8] sm:$0xff] %vm633, %v580
  %698 = vst.msk [vmem:[#allocation2 + $0x200] sm:$0xff] %vm633, %v583
  %699 = vst.msk [vmem:[#allocation2 + $0x208] sm:$0xff] %vm633, %v586
  %700 = vst.msk [vmem:[#allocation2 + $0x210] sm:$0xff] %vm633, %v589
  %701 = vst.msk [vmem:[#allocation2 + $0x218] sm:$0xff] %vm633, %v592
  %702 = vst.msk [vmem:[#allocation2 + $0x220] sm:$0xff] %vm633, %v595
  %703 = vst.msk [vmem:[#allocation2 + $0x228] sm:$0xff] %vm633, %v598
  %704 = vst.msk [vmem:[#allocation2 + $0x230] sm:$0xff] %vm633, %v601
  %705 = vst.msk [vmem:[#allocation2 + $0x238] sm:$0xff] %vm633, %v604
  %706 = vst.msk [vmem:[#allocation2 + $0x240] sm:$0xff] %vm633, %v607
  %707 = vst.msk [vmem:[#allocation2 + $0x248] sm:$0xff] %vm633, %v610
  %708 = vst.msk [vmem:[#allocation2 + $0x250] sm:$0xff] %vm633, %v613
  %709 = vst.msk [vmem:[#allocation2 + $0x258] sm:$0xff] %vm633, %v616
  %710 = vst.msk [vmem:[#allocation2 + $0x260] sm:$0xff] %vm633, %v619
  %711 = vst.msk [vmem:[#allocation2 + $0x268] sm:$0xff] %vm633, %v622
  %712 = vst.msk [vmem:[#allocation2 + $0x270] sm:$0xff] %vm633, %v625
  %713 = vst.msk [vmem:[#allocation2 + $0x278] sm:$0xff] %vm633, %v628
  %714 = vst.msk [vmem:[#allocation2 + $0x280] sm:$0xff] %vm633, %v631
  %v715 = vld [vmem:[#allocation2] sm:$0xff]
  %v716 = vld [vmem:[#allocation2 + $0x8] sm:$0xff]
  %v717 = vld [vmem:[#allocation2 + $0x10] sm:$0xff]
  %v718 = vld [vmem:[#allocation2 + $0x18] sm:$0xff]
  %v719 = vld [vmem:[#allocation2 + $0x20] sm:$0xff]
  %v720 = vld [vmem:[#allocation2 + $0x28] sm:$0xff]
  %v721 = vld [vmem:[#allocation2 + $0x30] sm:$0xff]
  %v722 = vld [vmem:[#allocation2 + $0x38] sm:$0xff]
  %v723 = vld [vmem:[#allocation2 + $0x40] sm:$0xff]
  %v724 = vld [vmem:[#allocation2 + $0x48] sm:$0xff]
  %v725 = vld [vmem:[#allocation2 + $0x50] sm:$0xff]
  %v726 = vld [vmem:[#allocation2 + $0x58] sm:$0xff]
  %v727 = vld [vmem:[#allocation2 + $0x60] sm:$0xff]
  %v728 = vld [vmem:[#allocation2 + $0x68] sm:$0xff]
  %v729 = vld [vmem:[#allocation2 + $0x70] sm:$0xff]
  %v730 = vld [vmem:[#allocation2 + $0x78] sm:$0xff]
  %v731 = vld [vmem:[#allocation2 + $0x80] sm:$0xff]
  %v732 = vld [vmem:[#allocation2 + $0x88] sm:$0xff]
  %v733 = vld [vmem:[#allocation2 + $0x90] sm:$0xff]
  %v734 = vld [vmem:[#allocation2 + $0x98] sm:$0xff]
  %v735 = vld [vmem:[#allocation2 + $0xa0] sm:$0xff]
  %v736 = vld [vmem:[#allocation2 + $0xa8] sm:$0xff]
  %v737 = vld [vmem:[#allocation2 + $0xb0] sm:$0xff]
  %v738 = vld [vmem:[#allocation2 + $0xb8] sm:$0xff]
  %v739 = vld [vmem:[#allocation2 + $0xc0] sm:$0xff]
  %v740 = vld [vmem:[#allocation2 + $0xc8] sm:$0xff]
  %v741 = vld [vmem:[#allocation2 + $0xd0] sm:$0xff]
  %v742 = vld [vmem:[#allocation2 + $0xd8] sm:$0xff]
  %v743 = vld [vmem:[#allocation2 + $0xe0] sm:$0xff]
  %v744 = vld [vmem:[#allocation2 + $0xe8] sm:$0xff]
  %v745 = vld [vmem:[#allocation2 + $0xf0] sm:$0xff]
  %v746 = vld [vmem:[#allocation2 + $0xf8] sm:$0xff]
  %v747 = vld [vmem:[#allocation2 + $0x100] sm:$0xff]
  %v748 = vld [vmem:[#allocation2 + $0x108] sm:$0xff]
  %v749 = vld [vmem:[#allocation2 + $0x110] sm:$0xff]
  %v750 = vld [vmem:[#allocation2 + $0x118] sm:$0xff]
  %v751 = vld [vmem:[#allocation2 + $0x120] sm:$0xff]
  %v752 = vld [vmem:[#allocation2 + $0x128] sm:$0xff]
  %v753 = vld [vmem:[#allocation2 + $0x130] sm:$0xff]
  %v754 = vld [vmem:[#allocation2 + $0x138] sm:$0xff]
  %v755 = vld [vmem:[#allocation2 + $0x140] sm:$0xff]
  %v756 = vld [vmem:[#allocation2 + $0x148] sm:$0xff]
  %v757 = vld [vmem:[#allocation2 + $0x150] sm:$0xff]
  %v758 = vld [vmem:[#allocation2 + $0x158] sm:$0xff]
  %v759 = vld [vmem:[#allocation2 + $0x160] sm:$0xff]
  %v760 = vld [vmem:[#allocation2 + $0x168] sm:$0xff]
  %v761 = vld [vmem:[#allocation2 + $0x170] sm:$0xff]
  %v762 = vld [vmem:[#allocation2 + $0x178] sm:$0xff]
  %v763 = vld [vmem:[#allocation2 + $0x180] sm:$0xff]
  %v764 = vld [vmem:[#allocation2 + $0x188] sm:$0xff]
  %v765 = vld [vmem:[#allocation2 + $0x190] sm:$0xff]
  %v766 = vld [vmem:[#allocation2 + $0x198] sm:$0xff]
  %v767 = vld [vmem:[#allocation2 + $0x1a0] sm:$0xff]
  %v768 = vld [vmem:[#allocation2 + $0x1a8] sm:$0xff]
  %v769 = vld [vmem:[#allocation2 + $0x1b0] sm:$0xff]
  %v770 = vld [vmem:[#allocation2 + $0x1b8] sm:$0xff]
  %v771 = vld [vmem:[#allocation2 + $0x1c0] sm:$0xff]
  %v772 = vld [vmem:[#allocation2 + $0x1c8] sm:$0xff]
  %v773 = vld [vmem:[#allocation2 + $0x1d0] sm:$0xff]
  %v774 = vld [vmem:[#allocation2 + $0x1d8] sm:$0xff]
  %v775 = vld [vmem:[#allocation2 + $0x1e0] sm:$0xff]
  %v776 = vld [vmem:[#allocation2 + $0x1e8] sm:$0xff]
  %v777 = vld [vmem:[#allocation2 + $0x1f0] sm:$0xff]
  %v778 = vld [vmem:[#allocation2 + $0x1f8] sm:$0xff]
  %v779 = vld [vmem:[#allocation2 + $0x200] sm:$0xff]
  %v780 = vld [vmem:[#allocation2 + $0x208] sm:$0xff]
  %v781 = vld [vmem:[#allocation2 + $0x210] sm:$0xff]
  %v782 = vld [vmem:[#allocation2 + $0x218] sm:$0xff]
  %v783 = vld [vmem:[#allocation2 + $0x220] sm:$0xff]
  %v784 = vld [vmem:[#allocation2 + $0x228] sm:$0xff]
  %v785 = vld [vmem:[#allocation2 + $0x230] sm:$0xff]
  %v786 = vld [vmem:[#allocation2 + $0x238] sm:$0xff]
  %v787 = vld [vmem:[#allocation2 + $0x240] sm:$0xff]
  %v788 = vld [vmem:[#allocation2 + $0x248] sm:$0xff]
  %v789 = vld [vmem:[#allocation2 + $0x250] sm:$0xff]
  %v790 = vld [vmem:[#allocation2 + $0x258] sm:$0xff]
  %v791 = vld [vmem:[#allocation2 + $0x260] sm:$0xff]
  %v792 = vld [vmem:[#allocation2 + $0x268] sm:$0xff]
  %v793 = vld [vmem:[#allocation2 + $0x270] sm:$0xff]
  %v794 = vld [vmem:[#allocation2 + $0x278] sm:$0xff]
  %v795 = vld [vmem:[#allocation2 + $0x280] sm:$0xff]
  %v796 = vld [vmem:[%s0 + $0x1] sm:$0xff]
  %v797 = vld [vmem:[%s0 + $0x9] sm:$0xff]
  %v798 = vld [vmem:[%s0 + $0x11] sm:$0xff]
  %v799 = vld [vmem:[%s0 + $0x19] sm:$0xff]
  %v800 = vld [vmem:[%s0 + $0x21] sm:$0xff]
  %v801 = vld [vmem:[%s0 + $0x29] sm:$0xff]
  %v802 = vld [vmem:[%s0 + $0x31] sm:$0xff]
  %v803 = vld [vmem:[%s0 + $0x39] sm:$0xff]
  %v804 = vld [vmem:[%s0 + $0x41] sm:$0xff]
  %v805 = vld [vmem:[%s0 + $0x49] sm:$0xff]
  %v806 = vld [vmem:[%s0 + $0x51] sm:$0xff]
  %v807 = vld [vmem:[%s0 + $0x59] sm:$0xff]
  %v808 = vld [vmem:[%s0 + $0x61] sm:$0xff]
  %v809 = vld [vmem:[%s0 + $0x69] sm:$0xff]
  %v810 = vld [vmem:[%s0 + $0x71] sm:$0xff]
  %v811 = vld [vmem:[%s0 + $0x79] sm:$0xff]
  %v812 = vld [vmem:[%s0 + $0x81] sm:$0xff]
  %v813 = vld [vmem:[%s0 + $0x89] sm:$0xff]
  %v814 = vld [vmem:[%s0 + $0x91] sm:$0xff]
  %v815 = vld [vmem:[%s0 + $0x99] sm:$0xff]
  %v816 = vld [vmem:[%s0 + $0xa1] sm:$0xff]
  %v817 = vld [vmem:[%s0 + $0xa9] sm:$0xff]
  %v818 = vld [vmem:[%s0 + $0xb1] sm:$0xff]
  %v819 = vld [vmem:[%s0 + $0xb9] sm:$0xff]
  %v820 = vld [vmem:[%s0 + $0xc1] sm:$0xff]
  %v821 = vld [vmem:[%s0 + $0xc9] sm:$0xff]
  %v822 = vld [vmem:[%s0 + $0xd1] sm:$0xff]
  %v823 = vld [vmem:[%s0 + $0xd9] sm:$0xff]
  %v824 = vld [vmem:[%s0 + $0xe1] sm:$0xff]
  %v825 = vld [vmem:[%s0 + $0xe9] sm:$0xff]
  %v826 = vld [vmem:[%s0 + $0xf1] sm:$0xff]
  %v827 = vld [vmem:[%s0 + $0xf9] sm:$0xff]
  %v828 = vld [vmem:[%s0 + $0x101] sm:$0xff]
  %v829 = vld [vmem:[%s0 + $0x109] sm:$0xff]
  %v830 = vld [vmem:[%s0 + $0x111] sm:$0xff]
  %v831 = vld [vmem:[%s0 + $0x119] sm:$0xff]
  %v832 = vld [vmem:[%s0 + $0x121] sm:$0xff]
  %v833 = vld [vmem:[%s0 + $0x129] sm:$0xff]
  %v834 = vld [vmem:[%s0 + $0x131] sm:$0xff]
  %v835 = vld [vmem:[%s0 + $0x139] sm:$0xff]
  %v836 = vld [vmem:[%s0 + $0x141] sm:$0xff]
  %v837 = vld [vmem:[%s0 + $0x149] sm:$0xff]
  %v838 = vld [vmem:[%s0 + $0x151] sm:$0xff]
  %v839 = vld [vmem:[%s0 + $0x159] sm:$0xff]
  %v840 = vld [vmem:[%s0 + $0x161] sm:$0xff]
  %v841 = vld [vmem:[%s0 + $0x169] sm:$0xff]
  %v842 = vld [vmem:[%s0 + $0x171] sm:$0xff]
  %v843 = vld [vmem:[%s0 + $0x179] sm:$0xff]
  %v844 = vld [vmem:[%s0 + $0x181] sm:$0xff]
  %v845 = vld [vmem:[%s0 + $0x189] sm:$0xff]
  %v846 = vld [vmem:[%s0 + $0x191] sm:$0xff]
  %v847 = vld [vmem:[%s0 + $0x199] sm:$0xff]
  %v848 = vld [vmem:[%s0 + $0x1a1] sm:$0xff]
  %v849 = vld [vmem:[%s0 + $0x1a9] sm:$0xff]
  %v850 = vld [vmem:[%s0 + $0x1b1] sm:$0xff]
  %v851 = vld [vmem:[%s0 + $0x1b9] sm:$0xff]
  %v852 = vld [vmem:[%s0 + $0x1c1] sm:$0xff]
  %v853 = vld [vmem:[%s0 + $0x1c9] sm:$0xff]
  %v854 = vld [vmem:[%s0 + $0x1d1] sm:$0xff]
  %v855 = vld [vmem:[%s0 + $0x1d9] sm:$0xff]
  %v856 = vld [vmem:[%s0 + $0x1e1] sm:$0xff]
  %v857 = vld [vmem:[%s0 + $0x1e9] sm:$0xff]
  %v858 = vld [vmem:[%s0 + $0x1f1] sm:$0xff]
  %v859 = vld [vmem:[%s0 + $0x1f9] sm:$0xff]
  %v860 = vld [vmem:[%s0 + $0x201] sm:$0xff]
  %v861 = vld [vmem:[%s0 + $0x209] sm:$0xff]
  %v862 = vld [vmem:[%s0 + $0x211] sm:$0xff]
  %v863 = vld [vmem:[%s0 + $0x219] sm:$0xff]
  %v864 = vld [vmem:[%s0 + $0x221] sm:$0xff]
  %v865 = vld [vmem:[%s0 + $0x229] sm:$0xff]
  %v866 = vld [vmem:[%s0 + $0x231] sm:$0xff]
  %v867 = vld [vmem:[%s0 + $0x239] sm:$0xff]
  %v868 = vld [vmem:[%s0 + $0x241] sm:$0xff]
  %v869 = vld [vmem:[%s0 + $0x249] sm:$0xff]
  %v870 = vld [vmem:[%s0 + $0x251] sm:$0xff]
  %v871 = vld [vmem:[%s0 + $0x259] sm:$0xff]
  %v872 = vld [vmem:[%s0 + $0x261] sm:$0xff]
  %v873 = vld [vmem:[%s0 + $0x269] sm:$0xff]
  %v874 = vld [vmem:[%s0 + $0x271] sm:$0xff]
  %v875 = vld [vmem:[%s0 + $0x279] sm:$0xff]
  %v876 = vld [vmem:[%s0 + $0x281] sm:$0xff]
  %s877 = scalar_lea.vmem %s1, 4
  %v878 = vld [vmem:[%s877] sm:$0xf]
  %v880 = vsel %vm125, %v796, 0
  %v883 = vsel %vm125, %v797, 0
  %v886 = vsel %vm125, %v798, 0
  %v889 = vsel %vm125, %v799, 0
  %v892 = vsel %vm125, %v800, 0
  %v895 = vsel %vm125, %v801, 0
  %v898 = vsel %vm125, %v802, 0
  %v901 = vsel %vm125, %v803, 0
  %v904 = vsel %vm125, %v804, 0
  %v907 = vsel %vm125, %v805, 0
  %v910 = vsel %vm125, %v806, 0
  %v913 = vsel %vm125, %v807, 0
  %v916 = vsel %vm125, %v808, 0
  %v919 = vsel %vm125, %v809, 0
  %v922 = vsel %vm125, %v810, 0
  %v925 = vsel %vm125, %v811, 0
  %v928 = vsel %vm125, %v812, 0
  %v931 = vsel %vm125, %v813, 0
  %v934 = vsel %vm125, %v814, 0
  %v937 = vsel %vm125, %v815, 0
  %v940 = vsel %vm125, %v816, 0
  %v943 = vsel %vm125, %v817, 0
  %v946 = vsel %vm125, %v818, 0
  %v949 = vsel %vm125, %v819, 0
  %v952 = vsel %vm125, %v820, 0
  %v955 = vsel %vm125, %v821, 0
  %v958 = vsel %vm125, %v822, 0
  %v961 = vsel %vm125, %v823, 0
  %v964 = vsel %vm125, %v824, 0
  %v967 = vsel %vm125, %v825, 0
  %v970 = vsel %vm125, %v826, 0
  %v973 = vsel %vm125, %v827, 0
  %v976 = vsel %vm125, %v828, 0
  %v979 = vsel %vm125, %v829, 0
  %v982 = vsel %vm125, %v830, 0
  %v985 = vsel %vm125, %v831, 0
  %v988 = vsel %vm125, %v832, 0
  %v991 = vsel %vm125, %v833, 0
  %v994 = vsel %vm125, %v834, 0
  %v997 = vsel %vm125, %v835, 0
  %v1000 = vsel %vm125, %v836, 0
  %v1003 = vsel %vm125, %v837, 0
  %v1006 = vsel %vm125, %v838, 0
  %v1009 = vsel %vm125, %v839, 0
  %v1012 = vsel %vm125, %v840, 0
  %v1015 = vsel %vm125, %v841, 0
  %v1018 = vsel %vm125, %v842, 0
  %v1021 = vsel %vm125, %v843, 0
  %v1024 = vsel %vm125, %v844, 0
  %v1027 = vsel %vm125, %v845, 0
  %v1030 = vsel %vm125, %v846, 0
  %v1033 = vsel %vm125, %v847, 0
  %v1036 = vsel %vm125, %v848, 0
  %v1039 = vsel %vm125, %v849, 0
  %v1042 = vsel %vm125, %v850, 0
  %v1045 = vsel %vm125, %v851, 0
  %v1048 = vsel %vm125, %v852, 0
  %v1051 = vsel %vm125, %v853, 0
  %v1054 = vsel %vm125, %v854, 0
  %v1057 = vsel %vm125, %v855, 0
  %v1060 = vsel %vm125, %v856, 0
  %v1063 = vsel %vm125, %v857, 0
  %v1066 = vsel %vm125, %v858, 0
  %v1069 = vsel %vm125, %v859, 0
  %v1072 = vsel %vm125, %v860, 0
  %v1075 = vsel %vm125, %v861, 0
  %v1078 = vsel %vm125, %v862, 0
  %v1081 = vsel %vm125, %v863, 0
  %v1084 = vsel %vm125, %v864, 0
  %v1087 = vsel %vm125, %v865, 0
  %v1090 = vsel %vm125, %v866, 0
  %v1093 = vsel %vm125, %v867, 0
  %v1096 = vsel %vm125, %v868, 0
  %v1099 = vsel %vm125, %v869, 0
  %v1102 = vsel %vm125, %v870, 0
  %v1105 = vsel %vm125, %v871, 0
  %v1108 = vsel %vm125, %v872, 0
  %v1111 = vsel %vm125, %v873, 0
  %v1114 = vsel %vm125, %v874, 0
  %v1117 = vsel %vm125, %v875, 0
  %v1120 = vsel %vm125, %v876, 0
  %v1123 = vsel %vm369, %v878, 0
  %1125 = vmatpush.msra.mxu0 0.0
  %1126 = vmatpush.msra.mxu0 0.0
  %1127 = vmatpush.msra.mxu0 0.0
  %1128 = vmatpush.msra.mxu0 0.0
  %1129 = vmatpush.msra.mxu0 0.0
  %1130 = vmatpush.msra.mxu0 0.0
  %1131 = vmatpush.msra.mxu0 0.0
  %1132 = vmatpush.msra.mxu0 0.0
  %1133 = vmatpush.msra.mxu0 0.0
  %1134 = vmatpush.msra.mxu0 0.0
  %1135 = vmatpush.msra.mxu0 0.0
  %1136 = vmatpush.msra.mxu0 0.0
  %1137 = vmatpush.msra.mxu0 0.0
  %1138 = vmatpush.msra.mxu0 0.0
  %1139 = vmatpush.msra.mxu0 0.0
  %1140 = vmatpush.msra.mxu0 %v1123
  %1141 = vmatmul.f32.gmra.mxu0 %v880
  %v1142 = vpop.f32.mrf.mxu0
  %v1143 = vadd.f32 0.0, %v1142
  %1144 = vmatmul.f32.gmra.mxu0 %v883
  %v1145 = vpop.f32.mrf.mxu0
  %v1146 = vadd.f32 0.0, %v1145
  %1147 = vmatmul.f32.gmra.mxu0 %v886
  %v1148 = vpop.f32.mrf.mxu0
  %v1149 = vadd.f32 0.0, %v1148
  %1150 = vmatmul.f32.gmra.mxu0 %v889
  %v1151 = vpop.f32.mrf.mxu0
  %v1152 = vadd.f32 0.0, %v1151
  %1153 = vmatmul.f32.gmra.mxu0 %v892
  %v1154 = vpop.f32.mrf.mxu0
  %v1155 = vadd.f32 0.0, %v1154
  %1156 = vmatmul.f32.gmra.mxu0 %v895
  %v1157 = vpop.f32.mrf.mxu0
  %v1158 = vadd.f32 0.0, %v1157
  %1159 = vmatmul.f32.gmra.mxu0 %v898
  %v1160 = vpop.f32.mrf.mxu0
  %v1161 = vadd.f32 0.0, %v1160
  %1162 = vmatmul.f32.gmra.mxu0 %v901
  %v1163 = vpop.f32.mrf.mxu0
  %v1164 = vadd.f32 0.0, %v1163
  %1165 = vmatmul.f32.gmra.mxu0 %v904
  %v1166 = vpop.f32.mrf.mxu0
  %v1167 = vadd.f32 0.0, %v1166
  %1168 = vmatmul.f32.gmra.mxu0 %v907
  %v1169 = vpop.f32.mrf.mxu0
  %v1170 = vadd.f32 0.0, %v1169
  %1171 = vmatmul.f32.gmra.mxu0 %v910
  %v1172 = vpop.f32.mrf.mxu0
  %v1173 = vadd.f32 0.0, %v1172
  %1174 = vmatmul.f32.gmra.mxu0 %v913
  %v1175 = vpop.f32.mrf.mxu0
  %v1176 = vadd.f32 0.0, %v1175
  %1177 = vmatmul.f32.gmra.mxu0 %v916
  %v1178 = vpop.f32.mrf.mxu0
  %v1179 = vadd.f32 0.0, %v1178
  %1180 = vmatmul.f32.gmra.mxu0 %v919
  %v1181 = vpop.f32.mrf.mxu0
  %v1182 = vadd.f32 0.0, %v1181
  %1183 = vmatmul.f32.gmra.mxu0 %v922
  %v1184 = vpop.f32.mrf.mxu0
  %v1185 = vadd.f32 0.0, %v1184
  %1186 = vmatmul.f32.gmra.mxu0 %v925
  %v1187 = vpop.f32.mrf.mxu0
  %v1188 = vadd.f32 0.0, %v1187
  %1189 = vmatmul.f32.gmra.mxu0 %v928
  %v1190 = vpop.f32.mrf.mxu0
  %v1191 = vadd.f32 0.0, %v1190
  %1192 = vmatmul.f32.gmra.mxu0 %v931
  %v1193 = vpop.f32.mrf.mxu0
  %v1194 = vadd.f32 0.0, %v1193
  %1195 = vmatmul.f32.gmra.mxu0 %v934
  %v1196 = vpop.f32.mrf.mxu0
  %v1197 = vadd.f32 0.0, %v1196
  %1198 = vmatmul.f32.gmra.mxu0 %v937
  %v1199 = vpop.f32.mrf.mxu0
  %v1200 = vadd.f32 0.0, %v1199
  %1201 = vmatmul.f32.gmra.mxu0 %v940
  %v1202 = vpop.f32.mrf.mxu0
  %v1203 = vadd.f32 0.0, %v1202
  %1204 = vmatmul.f32.gmra.mxu0 %v943
  %v1205 = vpop.f32.mrf.mxu0
  %v1206 = vadd.f32 0.0, %v1205
  %1207 = vmatmul.f32.gmra.mxu0 %v946
  %v1208 = vpop.f32.mrf.mxu0
  %v1209 = vadd.f32 0.0, %v1208
  %1210 = vmatmul.f32.gmra.mxu0 %v949
  %v1211 = vpop.f32.mrf.mxu0
  %v1212 = vadd.f32 0.0, %v1211
  %1213 = vmatmul.f32.gmra.mxu0 %v952
  %v1214 = vpop.f32.mrf.mxu0
  %v1215 = vadd.f32 0.0, %v1214
  %1216 = vmatmul.f32.gmra.mxu0 %v955
  %v1217 = vpop.f32.mrf.mxu0
  %v1218 = vadd.f32 0.0, %v1217
  %1219 = vmatmul.f32.gmra.mxu0 %v958
  %v1220 = vpop.f32.mrf.mxu0
  %v1221 = vadd.f32 0.0, %v1220
  %1222 = vmatmul.f32.gmra.mxu0 %v961
  %v1223 = vpop.f32.mrf.mxu0
  %v1224 = vadd.f32 0.0, %v1223
  %1225 = vmatmul.f32.gmra.mxu0 %v964
  %v1226 = vpop.f32.mrf.mxu0
  %v1227 = vadd.f32 0.0, %v1226
  %1228 = vmatmul.f32.gmra.mxu0 %v967
  %v1229 = vpop.f32.mrf.mxu0
  %v1230 = vadd.f32 0.0, %v1229
  %1231 = vmatmul.f32.gmra.mxu0 %v970
  %v1232 = vpop.f32.mrf.mxu0
  %v1233 = vadd.f32 0.0, %v1232
  %1234 = vmatmul.f32.gmra.mxu0 %v973
  %v1235 = vpop.f32.mrf.mxu0
  %v1236 = vadd.f32 0.0, %v1235
  %1237 = vmatmul.f32.gmra.mxu0 %v976
  %v1238 = vpop.f32.mrf.mxu0
  %v1239 = vadd.f32 0.0, %v1238
  %1240 = vmatmul.f32.gmra.mxu0 %v979
  %v1241 = vpop.f32.mrf.mxu0
  %v1242 = vadd.f32 0.0, %v1241
  %1243 = vmatmul.f32.gmra.mxu0 %v982
  %v1244 = vpop.f32.mrf.mxu0
  %v1245 = vadd.f32 0.0, %v1244
  %1246 = vmatmul.f32.gmra.mxu0 %v985
  %v1247 = vpop.f32.mrf.mxu0
  %v1248 = vadd.f32 0.0, %v1247
  %1249 = vmatmul.f32.gmra.mxu0 %v988
  %v1250 = vpop.f32.mrf.mxu0
  %v1251 = vadd.f32 0.0, %v1250
  %1252 = vmatmul.f32.gmra.mxu0 %v991
  %v1253 = vpop.f32.mrf.mxu0
  %v1254 = vadd.f32 0.0, %v1253
  %1255 = vmatmul.f32.gmra.mxu0 %v994
  %v1256 = vpop.f32.mrf.mxu0
  %v1257 = vadd.f32 0.0, %v1256
  %1258 = vmatmul.f32.gmra.mxu0 %v997
  %v1259 = vpop.f32.mrf.mxu0
  %v1260 = vadd.f32 0.0, %v1259
  %1261 = vmatmul.f32.gmra.mxu0 %v1000
  %v1262 = vpop.f32.mrf.mxu0
  %v1263 = vadd.f32 0.0, %v1262
  %1264 = vmatmul.f32.gmra.mxu0 %v1003
  %v1265 = vpop.f32.mrf.mxu0
  %v1266 = vadd.f32 0.0, %v1265
  %1267 = vmatmul.f32.gmra.mxu0 %v1006
  %v1268 = vpop.f32.mrf.mxu0
  %v1269 = vadd.f32 0.0, %v1268
  %1270 = vmatmul.f32.gmra.mxu0 %v1009
  %v1271 = vpop.f32.mrf.mxu0
  %v1272 = vadd.f32 0.0, %v1271
  %1273 = vmatmul.f32.gmra.mxu0 %v1012
  %v1274 = vpop.f32.mrf.mxu0
  %v1275 = vadd.f32 0.0, %v1274
  %1276 = vmatmul.f32.gmra.mxu0 %v1015
  %v1277 = vpop.f32.mrf.mxu0
  %v1278 = vadd.f32 0.0, %v1277
  %1279 = vmatmul.f32.gmra.mxu0 %v1018
  %v1280 = vpop.f32.mrf.mxu0
  %v1281 = vadd.f32 0.0, %v1280
  %1282 = vmatmul.f32.gmra.mxu0 %v1021
  %v1283 = vpop.f32.mrf.mxu0
  %v1284 = vadd.f32 0.0, %v1283
  %1285 = vmatmul.f32.gmra.mxu0 %v1024
  %v1286 = vpop.f32.mrf.mxu0
  %v1287 = vadd.f32 0.0, %v1286
  %1288 = vmatmul.f32.gmra.mxu0 %v1027
  %v1289 = vpop.f32.mrf.mxu0
  %v1290 = vadd.f32 0.0, %v1289
  %1291 = vmatmul.f32.gmra.mxu0 %v1030
  %v1292 = vpop.f32.mrf.mxu0
  %v1293 = vadd.f32 0.0, %v1292
  %1294 = vmatmul.f32.gmra.mxu0 %v1033
  %v1295 = vpop.f32.mrf.mxu0
  %v1296 = vadd.f32 0.0, %v1295
  %1297 = vmatmul.f32.gmra.mxu0 %v1036
  %v1298 = vpop.f32.mrf.mxu0
  %v1299 = vadd.f32 0.0, %v1298
  %1300 = vmatmul.f32.gmra.mxu0 %v1039
  %v1301 = vpop.f32.mrf.mxu0
  %v1302 = vadd.f32 0.0, %v1301
  %1303 = vmatmul.f32.gmra.mxu0 %v1042
  %v1304 = vpop.f32.mrf.mxu0
  %v1305 = vadd.f32 0.0, %v1304
  %1306 = vmatmul.f32.gmra.mxu0 %v1045
  %v1307 = vpop.f32.mrf.mxu0
  %v1308 = vadd.f32 0.0, %v1307
  %1309 = vmatmul.f32.gmra.mxu0 %v1048
  %v1310 = vpop.f32.mrf.mxu0
  %v1311 = vadd.f32 0.0, %v1310
  %1312 = vmatmul.f32.gmra.mxu0 %v1051
  %v1313 = vpop.f32.mrf.mxu0
  %v1314 = vadd.f32 0.0, %v1313
  %1315 = vmatmul.f32.gmra.mxu0 %v1054
  %v1316 = vpop.f32.mrf.mxu0
  %v1317 = vadd.f32 0.0, %v1316
  %1318 = vmatmul.f32.gmra.mxu0 %v1057
  %v1319 = vpop.f32.mrf.mxu0
  %v1320 = vadd.f32 0.0, %v1319
  %1321 = vmatmul.f32.gmra.mxu0 %v1060
  %v1322 = vpop.f32.mrf.mxu0
  %v1323 = vadd.f32 0.0, %v1322
  %1324 = vmatmul.f32.gmra.mxu0 %v1063
  %v1325 = vpop.f32.mrf.mxu0
  %v1326 = vadd.f32 0.0, %v1325
  %1327 = vmatmul.f32.gmra.mxu0 %v1066
  %v1328 = vpop.f32.mrf.mxu0
  %v1329 = vadd.f32 0.0, %v1328
  %1330 = vmatmul.f32.gmra.mxu0 %v1069
  %v1331 = vpop.f32.mrf.mxu0
  %v1332 = vadd.f32 0.0, %v1331
  %1333 = vmatmul.f32.gmra.mxu0 %v1072
  %v1334 = vpop.f32.mrf.mxu0
  %v1335 = vadd.f32 0.0, %v1334
  %1336 = vmatmul.f32.gmra.mxu0 %v1075
  %v1337 = vpop.f32.mrf.mxu0
  %v1338 = vadd.f32 0.0, %v1337
  %1339 = vmatmul.f32.gmra.mxu0 %v1078
  %v1340 = vpop.f32.mrf.mxu0
  %v1341 = vadd.f32 0.0, %v1340
  %1342 = vmatmul.f32.gmra.mxu0 %v1081
  %v1343 = vpop.f32.mrf.mxu0
  %v1344 = vadd.f32 0.0, %v1343
  %1345 = vmatmul.f32.gmra.mxu0 %v1084
  %v1346 = vpop.f32.mrf.mxu0
  %v1347 = vadd.f32 0.0, %v1346
  %1348 = vmatmul.f32.gmra.mxu0 %v1087
  %v1349 = vpop.f32.mrf.mxu0
  %v1350 = vadd.f32 0.0, %v1349
  %1351 = vmatmul.f32.gmra.mxu0 %v1090
  %v1352 = vpop.f32.mrf.mxu0
  %v1353 = vadd.f32 0.0, %v1352
  %1354 = vmatmul.f32.gmra.mxu0 %v1093
  %v1355 = vpop.f32.mrf.mxu0
  %v1356 = vadd.f32 0.0, %v1355
  %1357 = vmatmul.f32.gmra.mxu0 %v1096
  %v1358 = vpop.f32.mrf.mxu0
  %v1359 = vadd.f32 0.0, %v1358
  %1360 = vmatmul.f32.gmra.mxu0 %v1099
  %v1361 = vpop.f32.mrf.mxu0
  %v1362 = vadd.f32 0.0, %v1361
  %1363 = vmatmul.f32.gmra.mxu0 %v1102
  %v1364 = vpop.f32.mrf.mxu0
  %v1365 = vadd.f32 0.0, %v1364
  %1366 = vmatmul.f32.gmra.mxu0 %v1105
  %v1367 = vpop.f32.mrf.mxu0
  %v1368 = vadd.f32 0.0, %v1367
  %1369 = vmatmul.f32.gmra.mxu0 %v1108
  %v1370 = vpop.f32.mrf.mxu0
  %v1371 = vadd.f32 0.0, %v1370
  %1372 = vmatmul.f32.gmra.mxu0 %v1111
  %v1373 = vpop.f32.mrf.mxu0
  %v1374 = vadd.f32 0.0, %v1373
  %1375 = vmatmul.f32.gmra.mxu0 %v1114
  %v1376 = vpop.f32.mrf.mxu0
  %v1377 = vadd.f32 0.0, %v1376
  %1378 = vmatmul.f32.gmra.mxu0 %v1117
  %v1379 = vpop.f32.mrf.mxu0
  %v1380 = vadd.f32 0.0, %v1379
  %1381 = vmatmul.f32.gmra.mxu0 %v1120
  %v1382 = vpop.f32.mrf.mxu0
  %v1383 = vadd.f32 0.0, %v1382
  %1384 = vdwg.mxu0
  %v1385 = vadd.f32 %v715, %v1143
  %v1386 = vadd.f32 %v716, %v1146
  %v1387 = vadd.f32 %v717, %v1149
  %v1388 = vadd.f32 %v718, %v1152
  %v1389 = vadd.f32 %v719, %v1155
  %v1390 = vadd.f32 %v720, %v1158
  %v1391 = vadd.f32 %v721, %v1161
  %v1392 = vadd.f32 %v722, %v1164
  %v1393 = vadd.f32 %v723, %v1167
  %v1394 = vadd.f32 %v724, %v1170
  %v1395 = vadd.f32 %v725, %v1173
  %v1396 = vadd.f32 %v726, %v1176
  %v1397 = vadd.f32 %v727, %v1179
  %v1398 = vadd.f32 %v728, %v1182
  %v1399 = vadd.f32 %v729, %v1185
  %v1400 = vadd.f32 %v730, %v1188
  %v1401 = vadd.f32 %v731, %v1191
  %v1402 = vadd.f32 %v732, %v1194
  %v1403 = vadd.f32 %v733, %v1197
  %v1404 = vadd.f32 %v734, %v1200
  %v1405 = vadd.f32 %v735, %v1203
  %v1406 = vadd.f32 %v736, %v1206
  %v1407 = vadd.f32 %v737, %v1209
  %v1408 = vadd.f32 %v738, %v1212
  %v1409 = vadd.f32 %v739, %v1215
  %v1410 = vadd.f32 %v740, %v1218
  %v1411 = vadd.f32 %v741, %v1221
  %v1412 = vadd.f32 %v742, %v1224
  %v1413 = vadd.f32 %v743, %v1227
  %v1414 = vadd.f32 %v744, %v1230
  %v1415 = vadd.f32 %v745, %v1233
  %v1416 = vadd.f32 %v746, %v1236
  %v1417 = vadd.f32 %v747, %v1239
  %v1418 = vadd.f32 %v748, %v1242
  %v1419 = vadd.f32 %v749, %v1245
  %v1420 = vadd.f32 %v750, %v1248
  %v1421 = vadd.f32 %v751, %v1251
  %v1422 = vadd.f32 %v752, %v1254
  %v1423 = vadd.f32 %v753, %v1257
  %v1424 = vadd.f32 %v754, %v1260
  %v1425 = vadd.f32 %v755, %v1263
  %v1426 = vadd.f32 %v756, %v1266
  %v1427 = vadd.f32 %v757, %v1269
  %v1428 = vadd.f32 %v758, %v1272
  %v1429 = vadd.f32 %v759, %v1275
  %v1430 = vadd.f32 %v760, %v1278
  %v1431 = vadd.f32 %v761, %v1281
  %v1432 = vadd.f32 %v762, %v1284
  %v1433 = vadd.f32 %v763, %v1287
  %v1434 = vadd.f32 %v764, %v1290
  %v1435 = vadd.f32 %v765, %v1293
  %v1436 = vadd.f32 %v766, %v1296
  %v1437 = vadd.f32 %v767, %v1299
  %v1438 = vadd.f32 %v768, %v1302
  %v1439 = vadd.f32 %v769, %v1305
  %v1440 = vadd.f32 %v770, %v1308
  %v1441 = vadd.f32 %v771, %v1311
  %v1442 = vadd.f32 %v772, %v1314
  %v1443 = vadd.f32 %v773, %v1317
  %v1444 = vadd.f32 %v774, %v1320
  %v1445 = vadd.f32 %v775, %v1323
  %v1446 = vadd.f32 %v776, %v1326
  %v1447 = vadd.f32 %v777, %v1329
  %v1448 = vadd.f32 %v778, %v1332
  %v1449 = vadd.f32 %v779, %v1335
  %v1450 = vadd.f32 %v780, %v1338
  %v1451 = vadd.f32 %v781, %v1341
  %v1452 = vadd.f32 %v782, %v1344
  %v1453 = vadd.f32 %v783, %v1347
  %v1454 = vadd.f32 %v784, %v1350
  %v1455 = vadd.f32 %v785, %v1353
  %v1456 = vadd.f32 %v786, %v1356
  %v1457 = vadd.f32 %v787, %v1359
  %v1458 = vadd.f32 %v788, %v1362
  %v1459 = vadd.f32 %v789, %v1365
  %v1460 = vadd.f32 %v790, %v1368
  %v1461 = vadd.f32 %v791, %v1371
  %v1462 = vadd.f32 %v792, %v1374
  %v1463 = vadd.f32 %v793, %v1377
  %v1464 = vadd.f32 %v794, %v1380
  %v1465 = vadd.f32 %v795, %v1383
  %1466 = vst.msk [vmem:[#allocation2] sm:$0xff] %vm633, %v1385
  %1467 = vst.msk [vmem:[#allocation2 + $0x8] sm:$0xff] %vm633, %v1386
  %1468 = vst.msk [vmem:[#allocation2 + $0x10] sm:$0xff] %vm633, %v1387
  %1469 = vst.msk [vmem:[#allocation2 + $0x18] sm:$0xff] %vm633, %v1388
  %1470 = vst.msk [vmem:[#allocation2 + $0x20] sm:$0xff] %vm633, %v1389
  %1471 = vst.msk [vmem:[#allocation2 + $0x28] sm:$0xff] %vm633, %v1390
  %1472 = vst.msk [vmem:[#allocation2 + $0x30] sm:$0xff] %vm633, %v1391
  %1473 = vst.msk [vmem:[#allocation2 + $0x38] sm:$0xff] %vm633, %v1392
  %1474 = vst.msk [vmem:[#allocation2 + $0x40] sm:$0xff] %vm633, %v1393
  %1475 = vst.msk [vmem:[#allocation2 + $0x48] sm:$0xff] %vm633, %v1394
  %1476 = vst.msk [vmem:[#allocation2 + $0x50] sm:$0xff] %vm633, %v1395
  %1477 = vst.msk [vmem:[#allocation2 + $0x58] sm:$0xff] %vm633, %v1396
  %1478 = vst.msk [vmem:[#allocation2 + $0x60] sm:$0xff] %vm633, %v1397
  %1479 = vst.msk [vmem:[#allocation2 + $0x68] sm:$0xff] %vm633, %v1398
  %1480 = vst.msk [vmem:[#allocation2 + $0x70] sm:$0xff] %vm633, %v1399
  %1481 = vst.msk [vmem:[#allocation2 + $0x78] sm:$0xff] %vm633, %v1400
  %1482 = vst.msk [vmem:[#allocation2 + $0x80] sm:$0xff] %vm633, %v1401
  %1483 = vst.msk [vmem:[#allocation2 + $0x88] sm:$0xff] %vm633, %v1402
  %1484 = vst.msk [vmem:[#allocation2 + $0x90] sm:$0xff] %vm633, %v1403
  %1485 = vst.msk [vmem:[#allocation2 + $0x98] sm:$0xff] %vm633, %v1404
  %1486 = vst.msk [vmem:[#allocation2 + $0xa0] sm:$0xff] %vm633, %v1405
  %1487 = vst.msk [vmem:[#allocation2 + $0xa8] sm:$0xff] %vm633, %v1406
  %1488 = vst.msk [vmem:[#allocation2 + $0xb0] sm:$0xff] %vm633, %v1407
  %1489 = vst.msk [vmem:[#allocation2 + $0xb8] sm:$0xff] %vm633, %v1408
  %1490 = vst.msk [vmem:[#allocation2 + $0xc0] sm:$0xff] %vm633, %v1409
  %1491 = vst.msk [vmem:[#allocation2 + $0xc8] sm:$0xff] %vm633, %v1410
  %1492 = vst.msk [vmem:[#allocation2 + $0xd0] sm:$0xff] %vm633, %v1411
  %1493 = vst.msk [vmem:[#allocation2 + $0xd8] sm:$0xff] %vm633, %v1412
  %1494 = vst.msk [vmem:[#allocation2 + $0xe0] sm:$0xff] %vm633, %v1413
  %1495 = vst.msk [vmem:[#allocation2 + $0xe8] sm:$0xff] %vm633, %v1414
  %1496 = vst.msk [vmem:[#allocation2 + $0xf0] sm:$0xff] %vm633, %v1415
  %1497 = vst.msk [vmem:[#allocation2 + $0xf8] sm:$0xff] %vm633, %v1416
  %1498 = vst.msk [vmem:[#allocation2 + $0x100] sm:$0xff] %vm633, %v1417
  %1499 = vst.msk [vmem:[#allocation2 + $0x108] sm:$0xff] %vm633, %v1418
  %1500 = vst.msk [vmem:[#allocation2 + $0x110] sm:$0xff] %vm633, %v1419
  %1501 = vst.msk [vmem:[#allocation2 + $0x118] sm:$0xff] %vm633, %v1420
  %1502 = vst.msk [vmem:[#allocation2 + $0x120] sm:$0xff] %vm633, %v1421
  %1503 = vst.msk [vmem:[#allocation2 + $0x128] sm:$0xff] %vm633, %v1422
  %1504 = vst.msk [vmem:[#allocation2 + $0x130] sm:$0xff] %vm633, %v1423
  %1505 = vst.msk [vmem:[#allocation2 + $0x138] sm:$0xff] %vm633, %v1424
  %1506 = vst.msk [vmem:[#allocation2 + $0x140] sm:$0xff] %vm633, %v1425
  %1507 = vst.msk [vmem:[#allocation2 + $0x148] sm:$0xff] %vm633, %v1426
  %1508 = vst.msk [vmem:[#allocation2 + $0x150] sm:$0xff] %vm633, %v1427
  %1509 = vst.msk [vmem:[#allocation2 + $0x158] sm:$0xff] %vm633, %v1428
  %1510 = vst.msk [vmem:[#allocation2 + $0x160] sm:$0xff] %vm633, %v1429
  %1511 = vst.msk [vmem:[#allocation2 + $0x168] sm:$0xff] %vm633, %v1430
  %1512 = vst.msk [vmem:[#allocation2 + $0x170] sm:$0xff] %vm633, %v1431
  %1513 = vst.msk [vmem:[#allocation2 + $0x178] sm:$0xff] %vm633, %v1432
  %1514 = vst.msk [vmem:[#allocation2 + $0x180] sm:$0xff] %vm633, %v1433
  %1515 = vst.msk [vmem:[#allocation2 + $0x188] sm:$0xff] %vm633, %v1434
  %1516 = vst.msk [vmem:[#allocation2 + $0x190] sm:$0xff] %vm633, %v1435
  %1517 = vst.msk [vmem:[#allocation2 + $0x198] sm:$0xff] %vm633, %v1436
  %1518 = vst.msk [vmem:[#allocation2 + $0x1a0] sm:$0xff] %vm633, %v1437
  %1519 = vst.msk [vmem:[#allocation2 + $0x1a8] sm:$0xff] %vm633, %v1438
  %1520 = vst.msk [vmem:[#allocation2 + $0x1b0] sm:$0xff] %vm633, %v1439
  %1521 = vst.msk [vmem:[#allocation2 + $0x1b8] sm:$0xff] %vm633, %v1440
  %1522 = vst.msk [vmem:[#allocation2 + $0x1c0] sm:$0xff] %vm633, %v1441
  %1523 = vst.msk [vmem:[#allocation2 + $0x1c8] sm:$0xff] %vm633, %v1442
  %1524 = vst.msk [vmem:[#allocation2 + $0x1d0] sm:$0xff] %vm633, %v1443
  %1525 = vst.msk [vmem:[#allocation2 + $0x1d8] sm:$0xff] %vm633, %v1444
  %1526 = vst.msk [vmem:[#allocation2 + $0x1e0] sm:$0xff] %vm633, %v1445
  %1527 = vst.msk [vmem:[#allocation2 + $0x1e8] sm:$0xff] %vm633, %v1446
  %1528 = vst.msk [vmem:[#allocation2 + $0x1f0] sm:$0xff] %vm633, %v1447
  %1529 = vst.msk [vmem:[#allocation2 + $0x1f8] sm:$0xff] %vm633, %v1448
  %1530 = vst.msk [vmem:[#allocation2 + $0x200] sm:$0xff] %vm633, %v1449
  %1531 = vst.msk [vmem:[#allocation2 + $0x208] sm:$0xff] %vm633, %v1450
  %1532 = vst.msk [vmem:[#allocation2 + $0x210] sm:$0xff] %vm633, %v1451
  %1533 = vst.msk [vmem:[#allocation2 + $0x218] sm:$0xff] %vm633, %v1452
  %1534 = vst.msk [vmem:[#allocation2 + $0x220] sm:$0xff] %vm633, %v1453
  %1535 = vst.msk [vmem:[#allocation2 + $0x228] sm:$0xff] %vm633, %v1454
  %1536 = vst.msk [vmem:[#allocation2 + $0x230] sm:$0xff] %vm633, %v1455
  %1537 = vst.msk [vmem:[#allocation2 + $0x238] sm:$0xff] %vm633, %v1456
  %1538 = vst.msk [vmem:[#allocation2 + $0x240] sm:$0xff] %vm633, %v1457
  %1539 = vst.msk [vmem:[#allocation2 + $0x248] sm:$0xff] %vm633, %v1458
  %1540 = vst.msk [vmem:[#allocation2 + $0x250] sm:$0xff] %vm633, %v1459
  %1541 = vst.msk [vmem:[#allocation2 + $0x258] sm:$0xff] %vm633, %v1460
  %1542 = vst.msk [vmem:[#allocation2 + $0x260] sm:$0xff] %vm633, %v1461
  %1543 = vst.msk [vmem:[#allocation2 + $0x268] sm:$0xff] %vm633, %v1462
  %1544 = vst.msk [vmem:[#allocation2 + $0x270] sm:$0xff] %vm633, %v1463
  %1545 = vst.msk [vmem:[#allocation2 + $0x278] sm:$0xff] %vm633, %v1464
  %1546 = vst.msk [vmem:[#allocation2 + $0x280] sm:$0xff] %vm633, %v1465
  %v1547 = vld [vmem:[#allocation2] sm:$0xff]
  %v1548 = vld [vmem:[#allocation2 + $0x8] sm:$0xff]
  %v1549 = vld [vmem:[#allocation2 + $0x10] sm:$0xff]
  %v1550 = vld [vmem:[#allocation2 + $0x18] sm:$0xff]
  %v1551 = vld [vmem:[#allocation2 + $0x20] sm:$0xff]
  %v1552 = vld [vmem:[#allocation2 + $0x28] sm:$0xff]
  %v1553 = vld [vmem:[#allocation2 + $0x30] sm:$0xff]
  %v1554 = vld [vmem:[#allocation2 + $0x38] sm:$0xff]
  %v1555 = vld [vmem:[#allocation2 + $0x40] sm:$0xff]
  %v1556 = vld [vmem:[#allocation2 + $0x48] sm:$0xff]
  %v1557 = vld [vmem:[#allocation2 + $0x50] sm:$0xff]
  %v1558 = vld [vmem:[#allocation2 + $0x58] sm:$0xff]
  %v1559 = vld [vmem:[#allocation2 + $0x60] sm:$0xff]
  %v1560 = vld [vmem:[#allocation2 + $0x68] sm:$0xff]
  %v1561 = vld [vmem:[#allocation2 + $0x70] sm:$0xff]
  %v1562 = vld [vmem:[#allocation2 + $0x78] sm:$0xff]
  %v1563 = vld [vmem:[#allocation2 + $0x80] sm:$0xff]
  %v1564 = vld [vmem:[#allocation2 + $0x88] sm:$0xff]
  %v1565 = vld [vmem:[#allocation2 + $0x90] sm:$0xff]
  %v1566 = vld [vmem:[#allocation2 + $0x98] sm:$0xff]
  %v1567 = vld [vmem:[#allocation2 + $0xa0] sm:$0xff]
  %v1568 = vld [vmem:[#allocation2 + $0xa8] sm:$0xff]
  %v1569 = vld [vmem:[#allocation2 + $0xb0] sm:$0xff]
  %v1570 = vld [vmem:[#allocation2 + $0xb8] sm:$0xff]
  %v1571 = vld [vmem:[#allocation2 + $0xc0] sm:$0xff]
  %v1572 = vld [vmem:[#allocation2 + $0xc8] sm:$0xff]
  %v1573 = vld [vmem:[#allocation2 + $0xd0] sm:$0xff]
  %v1574 = vld [vmem:[#allocation2 + $0xd8] sm:$0xff]
  %v1575 = vld [vmem:[#allocation2 + $0xe0] sm:$0xff]
  %v1576 = vld [vmem:[#allocation2 + $0xe8] sm:$0xff]
  %v1577 = vld [vmem:[#allocation2 + $0xf0] sm:$0xff]
  %v1578 = vld [vmem:[#allocation2 + $0xf8] sm:$0xff]
  %v1579 = vld [vmem:[#allocation2 + $0x100] sm:$0xff]
  %v1580 = vld [vmem:[#allocation2 + $0x108] sm:$0xff]
  %v1581 = vld [vmem:[#allocation2 + $0x110] sm:$0xff]
  %v1582 = vld [vmem:[#allocation2 + $0x118] sm:$0xff]
  %v1583 = vld [vmem:[#allocation2 + $0x120] sm:$0xff]
  %v1584 = vld [vmem:[#allocation2 + $0x128] sm:$0xff]
  %v1585 = vld [vmem:[#allocation2 + $0x130] sm:$0xff]
  %v1586 = vld [vmem:[#allocation2 + $0x138] sm:$0xff]
  %v1587 = vld [vmem:[#allocation2 + $0x140] sm:$0xff]
  %v1588 = vld [vmem:[#allocation2 + $0x148] sm:$0xff]
  %v1589 = vld [vmem:[#allocation2 + $0x150] sm:$0xff]
  %v1590 = vld [vmem:[#allocation2 + $0x158] sm:$0xff]
  %v1591 = vld [vmem:[#allocation2 + $0x160] sm:$0xff]
  %v1592 = vld [vmem:[#allocation2 + $0x168] sm:$0xff]
  %v1593 = vld [vmem:[#allocation2 + $0x170] sm:$0xff]
  %v1594 = vld [vmem:[#allocation2 + $0x178] sm:$0xff]
  %v1595 = vld [vmem:[#allocation2 + $0x180] sm:$0xff]
  %v1596 = vld [vmem:[#allocation2 + $0x188] sm:$0xff]
  %v1597 = vld [vmem:[#allocation2 + $0x190] sm:$0xff]
  %v1598 = vld [vmem:[#allocation2 + $0x198] sm:$0xff]
  %v1599 = vld [vmem:[#allocation2 + $0x1a0] sm:$0xff]
  %v1600 = vld [vmem:[#allocation2 + $0x1a8] sm:$0xff]
  %v1601 = vld [vmem:[#allocation2 + $0x1b0] sm:$0xff]
  %v1602 = vld [vmem:[#allocation2 + $0x1b8] sm:$0xff]
  %v1603 = vld [vmem:[#allocation2 + $0x1c0] sm:$0xff]
  %v1604 = vld [vmem:[#allocation2 + $0x1c8] sm:$0xff]
  %v1605 = vld [vmem:[#allocation2 + $0x1d0] sm:$0xff]
  %v1606 = vld [vmem:[#allocation2 + $0x1d8] sm:$0xff]
  %v1607 = vld [vmem:[#allocation2 + $0x1e0] sm:$0xff]
  %v1608 = vld [vmem:[#allocation2 + $0x1e8] sm:$0xff]
  %v1609 = vld [vmem:[#allocation2 + $0x1f0] sm:$0xff]
  %v1610 = vld [vmem:[#allocation2 + $0x1f8] sm:$0xff]
  %v1611 = vld [vmem:[#allocation2 + $0x200] sm:$0xff]
  %v1612 = vld [vmem:[#allocation2 + $0x208] sm:$0xff]
  %v1613 = vld [vmem:[#allocation2 + $0x210] sm:$0xff]
  %v1614 = vld [vmem:[#allocation2 + $0x218] sm:$0xff]
  %v1615 = vld [vmem:[#allocation2 + $0x220] sm:$0xff]
  %v1616 = vld [vmem:[#allocation2 + $0x228] sm:$0xff]
  %v1617 = vld [vmem:[#allocation2 + $0x230] sm:$0xff]
  %v1618 = vld [vmem:[#allocation2 + $0x238] sm:$0xff]
  %v1619 = vld [vmem:[#allocation2 + $0x240] sm:$0xff]
  %v1620 = vld [vmem:[#allocation2 + $0x248] sm:$0xff]
  %v1621 = vld [vmem:[#allocation2 + $0x250] sm:$0xff]
  %v1622 = vld [vmem:[#allocation2 + $0x258] sm:$0xff]
  %v1623 = vld [vmem:[#allocation2 + $0x260] sm:$0xff]
  %v1624 = vld [vmem:[#allocation2 + $0x268] sm:$0xff]
  %v1625 = vld [vmem:[#allocation2 + $0x270] sm:$0xff]
  %v1626 = vld [vmem:[#allocation2 + $0x278] sm:$0xff]
  %v1627 = vld [vmem:[#allocation2 + $0x280] sm:$0xff]
  %v1628 = vld [vmem:[%s0 + $0x2] sm:$0xff]
  %v1629 = vld [vmem:[%s0 + $0xa] sm:$0xff]
  %v1630 = vld [vmem:[%s0 + $0x12] sm:$0xff]
  %v1631 = vld [vmem:[%s0 + $0x1a] sm:$0xff]
  %v1632 = vld [vmem:[%s0 + $0x22] sm:$0xff]
  %v1633 = vld [vmem:[%s0 + $0x2a] sm:$0xff]
  %v1634 = vld [vmem:[%s0 + $0x32] sm:$0xff]
  %v1635 = vld [vmem:[%s0 + $0x3a] sm:$0xff]
  %v1636 = vld [vmem:[%s0 + $0x42] sm:$0xff]
  %v1637 = vld [vmem:[%s0 + $0x4a] sm:$0xff]
  %v1638 = vld [vmem:[%s0 + $0x52] sm:$0xff]
  %v1639 = vld [vmem:[%s0 + $0x5a] sm:$0xff]
  %v1640 = vld [vmem:[%s0 + $0x62] sm:$0xff]
  %v1641 = vld [vmem:[%s0 + $0x6a] sm:$0xff]
  %v1642 = vld [vmem:[%s0 + $0x72] sm:$0xff]
  %v1643 = vld [vmem:[%s0 + $0x7a] sm:$0xff]
  %v1644 = vld [vmem:[%s0 + $0x82] sm:$0xff]
  %v1645 = vld [vmem:[%s0 + $0x8a] sm:$0xff]
  %v1646 = vld [vmem:[%s0 + $0x92] sm:$0xff]
  %v1647 = vld [vmem:[%s0 + $0x9a] sm:$0xff]
  %v1648 = vld [vmem:[%s0 + $0xa2] sm:$0xff]
  %v1649 = vld [vmem:[%s0 + $0xaa] sm:$0xff]
  %v1650 = vld [vmem:[%s0 + $0xb2] sm:$0xff]
  %v1651 = vld [vmem:[%s0 + $0xba] sm:$0xff]
  %v1652 = vld [vmem:[%s0 + $0xc2] sm:$0xff]
  %v1653 = vld [vmem:[%s0 + $0xca] sm:$0xff]
  %v1654 = vld [vmem:[%s0 + $0xd2] sm:$0xff]
  %v1655 = vld [vmem:[%s0 + $0xda] sm:$0xff]
  %v1656 = vld [vmem:[%s0 + $0xe2] sm:$0xff]
  %v1657 = vld [vmem:[%s0 + $0xea] sm:$0xff]
  %v1658 = vld [vmem:[%s0 + $0xf2] sm:$0xff]
  %v1659 = vld [vmem:[%s0 + $0xfa] sm:$0xff]
  %v1660 = vld [vmem:[%s0 + $0x102] sm:$0xff]
  %v1661 = vld [vmem:[%s0 + $0x10a] sm:$0xff]
  %v1662 = vld [vmem:[%s0 + $0x112] sm:$0xff]
  %v1663 = vld [vmem:[%s0 + $0x11a] sm:$0xff]
  %v1664 = vld [vmem:[%s0 + $0x122] sm:$0xff]
  %v1665 = vld [vmem:[%s0 + $0x12a] sm:$0xff]
  %v1666 = vld [vmem:[%s0 + $0x132] sm:$0xff]
  %v1667 = vld [vmem:[%s0 + $0x13a] sm:$0xff]
  %v1668 = vld [vmem:[%s0 + $0x142] sm:$0xff]
  %v1669 = vld [vmem:[%s0 + $0x14a] sm:$0xff]
  %v1670 = vld [vmem:[%s0 + $0x152] sm:$0xff]
  %v1671 = vld [vmem:[%s0 + $0x15a] sm:$0xff]
  %v1672 = vld [vmem:[%s0 + $0x162] sm:$0xff]
  %v1673 = vld [vmem:[%s0 + $0x16a] sm:$0xff]
  %v1674 = vld [vmem:[%s0 + $0x172] sm:$0xff]
  %v1675 = vld [vmem:[%s0 + $0x17a] sm:$0xff]
  %v1676 = vld [vmem:[%s0 + $0x182] sm:$0xff]
  %v1677 = vld [vmem:[%s0 + $0x18a] sm:$0xff]
  %v1678 = vld [vmem:[%s0 + $0x192] sm:$0xff]
  %v1679 = vld [vmem:[%s0 + $0x19a] sm:$0xff]
  %v1680 = vld [vmem:[%s0 + $0x1a2] sm:$0xff]
  %v1681 = vld [vmem:[%s0 + $0x1aa] sm:$0xff]
  %v1682 = vld [vmem:[%s0 + $0x1b2] sm:$0xff]
  %v1683 = vld [vmem:[%s0 + $0x1ba] sm:$0xff]
  %v1684 = vld [vmem:[%s0 + $0x1c2] sm:$0xff]
  %v1685 = vld [vmem:[%s0 + $0x1ca] sm:$0xff]
  %v1686 = vld [vmem:[%s0 + $0x1d2] sm:$0xff]
  %v1687 = vld [vmem:[%s0 + $0x1da] sm:$0xff]
  %v1688 = vld [vmem:[%s0 + $0x1e2] sm:$0xff]
  %v1689 = vld [vmem:[%s0 + $0x1ea] sm:$0xff]
  %v1690 = vld [vmem:[%s0 + $0x1f2] sm:$0xff]
  %v1691 = vld [vmem:[%s0 + $0x1fa] sm:$0xff]
  %v1692 = vld [vmem:[%s0 + $0x202] sm:$0xff]
  %v1693 = vld [vmem:[%s0 + $0x20a] sm:$0xff]
  %v1694 = vld [vmem:[%s0 + $0x212] sm:$0xff]
  %v1695 = vld [vmem:[%s0 + $0x21a] sm:$0xff]
  %v1696 = vld [vmem:[%s0 + $0x222] sm:$0xff]
  %v1697 = vld [vmem:[%s0 + $0x22a] sm:$0xff]
  %v1698 = vld [vmem:[%s0 + $0x232] sm:$0xff]
  %v1699 = vld [vmem:[%s0 + $0x23a] sm:$0xff]
  %v1700 = vld [vmem:[%s0 + $0x242] sm:$0xff]
  %v1701 = vld [vmem:[%s0 + $0x24a] sm:$0xff]
  %v1702 = vld [vmem:[%s0 + $0x252] sm:$0xff]
  %v1703 = vld [vmem:[%s0 + $0x25a] sm:$0xff]
  %v1704 = vld [vmem:[%s0 + $0x262] sm:$0xff]
  %v1705 = vld [vmem:[%s0 + $0x26a] sm:$0xff]
  %v1706 = vld [vmem:[%s0 + $0x272] sm:$0xff]
  %v1707 = vld [vmem:[%s0 + $0x27a] sm:$0xff]
  %v1708 = vld [vmem:[%s0 + $0x282] sm:$0xff]
  %s1709 = scalar_lea.vmem %s1, 8
  %v1710 = vld [vmem:[%s1709] sm:$0xf]
  %v1712 = vsel %vm125, %v1628, 0
  %v1715 = vsel %vm125, %v1629, 0
  %v1718 = vsel %vm125, %v1630, 0
  %v1721 = vsel %vm125, %v1631, 0
  %v1724 = vsel %vm125, %v1632, 0
  %v1727 = vsel %vm125, %v1633, 0
  %v1730 = vsel %vm125, %v1634, 0
  %v1733 = vsel %vm125, %v1635, 0
  %v1736 = vsel %vm125, %v1636, 0
  %v1739 = vsel %vm125, %v1637, 0
  %v1742 = vsel %vm125, %v1638, 0
  %v1745 = vsel %vm125, %v1639, 0
  %v1748 = vsel %vm125, %v1640, 0
  %v1751 = vsel %vm125, %v1641, 0
  %v1754 = vsel %vm125, %v1642, 0
  %v1757 = vsel %vm125, %v1643, 0
  %v1760 = vsel %vm125, %v1644, 0
  %v1763 = vsel %vm125, %v1645, 0
  %v1766 = vsel %vm125, %v1646, 0
  %v1769 = vsel %vm125, %v1647, 0
  %v1772 = vsel %vm125, %v1648, 0
  %v1775 = vsel %vm125, %v1649, 0
  %v1778 = vsel %vm125, %v1650, 0
  %v1781 = vsel %vm125, %v1651, 0
  %v1784 = vsel %vm125, %v1652, 0
  %v1787 = vsel %vm125, %v1653, 0
  %v1790 = vsel %vm125, %v1654, 0
  %v1793 = vsel %vm125, %v1655, 0
  %v1796 = vsel %vm125, %v1656, 0
  %v1799 = vsel %vm125, %v1657, 0
  %v1802 = vsel %vm125, %v1658, 0
  %v1805 = vsel %vm125, %v1659, 0
  %v1808 = vsel %vm125, %v1660, 0
  %v1811 = vsel %vm125, %v1661, 0
  %v1814 = vsel %vm125, %v1662, 0
  %v1817 = vsel %vm125, %v1663, 0
  %v1820 = vsel %vm125, %v1664, 0
  %v1823 = vsel %vm125, %v1665, 0
  %v1826 = vsel %vm125, %v1666, 0
  %v1829 = vsel %vm125, %v1667, 0
  %v1832 = vsel %vm125, %v1668, 0
  %v1835 = vsel %vm125, %v1669, 0
  %v1838 = vsel %vm125, %v1670, 0
  %v1841 = vsel %vm125, %v1671, 0
  %v1844 = vsel %vm125, %v1672, 0
  %v1847 = vsel %vm125, %v1673, 0
  %v1850 = vsel %vm125, %v1674, 0
  %v1853 = vsel %vm125, %v1675, 0
  %v1856 = vsel %vm125, %v1676, 0
  %v1859 = vsel %vm125, %v1677, 0
  %v1862 = vsel %vm125, %v1678, 0
  %v1865 = vsel %vm125, %v1679, 0
  %v1868 = vsel %vm125, %v1680, 0
  %v1871 = vsel %vm125, %v1681, 0
  %v1874 = vsel %vm125, %v1682, 0
  %v1877 = vsel %vm125, %v1683, 0
  %v1880 = vsel %vm125, %v1684, 0
  %v1883 = vsel %vm125, %v1685, 0
  %v1886 = vsel %vm125, %v1686, 0
  %v1889 = vsel %vm125, %v1687, 0
  %v1892 = vsel %vm125, %v1688, 0
  %v1895 = vsel %vm125, %v1689, 0
  %v1898 = vsel %vm125, %v1690, 0
  %v1901 = vsel %vm125, %v1691, 0
  %v1904 = vsel %vm125, %v1692, 0
  %v1907 = vsel %vm125, %v1693, 0
  %v1910 = vsel %vm125, %v1694, 0
  %v1913 = vsel %vm125, %v1695, 0
  %v1916 = vsel %vm125, %v1696, 0
  %v1919 = vsel %vm125, %v1697, 0
  %v1922 = vsel %vm125, %v1698, 0
  %v1925 = vsel %vm125, %v1699, 0
  %v1928 = vsel %vm125, %v1700, 0
  %v1931 = vsel %vm125, %v1701, 0
  %v1934 = vsel %vm125, %v1702, 0
  %v1937 = vsel %vm125, %v1703, 0
  %v1940 = vsel %vm125, %v1704, 0
  %v1943 = vsel %vm125, %v1705, 0
  %v1946 = vsel %vm125, %v1706, 0
  %v1949 = vsel %vm125, %v1707, 0
  %v1952 = vsel %vm125, %v1708, 0
  %v1955 = vsel %vm369, %v1710, 0
  %1957 = vmatpush.msra.mxu0 0.0
  %1958 = vmatpush.msra.mxu0 0.0
  %1959 = vmatpush.msra.mxu0 0.0
  %1960 = vmatpush.msra.mxu0 0.0
  %1961 = vmatpush.msra.mxu0 0.0
  %1962 = vmatpush.msra.mxu0 0.0
  %1963 = vmatpush.msra.mxu0 0.0
  %1964 = vmatpush.msra.mxu0 0.0
  %1965 = vmatpush.msra.mxu0 0.0
  %1966 = vmatpush.msra.mxu0 0.0
  %1967 = vmatpush.msra.mxu0 0.0
  %1968 = vmatpush.msra.mxu0 0.0
  %1969 = vmatpush.msra.mxu0 0.0
  %1970 = vmatpush.msra.mxu0 0.0
  %1971 = vmatpush.msra.mxu0 0.0
  %1972 = vmatpush.msra.mxu0 %v1955
  %1973 = vmatmul.f32.gmra.mxu0 %v1712
  %v1974 = vpop.f32.mrf.mxu0
  %v1975 = vadd.f32 0.0, %v1974
  %1976 = vmatmul.f32.gmra.mxu0 %v1715
  %v1977 = vpop.f32.mrf.mxu0
  %v1978 = vadd.f32 0.0, %v1977
  %1979 = vmatmul.f32.gmra.mxu0 %v1718
  %v1980 = vpop.f32.mrf.mxu0
  %v1981 = vadd.f32 0.0, %v1980
  %1982 = vmatmul.f32.gmra.mxu0 %v1721
  %v1983 = vpop.f32.mrf.mxu0
  %v1984 = vadd.f32 0.0, %v1983
  %1985 = vmatmul.f32.gmra.mxu0 %v1724
  %v1986 = vpop.f32.mrf.mxu0
  %v1987 = vadd.f32 0.0, %v1986
  %1988 = vmatmul.f32.gmra.mxu0 %v1727
  %v1989 = vpop.f32.mrf.mxu0
  %v1990 = vadd.f32 0.0, %v1989
  %1991 = vmatmul.f32.gmra.mxu0 %v1730
  %v1992 = vpop.f32.mrf.mxu0
  %v1993 = vadd.f32 0.0, %v1992
  %1994 = vmatmul.f32.gmra.mxu0 %v1733
  %v1995 = vpop.f32.mrf.mxu0
  %v1996 = vadd.f32 0.0, %v1995
  %1997 = vmatmul.f32.gmra.mxu0 %v1736
  %v1998 = vpop.f32.mrf.mxu0
  %v1999 = vadd.f32 0.0, %v1998
  %2000 = vmatmul.f32.gmra.mxu0 %v1739
  %v2001 = vpop.f32.mrf.mxu0
  %v2002 = vadd.f32 0.0, %v2001
  %2003 = vmatmul.f32.gmra.mxu0 %v1742
  %v2004 = vpop.f32.mrf.mxu0
  %v2005 = vadd.f32 0.0, %v2004
  %2006 = vmatmul.f32.gmra.mxu0 %v1745
  %v2007 = vpop.f32.mrf.mxu0
  %v2008 = vadd.f32 0.0, %v2007
  %2009 = vmatmul.f32.gmra.mxu0 %v1748
  %v2010 = vpop.f32.mrf.mxu0
  %v2011 = vadd.f32 0.0, %v2010
  %2012 = vmatmul.f32.gmra.mxu0 %v1751
  %v2013 = vpop.f32.mrf.mxu0
  %v2014 = vadd.f32 0.0, %v2013
  %2015 = vmatmul.f32.gmra.mxu0 %v1754
  %v2016 = vpop.f32.mrf.mxu0
  %v2017 = vadd.f32 0.0, %v2016
  %2018 = vmatmul.f32.gmra.mxu0 %v1757
  %v2019 = vpop.f32.mrf.mxu0
  %v2020 = vadd.f32 0.0, %v2019
  %2021 = vmatmul.f32.gmra.mxu0 %v1760
  %v2022 = vpop.f32.mrf.mxu0
  %v2023 = vadd.f32 0.0, %v2022
  %2024 = vmatmul.f32.gmra.mxu0 %v1763
  %v2025 = vpop.f32.mrf.mxu0
  %v2026 = vadd.f32 0.0, %v2025
  %2027 = vmatmul.f32.gmra.mxu0 %v1766
  %v2028 = vpop.f32.mrf.mxu0
  %v2029 = vadd.f32 0.0, %v2028
  %2030 = vmatmul.f32.gmra.mxu0 %v1769
  %v2031 = vpop.f32.mrf.mxu0
  %v2032 = vadd.f32 0.0, %v2031
  %2033 = vmatmul.f32.gmra.mxu0 %v1772
  %v2034 = vpop.f32.mrf.mxu0
  %v2035 = vadd.f32 0.0, %v2034
  %2036 = vmatmul.f32.gmra.mxu0 %v1775
  %v2037 = vpop.f32.mrf.mxu0
  %v2038 = vadd.f32 0.0, %v2037
  %2039 = vmatmul.f32.gmra.mxu0 %v1778
  %v2040 = vpop.f32.mrf.mxu0
  %v2041 = vadd.f32 0.0, %v2040
  %2042 = vmatmul.f32.gmra.mxu0 %v1781
  %v2043 = vpop.f32.mrf.mxu0
  %v2044 = vadd.f32 0.0, %v2043
  %2045 = vmatmul.f32.gmra.mxu0 %v1784
  %v2046 = vpop.f32.mrf.mxu0
  %v2047 = vadd.f32 0.0, %v2046
  %2048 = vmatmul.f32.gmra.mxu0 %v1787
  %v2049 = vpop.f32.mrf.mxu0
  %v2050 = vadd.f32 0.0, %v2049
  %2051 = vmatmul.f32.gmra.mxu0 %v1790
  %v2052 = vpop.f32.mrf.mxu0
  %v2053 = vadd.f32 0.0, %v2052
  %2054 = vmatmul.f32.gmra.mxu0 %v1793
  %v2055 = vpop.f32.mrf.mxu0
  %v2056 = vadd.f32 0.0, %v2055
  %2057 = vmatmul.f32.gmra.mxu0 %v1796
  %v2058 = vpop.f32.mrf.mxu0
  %v2059 = vadd.f32 0.0, %v2058
  %2060 = vmatmul.f32.gmra.mxu0 %v1799
  %v2061 = vpop.f32.mrf.mxu0
  %v2062 = vadd.f32 0.0, %v2061
  %2063 = vmatmul.f32.gmra.mxu0 %v1802
  %v2064 = vpop.f32.mrf.mxu0
  %v2065 = vadd.f32 0.0, %v2064
  %2066 = vmatmul.f32.gmra.mxu0 %v1805
  %v2067 = vpop.f32.mrf.mxu0
  %v2068 = vadd.f32 0.0, %v2067
  %2069 = vmatmul.f32.gmra.mxu0 %v1808
  %v2070 = vpop.f32.mrf.mxu0
  %v2071 = vadd.f32 0.0, %v2070
  %2072 = vmatmul.f32.gmra.mxu0 %v1811
  %v2073 = vpop.f32.mrf.mxu0
  %v2074 = vadd.f32 0.0, %v2073
  %2075 = vmatmul.f32.gmra.mxu0 %v1814
  %v2076 = vpop.f32.mrf.mxu0
  %v2077 = vadd.f32 0.0, %v2076
  %2078 = vmatmul.f32.gmra.mxu0 %v1817
  %v2079 = vpop.f32.mrf.mxu0
  %v2080 = vadd.f32 0.0, %v2079
  %2081 = vmatmul.f32.gmra.mxu0 %v1820
  %v2082 = vpop.f32.mrf.mxu0
  %v2083 = vadd.f32 0.0, %v2082
  %2084 = vmatmul.f32.gmra.mxu0 %v1823
  %v2085 = vpop.f32.mrf.mxu0
  %v2086 = vadd.f32 0.0, %v2085
  %2087 = vmatmul.f32.gmra.mxu0 %v1826
  %v2088 = vpop.f32.mrf.mxu0
  %v2089 = vadd.f32 0.0, %v2088
  %2090 = vmatmul.f32.gmra.mxu0 %v1829
  %v2091 = vpop.f32.mrf.mxu0
  %v2092 = vadd.f32 0.0, %v2091
  %2093 = vmatmul.f32.gmra.mxu0 %v1832
  %v2094 = vpop.f32.mrf.mxu0
  %v2095 = vadd.f32 0.0, %v2094
  %2096 = vmatmul.f32.gmra.mxu0 %v1835
  %v2097 = vpop.f32.mrf.mxu0
  %v2098 = vadd.f32 0.0, %v2097
  %2099 = vmatmul.f32.gmra.mxu0 %v1838
  %v2100 = vpop.f32.mrf.mxu0
  %v2101 = vadd.f32 0.0, %v2100
  %2102 = vmatmul.f32.gmra.mxu0 %v1841
  %v2103 = vpop.f32.mrf.mxu0
  %v2104 = vadd.f32 0.0, %v2103
  %2105 = vmatmul.f32.gmra.mxu0 %v1844
  %v2106 = vpop.f32.mrf.mxu0
  %v2107 = vadd.f32 0.0, %v2106
  %2108 = vmatmul.f32.gmra.mxu0 %v1847
  %v2109 = vpop.f32.mrf.mxu0
  %v2110 = vadd.f32 0.0, %v2109
  %2111 = vmatmul.f32.gmra.mxu0 %v1850
  %v2112 = vpop.f32.mrf.mxu0
  %v2113 = vadd.f32 0.0, %v2112
  %2114 = vmatmul.f32.gmra.mxu0 %v1853
  %v2115 = vpop.f32.mrf.mxu0
  %v2116 = vadd.f32 0.0, %v2115
  %2117 = vmatmul.f32.gmra.mxu0 %v1856
  %v2118 = vpop.f32.mrf.mxu0
  %v2119 = vadd.f32 0.0, %v2118
  %2120 = vmatmul.f32.gmra.mxu0 %v1859
  %v2121 = vpop.f32.mrf.mxu0
  %v2122 = vadd.f32 0.0, %v2121
  %2123 = vmatmul.f32.gmra.mxu0 %v1862
  %v2124 = vpop.f32.mrf.mxu0
  %v2125 = vadd.f32 0.0, %v2124
  %2126 = vmatmul.f32.gmra.mxu0 %v1865
  %v2127 = vpop.f32.mrf.mxu0
  %v2128 = vadd.f32 0.0, %v2127
  %2129 = vmatmul.f32.gmra.mxu0 %v1868
  %v2130 = vpop.f32.mrf.mxu0
  %v2131 = vadd.f32 0.0, %v2130
  %2132 = vmatmul.f32.gmra.mxu0 %v1871
  %v2133 = vpop.f32.mrf.mxu0
  %v2134 = vadd.f32 0.0, %v2133
  %2135 = vmatmul.f32.gmra.mxu0 %v1874
  %v2136 = vpop.f32.mrf.mxu0
  %v2137 = vadd.f32 0.0, %v2136
  %2138 = vmatmul.f32.gmra.mxu0 %v1877
  %v2139 = vpop.f32.mrf.mxu0
  %v2140 = vadd.f32 0.0, %v2139
  %2141 = vmatmul.f32.gmra.mxu0 %v1880
  %v2142 = vpop.f32.mrf.mxu0
  %v2143 = vadd.f32 0.0, %v2142
  %2144 = vmatmul.f32.gmra.mxu0 %v1883
  %v2145 = vpop.f32.mrf.mxu0
  %v2146 = vadd.f32 0.0, %v2145
  %2147 = vmatmul.f32.gmra.mxu0 %v1886
  %v2148 = vpop.f32.mrf.mxu0
  %v2149 = vadd.f32 0.0, %v2148
  %2150 = vmatmul.f32.gmra.mxu0 %v1889
  %v2151 = vpop.f32.mrf.mxu0
  %v2152 = vadd.f32 0.0, %v2151
  %2153 = vmatmul.f32.gmra.mxu0 %v1892
  %v2154 = vpop.f32.mrf.mxu0
  %v2155 = vadd.f32 0.0, %v2154
  %2156 = vmatmul.f32.gmra.mxu0 %v1895
  %v2157 = vpop.f32.mrf.mxu0
  %v2158 = vadd.f32 0.0, %v2157
  %2159 = vmatmul.f32.gmra.mxu0 %v1898
  %v2160 = vpop.f32.mrf.mxu0
  %v2161 = vadd.f32 0.0, %v2160
  %2162 = vmatmul.f32.gmra.mxu0 %v1901
  %v2163 = vpop.f32.mrf.mxu0
  %v2164 = vadd.f32 0.0, %v2163
  %2165 = vmatmul.f32.gmra.mxu0 %v1904
  %v2166 = vpop.f32.mrf.mxu0
  %v2167 = vadd.f32 0.0, %v2166
  %2168 = vmatmul.f32.gmra.mxu0 %v1907
  %v2169 = vpop.f32.mrf.mxu0
  %v2170 = vadd.f32 0.0, %v2169
  %2171 = vmatmul.f32.gmra.mxu0 %v1910
  %v2172 = vpop.f32.mrf.mxu0
  %v2173 = vadd.f32 0.0, %v2172
  %2174 = vmatmul.f32.gmra.mxu0 %v1913
  %v2175 = vpop.f32.mrf.mxu0
  %v2176 = vadd.f32 0.0, %v2175
  %2177 = vmatmul.f32.gmra.mxu0 %v1916
  %v2178 = vpop.f32.mrf.mxu0
  %v2179 = vadd.f32 0.0, %v2178
  %2180 = vmatmul.f32.gmra.mxu0 %v1919
  %v2181 = vpop.f32.mrf.mxu0
  %v2182 = vadd.f32 0.0, %v2181
  %2183 = vmatmul.f32.gmra.mxu0 %v1922
  %v2184 = vpop.f32.mrf.mxu0
  %v2185 = vadd.f32 0.0, %v2184
  %2186 = vmatmul.f32.gmra.mxu0 %v1925
  %v2187 = vpop.f32.mrf.mxu0
  %v2188 = vadd.f32 0.0, %v2187
  %2189 = vmatmul.f32.gmra.mxu0 %v1928
  %v2190 = vpop.f32.mrf.mxu0
  %v2191 = vadd.f32 0.0, %v2190
  %2192 = vmatmul.f32.gmra.mxu0 %v1931
  %v2193 = vpop.f32.mrf.mxu0
  %v2194 = vadd.f32 0.0, %v2193
  %2195 = vmatmul.f32.gmra.mxu0 %v1934
  %v2196 = vpop.f32.mrf.mxu0
  %v2197 = vadd.f32 0.0, %v2196
  %2198 = vmatmul.f32.gmra.mxu0 %v1937
  %v2199 = vpop.f32.mrf.mxu0
  %v2200 = vadd.f32 0.0, %v2199
  %2201 = vmatmul.f32.gmra.mxu0 %v1940
  %v2202 = vpop.f32.mrf.mxu0
  %v2203 = vadd.f32 0.0, %v2202
  %2204 = vmatmul.f32.gmra.mxu0 %v1943
  %v2205 = vpop.f32.mrf.mxu0
  %v2206 = vadd.f32 0.0, %v2205
  %2207 = vmatmul.f32.gmra.mxu0 %v1946
  %v2208 = vpop.f32.mrf.mxu0
  %v2209 = vadd.f32 0.0, %v2208
  %2210 = vmatmul.f32.gmra.mxu0 %v1949
  %v2211 = vpop.f32.mrf.mxu0
  %v2212 = vadd.f32 0.0, %v2211
  %2213 = vmatmul.f32.gmra.mxu0 %v1952
  %v2214 = vpop.f32.mrf.mxu0
  %v2215 = vadd.f32 0.0, %v2214
  %2216 = vdwg.mxu0
  %v2217 = vadd.f32 %v1547, %v1975
  %v2218 = vadd.f32 %v1548, %v1978
  %v2219 = vadd.f32 %v1549, %v1981
  %v2220 = vadd.f32 %v1550, %v1984
  %v2221 = vadd.f32 %v1551, %v1987
  %v2222 = vadd.f32 %v1552, %v1990
  %v2223 = vadd.f32 %v1553, %v1993
  %v2224 = vadd.f32 %v1554, %v1996
  %v2225 = vadd.f32 %v1555, %v1999
  %v2226 = vadd.f32 %v1556, %v2002
  %v2227 = vadd.f32 %v1557, %v2005
  %v2228 = vadd.f32 %v1558, %v2008
  %v2229 = vadd.f32 %v1559, %v2011
  %v2230 = vadd.f32 %v1560, %v2014
  %v2231 = vadd.f32 %v1561, %v2017
  %v2232 = vadd.f32 %v1562, %v2020
  %v2233 = vadd.f32 %v1563, %v2023
  %v2234 = vadd.f32 %v1564, %v2026
  %v2235 = vadd.f32 %v1565, %v2029
  %v2236 = vadd.f32 %v1566, %v2032
  %v2237 = vadd.f32 %v1567, %v2035
  %v2238 = vadd.f32 %v1568, %v2038
  %v2239 = vadd.f32 %v1569, %v2041
  %v2240 = vadd.f32 %v1570, %v2044
  %v2241 = vadd.f32 %v1571, %v2047
  %v2242 = vadd.f32 %v1572, %v2050
  %v2243 = vadd.f32 %v1573, %v2053
  %v2244 = vadd.f32 %v1574, %v2056
  %v2245 = vadd.f32 %v1575, %v2059
  %v2246 = vadd.f32 %v1576, %v2062
  %v2247 = vadd.f32 %v1577, %v2065
  %v2248 = vadd.f32 %v1578, %v2068
  %v2249 = vadd.f32 %v1579, %v2071
  %v2250 = vadd.f32 %v1580, %v2074
  %v2251 = vadd.f32 %v1581, %v2077
  %v2252 = vadd.f32 %v1582, %v2080
  %v2253 = vadd.f32 %v1583, %v2083
  %v2254 = vadd.f32 %v1584, %v2086
  %v2255 = vadd.f32 %v1585, %v2089
  %v2256 = vadd.f32 %v1586, %v2092
  %v2257 = vadd.f32 %v1587, %v2095
  %v2258 = vadd.f32 %v1588, %v2098
  %v2259 = vadd.f32 %v1589, %v2101
  %v2260 = vadd.f32 %v1590, %v2104
  %v2261 = vadd.f32 %v1591, %v2107
  %v2262 = vadd.f32 %v1592, %v2110
  %v2263 = vadd.f32 %v1593, %v2113
  %v2264 = vadd.f32 %v1594, %v2116
  %v2265 = vadd.f32 %v1595, %v2119
  %v2266 = vadd.f32 %v1596, %v2122
  %v2267 = vadd.f32 %v1597, %v2125
  %v2268 = vadd.f32 %v1598, %v2128
  %v2269 = vadd.f32 %v1599, %v2131
  %v2270 = vadd.f32 %v1600, %v2134
  %v2271 = vadd.f32 %v1601, %v2137
  %v2272 = vadd.f32 %v1602, %v2140
  %v2273 = vadd.f32 %v1603, %v2143
  %v2274 = vadd.f32 %v1604, %v2146
  %v2275 = vadd.f32 %v1605, %v2149
  %v2276 = vadd.f32 %v1606, %v2152
  %v2277 = vadd.f32 %v1607, %v2155
  %v2278 = vadd.f32 %v1608, %v2158
  %v2279 = vadd.f32 %v1609, %v2161
  %v2280 = vadd.f32 %v1610, %v2164
  %v2281 = vadd.f32 %v1611, %v2167
  %v2282 = vadd.f32 %v1612, %v2170
  %v2283 = vadd.f32 %v1613, %v2173
  %v2284 = vadd.f32 %v1614, %v2176
  %v2285 = vadd.f32 %v1615, %v2179
  %v2286 = vadd.f32 %v1616, %v2182
  %v2287 = vadd.f32 %v1617, %v2185
  %v2288 = vadd.f32 %v1618, %v2188
  %v2289 = vadd.f32 %v1619, %v2191
  %v2290 = vadd.f32 %v1620, %v2194
  %v2291 = vadd.f32 %v1621, %v2197
  %v2292 = vadd.f32 %v1622, %v2200
  %v2293 = vadd.f32 %v1623, %v2203
  %v2294 = vadd.f32 %v1624, %v2206
  %v2295 = vadd.f32 %v1625, %v2209
  %v2296 = vadd.f32 %v1626, %v2212
  %v2297 = vadd.f32 %v1627, %v2215
  %2298 = vst.msk [vmem:[#allocation2] sm:$0xff] %vm633, %v2217
  %2299 = vst.msk [vmem:[#allocation2 + $0x8] sm:$0xff] %vm633, %v2218
  %2300 = vst.msk [vmem:[#allocation2 + $0x10] sm:$0xff] %vm633, %v2219
  %2301 = vst.msk [vmem:[#allocation2 + $0x18] sm:$0xff] %vm633, %v2220
  %2302 = vst.msk [vmem:[#allocation2 + $0x20] sm:$0xff] %vm633, %v2221
  %2303 = vst.msk [vmem:[#allocation2 + $0x28] sm:$0xff] %vm633, %v2222
  %2304 = vst.msk [vmem:[#allocation2 + $0x30] sm:$0xff] %vm633, %v2223
  %2305 = vst.msk [vmem:[#allocation2 + $0x38] sm:$0xff] %vm633, %v2224
  %2306 = vst.msk [vmem:[#allocation2 + $0x40] sm:$0xff] %vm633, %v2225
  %2307 = vst.msk [vmem:[#allocation2 + $0x48] sm:$0xff] %vm633, %v2226
  %2308 = vst.msk [vmem:[#allocation2 + $0x50] sm:$0xff] %vm633, %v2227
  %2309 = vst.msk [vmem:[#allocation2 + $0x58] sm:$0xff] %vm633, %v2228
  %2310 = vst.msk [vmem:[#allocation2 + $0x60] sm:$0xff] %vm633, %v2229
  %2311 = vst.msk [vmem:[#allocation2 + $0x68] sm:$0xff] %vm633, %v2230
  %2312 = vst.msk [vmem:[#allocation2 + $0x70] sm:$0xff] %vm633, %v2231
  %2313 = vst.msk [vmem:[#allocation2 + $0x78] sm:$0xff] %vm633, %v2232
  %2314 = vst.msk [vmem:[#allocation2 + $0x80] sm:$0xff] %vm633, %v2233
  %2315 = vst.msk [vmem:[#allocation2 + $0x88] sm:$0xff] %vm633, %v2234
  %2316 = vst.msk [vmem:[#allocation2 + $0x90] sm:$0xff] %vm633, %v2235
  %2317 = vst.msk [vmem:[#allocation2 + $0x98] sm:$0xff] %vm633, %v2236
  %2318 = vst.msk [vmem:[#allocation2 + $0xa0] sm:$0xff] %vm633, %v2237
  %2319 = vst.msk [vmem:[#allocation2 + $0xa8] sm:$0xff] %vm633, %v2238
  %2320 = vst.msk [vmem:[#allocation2 + $0xb0] sm:$0xff] %vm633, %v2239
  %2321 = vst.msk [vmem:[#allocation2 + $0xb8] sm:$0xff] %vm633, %v2240
  %2322 = vst.msk [vmem:[#allocation2 + $0xc0] sm:$0xff] %vm633, %v2241
  %2323 = vst.msk [vmem:[#allocation2 + $0xc8] sm:$0xff] %vm633, %v2242
  %2324 = vst.msk [vmem:[#allocation2 + $0xd0] sm:$0xff] %vm633, %v2243
  %2325 = vst.msk [vmem:[#allocation2 + $0xd8] sm:$0xff] %vm633, %v2244
  %2326 = vst.msk [vmem:[#allocation2 + $0xe0] sm:$0xff] %vm633, %v2245
  %2327 = vst.msk [vmem:[#allocation2 + $0xe8] sm:$0xff] %vm633, %v2246
  %2328 = vst.msk [vmem:[#allocation2 + $0xf0] sm:$0xff] %vm633, %v2247
  %2329 = vst.msk [vmem:[#allocation2 + $0xf8] sm:$0xff] %vm633, %v2248
  %2330 = vst.msk [vmem:[#allocation2 + $0x100] sm:$0xff] %vm633, %v2249
  %2331 = vst.msk [vmem:[#allocation2 + $0x108] sm:$0xff] %vm633, %v2250
  %2332 = vst.msk [vmem:[#allocation2 + $0x110] sm:$0xff] %vm633, %v2251
  %2333 = vst.msk [vmem:[#allocation2 + $0x118] sm:$0xff] %vm633, %v2252
  %2334 = vst.msk [vmem:[#allocation2 + $0x120] sm:$0xff] %vm633, %v2253
  %2335 = vst.msk [vmem:[#allocation2 + $0x128] sm:$0xff] %vm633, %v2254
  %2336 = vst.msk [vmem:[#allocation2 + $0x130] sm:$0xff] %vm633, %v2255
  %2337 = vst.msk [vmem:[#allocation2 + $0x138] sm:$0xff] %vm633, %v2256
  %2338 = vst.msk [vmem:[#allocation2 + $0x140] sm:$0xff] %vm633, %v2257
  %2339 = vst.msk [vmem:[#allocation2 + $0x148] sm:$0xff] %vm633, %v2258
  %2340 = vst.msk [vmem:[#allocation2 + $0x150] sm:$0xff] %vm633, %v2259
  %2341 = vst.msk [vmem:[#allocation2 + $0x158] sm:$0xff] %vm633, %v2260
  %2342 = vst.msk [vmem:[#allocation2 + $0x160] sm:$0xff] %vm633, %v2261
  %2343 = vst.msk [vmem:[#allocation2 + $0x168] sm:$0xff] %vm633, %v2262
  %2344 = vst.msk [vmem:[#allocation2 + $0x170] sm:$0xff] %vm633, %v2263
  %2345 = vst.msk [vmem:[#allocation2 + $0x178] sm:$0xff] %vm633, %v2264
  %2346 = vst.msk [vmem:[#allocation2 + $0x180] sm:$0xff] %vm633, %v2265
  %2347 = vst.msk [vmem:[#allocation2 + $0x188] sm:$0xff] %vm633, %v2266
  %2348 = vst.msk [vmem:[#allocation2 + $0x190] sm:$0xff] %vm633, %v2267
  %2349 = vst.msk [vmem:[#allocation2 + $0x198] sm:$0xff] %vm633, %v2268
  %2350 = vst.msk [vmem:[#allocation2 + $0x1a0] sm:$0xff] %vm633, %v2269
  %2351 = vst.msk [vmem:[#allocation2 + $0x1a8] sm:$0xff] %vm633, %v2270
  %2352 = vst.msk [vmem:[#allocation2 + $0x1b0] sm:$0xff] %vm633, %v2271
  %2353 = vst.msk [vmem:[#allocation2 + $0x1b8] sm:$0xff] %vm633, %v2272
  %2354 = vst.msk [vmem:[#allocation2 + $0x1c0] sm:$0xff] %vm633, %v2273
  %2355 = vst.msk [vmem:[#allocation2 + $0x1c8] sm:$0xff] %vm633, %v2274
  %2356 = vst.msk [vmem:[#allocation2 + $0x1d0] sm:$0xff] %vm633, %v2275
  %2357 = vst.msk [vmem:[#allocation2 + $0x1d8] sm:$0xff] %vm633, %v2276
  %2358 = vst.msk [vmem:[#allocation2 + $0x1e0] sm:$0xff] %vm633, %v2277
  %2359 = vst.msk [vmem:[#allocation2 + $0x1e8] sm:$0xff] %vm633, %v2278
  %2360 = vst.msk [vmem:[#allocation2 + $0x1f0] sm:$0xff] %vm633, %v2279
  %2361 = vst.msk [vmem:[#allocation2 + $0x1f8] sm:$0xff] %vm633, %v2280
  %2362 = vst.msk [vmem:[#allocation2 + $0x200] sm:$0xff] %vm633, %v2281
  %2363 = vst.msk [vmem:[#allocation2 + $0x208] sm:$0xff] %vm633, %v2282
  %2364 = vst.msk [vmem:[#allocation2 + $0x210] sm:$0xff] %vm633, %v2283
  %2365 = vst.msk [vmem:[#allocation2 + $0x218] sm:$0xff] %vm633, %v2284
  %2366 = vst.msk [vmem:[#allocation2 + $0x220] sm:$0xff] %vm633, %v2285
  %2367 = vst.msk [vmem:[#allocation2 + $0x228] sm:$0xff] %vm633, %v2286
  %2368 = vst.msk [vmem:[#allocation2 + $0x230] sm:$0xff] %vm633, %v2287
  %2369 = vst.msk [vmem:[#allocation2 + $0x238] sm:$0xff] %vm633, %v2288
  %2370 = vst.msk [vmem:[#allocation2 + $0x240] sm:$0xff] %vm633, %v2289
  %2371 = vst.msk [vmem:[#allocation2 + $0x248] sm:$0xff] %vm633, %v2290
  %2372 = vst.msk [vmem:[#allocation2 + $0x250] sm:$0xff] %vm633, %v2291
  %2373 = vst.msk [vmem:[#allocation2 + $0x258] sm:$0xff] %vm633, %v2292
  %2374 = vst.msk [vmem:[#allocation2 + $0x260] sm:$0xff] %vm633, %v2293
  %2375 = vst.msk [vmem:[#allocation2 + $0x268] sm:$0xff] %vm633, %v2294
  %2376 = vst.msk [vmem:[#allocation2 + $0x270] sm:$0xff] %vm633, %v2295
  %2377 = vst.msk [vmem:[#allocation2 + $0x278] sm:$0xff] %vm633, %v2296
  %2378 = vst.msk [vmem:[#allocation2 + $0x280] sm:$0xff] %vm633, %v2297
  %v2379 = vld [vmem:[#allocation2] sm:$0xff]
  %v2380 = vld [vmem:[#allocation2 + $0x8] sm:$0xff]
  %v2381 = vld [vmem:[#allocation2 + $0x10] sm:$0xff]
  %v2382 = vld [vmem:[#allocation2 + $0x18] sm:$0xff]
  %v2383 = vld [vmem:[#allocation2 + $0x20] sm:$0xff]
  %v2384 = vld [vmem:[#allocation2 + $0x28] sm:$0xff]
  %v2385 = vld [vmem:[#allocation2 + $0x30] sm:$0xff]
  %v2386 = vld [vmem:[#allocation2 + $0x38] sm:$0xff]
  %v2387 = vld [vmem:[#allocation2 + $0x40] sm:$0xff]
  %v2388 = vld [vmem:[#allocation2 + $0x48] sm:$0xff]
  %v2389 = vld [vmem:[#allocation2 + $0x50] sm:$0xff]
  %v2390 = vld [vmem:[#allocation2 + $0x58] sm:$0xff]
  %v2391 = vld [vmem:[#allocation2 + $0x60] sm:$0xff]
  %v2392 = vld [vmem:[#allocation2 + $0x68] sm:$0xff]
  %v2393 = vld [vmem:[#allocation2 + $0x70] sm:$0xff]
  %v2394 = vld [vmem:[#allocation2 + $0x78] sm:$0xff]
  %v2395 = vld [vmem:[#allocation2 + $0x80] sm:$0xff]
  %v2396 = vld [vmem:[#allocation2 + $0x88] sm:$0xff]
  %v2397 = vld [vmem:[#allocation2 + $0x90] sm:$0xff]
  %v2398 = vld [vmem:[#allocation2 + $0x98] sm:$0xff]
  %v2399 = vld [vmem:[#allocation2 + $0xa0] sm:$0xff]
  %v2400 = vld [vmem:[#allocation2 + $0xa8] sm:$0xff]
  %v2401 = vld [vmem:[#allocation2 + $0xb0] sm:$0xff]
  %v2402 = vld [vmem:[#allocation2 + $0xb8] sm:$0xff]
  %v2403 = vld [vmem:[#allocation2 + $0xc0] sm:$0xff]
  %v2404 = vld [vmem:[#allocation2 + $0xc8] sm:$0xff]
  %v2405 = vld [vmem:[#allocation2 + $0xd0] sm:$0xff]
  %v2406 = vld [vmem:[#allocation2 + $0xd8] sm:$0xff]
  %v2407 = vld [vmem:[#allocation2 + $0xe0] sm:$0xff]
  %v2408 = vld [vmem:[#allocation2 + $0xe8] sm:$0xff]
  %v2409 = vld [vmem:[#allocation2 + $0xf0] sm:$0xff]
  %v2410 = vld [vmem:[#allocation2 + $0xf8] sm:$0xff]
  %v2411 = vld [vmem:[#allocation2 + $0x100] sm:$0xff]
  %v2412 = vld [vmem:[#allocation2 + $0x108] sm:$0xff]
  %v2413 = vld [vmem:[#allocation2 + $0x110] sm:$0xff]
  %v2414 = vld [vmem:[#allocation2 + $0x118] sm:$0xff]
  %v2415 = vld [vmem:[#allocation2 + $0x120] sm:$0xff]
  %v2416 = vld [vmem:[#allocation2 + $0x128] sm:$0xff]
  %v2417 = vld [vmem:[#allocation2 + $0x130] sm:$0xff]
  %v2418 = vld [vmem:[#allocation2 + $0x138] sm:$0xff]
  %v2419 = vld [vmem:[#allocation2 + $0x140] sm:$0xff]
  %v2420 = vld [vmem:[#allocation2 + $0x148] sm:$0xff]
  %v2421 = vld [vmem:[#allocation2 + $0x150] sm:$0xff]
  %v2422 = vld [vmem:[#allocation2 + $0x158] sm:$0xff]
  %v2423 = vld [vmem:[#allocation2 + $0x160] sm:$0xff]
  %v2424 = vld [vmem:[#allocation2 + $0x168] sm:$0xff]
  %v2425 = vld [vmem:[#allocation2 + $0x170] sm:$0xff]
  %v2426 = vld [vmem:[#allocation2 + $0x178] sm:$0xff]
  %v2427 = vld [vmem:[#allocation2 + $0x180] sm:$0xff]
  %v2428 = vld [vmem:[#allocation2 + $0x188] sm:$0xff]
  %v2429 = vld [vmem:[#allocation2 + $0x190] sm:$0xff]
  %v2430 = vld [vmem:[#allocation2 + $0x198] sm:$0xff]
  %v2431 = vld [vmem:[#allocation2 + $0x1a0] sm:$0xff]
  %v2432 = vld [vmem:[#allocation2 + $0x1a8] sm:$0xff]
  %v2433 = vld [vmem:[#allocation2 + $0x1b0] sm:$0xff]
  %v2434 = vld [vmem:[#allocation2 + $0x1b8] sm:$0xff]
  %v2435 = vld [vmem:[#allocation2 + $0x1c0] sm:$0xff]
  %v2436 = vld [vmem:[#allocation2 + $0x1c8] sm:$0xff]
  %v2437 = vld [vmem:[#allocation2 + $0x1d0] sm:$0xff]
  %v2438 = vld [vmem:[#allocation2 + $0x1d8] sm:$0xff]
  %v2439 = vld [vmem:[#allocation2 + $0x1e0] sm:$0xff]
  %v2440 = vld [vmem:[#allocation2 + $0x1e8] sm:$0xff]
  %v2441 = vld [vmem:[#allocation2 + $0x1f0] sm:$0xff]
  %v2442 = vld [vmem:[#allocation2 + $0x1f8] sm:$0xff]
  %v2443 = vld [vmem:[#allocation2 + $0x200] sm:$0xff]
  %v2444 = vld [vmem:[#allocation2 + $0x208] sm:$0xff]
  %v2445 = vld [vmem:[#allocation2 + $0x210] sm:$0xff]
  %v2446 = vld [vmem:[#allocation2 + $0x218] sm:$0xff]
  %v2447 = vld [vmem:[#allocation2 + $0x220] sm:$0xff]
  %v2448 = vld [vmem:[#allocation2 + $0x228] sm:$0xff]
  %v2449 = vld [vmem:[#allocation2 + $0x230] sm:$0xff]
  %v2450 = vld [vmem:[#allocation2 + $0x238] sm:$0xff]
  %v2451 = vld [vmem:[#allocation2 + $0x240] sm:$0xff]
  %v2452 = vld [vmem:[#allocation2 + $0x248] sm:$0xff]
  %v2453 = vld [vmem:[#allocation2 + $0x250] sm:$0xff]
  %v2454 = vld [vmem:[#allocation2 + $0x258] sm:$0xff]
  %v2455 = vld [vmem:[#allocation2 + $0x260] sm:$0xff]
  %v2456 = vld [vmem:[#allocation2 + $0x268] sm:$0xff]
  %v2457 = vld [vmem:[#allocation2 + $0x270] sm:$0xff]
  %v2458 = vld [vmem:[#allocation2 + $0x278] sm:$0xff]
  %v2459 = vld [vmem:[#allocation2 + $0x280] sm:$0xff]
  %v2460 = vld [vmem:[%s0 + $0x12] sm:$0xff]
  %v2461 = vld [vmem:[%s0 + $0x1a] sm:$0xff]
  %v2462 = vld [vmem:[%s0 + $0x22] sm:$0xff]
  %v2463 = vld [vmem:[%s0 + $0x2a] sm:$0xff]
  %v2464 = vld [vmem:[%s0 + $0x32] sm:$0xff]
  %v2465 = vld [vmem:[%s0 + $0x3a] sm:$0xff]
  %v2466 = vld [vmem:[%s0 + $0x42] sm:$0xff]
  %v2467 = vld [vmem:[%s0 + $0x4a] sm:$0xff]
  %v2468 = vld [vmem:[%s0 + $0x52] sm:$0xff]
  %v2469 = vld [vmem:[%s0 + $0x5a] sm:$0xff]
  %v2470 = vld [vmem:[%s0 + $0x62] sm:$0xff]
  %v2471 = vld [vmem:[%s0 + $0x6a] sm:$0xff]
  %v2472 = vld [vmem:[%s0 + $0x72] sm:$0xff]
  %v2473 = vld [vmem:[%s0 + $0x7a] sm:$0xff]
  %v2474 = vld [vmem:[%s0 + $0x82] sm:$0xff]
  %v2475 = vld [vmem:[%s0 + $0x8a] sm:$0xff]
  %v2476 = vld [vmem:[%s0 + $0x92] sm:$0xff]
  %v2477 = vld [vmem:[%s0 + $0x9a] sm:$0xff]
  %v2478 = vld [vmem:[%s0 + $0xa2] sm:$0xff]
  %v2479 = vld [vmem:[%s0 + $0xaa] sm:$0xff]
  %v2480 = vld [vmem:[%s0 + $0xb2] sm:$0xff]
  %v2481 = vld [vmem:[%s0 + $0xba] sm:$0xff]
  %v2482 = vld [vmem:[%s0 + $0xc2] sm:$0xff]
  %v2483 = vld [vmem:[%s0 + $0xca] sm:$0xff]
  %v2484 = vld [vmem:[%s0 + $0xd2] sm:$0xff]
  %v2485 = vld [vmem:[%s0 + $0xda] sm:$0xff]
  %v2486 = vld [vmem:[%s0 + $0xe2] sm:$0xff]
  %v2487 = vld [vmem:[%s0 + $0xea] sm:$0xff]
  %v2488 = vld [vmem:[%s0 + $0xf2] sm:$0xff]
  %v2489 = vld [vmem:[%s0 + $0xfa] sm:$0xff]
  %v2490 = vld [vmem:[%s0 + $0x102] sm:$0xff]
  %v2491 = vld [vmem:[%s0 + $0x10a] sm:$0xff]
  %v2492 = vld [vmem:[%s0 + $0x112] sm:$0xff]
  %v2493 = vld [vmem:[%s0 + $0x11a] sm:$0xff]
  %v2494 = vld [vmem:[%s0 + $0x122] sm:$0xff]
  %v2495 = vld [vmem:[%s0 + $0x12a] sm:$0xff]
  %v2496 = vld [vmem:[%s0 + $0x132] sm:$0xff]
  %v2497 = vld [vmem:[%s0 + $0x13a] sm:$0xff]
  %v2498 = vld [vmem:[%s0 + $0x142] sm:$0xff]
  %v2499 = vld [vmem:[%s0 + $0x14a] sm:$0xff]
  %v2500 = vld [vmem:[%s0 + $0x152] sm:$0xff]
  %v2501 = vld [vmem:[%s0 + $0x15a] sm:$0xff]
  %v2502 = vld [vmem:[%s0 + $0x162] sm:$0xff]
  %v2503 = vld [vmem:[%s0 + $0x16a] sm:$0xff]
  %v2504 = vld [vmem:[%s0 + $0x172] sm:$0xff]
  %v2505 = vld [vmem:[%s0 + $0x17a] sm:$0xff]
  %v2506 = vld [vmem:[%s0 + $0x182] sm:$0xff]
  %v2507 = vld [vmem:[%s0 + $0x18a] sm:$0xff]
  %v2508 = vld [vmem:[%s0 + $0x192] sm:$0xff]
  %v2509 = vld [vmem:[%s0 + $0x19a] sm:$0xff]
  %v2510 = vld [vmem:[%s0 + $0x1a2] sm:$0xff]
  %v2511 = vld [vmem:[%s0 + $0x1aa] sm:$0xff]
  %v2512 = vld [vmem:[%s0 + $0x1b2] sm:$0xff]
  %v2513 = vld [vmem:[%s0 + $0x1ba] sm:$0xff]
  %v2514 = vld [vmem:[%s0 + $0x1c2] sm:$0xff]
  %v2515 = vld [vmem:[%s0 + $0x1ca] sm:$0xff]
  %v2516 = vld [vmem:[%s0 + $0x1d2] sm:$0xff]
  %v2517 = vld [vmem:[%s0 + $0x1da] sm:$0xff]
  %v2518 = vld [vmem:[%s0 + $0x1e2] sm:$0xff]
  %v2519 = vld [vmem:[%s0 + $0x1ea] sm:$0xff]
  %v2520 = vld [vmem:[%s0 + $0x1f2] sm:$0xff]
  %v2521 = vld [vmem:[%s0 + $0x1fa] sm:$0xff]
  %v2522 = vld [vmem:[%s0 + $0x202] sm:$0xff]
  %v2523 = vld [vmem:[%s0 + $0x20a] sm:$0xff]
  %v2524 = vld [vmem:[%s0 + $0x212] sm:$0xff]
  %v2525 = vld [vmem:[%s0 + $0x21a] sm:$0xff]
  %v2526 = vld [vmem:[%s0 + $0x222] sm:$0xff]
  %v2527 = vld [vmem:[%s0 + $0x22a] sm:$0xff]
  %v2528 = vld [vmem:[%s0 + $0x232] sm:$0xff]
  %v2529 = vld [vmem:[%s0 + $0x23a] sm:$0xff]
  %v2530 = vld [vmem:[%s0 + $0x242] sm:$0xff]
  %v2531 = vld [vmem:[%s0 + $0x24a] sm:$0xff]
  %v2532 = vld [vmem:[%s0 + $0x252] sm:$0xff]
  %v2533 = vld [vmem:[%s0 + $0x25a] sm:$0xff]
  %v2534 = vld [vmem:[%s0 + $0x262] sm:$0xff]
  %v2535 = vld [vmem:[%s0 + $0x26a] sm:$0xff]
  %v2536 = vld [vmem:[%s0 + $0x272] sm:$0xff]
  %v2537 = vld [vmem:[%s0 + $0x27a] sm:$0xff]
  %v2538 = vld [vmem:[%s0 + $0x282] sm:$0xff]
  %v2539 = vld [vmem:[%s0 + $0x28a] sm:$0xff]
  %v2540 = vld [vmem:[%s0 + $0x292] sm:$0xff]
  %s2541 = scalar_lea.vmem %s1, 12
  %v2542 = vld [vmem:[%s2541] sm:$0xf]
  %v2544 = vsel %vm125, %v2460, 0
  %v2547 = vsel %vm125, %v2461, 0
  %v2550 = vsel %vm125, %v2462, 0
  %v2553 = vsel %vm125, %v2463, 0
  %v2556 = vsel %vm125, %v2464, 0
  %v2559 = vsel %vm125, %v2465, 0
  %v2562 = vsel %vm125, %v2466, 0
  %v2565 = vsel %vm125, %v2467, 0
  %v2568 = vsel %vm125, %v2468, 0
  %v2571 = vsel %vm125, %v2469, 0
  %v2574 = vsel %vm125, %v2470, 0
  %v2577 = vsel %vm125, %v2471, 0
  %v2580 = vsel %vm125, %v2472, 0
  %v2583 = vsel %vm125, %v2473, 0
  %v2586 = vsel %vm125, %v2474, 0
  %v2589 = vsel %vm125, %v2475, 0
  %v2592 = vsel %vm125, %v2476, 0
  %v2595 = vsel %vm125, %v2477, 0
  %v2598 = vsel %vm125, %v2478, 0
  %v2601 = vsel %vm125, %v2479, 0
  %v2604 = vsel %vm125, %v2480, 0
  %v2607 = vsel %vm125, %v2481, 0
  %v2610 = vsel %vm125, %v2482, 0
  %v2613 = vsel %vm125, %v2483, 0
  %v2616 = vsel %vm125, %v2484, 0
  %v2619 = vsel %vm125, %v2485, 0
  %v2622 = vsel %vm125, %v2486, 0
  %v2625 = vsel %vm125, %v2487, 0
  %v2628 = vsel %vm125, %v2488, 0
  %v2631 = vsel %vm125, %v2489, 0
  %v2634 = vsel %vm125, %v2490, 0
  %v2637 = vsel %vm125, %v2491, 0
  %v2640 = vsel %vm125, %v2492, 0
  %v2643 = vsel %vm125, %v2493, 0
  %v2646 = vsel %vm125, %v2494, 0
  %v2649 = vsel %vm125, %v2495, 0
  %v2652 = vsel %vm125, %v2496, 0
  %v2655 = vsel %vm125, %v2497, 0
  %v2658 = vsel %vm125, %v2498, 0
  %v2661 = vsel %vm125, %v2499, 0
  %v2664 = vsel %vm125, %v2500, 0
  %v2667 = vsel %vm125, %v2501, 0
  %v2670 = vsel %vm125, %v2502, 0
  %v2673 = vsel %vm125, %v2503, 0
  %v2676 = vsel %vm125, %v2504, 0
  %v2679 = vsel %vm125, %v2505, 0
  %v2682 = vsel %vm125, %v2506, 0
  %v2685 = vsel %vm125, %v2507, 0
  %v2688 = vsel %vm125, %v2508, 0
  %v2691 = vsel %vm125, %v2509, 0
  %v2694 = vsel %vm125, %v2510, 0
  %v2697 = vsel %vm125, %v2511, 0
  %v2700 = vsel %vm125, %v2512, 0
  %v2703 = vsel %vm125, %v2513, 0
  %v2706 = vsel %vm125, %v2514, 0
  %v2709 = vsel %vm125, %v2515, 0
  %v2712 = vsel %vm125, %v2516, 0
  %v2715 = vsel %vm125, %v2517, 0
  %v2718 = vsel %vm125, %v2518, 0
  %v2721 = vsel %vm125, %v2519, 0
  %v2724 = vsel %vm125, %v2520, 0
  %v2727 = vsel %vm125, %v2521, 0
  %v2730 = vsel %vm125, %v2522, 0
  %v2733 = vsel %vm125, %v2523, 0
  %v2736 = vsel %vm125, %v2524, 0
  %v2739 = vsel %vm125, %v2525, 0
  %v2742 = vsel %vm125, %v2526, 0
  %v2745 = vsel %vm125, %v2527, 0
  %v2748 = vsel %vm125, %v2528, 0
  %v2751 = vsel %vm125, %v2529, 0
  %v2754 = vsel %vm125, %v2530, 0
  %v2757 = vsel %vm125, %v2531, 0
  %v2760 = vsel %vm125, %v2532, 0
  %v2763 = vsel %vm125, %v2533, 0
  %v2766 = vsel %vm125, %v2534, 0
  %v2769 = vsel %vm125, %v2535, 0
  %v2772 = vsel %vm125, %v2536, 0
  %v2775 = vsel %vm125, %v2537, 0
  %v2778 = vsel %vm125, %v2538, 0
  %v2781 = vsel %vm125, %v2539, 0
  %v2784 = vsel %vm125, %v2540, 0
  %v2787 = vsel %vm369, %v2542, 0
  %2789 = vmatpush.msra.mxu0 0.0
  %2790 = vmatpush.msra.mxu0 0.0
  %2791 = vmatpush.msra.mxu0 0.0
  %2792 = vmatpush.msra.mxu0 0.0
  %2793 = vmatpush.msra.mxu0 0.0
  %2794 = vmatpush.msra.mxu0 0.0
  %2795 = vmatpush.msra.mxu0 0.0
  %2796 = vmatpush.msra.mxu0 0.0
  %2797 = vmatpush.msra.mxu0 0.0
  %2798 = vmatpush.msra.mxu0 0.0
  %2799 = vmatpush.msra.mxu0 0.0
  %2800 = vmatpush.msra.mxu0 0.0
  %2801 = vmatpush.msra.mxu0 0.0
  %2802 = vmatpush.msra.mxu0 0.0
  %2803 = vmatpush.msra.mxu0 0.0
  %2804 = vmatpush.msra.mxu0 %v2787
  %2805 = vmatmul.f32.gmra.mxu0 %v2544
  %v2806 = vpop.f32.mrf.mxu0
  %v2807 = vadd.f32 0.0, %v2806
  %2808 = vmatmul.f32.gmra.mxu0 %v2547
  %v2809 = vpop.f32.mrf.mxu0
  %v2810 = vadd.f32 0.0, %v2809
  %2811 = vmatmul.f32.gmra.mxu0 %v2550
  %v2812 = vpop.f32.mrf.mxu0
  %v2813 = vadd.f32 0.0, %v2812
  %2814 = vmatmul.f32.gmra.mxu0 %v2553
  %v2815 = vpop.f32.mrf.mxu0
  %v2816 = vadd.f32 0.0, %v2815
  %2817 = vmatmul.f32.gmra.mxu0 %v2556
  %v2818 = vpop.f32.mrf.mxu0
  %v2819 = vadd.f32 0.0, %v2818
  %2820 = vmatmul.f32.gmra.mxu0 %v2559
  %v2821 = vpop.f32.mrf.mxu0
  %v2822 = vadd.f32 0.0, %v2821
  %2823 = vmatmul.f32.gmra.mxu0 %v2562
  %v2824 = vpop.f32.mrf.mxu0
  %v2825 = vadd.f32 0.0, %v2824
  %2826 = vmatmul.f32.gmra.mxu0 %v2565
  %v2827 = vpop.f32.mrf.mxu0
  %v2828 = vadd.f32 0.0, %v2827
  %2829 = vmatmul.f32.gmra.mxu0 %v2568
  %v2830 = vpop.f32.mrf.mxu0
  %v2831 = vadd.f32 0.0, %v2830
  %2832 = vmatmul.f32.gmra.mxu0 %v2571
  %v2833 = vpop.f32.mrf.mxu0
  %v2834 = vadd.f32 0.0, %v2833
  %2835 = vmatmul.f32.gmra.mxu0 %v2574
  %v2836 = vpop.f32.mrf.mxu0
  %v2837 = vadd.f32 0.0, %v2836
  %2838 = vmatmul.f32.gmra.mxu0 %v2577
  %v2839 = vpop.f32.mrf.mxu0
  %v2840 = vadd.f32 0.0, %v2839
  %2841 = vmatmul.f32.gmra.mxu0 %v2580
  %v2842 = vpop.f32.mrf.mxu0
  %v2843 = vadd.f32 0.0, %v2842
  %2844 = vmatmul.f32.gmra.mxu0 %v2583
  %v2845 = vpop.f32.mrf.mxu0
  %v2846 = vadd.f32 0.0, %v2845
  %2847 = vmatmul.f32.gmra.mxu0 %v2586
  %v2848 = vpop.f32.mrf.mxu0
  %v2849 = vadd.f32 0.0, %v2848
  %2850 = vmatmul.f32.gmra.mxu0 %v2589
  %v2851 = vpop.f32.mrf.mxu0
  %v2852 = vadd.f32 0.0, %v2851
  %2853 = vmatmul.f32.gmra.mxu0 %v2592
  %v2854 = vpop.f32.mrf.mxu0
  %v2855 = vadd.f32 0.0, %v2854
  %2856 = vmatmul.f32.gmra.mxu0 %v2595
  %v2857 = vpop.f32.mrf.mxu0
  %v2858 = vadd.f32 0.0, %v2857
  %2859 = vmatmul.f32.gmra.mxu0 %v2598
  %v2860 = vpop.f32.mrf.mxu0
  %v2861 = vadd.f32 0.0, %v2860
  %2862 = vmatmul.f32.gmra.mxu0 %v2601
  %v2863 = vpop.f32.mrf.mxu0
  %v2864 = vadd.f32 0.0, %v2863
  %2865 = vmatmul.f32.gmra.mxu0 %v2604
  %v2866 = vpop.f32.mrf.mxu0
  %v2867 = vadd.f32 0.0, %v2866
  %2868 = vmatmul.f32.gmra.mxu0 %v2607
  %v2869 = vpop.f32.mrf.mxu0
  %v2870 = vadd.f32 0.0, %v2869
  %2871 = vmatmul.f32.gmra.mxu0 %v2610
  %v2872 = vpop.f32.mrf.mxu0
  %v2873 = vadd.f32 0.0, %v2872
  %2874 = vmatmul.f32.gmra.mxu0 %v2613
  %v2875 = vpop.f32.mrf.mxu0
  %v2876 = vadd.f32 0.0, %v2875
  %2877 = vmatmul.f32.gmra.mxu0 %v2616
  %v2878 = vpop.f32.mrf.mxu0
  %v2879 = vadd.f32 0.0, %v2878
  %2880 = vmatmul.f32.gmra.mxu0 %v2619
  %v2881 = vpop.f32.mrf.mxu0
  %v2882 = vadd.f32 0.0, %v2881
  %2883 = vmatmul.f32.gmra.mxu0 %v2622
  %v2884 = vpop.f32.mrf.mxu0
  %v2885 = vadd.f32 0.0, %v2884
  %2886 = vmatmul.f32.gmra.mxu0 %v2625
  %v2887 = vpop.f32.mrf.mxu0
  %v2888 = vadd.f32 0.0, %v2887
  %2889 = vmatmul.f32.gmra.mxu0 %v2628
  %v2890 = vpop.f32.mrf.mxu0
  %v2891 = vadd.f32 0.0, %v2890
  %2892 = vmatmul.f32.gmra.mxu0 %v2631
  %v2893 = vpop.f32.mrf.mxu0
  %v2894 = vadd.f32 0.0, %v2893
  %2895 = vmatmul.f32.gmra.mxu0 %v2634
  %v2896 = vpop.f32.mrf.mxu0
  %v2897 = vadd.f32 0.0, %v2896
  %2898 = vmatmul.f32.gmra.mxu0 %v2637
  %v2899 = vpop.f32.mrf.mxu0
  %v2900 = vadd.f32 0.0, %v2899
  %2901 = vmatmul.f32.gmra.mxu0 %v2640
  %v2902 = vpop.f32.mrf.mxu0
  %v2903 = vadd.f32 0.0, %v2902
  %2904 = vmatmul.f32.gmra.mxu0 %v2643
  %v2905 = vpop.f32.mrf.mxu0
  %v2906 = vadd.f32 0.0, %v2905
  %2907 = vmatmul.f32.gmra.mxu0 %v2646
  %v2908 = vpop.f32.mrf.mxu0
  %v2909 = vadd.f32 0.0, %v2908
  %2910 = vmatmul.f32.gmra.mxu0 %v2649
  %v2911 = vpop.f32.mrf.mxu0
  %v2912 = vadd.f32 0.0, %v2911
  %2913 = vmatmul.f32.gmra.mxu0 %v2652
  %v2914 = vpop.f32.mrf.mxu0
  %v2915 = vadd.f32 0.0, %v2914
  %2916 = vmatmul.f32.gmra.mxu0 %v2655
  %v2917 = vpop.f32.mrf.mxu0
  %v2918 = vadd.f32 0.0, %v2917
  %2919 = vmatmul.f32.gmra.mxu0 %v2658
  %v2920 = vpop.f32.mrf.mxu0
  %v2921 = vadd.f32 0.0, %v2920
  %2922 = vmatmul.f32.gmra.mxu0 %v2661
  %v2923 = vpop.f32.mrf.mxu0
  %v2924 = vadd.f32 0.0, %v2923
  %2925 = vmatmul.f32.gmra.mxu0 %v2664
  %v2926 = vpop.f32.mrf.mxu0
  %v2927 = vadd.f32 0.0, %v2926
  %2928 = vmatmul.f32.gmra.mxu0 %v2667
  %v2929 = vpop.f32.mrf.mxu0
  %v2930 = vadd.f32 0.0, %v2929
  %2931 = vmatmul.f32.gmra.mxu0 %v2670
  %v2932 = vpop.f32.mrf.mxu0
  %v2933 = vadd.f32 0.0, %v2932
  %2934 = vmatmul.f32.gmra.mxu0 %v2673
  %v2935 = vpop.f32.mrf.mxu0
  %v2936 = vadd.f32 0.0, %v2935
  %2937 = vmatmul.f32.gmra.mxu0 %v2676
  %v2938 = vpop.f32.mrf.mxu0
  %v2939 = vadd.f32 0.0, %v2938
  %2940 = vmatmul.f32.gmra.mxu0 %v2679
  %v2941 = vpop.f32.mrf.mxu0
  %v2942 = vadd.f32 0.0, %v2941
  %2943 = vmatmul.f32.gmra.mxu0 %v2682
  %v2944 = vpop.f32.mrf.mxu0
  %v2945 = vadd.f32 0.0, %v2944
  %2946 = vmatmul.f32.gmra.mxu0 %v2685
  %v2947 = vpop.f32.mrf.mxu0
  %v2948 = vadd.f32 0.0, %v2947
  %2949 = vmatmul.f32.gmra.mxu0 %v2688
  %v2950 = vpop.f32.mrf.mxu0
  %v2951 = vadd.f32 0.0, %v2950
  %2952 = vmatmul.f32.gmra.mxu0 %v2691
  %v2953 = vpop.f32.mrf.mxu0
  %v2954 = vadd.f32 0.0, %v2953
  %2955 = vmatmul.f32.gmra.mxu0 %v2694
  %v2956 = vpop.f32.mrf.mxu0
  %v2957 = vadd.f32 0.0, %v2956
  %2958 = vmatmul.f32.gmra.mxu0 %v2697
  %v2959 = vpop.f32.mrf.mxu0
  %v2960 = vadd.f32 0.0, %v2959
  %2961 = vmatmul.f32.gmra.mxu0 %v2700
  %v2962 = vpop.f32.mrf.mxu0
  %v2963 = vadd.f32 0.0, %v2962
  %2964 = vmatmul.f32.gmra.mxu0 %v2703
  %v2965 = vpop.f32.mrf.mxu0
  %v2966 = vadd.f32 0.0, %v2965
  %2967 = vmatmul.f32.gmra.mxu0 %v2706
  %v2968 = vpop.f32.mrf.mxu0
  %v2969 = vadd.f32 0.0, %v2968
  %2970 = vmatmul.f32.gmra.mxu0 %v2709
  %v2971 = vpop.f32.mrf.mxu0
  %v2972 = vadd.f32 0.0, %v2971
  %2973 = vmatmul.f32.gmra.mxu0 %v2712
  %v2974 = vpop.f32.mrf.mxu0
  %v2975 = vadd.f32 0.0, %v2974
  %2976 = vmatmul.f32.gmra.mxu0 %v2715
  %v2977 = vpop.f32.mrf.mxu0
  %v2978 = vadd.f32 0.0, %v2977
  %2979 = vmatmul.f32.gmra.mxu0 %v2718
  %v2980 = vpop.f32.mrf.mxu0
  %v2981 = vadd.f32 0.0, %v2980
  %2982 = vmatmul.f32.gmra.mxu0 %v2721
  %v2983 = vpop.f32.mrf.mxu0
  %v2984 = vadd.f32 0.0, %v2983
  %2985 = vmatmul.f32.gmra.mxu0 %v2724
  %v2986 = vpop.f32.mrf.mxu0
  %v2987 = vadd.f32 0.0, %v2986
  %2988 = vmatmul.f32.gmra.mxu0 %v2727
  %v2989 = vpop.f32.mrf.mxu0
  %v2990 = vadd.f32 0.0, %v2989
  %2991 = vmatmul.f32.gmra.mxu0 %v2730
  %v2992 = vpop.f32.mrf.mxu0
  %v2993 = vadd.f32 0.0, %v2992
  %2994 = vmatmul.f32.gmra.mxu0 %v2733
  %v2995 = vpop.f32.mrf.mxu0
  %v2996 = vadd.f32 0.0, %v2995
  %2997 = vmatmul.f32.gmra.mxu0 %v2736
  %v2998 = vpop.f32.mrf.mxu0
  %v2999 = vadd.f32 0.0, %v2998
  %3000 = vmatmul.f32.gmra.mxu0 %v2739
  %v3001 = vpop.f32.mrf.mxu0
  %v3002 = vadd.f32 0.0, %v3001
  %3003 = vmatmul.f32.gmra.mxu0 %v2742
  %v3004 = vpop.f32.mrf.mxu0
  %v3005 = vadd.f32 0.0, %v3004
  %3006 = vmatmul.f32.gmra.mxu0 %v2745
  %v3007 = vpop.f32.mrf.mxu0
  %v3008 = vadd.f32 0.0, %v3007
  %3009 = vmatmul.f32.gmra.mxu0 %v2748
  %v3010 = vpop.f32.mrf.mxu0
  %v3011 = vadd.f32 0.0, %v3010
  %3012 = vmatmul.f32.gmra.mxu0 %v2751
  %v3013 = vpop.f32.mrf.mxu0
  %v3014 = vadd.f32 0.0, %v3013
  %3015 = vmatmul.f32.gmra.mxu0 %v2754
  %v3016 = vpop.f32.mrf.mxu0
  %v3017 = vadd.f32 0.0, %v3016
  %3018 = vmatmul.f32.gmra.mxu0 %v2757
  %v3019 = vpop.f32.mrf.mxu0
  %v3020 = vadd.f32 0.0, %v3019
  %3021 = vmatmul.f32.gmra.mxu0 %v2760
  %v3022 = vpop.f32.mrf.mxu0
  %v3023 = vadd.f32 0.0, %v3022
  %3024 = vmatmul.f32.gmra.mxu0 %v2763
  %v3025 = vpop.f32.mrf.mxu0
  %v3026 = vadd.f32 0.0, %v3025
  %3027 = vmatmul.f32.gmra.mxu0 %v2766
  %v3028 = vpop.f32.mrf.mxu0
  %v3029 = vadd.f32 0.0, %v3028
  %3030 = vmatmul.f32.gmra.mxu0 %v2769
  %v3031 = vpop.f32.mrf.mxu0
  %v3032 = vadd.f32 0.0, %v3031
  %3033 = vmatmul.f32.gmra.mxu0 %v2772
  %v3034 = vpop.f32.mrf.mxu0
  %v3035 = vadd.f32 0.0, %v3034
  %3036 = vmatmul.f32.gmra.mxu0 %v2775
  %v3037 = vpop.f32.mrf.mxu0
  %v3038 = vadd.f32 0.0, %v3037
  %3039 = vmatmul.f32.gmra.mxu0 %v2778
  %v3040 = vpop.f32.mrf.mxu0
  %v3041 = vadd.f32 0.0, %v3040
  %3042 = vmatmul.f32.gmra.mxu0 %v2781
  %v3043 = vpop.f32.mrf.mxu0
  %v3044 = vadd.f32 0.0, %v3043
  %3045 = vmatmul.f32.gmra.mxu0 %v2784
  %v3046 = vpop.f32.mrf.mxu0
  %v3047 = vadd.f32 0.0, %v3046
  %3048 = vdwg.mxu0
  %v3049 = vadd.f32 %v2379, %v2807
  %v3050 = vadd.f32 %v2380, %v2810
  %v3051 = vadd.f32 %v2381, %v2813
  %v3052 = vadd.f32 %v2382, %v2816
  %v3053 = vadd.f32 %v2383, %v2819
  %v3054 = vadd.f32 %v2384, %v2822
  %v3055 = vadd.f32 %v2385, %v2825
  %v3056 = vadd.f32 %v2386, %v2828
  %v3057 = vadd.f32 %v2387, %v2831
  %v3058 = vadd.f32 %v2388, %v2834
  %v3059 = vadd.f32 %v2389, %v2837
  %v3060 = vadd.f32 %v2390, %v2840
  %v3061 = vadd.f32 %v2391, %v2843
  %v3062 = vadd.f32 %v2392, %v2846
  %v3063 = vadd.f32 %v2393, %v2849
  %v3064 = vadd.f32 %v2394, %v2852
  %v3065 = vadd.f32 %v2395, %v2855
  %v3066 = vadd.f32 %v2396, %v2858
  %v3067 = vadd.f32 %v2397, %v2861
  %v3068 = vadd.f32 %v2398, %v2864
  %v3069 = vadd.f32 %v2399, %v2867
  %v3070 = vadd.f32 %v2400, %v2870
  %v3071 = vadd.f32 %v2401, %v2873
  %v3072 = vadd.f32 %v2402, %v2876
  %v3073 = vadd.f32 %v2403, %v2879
  %v3074 = vadd.f32 %v2404, %v2882
  %v3075 = vadd.f32 %v2405, %v2885
  %v3076 = vadd.f32 %v2406, %v2888
  %v3077 = vadd.f32 %v2407, %v2891
  %v3078 = vadd.f32 %v2408, %v2894
  %v3079 = vadd.f32 %v2409, %v2897
  %v3080 = vadd.f32 %v2410, %v2900
  %v3081 = vadd.f32 %v2411, %v2903
  %v3082 = vadd.f32 %v2412, %v2906
  %v3083 = vadd.f32 %v2413, %v2909
  %v3084 = vadd.f32 %v2414, %v2912
  %v3085 = vadd.f32 %v2415, %v2915
  %v3086 = vadd.f32 %v2416, %v2918
  %v3087 = vadd.f32 %v2417, %v2921
  %v3088 = vadd.f32 %v2418, %v2924
  %v3089 = vadd.f32 %v2419, %v2927
  %v3090 = vadd.f32 %v2420, %v2930
  %v3091 = vadd.f32 %v2421, %v2933
  %v3092 = vadd.f32 %v2422, %v2936
  %v3093 = vadd.f32 %v2423, %v2939
  %v3094 = vadd.f32 %v2424, %v2942
  %v3095 = vadd.f32 %v2425, %v2945
  %v3096 = vadd.f32 %v2426, %v2948
  %v3097 = vadd.f32 %v2427, %v2951
  %v3098 = vadd.f32 %v2428, %v2954
  %v3099 = vadd.f32 %v2429, %v2957
  %v3100 = vadd.f32 %v2430, %v2960
  %v3101 = vadd.f32 %v2431, %v2963
  %v3102 = vadd.f32 %v2432, %v2966
  %v3103 = vadd.f32 %v2433, %v2969
  %v3104 = vadd.f32 %v2434, %v2972
  %v3105 = vadd.f32 %v2435, %v2975
  %v3106 = vadd.f32 %v2436, %v2978
  %v3107 = vadd.f32 %v2437, %v2981
  %v3108 = vadd.f32 %v2438, %v2984
  %v3109 = vadd.f32 %v2439, %v2987
  %v3110 = vadd.f32 %v2440, %v2990
  %v3111 = vadd.f32 %v2441, %v2993
  %v3112 = vadd.f32 %v2442, %v2996
  %v3113 = vadd.f32 %v2443, %v2999
  %v3114 = vadd.f32 %v2444, %v3002
  %v3115 = vadd.f32 %v2445, %v3005
  %v3116 = vadd.f32 %v2446, %v3008
  %v3117 = vadd.f32 %v2447, %v3011
  %v3118 = vadd.f32 %v2448, %v3014
  %v3119 = vadd.f32 %v2449, %v3017
  %v3120 = vadd.f32 %v2450, %v3020
  %v3121 = vadd.f32 %v2451, %v3023
  %v3122 = vadd.f32 %v2452, %v3026
  %v3123 = vadd.f32 %v2453, %v3029
  %v3124 = vadd.f32 %v2454, %v3032
  %v3125 = vadd.f32 %v2455, %v3035
  %v3126 = vadd.f32 %v2456, %v3038
  %v3127 = vadd.f32 %v2457, %v3041
  %v3128 = vadd.f32 %v2458, %v3044
  %v3129 = vadd.f32 %v2459, %v3047
  %3130 = vst.msk [vmem:[#allocation2] sm:$0xff] %vm633, %v3049
  %3131 = vst.msk [vmem:[#allocation2 + $0x8] sm:$0xff] %vm633, %v3050
  %3132 = vst.msk [vmem:[#allocation2 + $0x10] sm:$0xff] %vm633, %v3051
  %3133 = vst.msk [vmem:[#allocation2 + $0x18] sm:$0xff] %vm633, %v3052
  %3134 = vst.msk [vmem:[#allocation2 + $0x20] sm:$0xff] %vm633, %v3053
  %3135 = vst.msk [vmem:[#allocation2 + $0x28] sm:$0xff] %vm633, %v3054
  %3136 = vst.msk [vmem:[#allocation2 + $0x30] sm:$0xff] %vm633, %v3055
  %3137 = vst.msk [vmem:[#allocation2 + $0x38] sm:$0xff] %vm633, %v3056
  %3138 = vst.msk [vmem:[#allocation2 + $0x40] sm:$0xff] %vm633, %v3057
  %3139 = vst.msk [vmem:[#allocation2 + $0x48] sm:$0xff] %vm633, %v3058
  %3140 = vst.msk [vmem:[#allocation2 + $0x50] sm:$0xff] %vm633, %v3059
  %3141 = vst.msk [vmem:[#allocation2 + $0x58] sm:$0xff] %vm633, %v3060
  %3142 = vst.msk [vmem:[#allocation2 + $0x60] sm:$0xff] %vm633, %v3061
  %3143 = vst.msk [vmem:[#allocation2 + $0x68] sm:$0xff] %vm633, %v3062
  %3144 = vst.msk [vmem:[#allocation2 + $0x70] sm:$0xff] %vm633, %v3063
  %3145 = vst.msk [vmem:[#allocation2 + $0x78] sm:$0xff] %vm633, %v3064
  %3146 = vst.msk [vmem:[#allocation2 + $0x80] sm:$0xff] %vm633, %v3065
  %3147 = vst.msk [vmem:[#allocation2 + $0x88] sm:$0xff] %vm633, %v3066
  %3148 = vst.msk [vmem:[#allocation2 + $0x90] sm:$0xff] %vm633, %v3067
  %3149 = vst.msk [vmem:[#allocation2 + $0x98] sm:$0xff] %vm633, %v3068
  %3150 = vst.msk [vmem:[#allocation2 + $0xa0] sm:$0xff] %vm633, %v3069
  %3151 = vst.msk [vmem:[#allocation2 + $0xa8] sm:$0xff] %vm633, %v3070
  %3152 = vst.msk [vmem:[#allocation2 + $0xb0] sm:$0xff] %vm633, %v3071
  %3153 = vst.msk [vmem:[#allocation2 + $0xb8] sm:$0xff] %vm633, %v3072
  %3154 = vst.msk [vmem:[#allocation2 + $0xc0] sm:$0xff] %vm633, %v3073
  %3155 = vst.msk [vmem:[#allocation2 + $0xc8] sm:$0xff] %vm633, %v3074
  %3156 = vst.msk [vmem:[#allocation2 + $0xd0] sm:$0xff] %vm633, %v3075
  %3157 = vst.msk [vmem:[#allocation2 + $0xd8] sm:$0xff] %vm633, %v3076
  %3158 = vst.msk [vmem:[#allocation2 + $0xe0] sm:$0xff] %vm633, %v3077
  %3159 = vst.msk [vmem:[#allocation2 + $0xe8] sm:$0xff] %vm633, %v3078
  %3160 = vst.msk [vmem:[#allocation2 + $0xf0] sm:$0xff] %vm633, %v3079
  %3161 = vst.msk [vmem:[#allocation2 + $0xf8] sm:$0xff] %vm633, %v3080
  %3162 = vst.msk [vmem:[#allocation2 + $0x100] sm:$0xff] %vm633, %v3081
  %3163 = vst.msk [vmem:[#allocation2 + $0x108] sm:$0xff] %vm633, %v3082
  %3164 = vst.msk [vmem:[#allocation2 + $0x110] sm:$0xff] %vm633, %v3083
  %3165 = vst.msk [vmem:[#allocation2 + $0x118] sm:$0xff] %vm633, %v3084
  %3166 = vst.msk [vmem:[#allocation2 + $0x120] sm:$0xff] %vm633, %v3085
  %3167 = vst.msk [vmem:[#allocation2 + $0x128] sm:$0xff] %vm633, %v3086
  %3168 = vst.msk [vmem:[#allocation2 + $0x130] sm:$0xff] %vm633, %v3087
  %3169 = vst.msk [vmem:[#allocation2 + $0x138] sm:$0xff] %vm633, %v3088
  %3170 = vst.msk [vmem:[#allocation2 + $0x140] sm:$0xff] %vm633, %v3089
  %3171 = vst.msk [vmem:[#allocation2 + $0x148] sm:$0xff] %vm633, %v3090
  %3172 = vst.msk [vmem:[#allocation2 + $0x150] sm:$0xff] %vm633, %v3091
  %3173 = vst.msk [vmem:[#allocation2 + $0x158] sm:$0xff] %vm633, %v3092
  %3174 = vst.msk [vmem:[#allocation2 + $0x160] sm:$0xff] %vm633, %v3093
  %3175 = vst.msk [vmem:[#allocation2 + $0x168] sm:$0xff] %vm633, %v3094
  %3176 = vst.msk [vmem:[#allocation2 + $0x170] sm:$0xff] %vm633, %v3095
  %3177 = vst.msk [vmem:[#allocation2 + $0x178] sm:$0xff] %vm633, %v3096
  %3178 = vst.msk [vmem:[#allocation2 + $0x180] sm:$0xff] %vm633, %v3097
  %3179 = vst.msk [vmem:[#allocation2 + $0x188] sm:$0xff] %vm633, %v3098
  %3180 = vst.msk [vmem:[#allocation2 + $0x190] sm:$0xff] %vm633, %v3099
  %3181 = vst.msk [vmem:[#allocation2 + $0x198] sm:$0xff] %vm633, %v3100
  %3182 = vst.msk [vmem:[#allocation2 + $0x1a0] sm:$0xff] %vm633, %v3101
  %3183 = vst.msk [vmem:[#allocation2 + $0x1a8] sm:$0xff] %vm633, %v3102
  %3184 = vst.msk [vmem:[#allocation2 + $0x1b0] sm:$0xff] %vm633, %v3103
  %3185 = vst.msk [vmem:[#allocation2 + $0x1b8] sm:$0xff] %vm633, %v3104
  %3186 = vst.msk [vmem:[#allocation2 + $0x1c0] sm:$0xff] %vm633, %v3105
  %3187 = vst.msk [vmem:[#allocation2 + $0x1c8] sm:$0xff] %vm633, %v3106
  %3188 = vst.msk [vmem:[#allocation2 + $0x1d0] sm:$0xff] %vm633, %v3107
  %3189 = vst.msk [vmem:[#allocation2 + $0x1d8] sm:$0xff] %vm633, %v3108
  %3190 = vst.msk [vmem:[#allocation2 + $0x1e0] sm:$0xff] %vm633, %v3109
  %3191 = vst.msk [vmem:[#allocation2 + $0x1e8] sm:$0xff] %vm633, %v3110
  %3192 = vst.msk [vmem:[#allocation2 + $0x1f0] sm:$0xff] %vm633, %v3111
  %3193 = vst.msk [vmem:[#allocation2 + $0x1f8] sm:$0xff] %vm633, %v3112
  %3194 = vst.msk [vmem:[#allocation2 + $0x200] sm:$0xff] %vm633, %v3113
  %3195 = vst.msk [vmem:[#allocation2 + $0x208] sm:$0xff] %vm633, %v3114
  %3196 = vst.msk [vmem:[#allocation2 + $0x210] sm:$0xff] %vm633, %v3115
  %3197 = vst.msk [vmem:[#allocation2 + $0x218] sm:$0xff] %vm633, %v3116
  %3198 = vst.msk [vmem:[#allocation2 + $0x220] sm:$0xff] %vm633, %v3117
  %3199 = vst.msk [vmem:[#allocation2 + $0x228] sm:$0xff] %vm633, %v3118
  %3200 = vst.msk [vmem:[#allocation2 + $0x230] sm:$0xff] %vm633, %v3119
  %3201 = vst.msk [vmem:[#allocation2 + $0x238] sm:$0xff] %vm633, %v3120
  %3202 = vst.msk [vmem:[#allocation2 + $0x240] sm:$0xff] %vm633, %v3121
  %3203 = vst.msk [vmem:[#allocation2 + $0x248] sm:$0xff] %vm633, %v3122
  %3204 = vst.msk [vmem:[#allocation2 + $0x250] sm:$0xff] %vm633, %v3123
  %3205 = vst.msk [vmem:[#allocation2 + $0x258] sm:$0xff] %vm633, %v3124
  %3206 = vst.msk [vmem:[#allocation2 + $0x260] sm:$0xff] %vm633, %v3125
  %3207 = vst.msk [vmem:[#allocation2 + $0x268] sm:$0xff] %vm633, %v3126
  %3208 = vst.msk [vmem:[#allocation2 + $0x270] sm:$0xff] %vm633, %v3127
  %3209 = vst.msk [vmem:[#allocation2 + $0x278] sm:$0xff] %vm633, %v3128
  %3210 = vst.msk [vmem:[#allocation2 + $0x280] sm:$0xff] %vm633, %v3129
  %v3211 = vld [vmem:[#allocation2] sm:$0xff]
  %v3212 = vld [vmem:[#allocation2 + $0x8] sm:$0xff]
  %v3213 = vld [vmem:[#allocation2 + $0x10] sm:$0xff]
  %v3214 = vld [vmem:[#allocation2 + $0x18] sm:$0xff]
  %v3215 = vld [vmem:[#allocation2 + $0x20] sm:$0xff]
  %v3216 = vld [vmem:[#allocation2 + $0x28] sm:$0xff]
  %v3217 = vld [vmem:[#allocation2 + $0x30] sm:$0xff]
  %v3218 = vld [vmem:[#allocation2 + $0x38] sm:$0xff]
  %v3219 = vld [vmem:[#allocation2 + $0x40] sm:$0xff]
  %v3220 = vld [vmem:[#allocation2 + $0x48] sm:$0xff]
  %v3221 = vld [vmem:[#allocation2 + $0x50] sm:$0xff]
  %v3222 = vld [vmem:[#allocation2 + $0x58] sm:$0xff]
  %v3223 = vld [vmem:[#allocation2 + $0x60] sm:$0xff]
  %v3224 = vld [vmem:[#allocation2 + $0x68] sm:$0xff]
  %v3225 = vld [vmem:[#allocation2 + $0x70] sm:$0xff]
  %v3226 = vld [vmem:[#allocation2 + $0x78] sm:$0xff]
  %v3227 = vld [vmem:[#allocation2 + $0x80] sm:$0xff]
  %v3228 = vld [vmem:[#allocation2 + $0x88] sm:$0xff]
  %v3229 = vld [vmem:[#allocation2 + $0x90] sm:$0xff]
  %v3230 = vld [vmem:[#allocation2 + $0x98] sm:$0xff]
  %v3231 = vld [vmem:[#allocation2 + $0xa0] sm:$0xff]
  %v3232 = vld [vmem:[#allocation2 + $0xa8] sm:$0xff]
  %v3233 = vld [vmem:[#allocation2 + $0xb0] sm:$0xff]
  %v3234 = vld [vmem:[#allocation2 + $0xb8] sm:$0xff]
  %v3235 = vld [vmem:[#allocation2 + $0xc0] sm:$0xff]
  %v3236 = vld [vmem:[#allocation2 + $0xc8] sm:$0xff]
  %v3237 = vld [vmem:[#allocation2 + $0xd0] sm:$0xff]
  %v3238 = vld [vmem:[#allocation2 + $0xd8] sm:$0xff]
  %v3239 = vld [vmem:[#allocation2 + $0xe0] sm:$0xff]
  %v3240 = vld [vmem:[#allocation2 + $0xe8] sm:$0xff]
  %v3241 = vld [vmem:[#allocation2 + $0xf0] sm:$0xff]
  %v3242 = vld [vmem:[#allocation2 + $0xf8] sm:$0xff]
  %v3243 = vld [vmem:[#allocation2 + $0x100] sm:$0xff]
  %v3244 = vld [vmem:[#allocation2 + $0x108] sm:$0xff]
  %v3245 = vld [vmem:[#allocation2 + $0x110] sm:$0xff]
  %v3246 = vld [vmem:[#allocation2 + $0x118] sm:$0xff]
  %v3247 = vld [vmem:[#allocation2 + $0x120] sm:$0xff]
  %v3248 = vld [vmem:[#allocation2 + $0x128] sm:$0xff]
  %v3249 = vld [vmem:[#allocation2 + $0x130] sm:$0xff]
  %v3250 = vld [vmem:[#allocation2 + $0x138] sm:$0xff]
  %v3251 = vld [vmem:[#allocation2 + $0x140] sm:$0xff]
  %v3252 = vld [vmem:[#allocation2 + $0x148] sm:$0xff]
  %v3253 = vld [vmem:[#allocation2 + $0x150] sm:$0xff]
  %v3254 = vld [vmem:[#allocation2 + $0x158] sm:$0xff]
  %v3255 = vld [vmem:[#allocation2 + $0x160] sm:$0xff]
  %v3256 = vld [vmem:[#allocation2 + $0x168] sm:$0xff]
  %v3257 = vld [vmem:[#allocation2 + $0x170] sm:$0xff]
  %v3258 = vld [vmem:[#allocation2 + $0x178] sm:$0xff]
  %v3259 = vld [vmem:[#allocation2 + $0x180] sm:$0xff]
  %v3260 = vld [vmem:[#allocation2 + $0x188] sm:$0xff]
  %v3261 = vld [vmem:[#allocation2 + $0x190] sm:$0xff]
  %v3262 = vld [vmem:[#allocation2 + $0x198] sm:$0xff]
  %v3263 = vld [vmem:[#allocation2 + $0x1a0] sm:$0xff]
  %v3264 = vld [vmem:[#allocation2 + $0x1a8] sm:$0xff]
  %v3265 = vld [vmem:[#allocation2 + $0x1b0] sm:$0xff]
  %v3266 = vld [vmem:[#allocation2 + $0x1b8] sm:$0xff]
  %v3267 = vld [vmem:[#allocation2 + $0x1c0] sm:$0xff]
  %v3268 = vld [vmem:[#allocation2 + $0x1c8] sm:$0xff]
  %v3269 = vld [vmem:[#allocation2 + $0x1d0] sm:$0xff]
  %v3270 = vld [vmem:[#allocation2 + $0x1d8] sm:$0xff]
  %v3271 = vld [vmem:[#allocation2 + $0x1e0] sm:$0xff]
  %v3272 = vld [vmem:[#allocation2 + $0x1e8] sm:$0xff]
  %v3273 = vld [vmem:[#allocation2 + $0x1f0] sm:$0xff]
  %v3274 = vld [vmem:[#allocation2 + $0x1f8] sm:$0xff]
  %v3275 = vld [vmem:[#allocation2 + $0x200] sm:$0xff]
  %v3276 = vld [vmem:[#allocation2 + $0x208] sm:$0xff]
  %v3277 = vld [vmem:[#allocation2 + $0x210] sm:$0xff]
  %v3278 = vld [vmem:[#allocation2 + $0x218] sm:$0xff]
  %v3279 = vld [vmem:[#allocation2 + $0x220] sm:$0xff]
  %v3280 = vld [vmem:[#allocation2 + $0x228] sm:$0xff]
  %v3281 = vld [vmem:[#allocation2 + $0x230] sm:$0xff]
  %v3282 = vld [vmem:[#allocation2 + $0x238] sm:$0xff]
  %v3283 = vld [vmem:[#allocation2 + $0x240] sm:$0xff]
  %v3284 = vld [vmem:[#allocation2 + $0x248] sm:$0xff]
  %v3285 = vld [vmem:[#allocation2 + $0x250] sm:$0xff]
  %v3286 = vld [vmem:[#allocation2 + $0x258] sm:$0xff]
  %v3287 = vld [vmem:[#allocation2 + $0x260] sm:$0xff]
  %v3288 = vld [vmem:[#allocation2 + $0x268] sm:$0xff]
  %v3289 = vld [vmem:[#allocation2 + $0x270] sm:$0xff]
  %v3290 = vld [vmem:[#allocation2 + $0x278] sm:$0xff]
  %v3291 = vld [vmem:[#allocation2 + $0x280] sm:$0xff]
  %v3292 = vld [vmem:[%s0 + $0x13] sm:$0xff]
  %v3293 = vld [vmem:[%s0 + $0x1b] sm:$0xff]
  %v3294 = vld [vmem:[%s0 + $0x23] sm:$0xff]
  %v3295 = vld [vmem:[%s0 + $0x2b] sm:$0xff]
  %v3296 = vld [vmem:[%s0 + $0x33] sm:$0xff]
  %v3297 = vld [vmem:[%s0 + $0x3b] sm:$0xff]
  %v3298 = vld [vmem:[%s0 + $0x43] sm:$0xff]
  %v3299 = vld [vmem:[%s0 + $0x4b] sm:$0xff]
  %v3300 = vld [vmem:[%s0 + $0x53] sm:$0xff]
  %v3301 = vld [vmem:[%s0 + $0x5b] sm:$0xff]
  %v3302 = vld [vmem:[%s0 + $0x63] sm:$0xff]
  %v3303 = vld [vmem:[%s0 + $0x6b] sm:$0xff]
  %v3304 = vld [vmem:[%s0 + $0x73] sm:$0xff]
  %v3305 = vld [vmem:[%s0 + $0x7b] sm:$0xff]
  %v3306 = vld [vmem:[%s0 + $0x83] sm:$0xff]
  %v3307 = vld [vmem:[%s0 + $0x8b] sm:$0xff]
  %v3308 = vld [vmem:[%s0 + $0x93] sm:$0xff]
  %v3309 = vld [vmem:[%s0 + $0x9b] sm:$0xff]
  %v3310 = vld [vmem:[%s0 + $0xa3] sm:$0xff]
  %v3311 = vld [vmem:[%s0 + $0xab] sm:$0xff]
  %v3312 = vld [vmem:[%s0 + $0xb3] sm:$0xff]
  %v3313 = vld [vmem:[%s0 + $0xbb] sm:$0xff]
  %v3314 = vld [vmem:[%s0 + $0xc3] sm:$0xff]
  %v3315 = vld [vmem:[%s0 + $0xcb] sm:$0xff]
  %v3316 = vld [vmem:[%s0 + $0xd3] sm:$0xff]
  %v3317 = vld [vmem:[%s0 + $0xdb] sm:$0xff]
  %v3318 = vld [vmem:[%s0 + $0xe3] sm:$0xff]
  %v3319 = vld [vmem:[%s0 + $0xeb] sm:$0xff]
  %v3320 = vld [vmem:[%s0 + $0xf3] sm:$0xff]
  %v3321 = vld [vmem:[%s0 + $0xfb] sm:$0xff]
  %v3322 = vld [vmem:[%s0 + $0x103] sm:$0xff]
  %v3323 = vld [vmem:[%s0 + $0x10b] sm:$0xff]
  %v3324 = vld [vmem:[%s0 + $0x113] sm:$0xff]
  %v3325 = vld [vmem:[%s0 + $0x11b] sm:$0xff]
  %v3326 = vld [vmem:[%s0 + $0x123] sm:$0xff]
  %v3327 = vld [vmem:[%s0 + $0x12b] sm:$0xff]
  %v3328 = vld [vmem:[%s0 + $0x133] sm:$0xff]
  %v3329 = vld [vmem:[%s0 + $0x13b] sm:$0xff]
  %v3330 = vld [vmem:[%s0 + $0x143] sm:$0xff]
  %v3331 = vld [vmem:[%s0 + $0x14b] sm:$0xff]
  %v3332 = vld [vmem:[%s0 + $0x153] sm:$0xff]
  %v3333 = vld [vmem:[%s0 + $0x15b] sm:$0xff]
  %v3334 = vld [vmem:[%s0 + $0x163] sm:$0xff]
  %v3335 = vld [vmem:[%s0 + $0x16b] sm:$0xff]
  %v3336 = vld [vmem:[%s0 + $0x173] sm:$0xff]
  %v3337 = vld [vmem:[%s0 + $0x17b] sm:$0xff]
  %v3338 = vld [vmem:[%s0 + $0x183] sm:$0xff]
  %v3339 = vld [vmem:[%s0 + $0x18b] sm:$0xff]
  %v3340 = vld [vmem:[%s0 + $0x193] sm:$0xff]
  %v3341 = vld [vmem:[%s0 + $0x19b] sm:$0xff]
  %v3342 = vld [vmem:[%s0 + $0x1a3] sm:$0xff]
  %v3343 = vld [vmem:[%s0 + $0x1ab] sm:$0xff]
  %v3344 = vld [vmem:[%s0 + $0x1b3] sm:$0xff]
  %v3345 = vld [vmem:[%s0 + $0x1bb] sm:$0xff]
  %v3346 = vld [vmem:[%s0 + $0x1c3] sm:$0xff]
  %v3347 = vld [vmem:[%s0 + $0x1cb] sm:$0xff]
  %v3348 = vld [vmem:[%s0 + $0x1d3] sm:$0xff]
  %v3349 = vld [vmem:[%s0 + $0x1db] sm:$0xff]
  %v3350 = vld [vmem:[%s0 + $0x1e3] sm:$0xff]
  %v3351 = vld [vmem:[%s0 + $0x1eb] sm:$0xff]
  %v3352 = vld [vmem:[%s0 + $0x1f3] sm:$0xff]
  %v3353 = vld [vmem:[%s0 + $0x1fb] sm:$0xff]
  %v3354 = vld [vmem:[%s0 + $0x203] sm:$0xff]
  %v3355 = vld [vmem:[%s0 + $0x20b] sm:$0xff]
  %v3356 = vld [vmem:[%s0 + $0x213] sm:$0xff]
  %v3357 = vld [vmem:[%s0 + $0x21b] sm:$0xff]
  %v3358 = vld [vmem:[%s0 + $0x223] sm:$0xff]
  %v3359 = vld [vmem:[%s0 + $0x22b] sm:$0xff]
  %v3360 = vld [vmem:[%s0 + $0x233] sm:$0xff]
  %v3361 = vld [vmem:[%s0 + $0x23b] sm:$0xff]
  %v3362 = vld [vmem:[%s0 + $0x243] sm:$0xff]
  %v3363 = vld [vmem:[%s0 + $0x24b] sm:$0xff]
  %v3364 = vld [vmem:[%s0 + $0x253] sm:$0xff]
  %v3365 = vld [vmem:[%s0 + $0x25b] sm:$0xff]
  %v3366 = vld [vmem:[%s0 + $0x263] sm:$0xff]
  %v3367 = vld [vmem:[%s0 + $0x26b] sm:$0xff]
  %v3368 = vld [vmem:[%s0 + $0x273] sm:$0xff]
  %v3369 = vld [vmem:[%s0 + $0x27b] sm:$0xff]
  %v3370 = vld [vmem:[%s0 + $0x283] sm:$0xff]
  %v3371 = vld [vmem:[%s0 + $0x28b] sm:$0xff]
  %v3372 = vld [vmem:[%s0 + $0x293] sm:$0xff]
  %s3373 = scalar_lea.vmem %s1, 16
  %v3374 = vld [vmem:[%s3373] sm:$0xf]
  %v3376 = vsel %vm125, %v3292, 0
  %v3379 = vsel %vm125, %v3293, 0
  %v3382 = vsel %vm125, %v3294, 0
  %v3385 = vsel %vm125, %v3295, 0
  %v3388 = vsel %vm125, %v3296, 0
  %v3391 = vsel %vm125, %v3297, 0
  %v3394 = vsel %vm125, %v3298, 0
  %v3397 = vsel %vm125, %v3299, 0
  %v3400 = vsel %vm125, %v3300, 0
  %v3403 = vsel %vm125, %v3301, 0
  %v3406 = vsel %vm125, %v3302, 0
  %v3409 = vsel %vm125, %v3303, 0
  %v3412 = vsel %vm125, %v3304, 0
  %v3415 = vsel %vm125, %v3305, 0
  %v3418 = vsel %vm125, %v3306, 0
  %v3421 = vsel %vm125, %v3307, 0
  %v3424 = vsel %vm125, %v3308, 0
  %v3427 = vsel %vm125, %v3309, 0
  %v3430 = vsel %vm125, %v3310, 0
  %v3433 = vsel %vm125, %v3311, 0
  %v3436 = vsel %vm125, %v3312, 0
  %v3439 = vsel %vm125, %v3313, 0
  %v3442 = vsel %vm125, %v3314, 0
  %v3445 = vsel %vm125, %v3315, 0
  %v3448 = vsel %vm125, %v3316, 0
  %v3451 = vsel %vm125, %v3317, 0
  %v3454 = vsel %vm125, %v3318, 0
  %v3457 = vsel %vm125, %v3319, 0
  %v3460 = vsel %vm125, %v3320, 0
  %v3463 = vsel %vm125, %v3321, 0
  %v3466 = vsel %vm125, %v3322, 0
  %v3469 = vsel %vm125, %v3323, 0
  %v3472 = vsel %vm125, %v3324, 0
  %v3475 = vsel %vm125, %v3325, 0
  %v3478 = vsel %vm125, %v3326, 0
  %v3481 = vsel %vm125, %v3327, 0
  %v3484 = vsel %vm125, %v3328, 0
  %v3487 = vsel %vm125, %v3329, 0
  %v3490 = vsel %vm125, %v3330, 0
  %v3493 = vsel %vm125, %v3331, 0
  %v3496 = vsel %vm125, %v3332, 0
  %v3499 = vsel %vm125, %v3333, 0
  %v3502 = vsel %vm125, %v3334, 0
  %v3505 = vsel %vm125, %v3335, 0
  %v3508 = vsel %vm125, %v3336, 0
  %v3511 = vsel %vm125, %v3337, 0
  %v3514 = vsel %vm125, %v3338, 0
  %v3517 = vsel %vm125, %v3339, 0
  %v3520 = vsel %vm125, %v3340, 0
  %v3523 = vsel %vm125, %v3341, 0
  %v3526 = vsel %vm125, %v3342, 0
  %v3529 = vsel %vm125, %v3343, 0
  %v3532 = vsel %vm125, %v3344, 0
  %v3535 = vsel %vm125, %v3345, 0
  %v3538 = vsel %vm125, %v3346, 0
  %v3541 = vsel %vm125, %v3347, 0
  %v3544 = vsel %vm125, %v3348, 0
  %v3547 = vsel %vm125, %v3349, 0
  %v3550 = vsel %vm125, %v3350, 0
  %v3553 = vsel %vm125, %v3351, 0
  %v3556 = vsel %vm125, %v3352, 0
  %v3559 = vsel %vm125, %v3353, 0
  %v3562 = vsel %vm125, %v3354, 0
  %v3565 = vsel %vm125, %v3355, 0
  %v3568 = vsel %vm125, %v3356, 0
  %v3571 = vsel %vm125, %v3357, 0
  %v3574 = vsel %vm125, %v3358, 0
  %v3577 = vsel %vm125, %v3359, 0
  %v3580 = vsel %vm125, %v3360, 0
  %v3583 = vsel %vm125, %v3361, 0
  %v3586 = vsel %vm125, %v3362, 0
  %v3589 = vsel %vm125, %v3363, 0
  %v3592 = vsel %vm125, %v3364, 0
  %v3595 = vsel %vm125, %v3365, 0
  %v3598 = vsel %vm125, %v3366, 0
  %v3601 = vsel %vm125, %v3367, 0
  %v3604 = vsel %vm125, %v3368, 0
  %v3607 = vsel %vm125, %v3369, 0
  %v3610 = vsel %vm125, %v3370, 0
  %v3613 = vsel %vm125, %v3371, 0
  %v3616 = vsel %vm125, %v3372, 0
  %v3619 = vsel %vm369, %v3374, 0
  %3621 = vmatpush.msra.mxu0 0.0
  %3622 = vmatpush.msra.mxu0 0.0
  %3623 = vmatpush.msra.mxu0 0.0
  %3624 = vmatpush.msra.mxu0 0.0
  %3625 = vmatpush.msra.mxu0 0.0
  %3626 = vmatpush.msra.mxu0 0.0
  %3627 = vmatpush.msra.mxu0 0.0
  %3628 = vmatpush.msra.mxu0 0.0
  %3629 = vmatpush.msra.mxu0 0.0
  %3630 = vmatpush.msra.mxu0 0.0
  %3631 = vmatpush.msra.mxu0 0.0
  %3632 = vmatpush.msra.mxu0 0.0
  %3633 = vmatpush.msra.mxu0 0.0
  %3634 = vmatpush.msra.mxu0 0.0
  %3635 = vmatpush.msra.mxu0 0.0
  %3636 = vmatpush.msra.mxu0 %v3619
  %3637 = vmatmul.f32.gmra.mxu0 %v3376
  %v3638 = vpop.f32.mrf.mxu0
  %v3639 = vadd.f32 0.0, %v3638
  %3640 = vmatmul.f32.gmra.mxu0 %v3379
  %v3641 = vpop.f32.mrf.mxu0
  %v3642 = vadd.f32 0.0, %v3641
  %3643 = vmatmul.f32.gmra.mxu0 %v3382
  %v3644 = vpop.f32.mrf.mxu0
  %v3645 = vadd.f32 0.0, %v3644
  %3646 = vmatmul.f32.gmra.mxu0 %v3385
  %v3647 = vpop.f32.mrf.mxu0
  %v3648 = vadd.f32 0.0, %v3647
  %3649 = vmatmul.f32.gmra.mxu0 %v3388
  %v3650 = vpop.f32.mrf.mxu0
  %v3651 = vadd.f32 0.0, %v3650
  %3652 = vmatmul.f32.gmra.mxu0 %v3391
  %v3653 = vpop.f32.mrf.mxu0
  %v3654 = vadd.f32 0.0, %v3653
  %3655 = vmatmul.f32.gmra.mxu0 %v3394
  %v3656 = vpop.f32.mrf.mxu0
  %v3657 = vadd.f32 0.0, %v3656
  %3658 = vmatmul.f32.gmra.mxu0 %v3397
  %v3659 = vpop.f32.mrf.mxu0
  %v3660 = vadd.f32 0.0, %v3659
  %3661 = vmatmul.f32.gmra.mxu0 %v3400
  %v3662 = vpop.f32.mrf.mxu0
  %v3663 = vadd.f32 0.0, %v3662
  %3664 = vmatmul.f32.gmra.mxu0 %v3403
  %v3665 = vpop.f32.mrf.mxu0
  %v3666 = vadd.f32 0.0, %v3665
  %3667 = vmatmul.f32.gmra.mxu0 %v3406
  %v3668 = vpop.f32.mrf.mxu0
  %v3669 = vadd.f32 0.0, %v3668
  %3670 = vmatmul.f32.gmra.mxu0 %v3409
  %v3671 = vpop.f32.mrf.mxu0
  %v3672 = vadd.f32 0.0, %v3671
  %3673 = vmatmul.f32.gmra.mxu0 %v3412
  %v3674 = vpop.f32.mrf.mxu0
  %v3675 = vadd.f32 0.0, %v3674
  %3676 = vmatmul.f32.gmra.mxu0 %v3415
  %v3677 = vpop.f32.mrf.mxu0
  %v3678 = vadd.f32 0.0, %v3677
  %3679 = vmatmul.f32.gmra.mxu0 %v3418
  %v3680 = vpop.f32.mrf.mxu0
  %v3681 = vadd.f32 0.0, %v3680
  %3682 = vmatmul.f32.gmra.mxu0 %v3421
  %v3683 = vpop.f32.mrf.mxu0
  %v3684 = vadd.f32 0.0, %v3683
  %3685 = vmatmul.f32.gmra.mxu0 %v3424
  %v3686 = vpop.f32.mrf.mxu0
  %v3687 = vadd.f32 0.0, %v3686
  %3688 = vmatmul.f32.gmra.mxu0 %v3427
  %v3689 = vpop.f32.mrf.mxu0
  %v3690 = vadd.f32 0.0, %v3689
  %3691 = vmatmul.f32.gmra.mxu0 %v3430
  %v3692 = vpop.f32.mrf.mxu0
  %v3693 = vadd.f32 0.0, %v3692
  %3694 = vmatmul.f32.gmra.mxu0 %v3433
  %v3695 = vpop.f32.mrf.mxu0
  %v3696 = vadd.f32 0.0, %v3695
  %3697 = vmatmul.f32.gmra.mxu0 %v3436
  %v3698 = vpop.f32.mrf.mxu0
  %v3699 = vadd.f32 0.0, %v3698
  %3700 = vmatmul.f32.gmra.mxu0 %v3439
  %v3701 = vpop.f32.mrf.mxu0
  %v3702 = vadd.f32 0.0, %v3701
  %3703 = vmatmul.f32.gmra.mxu0 %v3442
  %v3704 = vpop.f32.mrf.mxu0
  %v3705 = vadd.f32 0.0, %v3704
  %3706 = vmatmul.f32.gmra.mxu0 %v3445
  %v3707 = vpop.f32.mrf.mxu0
  %v3708 = vadd.f32 0.0, %v3707
  %3709 = vmatmul.f32.gmra.mxu0 %v3448
  %v3710 = vpop.f32.mrf.mxu0
  %v3711 = vadd.f32 0.0, %v3710
  %3712 = vmatmul.f32.gmra.mxu0 %v3451
  %v3713 = vpop.f32.mrf.mxu0
  %v3714 = vadd.f32 0.0, %v3713
  %3715 = vmatmul.f32.gmra.mxu0 %v3454
  %v3716 = vpop.f32.mrf.mxu0
  %v3717 = vadd.f32 0.0, %v3716
  %3718 = vmatmul.f32.gmra.mxu0 %v3457
  %v3719 = vpop.f32.mrf.mxu0
  %v3720 = vadd.f32 0.0, %v3719
  %3721 = vmatmul.f32.gmra.mxu0 %v3460
  %v3722 = vpop.f32.mrf.mxu0
  %v3723 = vadd.f32 0.0, %v3722
  %3724 = vmatmul.f32.gmra.mxu0 %v3463
  %v3725 = vpop.f32.mrf.mxu0
  %v3726 = vadd.f32 0.0, %v3725
  %3727 = vmatmul.f32.gmra.mxu0 %v3466
  %v3728 = vpop.f32.mrf.mxu0
  %v3729 = vadd.f32 0.0, %v3728
  %3730 = vmatmul.f32.gmra.mxu0 %v3469
  %v3731 = vpop.f32.mrf.mxu0
  %v3732 = vadd.f32 0.0, %v3731
  %3733 = vmatmul.f32.gmra.mxu0 %v3472
  %v3734 = vpop.f32.mrf.mxu0
  %v3735 = vadd.f32 0.0, %v3734
  %3736 = vmatmul.f32.gmra.mxu0 %v3475
  %v3737 = vpop.f32.mrf.mxu0
  %v3738 = vadd.f32 0.0, %v3737
  %3739 = vmatmul.f32.gmra.mxu0 %v3478
  %v3740 = vpop.f32.mrf.mxu0
  %v3741 = vadd.f32 0.0, %v3740
  %3742 = vmatmul.f32.gmra.mxu0 %v3481
  %v3743 = vpop.f32.mrf.mxu0
  %v3744 = vadd.f32 0.0, %v3743
  %3745 = vmatmul.f32.gmra.mxu0 %v3484
  %v3746 = vpop.f32.mrf.mxu0
  %v3747 = vadd.f32 0.0, %v3746
  %3748 = vmatmul.f32.gmra.mxu0 %v3487
  %v3749 = vpop.f32.mrf.mxu0
  %v3750 = vadd.f32 0.0, %v3749
  %3751 = vmatmul.f32.gmra.mxu0 %v3490
  %v3752 = vpop.f32.mrf.mxu0
  %v3753 = vadd.f32 0.0, %v3752
  %3754 = vmatmul.f32.gmra.mxu0 %v3493
  %v3755 = vpop.f32.mrf.mxu0
  %v3756 = vadd.f32 0.0, %v3755
  %3757 = vmatmul.f32.gmra.mxu0 %v3496
  %v3758 = vpop.f32.mrf.mxu0
  %v3759 = vadd.f32 0.0, %v3758
  %3760 = vmatmul.f32.gmra.mxu0 %v3499
  %v3761 = vpop.f32.mrf.mxu0
  %v3762 = vadd.f32 0.0, %v3761
  %3763 = vmatmul.f32.gmra.mxu0 %v3502
  %v3764 = vpop.f32.mrf.mxu0
  %v3765 = vadd.f32 0.0, %v3764
  %3766 = vmatmul.f32.gmra.mxu0 %v3505
  %v3767 = vpop.f32.mrf.mxu0
  %v3768 = vadd.f32 0.0, %v3767
  %3769 = vmatmul.f32.gmra.mxu0 %v3508
  %v3770 = vpop.f32.mrf.mxu0
  %v3771 = vadd.f32 0.0, %v3770
  %3772 = vmatmul.f32.gmra.mxu0 %v3511
  %v3773 = vpop.f32.mrf.mxu0
  %v3774 = vadd.f32 0.0, %v3773
  %3775 = vmatmul.f32.gmra.mxu0 %v3514
  %v3776 = vpop.f32.mrf.mxu0
  %v3777 = vadd.f32 0.0, %v3776
  %3778 = vmatmul.f32.gmra.mxu0 %v3517
  %v3779 = vpop.f32.mrf.mxu0
  %v3780 = vadd.f32 0.0, %v3779
  %3781 = vmatmul.f32.gmra.mxu0 %v3520
  %v3782 = vpop.f32.mrf.mxu0
  %v3783 = vadd.f32 0.0, %v3782
  %3784 = vmatmul.f32.gmra.mxu0 %v3523
  %v3785 = vpop.f32.mrf.mxu0
  %v3786 = vadd.f32 0.0, %v3785
  %3787 = vmatmul.f32.gmra.mxu0 %v3526
  %v3788 = vpop.f32.mrf.mxu0
  %v3789 = vadd.f32 0.0, %v3788
  %3790 = vmatmul.f32.gmra.mxu0 %v3529
  %v3791 = vpop.f32.mrf.mxu0
  %v3792 = vadd.f32 0.0, %v3791
  %3793 = vmatmul.f32.gmra.mxu0 %v3532
  %v3794 = vpop.f32.mrf.mxu0
  %v3795 = vadd.f32 0.0, %v3794
  %3796 = vmatmul.f32.gmra.mxu0 %v3535
  %v3797 = vpop.f32.mrf.mxu0
  %v3798 = vadd.f32 0.0, %v3797
  %3799 = vmatmul.f32.gmra.mxu0 %v3538
  %v3800 = vpop.f32.mrf.mxu0
  %v3801 = vadd.f32 0.0, %v3800
  %3802 = vmatmul.f32.gmra.mxu0 %v3541
  %v3803 = vpop.f32.mrf.mxu0
  %v3804 = vadd.f32 0.0, %v3803
  %3805 = vmatmul.f32.gmra.mxu0 %v3544
  %v3806 = vpop.f32.mrf.mxu0
  %v3807 = vadd.f32 0.0, %v3806
  %3808 = vmatmul.f32.gmra.mxu0 %v3547
  %v3809 = vpop.f32.mrf.mxu0
  %v3810 = vadd.f32 0.0, %v3809
  %3811 = vmatmul.f32.gmra.mxu0 %v3550
  %v3812 = vpop.f32.mrf.mxu0
  %v3813 = vadd.f32 0.0, %v3812
  %3814 = vmatmul.f32.gmra.mxu0 %v3553
  %v3815 = vpop.f32.mrf.mxu0
  %v3816 = vadd.f32 0.0, %v3815
  %3817 = vmatmul.f32.gmra.mxu0 %v3556
  %v3818 = vpop.f32.mrf.mxu0
  %v3819 = vadd.f32 0.0, %v3818
  %3820 = vmatmul.f32.gmra.mxu0 %v3559
  %v3821 = vpop.f32.mrf.mxu0
  %v3822 = vadd.f32 0.0, %v3821
  %3823 = vmatmul.f32.gmra.mxu0 %v3562
  %v3824 = vpop.f32.mrf.mxu0
  %v3825 = vadd.f32 0.0, %v3824
  %3826 = vmatmul.f32.gmra.mxu0 %v3565
  %v3827 = vpop.f32.mrf.mxu0
  %v3828 = vadd.f32 0.0, %v3827
  %3829 = vmatmul.f32.gmra.mxu0 %v3568
  %v3830 = vpop.f32.mrf.mxu0
  %v3831 = vadd.f32 0.0, %v3830
  %3832 = vmatmul.f32.gmra.mxu0 %v3571
  %v3833 = vpop.f32.mrf.mxu0
  %v3834 = vadd.f32 0.0, %v3833
  %3835 = vmatmul.f32.gmra.mxu0 %v3574
  %v3836 = vpop.f32.mrf.mxu0
  %v3837 = vadd.f32 0.0, %v3836
  %3838 = vmatmul.f32.gmra.mxu0 %v3577
  %v3839 = vpop.f32.mrf.mxu0
  %v3840 = vadd.f32 0.0, %v3839
  %3841 = vmatmul.f32.gmra.mxu0 %v3580
  %v3842 = vpop.f32.mrf.mxu0
  %v3843 = vadd.f32 0.0, %v3842
  %3844 = vmatmul.f32.gmra.mxu0 %v3583
  %v3845 = vpop.f32.mrf.mxu0
  %v3846 = vadd.f32 0.0, %v3845
  %3847 = vmatmul.f32.gmra.mxu0 %v3586
  %v3848 = vpop.f32.mrf.mxu0
  %v3849 = vadd.f32 0.0, %v3848
  %3850 = vmatmul.f32.gmra.mxu0 %v3589
  %v3851 = vpop.f32.mrf.mxu0
  %v3852 = vadd.f32 0.0, %v3851
  %3853 = vmatmul.f32.gmra.mxu0 %v3592
  %v3854 = vpop.f32.mrf.mxu0
  %v3855 = vadd.f32 0.0, %v3854
  %3856 = vmatmul.f32.gmra.mxu0 %v3595
  %v3857 = vpop.f32.mrf.mxu0
  %v3858 = vadd.f32 0.0, %v3857
  %3859 = vmatmul.f32.gmra.mxu0 %v3598
  %v3860 = vpop.f32.mrf.mxu0
  %v3861 = vadd.f32 0.0, %v3860
  %3862 = vmatmul.f32.gmra.mxu0 %v3601
  %v3863 = vpop.f32.mrf.mxu0
  %v3864 = vadd.f32 0.0, %v3863
  %3865 = vmatmul.f32.gmra.mxu0 %v3604
  %v3866 = vpop.f32.mrf.mxu0
  %v3867 = vadd.f32 0.0, %v3866
  %3868 = vmatmul.f32.gmra.mxu0 %v3607
  %v3869 = vpop.f32.mrf.mxu0
  %v3870 = vadd.f32 0.0, %v3869
  %3871 = vmatmul.f32.gmra.mxu0 %v3610
  %v3872 = vpop.f32.mrf.mxu0
  %v3873 = vadd.f32 0.0, %v3872
  %3874 = vmatmul.f32.gmra.mxu0 %v3613
  %v3875 = vpop.f32.mrf.mxu0
  %v3876 = vadd.f32 0.0, %v3875
  %3877 = vmatmul.f32.gmra.mxu0 %v3616
  %v3878 = vpop.f32.mrf.mxu0
  %v3879 = vadd.f32 0.0, %v3878
  %3880 = vdwg.mxu0
  %v3881 = vadd.f32 %v3211, %v3639
  %v3882 = vadd.f32 %v3212, %v3642
  %v3883 = vadd.f32 %v3213, %v3645
  %v3884 = vadd.f32 %v3214, %v3648
  %v3885 = vadd.f32 %v3215, %v3651
  %v3886 = vadd.f32 %v3216, %v3654
  %v3887 = vadd.f32 %v3217, %v3657
  %v3888 = vadd.f32 %v3218, %v3660
  %v3889 = vadd.f32 %v3219, %v3663
  %v3890 = vadd.f32 %v3220, %v3666
  %v3891 = vadd.f32 %v3221, %v3669
  %v3892 = vadd.f32 %v3222, %v3672
  %v3893 = vadd.f32 %v3223, %v3675
  %v3894 = vadd.f32 %v3224, %v3678
  %v3895 = vadd.f32 %v3225, %v3681
  %v3896 = vadd.f32 %v3226, %v3684
  %v3897 = vadd.f32 %v3227, %v3687
  %v3898 = vadd.f32 %v3228, %v3690
  %v3899 = vadd.f32 %v3229, %v3693
  %v3900 = vadd.f32 %v3230, %v3696
  %v3901 = vadd.f32 %v3231, %v3699
  %v3902 = vadd.f32 %v3232, %v3702
  %v3903 = vadd.f32 %v3233, %v3705
  %v3904 = vadd.f32 %v3234, %v3708
  %v3905 = vadd.f32 %v3235, %v3711
  %v3906 = vadd.f32 %v3236, %v3714
  %v3907 = vadd.f32 %v3237, %v3717
  %v3908 = vadd.f32 %v3238, %v3720
  %v3909 = vadd.f32 %v3239, %v3723
  %v3910 = vadd.f32 %v3240, %v3726
  %v3911 = vadd.f32 %v3241, %v3729
  %v3912 = vadd.f32 %v3242, %v3732
  %v3913 = vadd.f32 %v3243, %v3735
  %v3914 = vadd.f32 %v3244, %v3738
  %v3915 = vadd.f32 %v3245, %v3741
  %v3916 = vadd.f32 %v3246, %v3744
  %v3917 = vadd.f32 %v3247, %v3747
  %v3918 = vadd.f32 %v3248, %v3750
  %v3919 = vadd.f32 %v3249, %v3753
  %v3920 = vadd.f32 %v3250, %v3756
  %v3921 = vadd.f32 %v3251, %v3759
  %v3922 = vadd.f32 %v3252, %v3762
  %v3923 = vadd.f32 %v3253, %v3765
  %v3924 = vadd.f32 %v3254, %v3768
  %v3925 = vadd.f32 %v3255, %v3771
  %v3926 = vadd.f32 %v3256, %v3774
  %v3927 = vadd.f32 %v3257, %v3777
  %v3928 = vadd.f32 %v3258, %v3780
  %v3929 = vadd.f32 %v3259, %v3783
  %v3930 = vadd.f32 %v3260, %v3786
  %v3931 = vadd.f32 %v3261, %v3789
  %v3932 = vadd.f32 %v3262, %v3792
  %v3933 = vadd.f32 %v3263, %v3795
  %v3934 = vadd.f32 %v3264, %v3798
  %v3935 = vadd.f32 %v3265, %v3801
  %v3936 = vadd.f32 %v3266, %v3804
  %v3937 = vadd.f32 %v3267, %v3807
  %v3938 = vadd.f32 %v3268, %v3810
  %v3939 = vadd.f32 %v3269, %v3813
  %v3940 = vadd.f32 %v3270, %v3816
  %v3941 = vadd.f32 %v3271, %v3819
  %v3942 = vadd.f32 %v3272, %v3822
  %v3943 = vadd.f32 %v3273, %v3825
  %v3944 = vadd.f32 %v3274, %v3828
  %v3945 = vadd.f32 %v3275, %v3831
  %v3946 = vadd.f32 %v3276, %v3834
  %v3947 = vadd.f32 %v3277, %v3837
  %v3948 = vadd.f32 %v3278, %v3840
  %v3949 = vadd.f32 %v3279, %v3843
  %v3950 = vadd.f32 %v3280, %v3846
  %v3951 = vadd.f32 %v3281, %v3849
  %v3952 = vadd.f32 %v3282, %v3852
  %v3953 = vadd.f32 %v3283, %v3855
  %v3954 = vadd.f32 %v3284, %v3858
  %v3955 = vadd.f32 %v3285, %v3861
  %v3956 = vadd.f32 %v3286, %v3864
  %v3957 = vadd.f32 %v3287, %v3867
  %v3958 = vadd.f32 %v3288, %v3870
  %v3959 = vadd.f32 %v3289, %v3873
  %v3960 = vadd.f32 %v3290, %v3876
  %v3961 = vadd.f32 %v3291, %v3879
  %3962 = vst.msk [vmem:[#allocation2] sm:$0xff] %vm633, %v3881
  %3963 = vst.msk [vmem:[#allocation2 + $0x8] sm:$0xff] %vm633, %v3882
  %3964 = vst.msk [vmem:[#allocation2 + $0x10] sm:$0xff] %vm633, %v3883
  %3965 = vst.msk [vmem:[#allocation2 + $0x18] sm:$0xff] %vm633, %v3884
  %3966 = vst.msk [vmem:[#allocation2 + $0x20] sm:$0xff] %vm633, %v3885
  %3967 = vst.msk [vmem:[#allocation2 + $0x28] sm:$0xff] %vm633, %v3886
  %3968 = vst.msk [vmem:[#allocation2 + $0x30] sm:$0xff] %vm633, %v3887
  %3969 = vst.msk [vmem:[#allocation2 + $0x38] sm:$0xff] %vm633, %v3888
  %3970 = vst.msk [vmem:[#allocation2 + $0x40] sm:$0xff] %vm633, %v3889
  %3971 = vst.msk [vmem:[#allocation2 + $0x48] sm:$0xff] %vm633, %v3890
  %3972 = vst.msk [vmem:[#allocation2 + $0x50] sm:$0xff] %vm633, %v3891
  %3973 = vst.msk [vmem:[#allocation2 + $0x58] sm:$0xff] %vm633, %v3892
  %3974 = vst.msk [vmem:[#allocation2 + $0x60] sm:$0xff] %vm633, %v3893
  %3975 = vst.msk [vmem:[#allocation2 + $0x68] sm:$0xff] %vm633, %v3894
  %3976 = vst.msk [vmem:[#allocation2 + $0x70] sm:$0xff] %vm633, %v3895
  %3977 = vst.msk [vmem:[#allocation2 + $0x78] sm:$0xff] %vm633, %v3896
  %3978 = vst.msk [vmem:[#allocation2 + $0x80] sm:$0xff] %vm633, %v3897
  %3979 = vst.msk [vmem:[#allocation2 + $0x88] sm:$0xff] %vm633, %v3898
  %3980 = vst.msk [vmem:[#allocation2 + $0x90] sm:$0xff] %vm633, %v3899
  %3981 = vst.msk [vmem:[#allocation2 + $0x98] sm:$0xff] %vm633, %v3900
  %3982 = vst.msk [vmem:[#allocation2 + $0xa0] sm:$0xff] %vm633, %v3901
  %3983 = vst.msk [vmem:[#allocation2 + $0xa8] sm:$0xff] %vm633, %v3902
  %3984 = vst.msk [vmem:[#allocation2 + $0xb0] sm:$0xff] %vm633, %v3903
  %3985 = vst.msk [vmem:[#allocation2 + $0xb8] sm:$0xff] %vm633, %v3904
  %3986 = vst.msk [vmem:[#allocation2 + $0xc0] sm:$0xff] %vm633, %v3905
  %3987 = vst.msk [vmem:[#allocation2 + $0xc8] sm:$0xff] %vm633, %v3906
  %3988 = vst.msk [vmem:[#allocation2 + $0xd0] sm:$0xff] %vm633, %v3907
  %3989 = vst.msk [vmem:[#allocation2 + $0xd8] sm:$0xff] %vm633, %v3908
  %3990 = vst.msk [vmem:[#allocation2 + $0xe0] sm:$0xff] %vm633, %v3909
  %3991 = vst.msk [vmem:[#allocation2 + $0xe8] sm:$0xff] %vm633, %v3910
  %3992 = vst.msk [vmem:[#allocation2 + $0xf0] sm:$0xff] %vm633, %v3911
  %3993 = vst.msk [vmem:[#allocation2 + $0xf8] sm:$0xff] %vm633, %v3912
  %3994 = vst.msk [vmem:[#allocation2 + $0x100] sm:$0xff] %vm633, %v3913
  %3995 = vst.msk [vmem:[#allocation2 + $0x108] sm:$0xff] %vm633, %v3914
  %3996 = vst.msk [vmem:[#allocation2 + $0x110] sm:$0xff] %vm633, %v3915
  %3997 = vst.msk [vmem:[#allocation2 + $0x118] sm:$0xff] %vm633, %v3916
  %3998 = vst.msk [vmem:[#allocation2 + $0x120] sm:$0xff] %vm633, %v3917
  %3999 = vst.msk [vmem:[#allocation2 + $0x128] sm:$0xff] %vm633, %v3918
  %4000 = vst.msk [vmem:[#allocation2 + $0x130] sm:$0xff] %vm633, %v3919
  %4001 = vst.msk [vmem:[#allocation2 + $0x138] sm:$0xff] %vm633, %v3920
  %4002 = vst.msk [vmem:[#allocation2 + $0x140] sm:$0xff] %vm633, %v3921
  %4003 = vst.msk [vmem:[#allocation2 + $0x148] sm:$0xff] %vm633, %v3922
  %4004 = vst.msk [vmem:[#allocation2 + $0x150] sm:$0xff] %vm633, %v3923
  %4005 = vst.msk [vmem:[#allocation2 + $0x158] sm:$0xff] %vm633, %v3924
  %4006 = vst.msk [vmem:[#allocation2 + $0x160] sm:$0xff] %vm633, %v3925
  %4007 = vst.msk [vmem:[#allocation2 + $0x168] sm:$0xff] %vm633, %v3926
  %4008 = vst.msk [vmem:[#allocation2 + $0x170] sm:$0xff] %vm633, %v3927
  %4009 = vst.msk [vmem:[#allocation2 + $0x178] sm:$0xff] %vm633, %v3928
  %4010 = vst.msk [vmem:[#allocation2 + $0x180] sm:$0xff] %vm633, %v3929
  %4011 = vst.msk [vmem:[#allocation2 + $0x188] sm:$0xff] %vm633, %v3930
  %4012 = vst.msk [vmem:[#allocation2 + $0x190] sm:$0xff] %vm633, %v3931
  %4013 = vst.msk [vmem:[#allocation2 + $0x198] sm:$0xff] %vm633, %v3932
  %4014 = vst.msk [vmem:[#allocation2 + $0x1a0] sm:$0xff] %vm633, %v3933
  %4015 = vst.msk [vmem:[#allocation2 + $0x1a8] sm:$0xff] %vm633, %v3934
  %4016 = vst.msk [vmem:[#allocation2 + $0x1b0] sm:$0xff] %vm633, %v3935
  %4017 = vst.msk [vmem:[#allocation2 + $0x1b8] sm:$0xff] %vm633, %v3936
  %4018 = vst.msk [vmem:[#allocation2 + $0x1c0] sm:$0xff] %vm633, %v3937
  %4019 = vst.msk [vmem:[#allocation2 + $0x1c8] sm:$0xff] %vm633, %v3938
  %4020 = vst.msk [vmem:[#allocation2 + $0x1d0] sm:$0xff] %vm633, %v3939
  %4021 = vst.msk [vmem:[#allocation2 + $0x1d8] sm:$0xff] %vm633, %v3940
  %4022 = vst.msk [vmem:[#allocation2 + $0x1e0] sm:$0xff] %vm633, %v3941
  %4023 = vst.msk [vmem:[#allocation2 + $0x1e8] sm:$0xff] %vm633, %v3942
  %4024 = vst.msk [vmem:[#allocation2 + $0x1f0] sm:$0xff] %vm633, %v3943
  %4025 = vst.msk [vmem:[#allocation2 + $0x1f8] sm:$0xff] %vm633, %v3944
  %4026 = vst.msk [vmem:[#allocation2 + $0x200] sm:$0xff] %vm633, %v3945
  %4027 = vst.msk [vmem:[#allocation2 + $0x208] sm:$0xff] %vm633, %v3946
  %4028 = vst.msk [vmem:[#allocation2 + $0x210] sm:$0xff] %vm633, %v3947
  %4029 = vst.msk [vmem:[#allocation2 + $0x218] sm:$0xff] %vm633, %v3948
  %4030 = vst.msk [vmem:[#allocation2 + $0x220] sm:$0xff] %vm633, %v3949
  %4031 = vst.msk [vmem:[#allocation2 + $0x228] sm:$0xff] %vm633, %v3950
  %4032 = vst.msk [vmem:[#allocation2 + $0x230] sm:$0xff] %vm633, %v3951
  %4033 = vst.msk [vmem:[#allocation2 + $0x238] sm:$0xff] %vm633, %v3952
  %4034 = vst.msk [vmem:[#allocation2 + $0x240] sm:$0xff] %vm633, %v3953
  %4035 = vst.msk [vmem:[#allocation2 + $0x248] sm:$0xff] %vm633, %v3954
  %4036 = vst.msk [vmem:[#allocation2 + $0x250] sm:$0xff] %vm633, %v3955
  %4037 = vst.msk [vmem:[#allocation2 + $0x258] sm:$0xff] %vm633, %v3956
  %4038 = vst.msk [vmem:[#allocation2 + $0x260] sm:$0xff] %vm633, %v3957
  %4039 = vst.msk [vmem:[#allocation2 + $0x268] sm:$0xff] %vm633, %v3958
  %4040 = vst.msk [vmem:[#allocation2 + $0x270] sm:$0xff] %vm633, %v3959
  %4041 = vst.msk [vmem:[#allocation2 + $0x278] sm:$0xff] %vm633, %v3960
  %4042 = vst.msk [vmem:[#allocation2 + $0x280] sm:$0xff] %vm633, %v3961
  %v4043 = vld [vmem:[#allocation2] sm:$0xff]
  %v4044 = vld [vmem:[#allocation2 + $0x8] sm:$0xff]
  %v4045 = vld [vmem:[#allocation2 + $0x10] sm:$0xff]
  %v4046 = vld [vmem:[#allocation2 + $0x18] sm:$0xff]
  %v4047 = vld [vmem:[#allocation2 + $0x20] sm:$0xff]
  %v4048 = vld [vmem:[#allocation2 + $0x28] sm:$0xff]
  %v4049 = vld [vmem:[#allocation2 + $0x30] sm:$0xff]
  %v4050 = vld [vmem:[#allocation2 + $0x38] sm:$0xff]
  %v4051 = vld [vmem:[#allocation2 + $0x40] sm:$0xff]
  %v4052 = vld [vmem:[#allocation2 + $0x48] sm:$0xff]
  %v4053 = vld [vmem:[#allocation2 + $0x50] sm:$0xff]
  %v4054 = vld [vmem:[#allocation2 + $0x58] sm:$0xff]
  %v4055 = vld [vmem:[#allocation2 + $0x60] sm:$0xff]
  %v4056 = vld [vmem:[#allocation2 + $0x68] sm:$0xff]
  %v4057 = vld [vmem:[#allocation2 + $0x70] sm:$0xff]
  %v4058 = vld [vmem:[#allocation2 + $0x78] sm:$0xff]
  %v4059 = vld [vmem:[#allocation2 + $0x80] sm:$0xff]
  %v4060 = vld [vmem:[#allocation2 + $0x88] sm:$0xff]
  %v4061 = vld [vmem:[#allocation2 + $0x90] sm:$0xff]
  %v4062 = vld [vmem:[#allocation2 + $0x98] sm:$0xff]
  %v4063 = vld [vmem:[#allocation2 + $0xa0] sm:$0xff]
  %v4064 = vld [vmem:[#allocation2 + $0xa8] sm:$0xff]
  %v4065 = vld [vmem:[#allocation2 + $0xb0] sm:$0xff]
  %v4066 = vld [vmem:[#allocation2 + $0xb8] sm:$0xff]
  %v4067 = vld [vmem:[#allocation2 + $0xc0] sm:$0xff]
  %v4068 = vld [vmem:[#allocation2 + $0xc8] sm:$0xff]
  %v4069 = vld [vmem:[#allocation2 + $0xd0] sm:$0xff]
  %v4070 = vld [vmem:[#allocation2 + $0xd8] sm:$0xff]
  %v4071 = vld [vmem:[#allocation2 + $0xe0] sm:$0xff]
  %v4072 = vld [vmem:[#allocation2 + $0xe8] sm:$0xff]
  %v4073 = vld [vmem:[#allocation2 + $0xf0] sm:$0xff]
  %v4074 = vld [vmem:[#allocation2 + $0xf8] sm:$0xff]
  %v4075 = vld [vmem:[#allocation2 + $0x100] sm:$0xff]
  %v4076 = vld [vmem:[#allocation2 + $0x108] sm:$0xff]
  %v4077 = vld [vmem:[#allocation2 + $0x110] sm:$0xff]
  %v4078 = vld [vmem:[#allocation2 + $0x118] sm:$0xff]
  %v4079 = vld [vmem:[#allocation2 + $0x120] sm:$0xff]
  %v4080 = vld [vmem:[#allocation2 + $0x128] sm:$0xff]
  %v4081 = vld [vmem:[#allocation2 + $0x130] sm:$0xff]
  %v4082 = vld [vmem:[#allocation2 + $0x138] sm:$0xff]
  %v4083 = vld [vmem:[#allocation2 + $0x140] sm:$0xff]
  %v4084 = vld [vmem:[#allocation2 + $0x148] sm:$0xff]
  %v4085 = vld [vmem:[#allocation2 + $0x150] sm:$0xff]
  %v4086 = vld [vmem:[#allocation2 + $0x158] sm:$0xff]
  %v4087 = vld [vmem:[#allocation2 + $0x160] sm:$0xff]
  %v4088 = vld [vmem:[#allocation2 + $0x168] sm:$0xff]
  %v4089 = vld [vmem:[#allocation2 + $0x170] sm:$0xff]
  %v4090 = vld [vmem:[#allocation2 + $0x178] sm:$0xff]
  %v4091 = vld [vmem:[#allocation2 + $0x180] sm:$0xff]
  %v4092 = vld [vmem:[#allocation2 + $0x188] sm:$0xff]
  %v4093 = vld [vmem:[#allocation2 + $0x190] sm:$0xff]
  %v4094 = vld [vmem:[#allocation2 + $0x198] sm:$0xff]
  %v4095 = vld [vmem:[#allocation2 + $0x1a0] sm:$0xff]
  %v4096 = vld [vmem:[#allocation2 + $0x1a8] sm:$0xff]
  %v4097 = vld [vmem:[#allocation2 + $0x1b0] sm:$0xff]
  %v4098 = vld [vmem:[#allocation2 + $0x1b8] sm:$0xff]
  %v4099 = vld [vmem:[#allocation2 + $0x1c0] sm:$0xff]
  %v4100 = vld [vmem:[#allocation2 + $0x1c8] sm:$0xff]
  %v4101 = vld [vmem:[#allocation2 + $0x1d0] sm:$0xff]
  %v4102 = vld [vmem:[#allocation2 + $0x1d8] sm:$0xff]
  %v4103 = vld [vmem:[#allocation2 + $0x1e0] sm:$0xff]
  %v4104 = vld [vmem:[#allocation2 + $0x1e8] sm:$0xff]
  %v4105 = vld [vmem:[#allocation2 + $0x1f0] sm:$0xff]
  %v4106 = vld [vmem:[#allocation2 + $0x1f8] sm:$0xff]
  %v4107 = vld [vmem:[#allocation2 + $0x200] sm:$0xff]
  %v4108 = vld [vmem:[#allocation2 + $0x208] sm:$0xff]
  %v4109 = vld [vmem:[#allocation2 + $0x210] sm:$0xff]
  %v4110 = vld [vmem:[#allocation2 + $0x218] sm:$0xff]
  %v4111 = vld [vmem:[#allocation2 + $0x220] sm:$0xff]
  %v4112 = vld [vmem:[#allocation2 + $0x228] sm:$0xff]
  %v4113 = vld [vmem:[#allocation2 + $0x230] sm:$0xff]
  %v4114 = vld [vmem:[#allocation2 + $0x238] sm:$0xff]
  %v4115 = vld [vmem:[#allocation2 + $0x240] sm:$0xff]
  %v4116 = vld [vmem:[#allocation2 + $0x248] sm:$0xff]
  %v4117 = vld [vmem:[#allocation2 + $0x250] sm:$0xff]
  %v4118 = vld [vmem:[#allocation2 + $0x258] sm:$0xff]
  %v4119 = vld [vmem:[#allocation2 + $0x260] sm:$0xff]
  %v4120 = vld [vmem:[#allocation2 + $0x268] sm:$0xff]
  %v4121 = vld [vmem:[#allocation2 + $0x270] sm:$0xff]
  %v4122 = vld [vmem:[#allocation2 + $0x278] sm:$0xff]
  %v4123 = vld [vmem:[#allocation2 + $0x280] sm:$0xff]
  %v4124 = vld [vmem:[%s0 + $0x14] sm:$0xff]
  %v4125 = vld [vmem:[%s0 + $0x1c] sm:$0xff]
  %v4126 = vld [vmem:[%s0 + $0x24] sm:$0xff]
  %v4127 = vld [vmem:[%s0 + $0x2c] sm:$0xff]
  %v4128 = vld [vmem:[%s0 + $0x34] sm:$0xff]
  %v4129 = vld [vmem:[%s0 + $0x3c] sm:$0xff]
  %v4130 = vld [vmem:[%s0 + $0x44] sm:$0xff]
  %v4131 = vld [vmem:[%s0 + $0x4c] sm:$0xff]
  %v4132 = vld [vmem:[%s0 + $0x54] sm:$0xff]
  %v4133 = vld [vmem:[%s0 + $0x5c] sm:$0xff]
  %v4134 = vld [vmem:[%s0 + $0x64] sm:$0xff]
  %v4135 = vld [vmem:[%s0 + $0x6c] sm:$0xff]
  %v4136 = vld [vmem:[%s0 + $0x74] sm:$0xff]
  %v4137 = vld [vmem:[%s0 + $0x7c] sm:$0xff]
  %v4138 = vld [vmem:[%s0 + $0x84] sm:$0xff]
  %v4139 = vld [vmem:[%s0 + $0x8c] sm:$0xff]
  %v4140 = vld [vmem:[%s0 + $0x94] sm:$0xff]
  %v4141 = vld [vmem:[%s0 + $0x9c] sm:$0xff]
  %v4142 = vld [vmem:[%s0 + $0xa4] sm:$0xff]
  %v4143 = vld [vmem:[%s0 + $0xac] sm:$0xff]
  %v4144 = vld [vmem:[%s0 + $0xb4] sm:$0xff]
  %v4145 = vld [vmem:[%s0 + $0xbc] sm:$0xff]
  %v4146 = vld [vmem:[%s0 + $0xc4] sm:$0xff]
  %v4147 = vld [vmem:[%s0 + $0xcc] sm:$0xff]
  %v4148 = vld [vmem:[%s0 + $0xd4] sm:$0xff]
  %v4149 = vld [vmem:[%s0 + $0xdc] sm:$0xff]
  %v4150 = vld [vmem:[%s0 + $0xe4] sm:$0xff]
  %v4151 = vld [vmem:[%s0 + $0xec] sm:$0xff]
  %v4152 = vld [vmem:[%s0 + $0xf4] sm:$0xff]
  %v4153 = vld [vmem:[%s0 + $0xfc] sm:$0xff]
  %v4154 = vld [vmem:[%s0 + $0x104] sm:$0xff]
  %v4155 = vld [vmem:[%s0 + $0x10c] sm:$0xff]
  %v4156 = vld [vmem:[%s0 + $0x114] sm:$0xff]
  %v4157 = vld [vmem:[%s0 + $0x11c] sm:$0xff]
  %v4158 = vld [vmem:[%s0 + $0x124] sm:$0xff]
  %v4159 = vld [vmem:[%s0 + $0x12c] sm:$0xff]
  %v4160 = vld [vmem:[%s0 + $0x134] sm:$0xff]
  %v4161 = vld [vmem:[%s0 + $0x13c] sm:$0xff]
  %v4162 = vld [vmem:[%s0 + $0x144] sm:$0xff]
  %v4163 = vld [vmem:[%s0 + $0x14c] sm:$0xff]
  %v4164 = vld [vmem:[%s0 + $0x154] sm:$0xff]
  %v4165 = vld [vmem:[%s0 + $0x15c] sm:$0xff]
  %v4166 = vld [vmem:[%s0 + $0x164] sm:$0xff]
  %v4167 = vld [vmem:[%s0 + $0x16c] sm:$0xff]
  %v4168 = vld [vmem:[%s0 + $0x174] sm:$0xff]
  %v4169 = vld [vmem:[%s0 + $0x17c] sm:$0xff]
  %v4170 = vld [vmem:[%s0 + $0x184] sm:$0xff]
  %v4171 = vld [vmem:[%s0 + $0x18c] sm:$0xff]
  %v4172 = vld [vmem:[%s0 + $0x194] sm:$0xff]
  %v4173 = vld [vmem:[%s0 + $0x19c] sm:$0xff]
  %v4174 = vld [vmem:[%s0 + $0x1a4] sm:$0xff]
  %v4175 = vld [vmem:[%s0 + $0x1ac] sm:$0xff]
  %v4176 = vld [vmem:[%s0 + $0x1b4] sm:$0xff]
  %v4177 = vld [vmem:[%s0 + $0x1bc] sm:$0xff]
  %v4178 = vld [vmem:[%s0 + $0x1c4] sm:$0xff]
  %v4179 = vld [vmem:[%s0 + $0x1cc] sm:$0xff]
  %v4180 = vld [vmem:[%s0 + $0x1d4] sm:$0xff]
  %v4181 = vld [vmem:[%s0 + $0x1dc] sm:$0xff]
  %v4182 = vld [vmem:[%s0 + $0x1e4] sm:$0xff]
  %v4183 = vld [vmem:[%s0 + $0x1ec] sm:$0xff]
  %v4184 = vld [vmem:[%s0 + $0x1f4] sm:$0xff]
  %v4185 = vld [vmem:[%s0 + $0x1fc] sm:$0xff]
  %v4186 = vld [vmem:[%s0 + $0x204] sm:$0xff]
  %v4187 = vld [vmem:[%s0 + $0x20c] sm:$0xff]
  %v4188 = vld [vmem:[%s0 + $0x214] sm:$0xff]
  %v4189 = vld [vmem:[%s0 + $0x21c] sm:$0xff]
  %v4190 = vld [vmem:[%s0 + $0x224] sm:$0xff]
  %v4191 = vld [vmem:[%s0 + $0x22c] sm:$0xff]
  %v4192 = vld [vmem:[%s0 + $0x234] sm:$0xff]
  %v4193 = vld [vmem:[%s0 + $0x23c] sm:$0xff]
  %v4194 = vld [vmem:[%s0 + $0x244] sm:$0xff]
  %v4195 = vld [vmem:[%s0 + $0x24c] sm:$0xff]
  %v4196 = vld [vmem:[%s0 + $0x254] sm:$0xff]
  %v4197 = vld [vmem:[%s0 + $0x25c] sm:$0xff]
  %v4198 = vld [vmem:[%s0 + $0x264] sm:$0xff]
  %v4199 = vld [vmem:[%s0 + $0x26c] sm:$0xff]
  %v4200 = vld [vmem:[%s0 + $0x274] sm:$0xff]
  %v4201 = vld [vmem:[%s0 + $0x27c] sm:$0xff]
  %v4202 = vld [vmem:[%s0 + $0x284] sm:$0xff]
  %v4203 = vld [vmem:[%s0 + $0x28c] sm:$0xff]
  %v4204 = vld [vmem:[%s0 + $0x294] sm:$0xff]
  %s4205 = scalar_lea.vmem %s1, 20
  %v4206 = vld [vmem:[%s4205] sm:$0xf]
  %v4208 = vsel %vm125, %v4124, 0
  %v4211 = vsel %vm125, %v4125, 0
  %v4214 = vsel %vm125, %v4126, 0
  %v4217 = vsel %vm125, %v4127, 0
  %v4220 = vsel %vm125, %v4128, 0
  %v4223 = vsel %vm125, %v4129, 0
  %v4226 = vsel %vm125, %v4130, 0
  %v4229 = vsel %vm125, %v4131, 0
  %v4232 = vsel %vm125, %v4132, 0
  %v4235 = vsel %vm125, %v4133, 0
  %v4238 = vsel %vm125, %v4134, 0
  %v4241 = vsel %vm125, %v4135, 0
  %v4244 = vsel %vm125, %v4136, 0
  %v4247 = vsel %vm125, %v4137, 0
  %v4250 = vsel %vm125, %v4138, 0
  %v4253 = vsel %vm125, %v4139, 0
  %v4256 = vsel %vm125, %v4140, 0
  %v4259 = vsel %vm125, %v4141, 0
  %v4262 = vsel %vm125, %v4142, 0
  %v4265 = vsel %vm125, %v4143, 0
  %v4268 = vsel %vm125, %v4144, 0
  %v4271 = vsel %vm125, %v4145, 0
  %v4274 = vsel %vm125, %v4146, 0
  %v4277 = vsel %vm125, %v4147, 0
  %v4280 = vsel %vm125, %v4148, 0
  %v4283 = vsel %vm125, %v4149, 0
  %v4286 = vsel %vm125, %v4150, 0
  %v4289 = vsel %vm125, %v4151, 0
  %v4292 = vsel %vm125, %v4152, 0
  %v4295 = vsel %vm125, %v4153, 0
  %v4298 = vsel %vm125, %v4154, 0
  %v4301 = vsel %vm125, %v4155, 0
  %v4304 = vsel %vm125, %v4156, 0
  %v4307 = vsel %vm125, %v4157, 0
  %v4310 = vsel %vm125, %v4158, 0
  %v4313 = vsel %vm125, %v4159, 0
  %v4316 = vsel %vm125, %v4160, 0
  %v4319 = vsel %vm125, %v4161, 0
  %v4322 = vsel %vm125, %v4162, 0
  %v4325 = vsel %vm125, %v4163, 0
  %v4328 = vsel %vm125, %v4164, 0
  %v4331 = vsel %vm125, %v4165, 0
  %v4334 = vsel %vm125, %v4166, 0
  %v4337 = vsel %vm125, %v4167, 0
  %v4340 = vsel %vm125, %v4168, 0
  %v4343 = vsel %vm125, %v4169, 0
  %v4346 = vsel %vm125, %v4170, 0
  %v4349 = vsel %vm125, %v4171, 0
  %v4352 = vsel %vm125, %v4172, 0
  %v4355 = vsel %vm125, %v4173, 0
  %v4358 = vsel %vm125, %v4174, 0
  %v4361 = vsel %vm125, %v4175, 0
  %v4364 = vsel %vm125, %v4176, 0
  %v4367 = vsel %vm125, %v4177, 0
  %v4370 = vsel %vm125, %v4178, 0
  %v4373 = vsel %vm125, %v4179, 0
  %v4376 = vsel %vm125, %v4180, 0
  %v4379 = vsel %vm125, %v4181, 0
  %v4382 = vsel %vm125, %v4182, 0
  %v4385 = vsel %vm125, %v4183, 0
  %v4388 = vsel %vm125, %v4184, 0
  %v4391 = vsel %vm125, %v4185, 0
  %v4394 = vsel %vm125, %v4186, 0
  %v4397 = vsel %vm125, %v4187, 0
  %v4400 = vsel %vm125, %v4188, 0
  %v4403 = vsel %vm125, %v4189, 0
  %v4406 = vsel %vm125, %v4190, 0
  %v4409 = vsel %vm125, %v4191, 0
  %v4412 = vsel %vm125, %v4192, 0
  %v4415 = vsel %vm125, %v4193, 0
  %v4418 = vsel %vm125, %v4194, 0
  %v4421 = vsel %vm125, %v4195, 0
  %v4424 = vsel %vm125, %v4196, 0
  %v4427 = vsel %vm125, %v4197, 0
  %v4430 = vsel %vm125, %v4198, 0
  %v4433 = vsel %vm125, %v4199, 0
  %v4436 = vsel %vm125, %v4200, 0
  %v4439 = vsel %vm125, %v4201, 0
  %v4442 = vsel %vm125, %v4202, 0
  %v4445 = vsel %vm125, %v4203, 0
  %v4448 = vsel %vm125, %v4204, 0
  %v4451 = vsel %vm369, %v4206, 0
  %4453 = vmatpush.msra.mxu0 0.0
  %4454 = vmatpush.msra.mxu0 0.0
  %4455 = vmatpush.msra.mxu0 0.0
  %4456 = vmatpush.msra.mxu0 0.0
  %4457 = vmatpush.msra.mxu0 0.0
  %4458 = vmatpush.msra.mxu0 0.0
  %4459 = vmatpush.msra.mxu0 0.0
  %4460 = vmatpush.msra.mxu0 0.0
  %4461 = vmatpush.msra.mxu0 0.0
  %4462 = vmatpush.msra.mxu0 0.0
  %4463 = vmatpush.msra.mxu0 0.0
  %4464 = vmatpush.msra.mxu0 0.0
  %4465 = vmatpush.msra.mxu0 0.0
  %4466 = vmatpush.msra.mxu0 0.0
  %4467 = vmatpush.msra.mxu0 0.0
  %4468 = vmatpush.msra.mxu0 %v4451
  %4469 = vmatmul.f32.gmra.mxu0 %v4208
  %v4470 = vpop.f32.mrf.mxu0
  %v4471 = vadd.f32 0.0, %v4470
  %4472 = vmatmul.f32.gmra.mxu0 %v4211
  %v4473 = vpop.f32.mrf.mxu0
  %v4474 = vadd.f32 0.0, %v4473
  %4475 = vmatmul.f32.gmra.mxu0 %v4214
  %v4476 = vpop.f32.mrf.mxu0
  %v4477 = vadd.f32 0.0, %v4476
  %4478 = vmatmul.f32.gmra.mxu0 %v4217
  %v4479 = vpop.f32.mrf.mxu0
  %v4480 = vadd.f32 0.0, %v4479
  %4481 = vmatmul.f32.gmra.mxu0 %v4220
  %v4482 = vpop.f32.mrf.mxu0
  %v4483 = vadd.f32 0.0, %v4482
  %4484 = vmatmul.f32.gmra.mxu0 %v4223
  %v4485 = vpop.f32.mrf.mxu0
  %v4486 = vadd.f32 0.0, %v4485
  %4487 = vmatmul.f32.gmra.mxu0 %v4226
  %v4488 = vpop.f32.mrf.mxu0
  %v4489 = vadd.f32 0.0, %v4488
  %4490 = vmatmul.f32.gmra.mxu0 %v4229
  %v4491 = vpop.f32.mrf.mxu0
  %v4492 = vadd.f32 0.0, %v4491
  %4493 = vmatmul.f32.gmra.mxu0 %v4232
  %v4494 = vpop.f32.mrf.mxu0
  %v4495 = vadd.f32 0.0, %v4494
  %4496 = vmatmul.f32.gmra.mxu0 %v4235
  %v4497 = vpop.f32.mrf.mxu0
  %v4498 = vadd.f32 0.0, %v4497
  %4499 = vmatmul.f32.gmra.mxu0 %v4238
  %v4500 = vpop.f32.mrf.mxu0
  %v4501 = vadd.f32 0.0, %v4500
  %4502 = vmatmul.f32.gmra.mxu0 %v4241
  %v4503 = vpop.f32.mrf.mxu0
  %v4504 = vadd.f32 0.0, %v4503
  %4505 = vmatmul.f32.gmra.mxu0 %v4244
  %v4506 = vpop.f32.mrf.mxu0
  %v4507 = vadd.f32 0.0, %v4506
  %4508 = vmatmul.f32.gmra.mxu0 %v4247
  %v4509 = vpop.f32.mrf.mxu0
  %v4510 = vadd.f32 0.0, %v4509
  %4511 = vmatmul.f32.gmra.mxu0 %v4250
  %v4512 = vpop.f32.mrf.mxu0
  %v4513 = vadd.f32 0.0, %v4512
  %4514 = vmatmul.f32.gmra.mxu0 %v4253
  %v4515 = vpop.f32.mrf.mxu0
  %v4516 = vadd.f32 0.0, %v4515
  %4517 = vmatmul.f32.gmra.mxu0 %v4256
  %v4518 = vpop.f32.mrf.mxu0
  %v4519 = vadd.f32 0.0, %v4518
  %4520 = vmatmul.f32.gmra.mxu0 %v4259
  %v4521 = vpop.f32.mrf.mxu0
  %v4522 = vadd.f32 0.0, %v4521
  %4523 = vmatmul.f32.gmra.mxu0 %v4262
  %v4524 = vpop.f32.mrf.mxu0
  %v4525 = vadd.f32 0.0, %v4524
  %4526 = vmatmul.f32.gmra.mxu0 %v4265
  %v4527 = vpop.f32.mrf.mxu0
  %v4528 = vadd.f32 0.0, %v4527
  %4529 = vmatmul.f32.gmra.mxu0 %v4268
  %v4530 = vpop.f32.mrf.mxu0
  %v4531 = vadd.f32 0.0, %v4530
  %4532 = vmatmul.f32.gmra.mxu0 %v4271
  %v4533 = vpop.f32.mrf.mxu0
  %v4534 = vadd.f32 0.0, %v4533
  %4535 = vmatmul.f32.gmra.mxu0 %v4274
  %v4536 = vpop.f32.mrf.mxu0
  %v4537 = vadd.f32 0.0, %v4536
  %4538 = vmatmul.f32.gmra.mxu0 %v4277
  %v4539 = vpop.f32.mrf.mxu0
  %v4540 = vadd.f32 0.0, %v4539
  %4541 = vmatmul.f32.gmra.mxu0 %v4280
  %v4542 = vpop.f32.mrf.mxu0
  %v4543 = vadd.f32 0.0, %v4542
  %4544 = vmatmul.f32.gmra.mxu0 %v4283
  %v4545 = vpop.f32.mrf.mxu0
  %v4546 = vadd.f32 0.0, %v4545
  %4547 = vmatmul.f32.gmra.mxu0 %v4286
  %v4548 = vpop.f32.mrf.mxu0
  %v4549 = vadd.f32 0.0, %v4548
  %4550 = vmatmul.f32.gmra.mxu0 %v4289
  %v4551 = vpop.f32.mrf.mxu0
  %v4552 = vadd.f32 0.0, %v4551
  %4553 = vmatmul.f32.gmra.mxu0 %v4292
  %v4554 = vpop.f32.mrf.mxu0
  %v4555 = vadd.f32 0.0, %v4554
  %4556 = vmatmul.f32.gmra.mxu0 %v4295
  %v4557 = vpop.f32.mrf.mxu0
  %v4558 = vadd.f32 0.0, %v4557
  %4559 = vmatmul.f32.gmra.mxu0 %v4298
  %v4560 = vpop.f32.mrf.mxu0
  %v4561 = vadd.f32 0.0, %v4560
  %4562 = vmatmul.f32.gmra.mxu0 %v4301
  %v4563 = vpop.f32.mrf.mxu0
  %v4564 = vadd.f32 0.0, %v4563
  %4565 = vmatmul.f32.gmra.mxu0 %v4304
  %v4566 = vpop.f32.mrf.mxu0
  %v4567 = vadd.f32 0.0, %v4566
  %4568 = vmatmul.f32.gmra.mxu0 %v4307
  %v4569 = vpop.f32.mrf.mxu0
  %v4570 = vadd.f32 0.0, %v4569
  %4571 = vmatmul.f32.gmra.mxu0 %v4310
  %v4572 = vpop.f32.mrf.mxu0
  %v4573 = vadd.f32 0.0, %v4572
  %4574 = vmatmul.f32.gmra.mxu0 %v4313
  %v4575 = vpop.f32.mrf.mxu0
  %v4576 = vadd.f32 0.0, %v4575
  %4577 = vmatmul.f32.gmra.mxu0 %v4316
  %v4578 = vpop.f32.mrf.mxu0
  %v4579 = vadd.f32 0.0, %v4578
  %4580 = vmatmul.f32.gmra.mxu0 %v4319
  %v4581 = vpop.f32.mrf.mxu0
  %v4582 = vadd.f32 0.0, %v4581
  %4583 = vmatmul.f32.gmra.mxu0 %v4322
  %v4584 = vpop.f32.mrf.mxu0
  %v4585 = vadd.f32 0.0, %v4584
  %4586 = vmatmul.f32.gmra.mxu0 %v4325
  %v4587 = vpop.f32.mrf.mxu0
  %v4588 = vadd.f32 0.0, %v4587
  %4589 = vmatmul.f32.gmra.mxu0 %v4328
  %v4590 = vpop.f32.mrf.mxu0
  %v4591 = vadd.f32 0.0, %v4590
  %4592 = vmatmul.f32.gmra.mxu0 %v4331
  %v4593 = vpop.f32.mrf.mxu0
  %v4594 = vadd.f32 0.0, %v4593
  %4595 = vmatmul.f32.gmra.mxu0 %v4334
  %v4596 = vpop.f32.mrf.mxu0
  %v4597 = vadd.f32 0.0, %v4596
  %4598 = vmatmul.f32.gmra.mxu0 %v4337
  %v4599 = vpop.f32.mrf.mxu0
  %v4600 = vadd.f32 0.0, %v4599
  %4601 = vmatmul.f32.gmra.mxu0 %v4340
  %v4602 = vpop.f32.mrf.mxu0
  %v4603 = vadd.f32 0.0, %v4602
  %4604 = vmatmul.f32.gmra.mxu0 %v4343
  %v4605 = vpop.f32.mrf.mxu0
  %v4606 = vadd.f32 0.0, %v4605
  %4607 = vmatmul.f32.gmra.mxu0 %v4346
  %v4608 = vpop.f32.mrf.mxu0
  %v4609 = vadd.f32 0.0, %v4608
  %4610 = vmatmul.f32.gmra.mxu0 %v4349
  %v4611 = vpop.f32.mrf.mxu0
  %v4612 = vadd.f32 0.0, %v4611
  %4613 = vmatmul.f32.gmra.mxu0 %v4352
  %v4614 = vpop.f32.mrf.mxu0
  %v4615 = vadd.f32 0.0, %v4614
  %4616 = vmatmul.f32.gmra.mxu0 %v4355
  %v4617 = vpop.f32.mrf.mxu0
  %v4618 = vadd.f32 0.0, %v4617
  %4619 = vmatmul.f32.gmra.mxu0 %v4358
  %v4620 = vpop.f32.mrf.mxu0
  %v4621 = vadd.f32 0.0, %v4620
  %4622 = vmatmul.f32.gmra.mxu0 %v4361
  %v4623 = vpop.f32.mrf.mxu0
  %v4624 = vadd.f32 0.0, %v4623
  %4625 = vmatmul.f32.gmra.mxu0 %v4364
  %v4626 = vpop.f32.mrf.mxu0
  %v4627 = vadd.f32 0.0, %v4626
  %4628 = vmatmul.f32.gmra.mxu0 %v4367
  %v4629 = vpop.f32.mrf.mxu0
  %v4630 = vadd.f32 0.0, %v4629
  %4631 = vmatmul.f32.gmra.mxu0 %v4370
  %v4632 = vpop.f32.mrf.mxu0
  %v4633 = vadd.f32 0.0, %v4632
  %4634 = vmatmul.f32.gmra.mxu0 %v4373
  %v4635 = vpop.f32.mrf.mxu0
  %v4636 = vadd.f32 0.0, %v4635
  %4637 = vmatmul.f32.gmra.mxu0 %v4376
  %v4638 = vpop.f32.mrf.mxu0
  %v4639 = vadd.f32 0.0, %v4638
  %4640 = vmatmul.f32.gmra.mxu0 %v4379
  %v4641 = vpop.f32.mrf.mxu0
  %v4642 = vadd.f32 0.0, %v4641
  %4643 = vmatmul.f32.gmra.mxu0 %v4382
  %v4644 = vpop.f32.mrf.mxu0
  %v4645 = vadd.f32 0.0, %v4644
  %4646 = vmatmul.f32.gmra.mxu0 %v4385
  %v4647 = vpop.f32.mrf.mxu0
  %v4648 = vadd.f32 0.0, %v4647
  %4649 = vmatmul.f32.gmra.mxu0 %v4388
  %v4650 = vpop.f32.mrf.mxu0
  %v4651 = vadd.f32 0.0, %v4650
  %4652 = vmatmul.f32.gmra.mxu0 %v4391
  %v4653 = vpop.f32.mrf.mxu0
  %v4654 = vadd.f32 0.0, %v4653
  %4655 = vmatmul.f32.gmra.mxu0 %v4394
  %v4656 = vpop.f32.mrf.mxu0
  %v4657 = vadd.f32 0.0, %v4656
  %4658 = vmatmul.f32.gmra.mxu0 %v4397
  %v4659 = vpop.f32.mrf.mxu0
  %v4660 = vadd.f32 0.0, %v4659
  %4661 = vmatmul.f32.gmra.mxu0 %v4400
  %v4662 = vpop.f32.mrf.mxu0
  %v4663 = vadd.f32 0.0, %v4662
  %4664 = vmatmul.f32.gmra.mxu0 %v4403
  %v4665 = vpop.f32.mrf.mxu0
  %v4666 = vadd.f32 0.0, %v4665
  %4667 = vmatmul.f32.gmra.mxu0 %v4406
  %v4668 = vpop.f32.mrf.mxu0
  %v4669 = vadd.f32 0.0, %v4668
  %4670 = vmatmul.f32.gmra.mxu0 %v4409
  %v4671 = vpop.f32.mrf.mxu0
  %v4672 = vadd.f32 0.0, %v4671
  %4673 = vmatmul.f32.gmra.mxu0 %v4412
  %v4674 = vpop.f32.mrf.mxu0
  %v4675 = vadd.f32 0.0, %v4674
  %4676 = vmatmul.f32.gmra.mxu0 %v4415
  %v4677 = vpop.f32.mrf.mxu0
  %v4678 = vadd.f32 0.0, %v4677
  %4679 = vmatmul.f32.gmra.mxu0 %v4418
  %v4680 = vpop.f32.mrf.mxu0
  %v4681 = vadd.f32 0.0, %v4680
  %4682 = vmatmul.f32.gmra.mxu0 %v4421
  %v4683 = vpop.f32.mrf.mxu0
  %v4684 = vadd.f32 0.0, %v4683
  %4685 = vmatmul.f32.gmra.mxu0 %v4424
  %v4686 = vpop.f32.mrf.mxu0
  %v4687 = vadd.f32 0.0, %v4686
  %4688 = vmatmul.f32.gmra.mxu0 %v4427
  %v4689 = vpop.f32.mrf.mxu0
  %v4690 = vadd.f32 0.0, %v4689
  %4691 = vmatmul.f32.gmra.mxu0 %v4430
  %v4692 = vpop.f32.mrf.mxu0
  %v4693 = vadd.f32 0.0, %v4692
  %4694 = vmatmul.f32.gmra.mxu0 %v4433
  %v4695 = vpop.f32.mrf.mxu0
  %v4696 = vadd.f32 0.0, %v4695
  %4697 = vmatmul.f32.gmra.mxu0 %v4436
  %v4698 = vpop.f32.mrf.mxu0
  %v4699 = vadd.f32 0.0, %v4698
  %4700 = vmatmul.f32.gmra.mxu0 %v4439
  %v4701 = vpop.f32.mrf.mxu0
  %v4702 = vadd.f32 0.0, %v4701
  %4703 = vmatmul.f32.gmra.mxu0 %v4442
  %v4704 = vpop.f32.mrf.mxu0
  %v4705 = vadd.f32 0.0, %v4704
  %4706 = vmatmul.f32.gmra.mxu0 %v4445
  %v4707 = vpop.f32.mrf.mxu0
  %v4708 = vadd.f32 0.0, %v4707
  %4709 = vmatmul.f32.gmra.mxu0 %v4448
  %v4710 = vpop.f32.mrf.mxu0
  %v4711 = vadd.f32 0.0, %v4710
  %4712 = vdwg.mxu0
  %v4713 = vadd.f32 %v4043, %v4471
  %v4714 = vadd.f32 %v4044, %v4474
  %v4715 = vadd.f32 %v4045, %v4477
  %v4716 = vadd.f32 %v4046, %v4480
  %v4717 = vadd.f32 %v4047, %v4483
  %v4718 = vadd.f32 %v4048, %v4486
  %v4719 = vadd.f32 %v4049, %v4489
  %v4720 = vadd.f32 %v4050, %v4492
  %v4721 = vadd.f32 %v4051, %v4495
  %v4722 = vadd.f32 %v4052, %v4498
  %v4723 = vadd.f32 %v4053, %v4501
  %v4724 = vadd.f32 %v4054, %v4504
  %v4725 = vadd.f32 %v4055, %v4507
  %v4726 = vadd.f32 %v4056, %v4510
  %v4727 = vadd.f32 %v4057, %v4513
  %v4728 = vadd.f32 %v4058, %v4516
  %v4729 = vadd.f32 %v4059, %v4519
  %v4730 = vadd.f32 %v4060, %v4522
  %v4731 = vadd.f32 %v4061, %v4525
  %v4732 = vadd.f32 %v4062, %v4528
  %v4733 = vadd.f32 %v4063, %v4531
  %v4734 = vadd.f32 %v4064, %v4534
  %v4735 = vadd.f32 %v4065, %v4537
  %v4736 = vadd.f32 %v4066, %v4540
  %v4737 = vadd.f32 %v4067, %v4543
  %v4738 = vadd.f32 %v4068, %v4546
  %v4739 = vadd.f32 %v4069, %v4549
  %v4740 = vadd.f32 %v4070, %v4552
  %v4741 = vadd.f32 %v4071, %v4555
  %v4742 = vadd.f32 %v4072, %v4558
  %v4743 = vadd.f32 %v4073, %v4561
  %v4744 = vadd.f32 %v4074, %v4564
  %v4745 = vadd.f32 %v4075, %v4567
  %v4746 = vadd.f32 %v4076, %v4570
  %v4747 = vadd.f32 %v4077, %v4573
  %v4748 = vadd.f32 %v4078, %v4576
  %v4749 = vadd.f32 %v4079, %v4579
  %v4750 = vadd.f32 %v4080, %v4582
  %v4751 = vadd.f32 %v4081, %v4585
  %v4752 = vadd.f32 %v4082, %v4588
  %v4753 = vadd.f32 %v4083, %v4591
  %v4754 = vadd.f32 %v4084, %v4594
  %v4755 = vadd.f32 %v4085, %v4597
  %v4756 = vadd.f32 %v4086, %v4600
  %v4757 = vadd.f32 %v4087, %v4603
  %v4758 = vadd.f32 %v4088, %v4606
  %v4759 = vadd.f32 %v4089, %v4609
  %v4760 = vadd.f32 %v4090, %v4612
  %v4761 = vadd.f32 %v4091, %v4615
  %v4762 = vadd.f32 %v4092, %v4618
  %v4763 = vadd.f32 %v4093, %v4621
  %v4764 = vadd.f32 %v4094, %v4624
  %v4765 = vadd.f32 %v4095, %v4627
  %v4766 = vadd.f32 %v4096, %v4630
  %v4767 = vadd.f32 %v4097, %v4633
  %v4768 = vadd.f32 %v4098, %v4636
  %v4769 = vadd.f32 %v4099, %v4639
  %v4770 = vadd.f32 %v4100, %v4642
  %v4771 = vadd.f32 %v4101, %v4645
  %v4772 = vadd.f32 %v4102, %v4648
  %v4773 = vadd.f32 %v4103, %v4651
  %v4774 = vadd.f32 %v4104, %v4654
  %v4775 = vadd.f32 %v4105, %v4657
  %v4776 = vadd.f32 %v4106, %v4660
  %v4777 = vadd.f32 %v4107, %v4663
  %v4778 = vadd.f32 %v4108, %v4666
  %v4779 = vadd.f32 %v4109, %v4669
  %v4780 = vadd.f32 %v4110, %v4672
  %v4781 = vadd.f32 %v4111, %v4675
  %v4782 = vadd.f32 %v4112, %v4678
  %v4783 = vadd.f32 %v4113, %v4681
  %v4784 = vadd.f32 %v4114, %v4684
  %v4785 = vadd.f32 %v4115, %v4687
  %v4786 = vadd.f32 %v4116, %v4690
  %v4787 = vadd.f32 %v4117, %v4693
  %v4788 = vadd.f32 %v4118, %v4696
  %v4789 = vadd.f32 %v4119, %v4699
  %v4790 = vadd.f32 %v4120, %v4702
  %v4791 = vadd.f32 %v4121, %v4705
  %v4792 = vadd.f32 %v4122, %v4708
  %v4793 = vadd.f32 %v4123, %v4711
  %4794 = vst.msk [vmem:[#allocation2] sm:$0xff] %vm633, %v4713
  %4795 = vst.msk [vmem:[#allocation2 + $0x8] sm:$0xff] %vm633, %v4714
  %4796 = vst.msk [vmem:[#allocation2 + $0x10] sm:$0xff] %vm633, %v4715
  %4797 = vst.msk [vmem:[#allocation2 + $0x18] sm:$0xff] %vm633, %v4716
  %4798 = vst.msk [vmem:[#allocation2 + $0x20] sm:$0xff] %vm633, %v4717
  %4799 = vst.msk [vmem:[#allocation2 + $0x28] sm:$0xff] %vm633, %v4718
  %4800 = vst.msk [vmem:[#allocation2 + $0x30] sm:$0xff] %vm633, %v4719
  %4801 = vst.msk [vmem:[#allocation2 + $0x38] sm:$0xff] %vm633, %v4720
  %4802 = vst.msk [vmem:[#allocation2 + $0x40] sm:$0xff] %vm633, %v4721
  %4803 = vst.msk [vmem:[#allocation2 + $0x48] sm:$0xff] %vm633, %v4722
  %4804 = vst.msk [vmem:[#allocation2 + $0x50] sm:$0xff] %vm633, %v4723
  %4805 = vst.msk [vmem:[#allocation2 + $0x58] sm:$0xff] %vm633, %v4724
  %4806 = vst.msk [vmem:[#allocation2 + $0x60] sm:$0xff] %vm633, %v4725
  %4807 = vst.msk [vmem:[#allocation2 + $0x68] sm:$0xff] %vm633, %v4726
  %4808 = vst.msk [vmem:[#allocation2 + $0x70] sm:$0xff] %vm633, %v4727
  %4809 = vst.msk [vmem:[#allocation2 + $0x78] sm:$0xff] %vm633, %v4728
  %4810 = vst.msk [vmem:[#allocation2 + $0x80] sm:$0xff] %vm633, %v4729
  %4811 = vst.msk [vmem:[#allocation2 + $0x88] sm:$0xff] %vm633, %v4730
  %4812 = vst.msk [vmem:[#allocation2 + $0x90] sm:$0xff] %vm633, %v4731
  %4813 = vst.msk [vmem:[#allocation2 + $0x98] sm:$0xff] %vm633, %v4732
  %4814 = vst.msk [vmem:[#allocation2 + $0xa0] sm:$0xff] %vm633, %v4733
  %4815 = vst.msk [vmem:[#allocation2 + $0xa8] sm:$0xff] %vm633, %v4734
  %4816 = vst.msk [vmem:[#allocation2 + $0xb0] sm:$0xff] %vm633, %v4735
  %4817 = vst.msk [vmem:[#allocation2 + $0xb8] sm:$0xff] %vm633, %v4736
  %4818 = vst.msk [vmem:[#allocation2 + $0xc0] sm:$0xff] %vm633, %v4737
  %4819 = vst.msk [vmem:[#allocation2 + $0xc8] sm:$0xff] %vm633, %v4738
  %4820 = vst.msk [vmem:[#allocation2 + $0xd0] sm:$0xff] %vm633, %v4739
  %4821 = vst.msk [vmem:[#allocation2 + $0xd8] sm:$0xff] %vm633, %v4740
  %4822 = vst.msk [vmem:[#allocation2 + $0xe0] sm:$0xff] %vm633, %v4741
  %4823 = vst.msk [vmem:[#allocation2 + $0xe8] sm:$0xff] %vm633, %v4742
  %4824 = vst.msk [vmem:[#allocation2 + $0xf0] sm:$0xff] %vm633, %v4743
  %4825 = vst.msk [vmem:[#allocation2 + $0xf8] sm:$0xff] %vm633, %v4744
  %4826 = vst.msk [vmem:[#allocation2 + $0x100] sm:$0xff] %vm633, %v4745
  %4827 = vst.msk [vmem:[#allocation2 + $0x108] sm:$0xff] %vm633, %v4746
  %4828 = vst.msk [vmem:[#allocation2 + $0x110] sm:$0xff] %vm633, %v4747
  %4829 = vst.msk [vmem:[#allocation2 + $0x118] sm:$0xff] %vm633, %v4748
  %4830 = vst.msk [vmem:[#allocation2 + $0x120] sm:$0xff] %vm633, %v4749
  %4831 = vst.msk [vmem:[#allocation2 + $0x128] sm:$0xff] %vm633, %v4750
  %4832 = vst.msk [vmem:[#allocation2 + $0x130] sm:$0xff] %vm633, %v4751
  %4833 = vst.msk [vmem:[#allocation2 + $0x138] sm:$0xff] %vm633, %v4752
  %4834 = vst.msk [vmem:[#allocation2 + $0x140] sm:$0xff] %vm633, %v4753
  %4835 = vst.msk [vmem:[#allocation2 + $0x148] sm:$0xff] %vm633, %v4754
  %4836 = vst.msk [vmem:[#allocation2 + $0x150] sm:$0xff] %vm633, %v4755
  %4837 = vst.msk [vmem:[#allocation2 + $0x158] sm:$0xff] %vm633, %v4756
  %4838 = vst.msk [vmem:[#allocation2 + $0x160] sm:$0xff] %vm633, %v4757
  %4839 = vst.msk [vmem:[#allocation2 + $0x168] sm:$0xff] %vm633, %v4758
  %4840 = vst.msk [vmem:[#allocation2 + $0x170] sm:$0xff] %vm633, %v4759
  %4841 = vst.msk [vmem:[#allocation2 + $0x178] sm:$0xff] %vm633, %v4760
  %4842 = vst.msk [vmem:[#allocation2 + $0x180] sm:$0xff] %vm633, %v4761
  %4843 = vst.msk [vmem:[#allocation2 + $0x188] sm:$0xff] %vm633, %v4762
  %4844 = vst.msk [vmem:[#allocation2 + $0x190] sm:$0xff] %vm633, %v4763
  %4845 = vst.msk [vmem:[#allocation2 + $0x198] sm:$0xff] %vm633, %v4764
  %4846 = vst.msk [vmem:[#allocation2 + $0x1a0] sm:$0xff] %vm633, %v4765
  %4847 = vst.msk [vmem:[#allocation2 + $0x1a8] sm:$0xff] %vm633, %v4766
  %4848 = vst.msk [vmem:[#allocation2 + $0x1b0] sm:$0xff] %vm633, %v4767
  %4849 = vst.msk [vmem:[#allocation2 + $0x1b8] sm:$0xff] %vm633, %v4768
  %4850 = vst.msk [vmem:[#allocation2 + $0x1c0] sm:$0xff] %vm633, %v4769
  %4851 = vst.msk [vmem:[#allocation2 + $0x1c8] sm:$0xff] %vm633, %v4770
  %4852 = vst.msk [vmem:[#allocation2 + $0x1d0] sm:$0xff] %vm633, %v4771
  %4853 = vst.msk [vmem:[#allocation2 + $0x1d8] sm:$0xff] %vm633, %v4772
  %4854 = vst.msk [vmem:[#allocation2 + $0x1e0] sm:$0xff] %vm633, %v4773
  %4855 = vst.msk [vmem:[#allocation2 + $0x1e8] sm:$0xff] %vm633, %v4774
  %4856 = vst.msk [vmem:[#allocation2 + $0x1f0] sm:$0xff] %vm633, %v4775
  %4857 = vst.msk [vmem:[#allocation2 + $0x1f8] sm:$0xff] %vm633, %v4776
  %4858 = vst.msk [vmem:[#allocation2 + $0x200] sm:$0xff] %vm633, %v4777
  %4859 = vst.msk [vmem:[#allocation2 + $0x208] sm:$0xff] %vm633, %v4778
  %4860 = vst.msk [vmem:[#allocation2 + $0x210] sm:$0xff] %vm633, %v4779
  %4861 = vst.msk [vmem:[#allocation2 + $0x218] sm:$0xff] %vm633, %v4780
  %4862 = vst.msk [vmem:[#allocation2 + $0x220] sm:$0xff] %vm633, %v4781
  %4863 = vst.msk [vmem:[#allocation2 + $0x228] sm:$0xff] %vm633, %v4782
  %4864 = vst.msk [vmem:[#allocation2 + $0x230] sm:$0xff] %vm633, %v4783
  %4865 = vst.msk [vmem:[#allocation2 + $0x238] sm:$0xff] %vm633, %v4784
  %4866 = vst.msk [vmem:[#allocation2 + $0x240] sm:$0xff] %vm633, %v4785
  %4867 = vst.msk [vmem:[#allocation2 + $0x248] sm:$0xff] %vm633, %v4786
  %4868 = vst.msk [vmem:[#allocation2 + $0x250] sm:$0xff] %vm633, %v4787
  %4869 = vst.msk [vmem:[#allocation2 + $0x258] sm:$0xff] %vm633, %v4788
  %4870 = vst.msk [vmem:[#allocation2 + $0x260] sm:$0xff] %vm633, %v4789
  %4871 = vst.msk [vmem:[#allocation2 + $0x268] sm:$0xff] %vm633, %v4790
  %4872 = vst.msk [vmem:[#allocation2 + $0x270] sm:$0xff] %vm633, %v4791
  %4873 = vst.msk [vmem:[#allocation2 + $0x278] sm:$0xff] %vm633, %v4792
  %4874 = vst.msk [vmem:[#allocation2 + $0x280] sm:$0xff] %vm633, %v4793
  %v4875 = vld [vmem:[#allocation2] sm:$0xff]
  %v4876 = vld [vmem:[#allocation2 + $0x8] sm:$0xff]
  %v4877 = vld [vmem:[#allocation2 + $0x10] sm:$0xff]
  %v4878 = vld [vmem:[#allocation2 + $0x18] sm:$0xff]
  %v4879 = vld [vmem:[#allocation2 + $0x20] sm:$0xff]
  %v4880 = vld [vmem:[#allocation2 + $0x28] sm:$0xff]
  %v4881 = vld [vmem:[#allocation2 + $0x30] sm:$0xff]
  %v4882 = vld [vmem:[#allocation2 + $0x38] sm:$0xff]
  %v4883 = vld [vmem:[#allocation2 + $0x40] sm:$0xff]
  %v4884 = vld [vmem:[#allocation2 + $0x48] sm:$0xff]
  %v4885 = vld [vmem:[#allocation2 + $0x50] sm:$0xff]
  %v4886 = vld [vmem:[#allocation2 + $0x58] sm:$0xff]
  %v4887 = vld [vmem:[#allocation2 + $0x60] sm:$0xff]
  %v4888 = vld [vmem:[#allocation2 + $0x68] sm:$0xff]
  %v4889 = vld [vmem:[#allocation2 + $0x70] sm:$0xff]
  %v4890 = vld [vmem:[#allocation2 + $0x78] sm:$0xff]
  %v4891 = vld [vmem:[#allocation2 + $0x80] sm:$0xff]
  %v4892 = vld [vmem:[#allocation2 + $0x88] sm:$0xff]
  %v4893 = vld [vmem:[#allocation2 + $0x90] sm:$0xff]
  %v4894 = vld [vmem:[#allocation2 + $0x98] sm:$0xff]
  %v4895 = vld [vmem:[#allocation2 + $0xa0] sm:$0xff]
  %v4896 = vld [vmem:[#allocation2 + $0xa8] sm:$0xff]
  %v4897 = vld [vmem:[#allocation2 + $0xb0] sm:$0xff]
  %v4898 = vld [vmem:[#allocation2 + $0xb8] sm:$0xff]
  %v4899 = vld [vmem:[#allocation2 + $0xc0] sm:$0xff]
  %v4900 = vld [vmem:[#allocation2 + $0xc8] sm:$0xff]
  %v4901 = vld [vmem:[#allocation2 + $0xd0] sm:$0xff]
  %v4902 = vld [vmem:[#allocation2 + $0xd8] sm:$0xff]
  %v4903 = vld [vmem:[#allocation2 + $0xe0] sm:$0xff]
  %v4904 = vld [vmem:[#allocation2 + $0xe8] sm:$0xff]
  %v4905 = vld [vmem:[#allocation2 + $0xf0] sm:$0xff]
  %v4906 = vld [vmem:[#allocation2 + $0xf8] sm:$0xff]
  %v4907 = vld [vmem:[#allocation2 + $0x100] sm:$0xff]
  %v4908 = vld [vmem:[#allocation2 + $0x108] sm:$0xff]
  %v4909 = vld [vmem:[#allocation2 + $0x110] sm:$0xff]
  %v4910 = vld [vmem:[#allocation2 + $0x118] sm:$0xff]
  %v4911 = vld [vmem:[#allocation2 + $0x120] sm:$0xff]
  %v4912 = vld [vmem:[#allocation2 + $0x128] sm:$0xff]
  %v4913 = vld [vmem:[#allocation2 + $0x130] sm:$0xff]
  %v4914 = vld [vmem:[#allocation2 + $0x138] sm:$0xff]
  %v4915 = vld [vmem:[#allocation2 + $0x140] sm:$0xff]
  %v4916 = vld [vmem:[#allocation2 + $0x148] sm:$0xff]
  %v4917 = vld [vmem:[#allocation2 + $0x150] sm:$0xff]
  %v4918 = vld [vmem:[#allocation2 + $0x158] sm:$0xff]
  %v4919 = vld [vmem:[#allocation2 + $0x160] sm:$0xff]
  %v4920 = vld [vmem:[#allocation2 + $0x168] sm:$0xff]
  %v4921 = vld [vmem:[#allocation2 + $0x170] sm:$0xff]
  %v4922 = vld [vmem:[#allocation2 + $0x178] sm:$0xff]
  %v4923 = vld [vmem:[#allocation2 + $0x180] sm:$0xff]
  %v4924 = vld [vmem:[#allocation2 + $0x188] sm:$0xff]
  %v4925 = vld [vmem:[#allocation2 + $0x190] sm:$0xff]
  %v4926 = vld [vmem:[#allocation2 + $0x198] sm:$0xff]
  %v4927 = vld [vmem:[#allocation2 + $0x1a0] sm:$0xff]
  %v4928 = vld [vmem:[#allocation2 + $0x1a8] sm:$0xff]
  %v4929 = vld [vmem:[#allocation2 + $0x1b0] sm:$0xff]
  %v4930 = vld [vmem:[#allocation2 + $0x1b8] sm:$0xff]
  %v4931 = vld [vmem:[#allocation2 + $0x1c0] sm:$0xff]
  %v4932 = vld [vmem:[#allocation2 + $0x1c8] sm:$0xff]
  %v4933 = vld [vmem:[#allocation2 + $0x1d0] sm:$0xff]
  %v4934 = vld [vmem:[#allocation2 + $0x1d8] sm:$0xff]
  %v4935 = vld [vmem:[#allocation2 + $0x1e0] sm:$0xff]
  %v4936 = vld [vmem:[#allocation2 + $0x1e8] sm:$0xff]
  %v4937 = vld [vmem:[#allocation2 + $0x1f0] sm:$0xff]
  %v4938 = vld [vmem:[#allocation2 + $0x1f8] sm:$0xff]
  %v4939 = vld [vmem:[#allocation2 + $0x200] sm:$0xff]
  %v4940 = vld [vmem:[#allocation2 + $0x208] sm:$0xff]
  %v4941 = vld [vmem:[#allocation2 + $0x210] sm:$0xff]
  %v4942 = vld [vmem:[#allocation2 + $0x218] sm:$0xff]
  %v4943 = vld [vmem:[#allocation2 + $0x220] sm:$0xff]
  %v4944 = vld [vmem:[#allocation2 + $0x228] sm:$0xff]
  %v4945 = vld [vmem:[#allocation2 + $0x230] sm:$0xff]
  %v4946 = vld [vmem:[#allocation2 + $0x238] sm:$0xff]
  %v4947 = vld [vmem:[#allocation2 + $0x240] sm:$0xff]
  %v4948 = vld [vmem:[#allocation2 + $0x248] sm:$0xff]
  %v4949 = vld [vmem:[#allocation2 + $0x250] sm:$0xff]
  %v4950 = vld [vmem:[#allocation2 + $0x258] sm:$0xff]
  %v4951 = vld [vmem:[#allocation2 + $0x260] sm:$0xff]
  %v4952 = vld [vmem:[#allocation2 + $0x268] sm:$0xff]
  %v4953 = vld [vmem:[#allocation2 + $0x270] sm:$0xff]
  %v4954 = vld [vmem:[#allocation2 + $0x278] sm:$0xff]
  %v4955 = vld [vmem:[#allocation2 + $0x280] sm:$0xff]
  %v4956 = vld [vmem:[%s0 + $0x24] sm:$0xff]
  %v4957 = vld [vmem:[%s0 + $0x2c] sm:$0xff]
  %v4958 = vld [vmem:[%s0 + $0x34] sm:$0xff]
  %v4959 = vld [vmem:[%s0 + $0x3c] sm:$0xff]
  %v4960 = vld [vmem:[%s0 + $0x44] sm:$0xff]
  %v4961 = vld [vmem:[%s0 + $0x4c] sm:$0xff]
  %v4962 = vld [vmem:[%s0 + $0x54] sm:$0xff]
  %v4963 = vld [vmem:[%s0 + $0x5c] sm:$0xff]
  %v4964 = vld [vmem:[%s0 + $0x64] sm:$0xff]
  %v4965 = vld [vmem:[%s0 + $0x6c] sm:$0xff]
  %v4966 = vld [vmem:[%s0 + $0x74] sm:$0xff]
  %v4967 = vld [vmem:[%s0 + $0x7c] sm:$0xff]
  %v4968 = vld [vmem:[%s0 + $0x84] sm:$0xff]
  %v4969 = vld [vmem:[%s0 + $0x8c] sm:$0xff]
  %v4970 = vld [vmem:[%s0 + $0x94] sm:$0xff]
  %v4971 = vld [vmem:[%s0 + $0x9c] sm:$0xff]
  %v4972 = vld [vmem:[%s0 + $0xa4] sm:$0xff]
  %v4973 = vld [vmem:[%s0 + $0xac] sm:$0xff]
  %v4974 = vld [vmem:[%s0 + $0xb4] sm:$0xff]
  %v4975 = vld [vmem:[%s0 + $0xbc] sm:$0xff]
  %v4976 = vld [vmem:[%s0 + $0xc4] sm:$0xff]
  %v4977 = vld [vmem:[%s0 + $0xcc] sm:$0xff]
  %v4978 = vld [vmem:[%s0 + $0xd4] sm:$0xff]
  %v4979 = vld [vmem:[%s0 + $0xdc] sm:$0xff]
  %v4980 = vld [vmem:[%s0 + $0xe4] sm:$0xff]
  %v4981 = vld [vmem:[%s0 + $0xec] sm:$0xff]
  %v4982 = vld [vmem:[%s0 + $0xf4] sm:$0xff]
  %v4983 = vld [vmem:[%s0 + $0xfc] sm:$0xff]
  %v4984 = vld [vmem:[%s0 + $0x104] sm:$0xff]
  %v4985 = vld [vmem:[%s0 + $0x10c] sm:$0xff]
  %v4986 = vld [vmem:[%s0 + $0x114] sm:$0xff]
  %v4987 = vld [vmem:[%s0 + $0x11c] sm:$0xff]
  %v4988 = vld [vmem:[%s0 + $0x124] sm:$0xff]
  %v4989 = vld [vmem:[%s0 + $0x12c] sm:$0xff]
  %v4990 = vld [vmem:[%s0 + $0x134] sm:$0xff]
  %v4991 = vld [vmem:[%s0 + $0x13c] sm:$0xff]
  %v4992 = vld [vmem:[%s0 + $0x144] sm:$0xff]
  %v4993 = vld [vmem:[%s0 + $0x14c] sm:$0xff]
  %v4994 = vld [vmem:[%s0 + $0x154] sm:$0xff]
  %v4995 = vld [vmem:[%s0 + $0x15c] sm:$0xff]
  %v4996 = vld [vmem:[%s0 + $0x164] sm:$0xff]
  %v4997 = vld [vmem:[%s0 + $0x16c] sm:$0xff]
  %v4998 = vld [vmem:[%s0 + $0x174] sm:$0xff]
  %v4999 = vld [vmem:[%s0 + $0x17c] sm:$0xff]
  %v5000 = vld [vmem:[%s0 + $0x184] sm:$0xff]
  %v5001 = vld [vmem:[%s0 + $0x18c] sm:$0xff]
  %v5002 = vld [vmem:[%s0 + $0x194] sm:$0xff]
  %v5003 = vld [vmem:[%s0 + $0x19c] sm:$0xff]
  %v5004 = vld [vmem:[%s0 + $0x1a4] sm:$0xff]
  %v5005 = vld [vmem:[%s0 + $0x1ac] sm:$0xff]
  %v5006 = vld [vmem:[%s0 + $0x1b4] sm:$0xff]
  %v5007 = vld [vmem:[%s0 + $0x1bc] sm:$0xff]
  %v5008 = vld [vmem:[%s0 + $0x1c4] sm:$0xff]
  %v5009 = vld [vmem:[%s0 + $0x1cc] sm:$0xff]
  %v5010 = vld [vmem:[%s0 + $0x1d4] sm:$0xff]
  %v5011 = vld [vmem:[%s0 + $0x1dc] sm:$0xff]
  %v5012 = vld [vmem:[%s0 + $0x1e4] sm:$0xff]
  %v5013 = vld [vmem:[%s0 + $0x1ec] sm:$0xff]
  %v5014 = vld [vmem:[%s0 + $0x1f4] sm:$0xff]
  %v5015 = vld [vmem:[%s0 + $0x1fc] sm:$0xff]
  %v5016 = vld [vmem:[%s0 + $0x204] sm:$0xff]
  %v5017 = vld [vmem:[%s0 + $0x20c] sm:$0xff]
  %v5018 = vld [vmem:[%s0 + $0x214] sm:$0xff]
  %v5019 = vld [vmem:[%s0 + $0x21c] sm:$0xff]
  %v5020 = vld [vmem:[%s0 + $0x224] sm:$0xff]
  %v5021 = vld [vmem:[%s0 + $0x22c] sm:$0xff]
  %v5022 = vld [vmem:[%s0 + $0x234] sm:$0xff]
  %v5023 = vld [vmem:[%s0 + $0x23c] sm:$0xff]
  %v5024 = vld [vmem:[%s0 + $0x244] sm:$0xff]
  %v5025 = vld [vmem:[%s0 + $0x24c] sm:$0xff]
  %v5026 = vld [vmem:[%s0 + $0x254] sm:$0xff]
  %v5027 = vld [vmem:[%s0 + $0x25c] sm:$0xff]
  %v5028 = vld [vmem:[%s0 + $0x264] sm:$0xff]
  %v5029 = vld [vmem:[%s0 + $0x26c] sm:$0xff]
  %v5030 = vld [vmem:[%s0 + $0x274] sm:$0xff]
  %v5031 = vld [vmem:[%s0 + $0x27c] sm:$0xff]
  %v5032 = vld [vmem:[%s0 + $0x284] sm:$0xff]
  %v5033 = vld [vmem:[%s0 + $0x28c] sm:$0xff]
  %v5034 = vld [vmem:[%s0 + $0x294] sm:$0xff]
  %v5035 = vld [vmem:[%s0 + $0x29c] sm:$0xff]
  %v5036 = vld [vmem:[%s0 + $0x2a4] sm:$0xff]
  %s5037 = scalar_lea.vmem %s1, 24
  %v5038 = vld [vmem:[%s5037] sm:$0xf]
  %v5040 = vsel %vm125, %v4956, 0
  %v5043 = vsel %vm125, %v4957, 0
  %v5046 = vsel %vm125, %v4958, 0
  %v5049 = vsel %vm125, %v4959, 0
  %v5052 = vsel %vm125, %v4960, 0
  %v5055 = vsel %vm125, %v4961, 0
  %v5058 = vsel %vm125, %v4962, 0
  %v5061 = vsel %vm125, %v4963, 0
  %v5064 = vsel %vm125, %v4964, 0
  %v5067 = vsel %vm125, %v4965, 0
  %v5070 = vsel %vm125, %v4966, 0
  %v5073 = vsel %vm125, %v4967, 0
  %v5076 = vsel %vm125, %v4968, 0
  %v5079 = vsel %vm125, %v4969, 0
  %v5082 = vsel %vm125, %v4970, 0
  %v5085 = vsel %vm125, %v4971, 0
  %v5088 = vsel %vm125, %v4972, 0
  %v5091 = vsel %vm125, %v4973, 0
  %v5094 = vsel %vm125, %v4974, 0
  %v5097 = vsel %vm125, %v4975, 0
  %v5100 = vsel %vm125, %v4976, 0
  %v5103 = vsel %vm125, %v4977, 0
  %v5106 = vsel %vm125, %v4978, 0
  %v5109 = vsel %vm125, %v4979, 0
  %v5112 = vsel %vm125, %v4980, 0
  %v5115 = vsel %vm125, %v4981, 0
  %v5118 = vsel %vm125, %v4982, 0
  %v5121 = vsel %vm125, %v4983, 0
  %v5124 = vsel %vm125, %v4984, 0
  %v5127 = vsel %vm125, %v4985, 0
  %v5130 = vsel %vm125, %v4986, 0
  %v5133 = vsel %vm125, %v4987, 0
  %v5136 = vsel %vm125, %v4988, 0
  %v5139 = vsel %vm125, %v4989, 0
  %v5142 = vsel %vm125, %v4990, 0
  %v5145 = vsel %vm125, %v4991, 0
  %v5148 = vsel %vm125, %v4992, 0
  %v5151 = vsel %vm125, %v4993, 0
  %v5154 = vsel %vm125, %v4994, 0
  %v5157 = vsel %vm125, %v4995, 0
  %v5160 = vsel %vm125, %v4996, 0
  %v5163 = vsel %vm125, %v4997, 0
  %v5166 = vsel %vm125, %v4998, 0
  %v5169 = vsel %vm125, %v4999, 0
  %v5172 = vsel %vm125, %v5000, 0
  %v5175 = vsel %vm125, %v5001, 0
  %v5178 = vsel %vm125, %v5002, 0
  %v5181 = vsel %vm125, %v5003, 0
  %v5184 = vsel %vm125, %v5004, 0
  %v5187 = vsel %vm125, %v5005, 0
  %v5190 = vsel %vm125, %v5006, 0
  %v5193 = vsel %vm125, %v5007, 0
  %v5196 = vsel %vm125, %v5008, 0
  %v5199 = vsel %vm125, %v5009, 0
  %v5202 = vsel %vm125, %v5010, 0
  %v5205 = vsel %vm125, %v5011, 0
  %v5208 = vsel %vm125, %v5012, 0
  %v5211 = vsel %vm125, %v5013, 0
  %v5214 = vsel %vm125, %v5014, 0
  %v5217 = vsel %vm125, %v5015, 0
  %v5220 = vsel %vm125, %v5016, 0
  %v5223 = vsel %vm125, %v5017, 0
  %v5226 = vsel %vm125, %v5018, 0
  %v5229 = vsel %vm125, %v5019, 0
  %v5232 = vsel %vm125, %v5020, 0
  %v5235 = vsel %vm125, %v5021, 0
  %v5238 = vsel %vm125, %v5022, 0
  %v5241 = vsel %vm125, %v5023, 0
  %v5244 = vsel %vm125, %v5024, 0
  %v5247 = vsel %vm125, %v5025, 0
  %v5250 = vsel %vm125, %v5026, 0
  %v5253 = vsel %vm125, %v5027, 0
  %v5256 = vsel %vm125, %v5028, 0
  %v5259 = vsel %vm125, %v5029, 0
  %v5262 = vsel %vm125, %v5030, 0
  %v5265 = vsel %vm125, %v5031, 0
  %v5268 = vsel %vm125, %v5032, 0
  %v5271 = vsel %vm125, %v5033, 0
  %v5274 = vsel %vm125, %v5034, 0
  %v5277 = vsel %vm125, %v5035, 0
  %v5280 = vsel %vm125, %v5036, 0
  %v5283 = vsel %vm369, %v5038, 0
  %5285 = vmatpush.msra.mxu0 0.0
  %5286 = vmatpush.msra.mxu0 0.0
  %5287 = vmatpush.msra.mxu0 0.0
  %5288 = vmatpush.msra.mxu0 0.0
  %5289 = vmatpush.msra.mxu0 0.0
  %5290 = vmatpush.msra.mxu0 0.0
  %5291 = vmatpush.msra.mxu0 0.0
  %5292 = vmatpush.msra.mxu0 0.0
  %5293 = vmatpush.msra.mxu0 0.0
  %5294 = vmatpush.msra.mxu0 0.0
  %5295 = vmatpush.msra.mxu0 0.0
  %5296 = vmatpush.msra.mxu0 0.0
  %5297 = vmatpush.msra.mxu0 0.0
  %5298 = vmatpush.msra.mxu0 0.0
  %5299 = vmatpush.msra.mxu0 0.0
  %5300 = vmatpush.msra.mxu0 %v5283
  %5301 = vmatmul.f32.gmra.mxu0 %v5040
  %v5302 = vpop.f32.mrf.mxu0
  %v5303 = vadd.f32 0.0, %v5302
  %5304 = vmatmul.f32.gmra.mxu0 %v5043
  %v5305 = vpop.f32.mrf.mxu0
  %v5306 = vadd.f32 0.0, %v5305
  %5307 = vmatmul.f32.gmra.mxu0 %v5046
  %v5308 = vpop.f32.mrf.mxu0
  %v5309 = vadd.f32 0.0, %v5308
  %5310 = vmatmul.f32.gmra.mxu0 %v5049
  %v5311 = vpop.f32.mrf.mxu0
  %v5312 = vadd.f32 0.0, %v5311
  %5313 = vmatmul.f32.gmra.mxu0 %v5052
  %v5314 = vpop.f32.mrf.mxu0
  %v5315 = vadd.f32 0.0, %v5314
  %5316 = vmatmul.f32.gmra.mxu0 %v5055
  %v5317 = vpop.f32.mrf.mxu0
  %v5318 = vadd.f32 0.0, %v5317
  %5319 = vmatmul.f32.gmra.mxu0 %v5058
  %v5320 = vpop.f32.mrf.mxu0
  %v5321 = vadd.f32 0.0, %v5320
  %5322 = vmatmul.f32.gmra.mxu0 %v5061
  %v5323 = vpop.f32.mrf.mxu0
  %v5324 = vadd.f32 0.0, %v5323
  %5325 = vmatmul.f32.gmra.mxu0 %v5064
  %v5326 = vpop.f32.mrf.mxu0
  %v5327 = vadd.f32 0.0, %v5326
  %5328 = vmatmul.f32.gmra.mxu0 %v5067
  %v5329 = vpop.f32.mrf.mxu0
  %v5330 = vadd.f32 0.0, %v5329
  %5331 = vmatmul.f32.gmra.mxu0 %v5070
  %v5332 = vpop.f32.mrf.mxu0
  %v5333 = vadd.f32 0.0, %v5332
  %5334 = vmatmul.f32.gmra.mxu0 %v5073
  %v5335 = vpop.f32.mrf.mxu0
  %v5336 = vadd.f32 0.0, %v5335
  %5337 = vmatmul.f32.gmra.mxu0 %v5076
  %v5338 = vpop.f32.mrf.mxu0
  %v5339 = vadd.f32 0.0, %v5338
  %5340 = vmatmul.f32.gmra.mxu0 %v5079
  %v5341 = vpop.f32.mrf.mxu0
  %v5342 = vadd.f32 0.0, %v5341
  %5343 = vmatmul.f32.gmra.mxu0 %v5082
  %v5344 = vpop.f32.mrf.mxu0
  %v5345 = vadd.f32 0.0, %v5344
  %5346 = vmatmul.f32.gmra.mxu0 %v5085
  %v5347 = vpop.f32.mrf.mxu0
  %v5348 = vadd.f32 0.0, %v5347
  %5349 = vmatmul.f32.gmra.mxu0 %v5088
  %v5350 = vpop.f32.mrf.mxu0
  %v5351 = vadd.f32 0.0, %v5350
  %5352 = vmatmul.f32.gmra.mxu0 %v5091
  %v5353 = vpop.f32.mrf.mxu0
  %v5354 = vadd.f32 0.0, %v5353
  %5355 = vmatmul.f32.gmra.mxu0 %v5094
  %v5356 = vpop.f32.mrf.mxu0
  %v5357 = vadd.f32 0.0, %v5356
  %5358 = vmatmul.f32.gmra.mxu0 %v5097
  %v5359 = vpop.f32.mrf.mxu0
  %v5360 = vadd.f32 0.0, %v5359
  %5361 = vmatmul.f32.gmra.mxu0 %v5100
  %v5362 = vpop.f32.mrf.mxu0
  %v5363 = vadd.f32 0.0, %v5362
  %5364 = vmatmul.f32.gmra.mxu0 %v5103
  %v5365 = vpop.f32.mrf.mxu0
  %v5366 = vadd.f32 0.0, %v5365
  %5367 = vmatmul.f32.gmra.mxu0 %v5106
  %v5368 = vpop.f32.mrf.mxu0
  %v5369 = vadd.f32 0.0, %v5368
  %5370 = vmatmul.f32.gmra.mxu0 %v5109
  %v5371 = vpop.f32.mrf.mxu0
  %v5372 = vadd.f32 0.0, %v5371
  %5373 = vmatmul.f32.gmra.mxu0 %v5112
  %v5374 = vpop.f32.mrf.mxu0
  %v5375 = vadd.f32 0.0, %v5374
  %5376 = vmatmul.f32.gmra.mxu0 %v5115
  %v5377 = vpop.f32.mrf.mxu0
  %v5378 = vadd.f32 0.0, %v5377
  %5379 = vmatmul.f32.gmra.mxu0 %v5118
  %v5380 = vpop.f32.mrf.mxu0
  %v5381 = vadd.f32 0.0, %v5380
  %5382 = vmatmul.f32.gmra.mxu0 %v5121
  %v5383 = vpop.f32.mrf.mxu0
  %v5384 = vadd.f32 0.0, %v5383
  %5385 = vmatmul.f32.gmra.mxu0 %v5124
  %v5386 = vpop.f32.mrf.mxu0
  %v5387 = vadd.f32 0.0, %v5386
  %5388 = vmatmul.f32.gmra.mxu0 %v5127
  %v5389 = vpop.f32.mrf.mxu0
  %v5390 = vadd.f32 0.0, %v5389
  %5391 = vmatmul.f32.gmra.mxu0 %v5130
  %v5392 = vpop.f32.mrf.mxu0
  %v5393 = vadd.f32 0.0, %v5392
  %5394 = vmatmul.f32.gmra.mxu0 %v5133
  %v5395 = vpop.f32.mrf.mxu0
  %v5396 = vadd.f32 0.0, %v5395
  %5397 = vmatmul.f32.gmra.mxu0 %v5136
  %v5398 = vpop.f32.mrf.mxu0
  %v5399 = vadd.f32 0.0, %v5398
  %5400 = vmatmul.f32.gmra.mxu0 %v5139
  %v5401 = vpop.f32.mrf.mxu0
  %v5402 = vadd.f32 0.0, %v5401
  %5403 = vmatmul.f32.gmra.mxu0 %v5142
  %v5404 = vpop.f32.mrf.mxu0
  %v5405 = vadd.f32 0.0, %v5404
  %5406 = vmatmul.f32.gmra.mxu0 %v5145
  %v5407 = vpop.f32.mrf.mxu0
  %v5408 = vadd.f32 0.0, %v5407
  %5409 = vmatmul.f32.gmra.mxu0 %v5148
  %v5410 = vpop.f32.mrf.mxu0
  %v5411 = vadd.f32 0.0, %v5410
  %5412 = vmatmul.f32.gmra.mxu0 %v5151
  %v5413 = vpop.f32.mrf.mxu0
  %v5414 = vadd.f32 0.0, %v5413
  %5415 = vmatmul.f32.gmra.mxu0 %v5154
  %v5416 = vpop.f32.mrf.mxu0
  %v5417 = vadd.f32 0.0, %v5416
  %5418 = vmatmul.f32.gmra.mxu0 %v5157
  %v5419 = vpop.f32.mrf.mxu0
  %v5420 = vadd.f32 0.0, %v5419
  %5421 = vmatmul.f32.gmra.mxu0 %v5160
  %v5422 = vpop.f32.mrf.mxu0
  %v5423 = vadd.f32 0.0, %v5422
  %5424 = vmatmul.f32.gmra.mxu0 %v5163
  %v5425 = vpop.f32.mrf.mxu0
  %v5426 = vadd.f32 0.0, %v5425
  %5427 = vmatmul.f32.gmra.mxu0 %v5166
  %v5428 = vpop.f32.mrf.mxu0
  %v5429 = vadd.f32 0.0, %v5428
  %5430 = vmatmul.f32.gmra.mxu0 %v5169
  %v5431 = vpop.f32.mrf.mxu0
  %v5432 = vadd.f32 0.0, %v5431
  %5433 = vmatmul.f32.gmra.mxu0 %v5172
  %v5434 = vpop.f32.mrf.mxu0
  %v5435 = vadd.f32 0.0, %v5434
  %5436 = vmatmul.f32.gmra.mxu0 %v5175
  %v5437 = vpop.f32.mrf.mxu0
  %v5438 = vadd.f32 0.0, %v5437
  %5439 = vmatmul.f32.gmra.mxu0 %v5178
  %v5440 = vpop.f32.mrf.mxu0
  %v5441 = vadd.f32 0.0, %v5440
  %5442 = vmatmul.f32.gmra.mxu0 %v5181
  %v5443 = vpop.f32.mrf.mxu0
  %v5444 = vadd.f32 0.0, %v5443
  %5445 = vmatmul.f32.gmra.mxu0 %v5184
  %v5446 = vpop.f32.mrf.mxu0
  %v5447 = vadd.f32 0.0, %v5446
  %5448 = vmatmul.f32.gmra.mxu0 %v5187
  %v5449 = vpop.f32.mrf.mxu0
  %v5450 = vadd.f32 0.0, %v5449
  %5451 = vmatmul.f32.gmra.mxu0 %v5190
  %v5452 = vpop.f32.mrf.mxu0
  %v5453 = vadd.f32 0.0, %v5452
  %5454 = vmatmul.f32.gmra.mxu0 %v5193
  %v5455 = vpop.f32.mrf.mxu0
  %v5456 = vadd.f32 0.0, %v5455
  %5457 = vmatmul.f32.gmra.mxu0 %v5196
  %v5458 = vpop.f32.mrf.mxu0
  %v5459 = vadd.f32 0.0, %v5458
  %5460 = vmatmul.f32.gmra.mxu0 %v5199
  %v5461 = vpop.f32.mrf.mxu0
  %v5462 = vadd.f32 0.0, %v5461
  %5463 = vmatmul.f32.gmra.mxu0 %v5202
  %v5464 = vpop.f32.mrf.mxu0
  %v5465 = vadd.f32 0.0, %v5464
  %5466 = vmatmul.f32.gmra.mxu0 %v5205
  %v5467 = vpop.f32.mrf.mxu0
  %v5468 = vadd.f32 0.0, %v5467
  %5469 = vmatmul.f32.gmra.mxu0 %v5208
  %v5470 = vpop.f32.mrf.mxu0
  %v5471 = vadd.f32 0.0, %v5470
  %5472 = vmatmul.f32.gmra.mxu0 %v5211
  %v5473 = vpop.f32.mrf.mxu0
  %v5474 = vadd.f32 0.0, %v5473
  %5475 = vmatmul.f32.gmra.mxu0 %v5214
  %v5476 = vpop.f32.mrf.mxu0
  %v5477 = vadd.f32 0.0, %v5476
  %5478 = vmatmul.f32.gmra.mxu0 %v5217
  %v5479 = vpop.f32.mrf.mxu0
  %v5480 = vadd.f32 0.0, %v5479
  %5481 = vmatmul.f32.gmra.mxu0 %v5220
  %v5482 = vpop.f32.mrf.mxu0
  %v5483 = vadd.f32 0.0, %v5482
  %5484 = vmatmul.f32.gmra.mxu0 %v5223
  %v5485 = vpop.f32.mrf.mxu0
  %v5486 = vadd.f32 0.0, %v5485
  %5487 = vmatmul.f32.gmra.mxu0 %v5226
  %v5488 = vpop.f32.mrf.mxu0
  %v5489 = vadd.f32 0.0, %v5488
  %5490 = vmatmul.f32.gmra.mxu0 %v5229
  %v5491 = vpop.f32.mrf.mxu0
  %v5492 = vadd.f32 0.0, %v5491
  %5493 = vmatmul.f32.gmra.mxu0 %v5232
  %v5494 = vpop.f32.mrf.mxu0
  %v5495 = vadd.f32 0.0, %v5494
  %5496 = vmatmul.f32.gmra.mxu0 %v5235
  %v5497 = vpop.f32.mrf.mxu0
  %v5498 = vadd.f32 0.0, %v5497
  %5499 = vmatmul.f32.gmra.mxu0 %v5238
  %v5500 = vpop.f32.mrf.mxu0
  %v5501 = vadd.f32 0.0, %v5500
  %5502 = vmatmul.f32.gmra.mxu0 %v5241
  %v5503 = vpop.f32.mrf.mxu0
  %v5504 = vadd.f32 0.0, %v5503
  %5505 = vmatmul.f32.gmra.mxu0 %v5244
  %v5506 = vpop.f32.mrf.mxu0
  %v5507 = vadd.f32 0.0, %v5506
  %5508 = vmatmul.f32.gmra.mxu0 %v5247
  %v5509 = vpop.f32.mrf.mxu0
  %v5510 = vadd.f32 0.0, %v5509
  %5511 = vmatmul.f32.gmra.mxu0 %v5250
  %v5512 = vpop.f32.mrf.mxu0
  %v5513 = vadd.f32 0.0, %v5512
  %5514 = vmatmul.f32.gmra.mxu0 %v5253
  %v5515 = vpop.f32.mrf.mxu0
  %v5516 = vadd.f32 0.0, %v5515
  %5517 = vmatmul.f32.gmra.mxu0 %v5256
  %v5518 = vpop.f32.mrf.mxu0
  %v5519 = vadd.f32 0.0, %v5518
  %5520 = vmatmul.f32.gmra.mxu0 %v5259
  %v5521 = vpop.f32.mrf.mxu0
  %v5522 = vadd.f32 0.0, %v5521
  %5523 = vmatmul.f32.gmra.mxu0 %v5262
  %v5524 = vpop.f32.mrf.mxu0
  %v5525 = vadd.f32 0.0, %v5524
  %5526 = vmatmul.f32.gmra.mxu0 %v5265
  %v5527 = vpop.f32.mrf.mxu0
  %v5528 = vadd.f32 0.0, %v5527
  %5529 = vmatmul.f32.gmra.mxu0 %v5268
  %v5530 = vpop.f32.mrf.mxu0
  %v5531 = vadd.f32 0.0, %v5530
  %5532 = vmatmul.f32.gmra.mxu0 %v5271
  %v5533 = vpop.f32.mrf.mxu0
  %v5534 = vadd.f32 0.0, %v5533
  %5535 = vmatmul.f32.gmra.mxu0 %v5274
  %v5536 = vpop.f32.mrf.mxu0
  %v5537 = vadd.f32 0.0, %v5536
  %5538 = vmatmul.f32.gmra.mxu0 %v5277
  %v5539 = vpop.f32.mrf.mxu0
  %v5540 = vadd.f32 0.0, %v5539
  %5541 = vmatmul.f32.gmra.mxu0 %v5280
  %v5542 = vpop.f32.mrf.mxu0
  %v5543 = vadd.f32 0.0, %v5542
  %5544 = vdwg.mxu0
  %v5545 = vadd.f32 %v4875, %v5303
  %v5546 = vadd.f32 %v4876, %v5306
  %v5547 = vadd.f32 %v4877, %v5309
  %v5548 = vadd.f32 %v4878, %v5312
  %v5549 = vadd.f32 %v4879, %v5315
  %v5550 = vadd.f32 %v4880, %v5318
  %v5551 = vadd.f32 %v4881, %v5321
  %v5552 = vadd.f32 %v4882, %v5324
  %v5553 = vadd.f32 %v4883, %v5327
  %v5554 = vadd.f32 %v4884, %v5330
  %v5555 = vadd.f32 %v4885, %v5333
  %v5556 = vadd.f32 %v4886, %v5336
  %v5557 = vadd.f32 %v4887, %v5339
  %v5558 = vadd.f32 %v4888, %v5342
  %v5559 = vadd.f32 %v4889, %v5345
  %v5560 = vadd.f32 %v4890, %v5348
  %v5561 = vadd.f32 %v4891, %v5351
  %v5562 = vadd.f32 %v4892, %v5354
  %v5563 = vadd.f32 %v4893, %v5357
  %v5564 = vadd.f32 %v4894, %v5360
  %v5565 = vadd.f32 %v4895, %v5363
  %v5566 = vadd.f32 %v4896, %v5366
  %v5567 = vadd.f32 %v4897, %v5369
  %v5568 = vadd.f32 %v4898, %v5372
  %v5569 = vadd.f32 %v4899, %v5375
  %v5570 = vadd.f32 %v4900, %v5378
  %v5571 = vadd.f32 %v4901, %v5381
  %v5572 = vadd.f32 %v4902, %v5384
  %v5573 = vadd.f32 %v4903, %v5387
  %v5574 = vadd.f32 %v4904, %v5390
  %v5575 = vadd.f32 %v4905, %v5393
  %v5576 = vadd.f32 %v4906, %v5396
  %v5577 = vadd.f32 %v4907, %v5399
  %v5578 = vadd.f32 %v4908, %v5402
  %v5579 = vadd.f32 %v4909, %v5405
  %v5580 = vadd.f32 %v4910, %v5408
  %v5581 = vadd.f32 %v4911, %v5411
  %v5582 = vadd.f32 %v4912, %v5414
  %v5583 = vadd.f32 %v4913, %v5417
  %v5584 = vadd.f32 %v4914, %v5420
  %v5585 = vadd.f32 %v4915, %v5423
  %v5586 = vadd.f32 %v4916, %v5426
  %v5587 = vadd.f32 %v4917, %v5429
  %v5588 = vadd.f32 %v4918, %v5432
  %v5589 = vadd.f32 %v4919, %v5435
  %v5590 = vadd.f32 %v4920, %v5438
  %v5591 = vadd.f32 %v4921, %v5441
  %v5592 = vadd.f32 %v4922, %v5444
  %v5593 = vadd.f32 %v4923, %v5447
  %v5594 = vadd.f32 %v4924, %v5450
  %v5595 = vadd.f32 %v4925, %v5453
  %v5596 = vadd.f32 %v4926, %v5456
  %v5597 = vadd.f32 %v4927, %v5459
  %v5598 = vadd.f32 %v4928, %v5462
  %v5599 = vadd.f32 %v4929, %v5465
  %v5600 = vadd.f32 %v4930, %v5468
  %v5601 = vadd.f32 %v4931, %v5471
  %v5602 = vadd.f32 %v4932, %v5474
  %v5603 = vadd.f32 %v4933, %v5477
  %v5604 = vadd.f32 %v4934, %v5480
  %v5605 = vadd.f32 %v4935, %v5483
  %v5606 = vadd.f32 %v4936, %v5486
  %v5607 = vadd.f32 %v4937, %v5489
  %v5608 = vadd.f32 %v4938, %v5492
  %v5609 = vadd.f32 %v4939, %v5495
  %v5610 = vadd.f32 %v4940, %v5498
  %v5611 = vadd.f32 %v4941, %v5501
  %v5612 = vadd.f32 %v4942, %v5504
  %v5613 = vadd.f32 %v4943, %v5507
  %v5614 = vadd.f32 %v4944, %v5510
  %v5615 = vadd.f32 %v4945, %v5513
  %v5616 = vadd.f32 %v4946, %v5516
  %v5617 = vadd.f32 %v4947, %v5519
  %v5618 = vadd.f32 %v4948, %v5522
  %v5619 = vadd.f32 %v4949, %v5525
  %v5620 = vadd.f32 %v4950, %v5528
  %v5621 = vadd.f32 %v4951, %v5531
  %v5622 = vadd.f32 %v4952, %v5534
  %v5623 = vadd.f32 %v4953, %v5537
  %v5624 = vadd.f32 %v4954, %v5540
  %v5625 = vadd.f32 %v4955, %v5543
  %5626 = vst.msk [vmem:[#allocation2] sm:$0xff] %vm633, %v5545
  %5627 = vst.msk [vmem:[#allocation2 + $0x8] sm:$0xff] %vm633, %v5546
  %5628 = vst.msk [vmem:[#allocation2 + $0x10] sm:$0xff] %vm633, %v5547
  %5629 = vst.msk [vmem:[#allocation2 + $0x18] sm:$0xff] %vm633, %v5548
  %5630 = vst.msk [vmem:[#allocation2 + $0x20] sm:$0xff] %vm633, %v5549
  %5631 = vst.msk [vmem:[#allocation2 + $0x28] sm:$0xff] %vm633, %v5550
  %5632 = vst.msk [vmem:[#allocation2 + $0x30] sm:$0xff] %vm633, %v5551
  %5633 = vst.msk [vmem:[#allocation2 + $0x38] sm:$0xff] %vm633, %v5552
  %5634 = vst.msk [vmem:[#allocation2 + $0x40] sm:$0xff] %vm633, %v5553
  %5635 = vst.msk [vmem:[#allocation2 + $0x48] sm:$0xff] %vm633, %v5554
  %5636 = vst.msk [vmem:[#allocation2 + $0x50] sm:$0xff] %vm633, %v5555
  %5637 = vst.msk [vmem:[#allocation2 + $0x58] sm:$0xff] %vm633, %v5556
  %5638 = vst.msk [vmem:[#allocation2 + $0x60] sm:$0xff] %vm633, %v5557
  %5639 = vst.msk [vmem:[#allocation2 + $0x68] sm:$0xff] %vm633, %v5558
  %5640 = vst.msk [vmem:[#allocation2 + $0x70] sm:$0xff] %vm633, %v5559
  %5641 = vst.msk [vmem:[#allocation2 + $0x78] sm:$0xff] %vm633, %v5560
  %5642 = vst.msk [vmem:[#allocation2 + $0x80] sm:$0xff] %vm633, %v5561
  %5643 = vst.msk [vmem:[#allocation2 + $0x88] sm:$0xff] %vm633, %v5562
  %5644 = vst.msk [vmem:[#allocation2 + $0x90] sm:$0xff] %vm633, %v5563
  %5645 = vst.msk [vmem:[#allocation2 + $0x98] sm:$0xff] %vm633, %v5564
  %5646 = vst.msk [vmem:[#allocation2 + $0xa0] sm:$0xff] %vm633, %v5565
  %5647 = vst.msk [vmem:[#allocation2 + $0xa8] sm:$0xff] %vm633, %v5566
  %5648 = vst.msk [vmem:[#allocation2 + $0xb0] sm:$0xff] %vm633, %v5567
  %5649 = vst.msk [vmem:[#allocation2 + $0xb8] sm:$0xff] %vm633, %v5568
  %5650 = vst.msk [vmem:[#allocation2 + $0xc0] sm:$0xff] %vm633, %v5569
  %5651 = vst.msk [vmem:[#allocation2 + $0xc8] sm:$0xff] %vm633, %v5570
  %5652 = vst.msk [vmem:[#allocation2 + $0xd0] sm:$0xff] %vm633, %v5571
  %5653 = vst.msk [vmem:[#allocation2 + $0xd8] sm:$0xff] %vm633, %v5572
  %5654 = vst.msk [vmem:[#allocation2 + $0xe0] sm:$0xff] %vm633, %v5573
  %5655 = vst.msk [vmem:[#allocation2 + $0xe8] sm:$0xff] %vm633, %v5574
  %5656 = vst.msk [vmem:[#allocation2 + $0xf0] sm:$0xff] %vm633, %v5575
  %5657 = vst.msk [vmem:[#allocation2 + $0xf8] sm:$0xff] %vm633, %v5576
  %5658 = vst.msk [vmem:[#allocation2 + $0x100] sm:$0xff] %vm633, %v5577
  %5659 = vst.msk [vmem:[#allocation2 + $0x108] sm:$0xff] %vm633, %v5578
  %5660 = vst.msk [vmem:[#allocation2 + $0x110] sm:$0xff] %vm633, %v5579
  %5661 = vst.msk [vmem:[#allocation2 + $0x118] sm:$0xff] %vm633, %v5580
  %5662 = vst.msk [vmem:[#allocation2 + $0x120] sm:$0xff] %vm633, %v5581
  %5663 = vst.msk [vmem:[#allocation2 + $0x128] sm:$0xff] %vm633, %v5582
  %5664 = vst.msk [vmem:[#allocation2 + $0x130] sm:$0xff] %vm633, %v5583
  %5665 = vst.msk [vmem:[#allocation2 + $0x138] sm:$0xff] %vm633, %v5584
  %5666 = vst.msk [vmem:[#allocation2 + $0x140] sm:$0xff] %vm633, %v5585
  %5667 = vst.msk [vmem:[#allocation2 + $0x148] sm:$0xff] %vm633, %v5586
  %5668 = vst.msk [vmem:[#allocation2 + $0x150] sm:$0xff] %vm633, %v5587
  %5669 = vst.msk [vmem:[#allocation2 + $0x158] sm:$0xff] %vm633, %v5588
  %5670 = vst.msk [vmem:[#allocation2 + $0x160] sm:$0xff] %vm633, %v5589
  %5671 = vst.msk [vmem:[#allocation2 + $0x168] sm:$0xff] %vm633, %v5590
  %5672 = vst.msk [vmem:[#allocation2 + $0x170] sm:$0xff] %vm633, %v5591
  %5673 = vst.msk [vmem:[#allocation2 + $0x178] sm:$0xff] %vm633, %v5592
  %5674 = vst.msk [vmem:[#allocation2 + $0x180] sm:$0xff] %vm633, %v5593
  %5675 = vst.msk [vmem:[#allocation2 + $0x188] sm:$0xff] %vm633, %v5594
  %5676 = vst.msk [vmem:[#allocation2 + $0x190] sm:$0xff] %vm633, %v5595
  %5677 = vst.msk [vmem:[#allocation2 + $0x198] sm:$0xff] %vm633, %v5596
  %5678 = vst.msk [vmem:[#allocation2 + $0x1a0] sm:$0xff] %vm633, %v5597
  %5679 = vst.msk [vmem:[#allocation2 + $0x1a8] sm:$0xff] %vm633, %v5598
  %5680 = vst.msk [vmem:[#allocation2 + $0x1b0] sm:$0xff] %vm633, %v5599
  %5681 = vst.msk [vmem:[#allocation2 + $0x1b8] sm:$0xff] %vm633, %v5600
  %5682 = vst.msk [vmem:[#allocation2 + $0x1c0] sm:$0xff] %vm633, %v5601
  %5683 = vst.msk [vmem:[#allocation2 + $0x1c8] sm:$0xff] %vm633, %v5602
  %5684 = vst.msk [vmem:[#allocation2 + $0x1d0] sm:$0xff] %vm633, %v5603
  %5685 = vst.msk [vmem:[#allocation2 + $0x1d8] sm:$0xff] %vm633, %v5604
  %5686 = vst.msk [vmem:[#allocation2 + $0x1e0] sm:$0xff] %vm633, %v5605
  %5687 = vst.msk [vmem:[#allocation2 + $0x1e8] sm:$0xff] %vm633, %v5606
  %5688 = vst.msk [vmem:[#allocation2 + $0x1f0] sm:$0xff] %vm633, %v5607
  %5689 = vst.msk [vmem:[#allocation2 + $0x1f8] sm:$0xff] %vm633, %v5608
  %5690 = vst.msk [vmem:[#allocation2 + $0x200] sm:$0xff] %vm633, %v5609
  %5691 = vst.msk [vmem:[#allocation2 + $0x208] sm:$0xff] %vm633, %v5610
  %5692 = vst.msk [vmem:[#allocation2 + $0x210] sm:$0xff] %vm633, %v5611
  %5693 = vst.msk [vmem:[#allocation2 + $0x218] sm:$0xff] %vm633, %v5612
  %5694 = vst.msk [vmem:[#allocation2 + $0x220] sm:$0xff] %vm633, %v5613
  %5695 = vst.msk [vmem:[#allocation2 + $0x228] sm:$0xff] %vm633, %v5614
  %5696 = vst.msk [vmem:[#allocation2 + $0x230] sm:$0xff] %vm633, %v5615
  %5697 = vst.msk [vmem:[#allocation2 + $0x238] sm:$0xff] %vm633, %v5616
  %5698 = vst.msk [vmem:[#allocation2 + $0x240] sm:$0xff] %vm633, %v5617
  %5699 = vst.msk [vmem:[#allocation2 + $0x248] sm:$0xff] %vm633, %v5618
  %5700 = vst.msk [vmem:[#allocation2 + $0x250] sm:$0xff] %vm633, %v5619
  %5701 = vst.msk [vmem:[#allocation2 + $0x258] sm:$0xff] %vm633, %v5620
  %5702 = vst.msk [vmem:[#allocation2 + $0x260] sm:$0xff] %vm633, %v5621
  %5703 = vst.msk [vmem:[#allocation2 + $0x268] sm:$0xff] %vm633, %v5622
  %5704 = vst.msk [vmem:[#allocation2 + $0x270] sm:$0xff] %vm633, %v5623
  %5705 = vst.msk [vmem:[#allocation2 + $0x278] sm:$0xff] %vm633, %v5624
  %5706 = vst.msk [vmem:[#allocation2 + $0x280] sm:$0xff] %vm633, %v5625
  %v5707 = vld [vmem:[#allocation2] sm:$0xff]
  %v5708 = vld [vmem:[#allocation2 + $0x8] sm:$0xff]
  %v5709 = vld [vmem:[#allocation2 + $0x10] sm:$0xff]
  %v5710 = vld [vmem:[#allocation2 + $0x18] sm:$0xff]
  %v5711 = vld [vmem:[#allocation2 + $0x20] sm:$0xff]
  %v5712 = vld [vmem:[#allocation2 + $0x28] sm:$0xff]
  %v5713 = vld [vmem:[#allocation2 + $0x30] sm:$0xff]
  %v5714 = vld [vmem:[#allocation2 + $0x38] sm:$0xff]
  %v5715 = vld [vmem:[#allocation2 + $0x40] sm:$0xff]
  %v5716 = vld [vmem:[#allocation2 + $0x48] sm:$0xff]
  %v5717 = vld [vmem:[#allocation2 + $0x50] sm:$0xff]
  %v5718 = vld [vmem:[#allocation2 + $0x58] sm:$0xff]
  %v5719 = vld [vmem:[#allocation2 + $0x60] sm:$0xff]
  %v5720 = vld [vmem:[#allocation2 + $0x68] sm:$0xff]
  %v5721 = vld [vmem:[#allocation2 + $0x70] sm:$0xff]
  %v5722 = vld [vmem:[#allocation2 + $0x78] sm:$0xff]
  %v5723 = vld [vmem:[#allocation2 + $0x80] sm:$0xff]
  %v5724 = vld [vmem:[#allocation2 + $0x88] sm:$0xff]
  %v5725 = vld [vmem:[#allocation2 + $0x90] sm:$0xff]
  %v5726 = vld [vmem:[#allocation2 + $0x98] sm:$0xff]
  %v5727 = vld [vmem:[#allocation2 + $0xa0] sm:$0xff]
  %v5728 = vld [vmem:[#allocation2 + $0xa8] sm:$0xff]
  %v5729 = vld [vmem:[#allocation2 + $0xb0] sm:$0xff]
  %v5730 = vld [vmem:[#allocation2 + $0xb8] sm:$0xff]
  %v5731 = vld [vmem:[#allocation2 + $0xc0] sm:$0xff]
  %v5732 = vld [vmem:[#allocation2 + $0xc8] sm:$0xff]
  %v5733 = vld [vmem:[#allocation2 + $0xd0] sm:$0xff]
  %v5734 = vld [vmem:[#allocation2 + $0xd8] sm:$0xff]
  %v5735 = vld [vmem:[#allocation2 + $0xe0] sm:$0xff]
  %v5736 = vld [vmem:[#allocation2 + $0xe8] sm:$0xff]
  %v5737 = vld [vmem:[#allocation2 + $0xf0] sm:$0xff]
  %v5738 = vld [vmem:[#allocation2 + $0xf8] sm:$0xff]
  %v5739 = vld [vmem:[#allocation2 + $0x100] sm:$0xff]
  %v5740 = vld [vmem:[#allocation2 + $0x108] sm:$0xff]
  %v5741 = vld [vmem:[#allocation2 + $0x110] sm:$0xff]
  %v5742 = vld [vmem:[#allocation2 + $0x118] sm:$0xff]
  %v5743 = vld [vmem:[#allocation2 + $0x120] sm:$0xff]
  %v5744 = vld [vmem:[#allocation2 + $0x128] sm:$0xff]
  %v5745 = vld [vmem:[#allocation2 + $0x130] sm:$0xff]
  %v5746 = vld [vmem:[#allocation2 + $0x138] sm:$0xff]
  %v5747 = vld [vmem:[#allocation2 + $0x140] sm:$0xff]
  %v5748 = vld [vmem:[#allocation2 + $0x148] sm:$0xff]
  %v5749 = vld [vmem:[#allocation2 + $0x150] sm:$0xff]
  %v5750 = vld [vmem:[#allocation2 + $0x158] sm:$0xff]
  %v5751 = vld [vmem:[#allocation2 + $0x160] sm:$0xff]
  %v5752 = vld [vmem:[#allocation2 + $0x168] sm:$0xff]
  %v5753 = vld [vmem:[#allocation2 + $0x170] sm:$0xff]
  %v5754 = vld [vmem:[#allocation2 + $0x178] sm:$0xff]
  %v5755 = vld [vmem:[#allocation2 + $0x180] sm:$0xff]
  %v5756 = vld [vmem:[#allocation2 + $0x188] sm:$0xff]
  %v5757 = vld [vmem:[#allocation2 + $0x190] sm:$0xff]
  %v5758 = vld [vmem:[#allocation2 + $0x198] sm:$0xff]
  %v5759 = vld [vmem:[#allocation2 + $0x1a0] sm:$0xff]
  %v5760 = vld [vmem:[#allocation2 + $0x1a8] sm:$0xff]
  %v5761 = vld [vmem:[#allocation2 + $0x1b0] sm:$0xff]
  %v5762 = vld [vmem:[#allocation2 + $0x1b8] sm:$0xff]
  %v5763 = vld [vmem:[#allocation2 + $0x1c0] sm:$0xff]
  %v5764 = vld [vmem:[#allocation2 + $0x1c8] sm:$0xff]
  %v5765 = vld [vmem:[#allocation2 + $0x1d0] sm:$0xff]
  %v5766 = vld [vmem:[#allocation2 + $0x1d8] sm:$0xff]
  %v5767 = vld [vmem:[#allocation2 + $0x1e0] sm:$0xff]
  %v5768 = vld [vmem:[#allocation2 + $0x1e8] sm:$0xff]
  %v5769 = vld [vmem:[#allocation2 + $0x1f0] sm:$0xff]
  %v5770 = vld [vmem:[#allocation2 + $0x1f8] sm:$0xff]
  %v5771 = vld [vmem:[#allocation2 + $0x200] sm:$0xff]
  %v5772 = vld [vmem:[#allocation2 + $0x208] sm:$0xff]
  %v5773 = vld [vmem:[#allocation2 + $0x210] sm:$0xff]
  %v5774 = vld [vmem:[#allocation2 + $0x218] sm:$0xff]
  %v5775 = vld [vmem:[#allocation2 + $0x220] sm:$0xff]
  %v5776 = vld [vmem:[#allocation2 + $0x228] sm:$0xff]
  %v5777 = vld [vmem:[#allocation2 + $0x230] sm:$0xff]
  %v5778 = vld [vmem:[#allocation2 + $0x238] sm:$0xff]
  %v5779 = vld [vmem:[#allocation2 + $0x240] sm:$0xff]
  %v5780 = vld [vmem:[#allocation2 + $0x248] sm:$0xff]
  %v5781 = vld [vmem:[#allocation2 + $0x250] sm:$0xff]
  %v5782 = vld [vmem:[#allocation2 + $0x258] sm:$0xff]
  %v5783 = vld [vmem:[#allocation2 + $0x260] sm:$0xff]
  %v5784 = vld [vmem:[#allocation2 + $0x268] sm:$0xff]
  %v5785 = vld [vmem:[#allocation2 + $0x270] sm:$0xff]
  %v5786 = vld [vmem:[#allocation2 + $0x278] sm:$0xff]
  %v5787 = vld [vmem:[#allocation2 + $0x280] sm:$0xff]
  %v5788 = vld [vmem:[%s0 + $0x25] sm:$0xff]
  %v5789 = vld [vmem:[%s0 + $0x2d] sm:$0xff]
  %v5790 = vld [vmem:[%s0 + $0x35] sm:$0xff]
  %v5791 = vld [vmem:[%s0 + $0x3d] sm:$0xff]
  %v5792 = vld [vmem:[%s0 + $0x45] sm:$0xff]
  %v5793 = vld [vmem:[%s0 + $0x4d] sm:$0xff]
  %v5794 = vld [vmem:[%s0 + $0x55] sm:$0xff]
  %v5795 = vld [vmem:[%s0 + $0x5d] sm:$0xff]
  %v5796 = vld [vmem:[%s0 + $0x65] sm:$0xff]
  %v5797 = vld [vmem:[%s0 + $0x6d] sm:$0xff]
  %v5798 = vld [vmem:[%s0 + $0x75] sm:$0xff]
  %v5799 = vld [vmem:[%s0 + $0x7d] sm:$0xff]
  %v5800 = vld [vmem:[%s0 + $0x85] sm:$0xff]
  %v5801 = vld [vmem:[%s0 + $0x8d] sm:$0xff]
  %v5802 = vld [vmem:[%s0 + $0x95] sm:$0xff]
  %v5803 = vld [vmem:[%s0 + $0x9d] sm:$0xff]
  %v5804 = vld [vmem:[%s0 + $0xa5] sm:$0xff]
  %v5805 = vld [vmem:[%s0 + $0xad] sm:$0xff]
  %v5806 = vld [vmem:[%s0 + $0xb5] sm:$0xff]
  %v5807 = vld [vmem:[%s0 + $0xbd] sm:$0xff]
  %v5808 = vld [vmem:[%s0 + $0xc5] sm:$0xff]
  %v5809 = vld [vmem:[%s0 + $0xcd] sm:$0xff]
  %v5810 = vld [vmem:[%s0 + $0xd5] sm:$0xff]
  %v5811 = vld [vmem:[%s0 + $0xdd] sm:$0xff]
  %v5812 = vld [vmem:[%s0 + $0xe5] sm:$0xff]
  %v5813 = vld [vmem:[%s0 + $0xed] sm:$0xff]
  %v5814 = vld [vmem:[%s0 + $0xf5] sm:$0xff]
  %v5815 = vld [vmem:[%s0 + $0xfd] sm:$0xff]
  %v5816 = vld [vmem:[%s0 + $0x105] sm:$0xff]
  %v5817 = vld [vmem:[%s0 + $0x10d] sm:$0xff]
  %v5818 = vld [vmem:[%s0 + $0x115] sm:$0xff]
  %v5819 = vld [vmem:[%s0 + $0x11d] sm:$0xff]
  %v5820 = vld [vmem:[%s0 + $0x125] sm:$0xff]
  %v5821 = vld [vmem:[%s0 + $0x12d] sm:$0xff]
  %v5822 = vld [vmem:[%s0 + $0x135] sm:$0xff]
  %v5823 = vld [vmem:[%s0 + $0x13d] sm:$0xff]
  %v5824 = vld [vmem:[%s0 + $0x145] sm:$0xff]
  %v5825 = vld [vmem:[%s0 + $0x14d] sm:$0xff]
  %v5826 = vld [vmem:[%s0 + $0x155] sm:$0xff]
  %v5827 = vld [vmem:[%s0 + $0x15d] sm:$0xff]
  %v5828 = vld [vmem:[%s0 + $0x165] sm:$0xff]
  %v5829 = vld [vmem:[%s0 + $0x16d] sm:$0xff]
  %v5830 = vld [vmem:[%s0 + $0x175] sm:$0xff]
  %v5831 = vld [vmem:[%s0 + $0x17d] sm:$0xff]
  %v5832 = vld [vmem:[%s0 + $0x185] sm:$0xff]
  %v5833 = vld [vmem:[%s0 + $0x18d] sm:$0xff]
  %v5834 = vld [vmem:[%s0 + $0x195] sm:$0xff]
  %v5835 = vld [vmem:[%s0 + $0x19d] sm:$0xff]
  %v5836 = vld [vmem:[%s0 + $0x1a5] sm:$0xff]
  %v5837 = vld [vmem:[%s0 + $0x1ad] sm:$0xff]
  %v5838 = vld [vmem:[%s0 + $0x1b5] sm:$0xff]
  %v5839 = vld [vmem:[%s0 + $0x1bd] sm:$0xff]
  %v5840 = vld [vmem:[%s0 + $0x1c5] sm:$0xff]
  %v5841 = vld [vmem:[%s0 + $0x1cd] sm:$0xff]
  %v5842 = vld [vmem:[%s0 + $0x1d5] sm:$0xff]
  %v5843 = vld [vmem:[%s0 + $0x1dd] sm:$0xff]
  %v5844 = vld [vmem:[%s0 + $0x1e5] sm:$0xff]
  %v5845 = vld [vmem:[%s0 + $0x1ed] sm:$0xff]
  %v5846 = vld [vmem:[%s0 + $0x1f5] sm:$0xff]
  %v5847 = vld [vmem:[%s0 + $0x1fd] sm:$0xff]
  %v5848 = vld [vmem:[%s0 + $0x205] sm:$0xff]
  %v5849 = vld [vmem:[%s0 + $0x20d] sm:$0xff]
  %v5850 = vld [vmem:[%s0 + $0x215] sm:$0xff]
  %v5851 = vld [vmem:[%s0 + $0x21d] sm:$0xff]
  %v5852 = vld [vmem:[%s0 + $0x225] sm:$0xff]
  %v5853 = vld [vmem:[%s0 + $0x22d] sm:$0xff]
  %v5854 = vld [vmem:[%s0 + $0x235] sm:$0xff]
  %v5855 = vld [vmem:[%s0 + $0x23d] sm:$0xff]
  %v5856 = vld [vmem:[%s0 + $0x245] sm:$0xff]
  %v5857 = vld [vmem:[%s0 + $0x24d] sm:$0xff]
  %v5858 = vld [vmem:[%s0 + $0x255] sm:$0xff]
  %v5859 = vld [vmem:[%s0 + $0x25d] sm:$0xff]
  %v5860 = vld [vmem:[%s0 + $0x265] sm:$0xff]
  %v5861 = vld [vmem:[%s0 + $0x26d] sm:$0xff]
  %v5862 = vld [vmem:[%s0 + $0x275] sm:$0xff]
  %v5863 = vld [vmem:[%s0 + $0x27d] sm:$0xff]
  %v5864 = vld [vmem:[%s0 + $0x285] sm:$0xff]
  %v5865 = vld [vmem:[%s0 + $0x28d] sm:$0xff]
  %v5866 = vld [vmem:[%s0 + $0x295] sm:$0xff]
  %v5867 = vld [vmem:[%s0 + $0x29d] sm:$0xff]
  %v5868 = vld [vmem:[%s0 + $0x2a5] sm:$0xff]
  %s5869 = scalar_lea.vmem %s1, 28
  %v5870 = vld [vmem:[%s5869] sm:$0xf]
  %v5872 = vsel %vm125, %v5788, 0
  %v5875 = vsel %vm125, %v5789, 0
  %v5878 = vsel %vm125, %v5790, 0
  %v5881 = vsel %vm125, %v5791, 0
  %v5884 = vsel %vm125, %v5792, 0
  %v5887 = vsel %vm125, %v5793, 0
  %v5890 = vsel %vm125, %v5794, 0
  %v5893 = vsel %vm125, %v5795, 0
  %v5896 = vsel %vm125, %v5796, 0
  %v5899 = vsel %vm125, %v5797, 0
  %v5902 = vsel %vm125, %v5798, 0
  %v5905 = vsel %vm125, %v5799, 0
  %v5908 = vsel %vm125, %v5800, 0
  %v5911 = vsel %vm125, %v5801, 0
  %v5914 = vsel %vm125, %v5802, 0
  %v5917 = vsel %vm125, %v5803, 0
  %v5920 = vsel %vm125, %v5804, 0
  %v5923 = vsel %vm125, %v5805, 0
  %v5926 = vsel %vm125, %v5806, 0
  %v5929 = vsel %vm125, %v5807, 0
  %v5932 = vsel %vm125, %v5808, 0
  %v5935 = vsel %vm125, %v5809, 0
  %v5938 = vsel %vm125, %v5810, 0
  %v5941 = vsel %vm125, %v5811, 0
  %v5944 = vsel %vm125, %v5812, 0
  %v5947 = vsel %vm125, %v5813, 0
  %v5950 = vsel %vm125, %v5814, 0
  %v5953 = vsel %vm125, %v5815, 0
  %v5956 = vsel %vm125, %v5816, 0
  %v5959 = vsel %vm125, %v5817, 0
  %v5962 = vsel %vm125, %v5818, 0
  %v5965 = vsel %vm125, %v5819, 0
  %v5968 = vsel %vm125, %v5820, 0
  %v5971 = vsel %vm125, %v5821, 0
  %v5974 = vsel %vm125, %v5822, 0
  %v5977 = vsel %vm125, %v5823, 0
  %v5980 = vsel %vm125, %v5824, 0
  %v5983 = vsel %vm125, %v5825, 0
  %v5986 = vsel %vm125, %v5826, 0
  %v5989 = vsel %vm125, %v5827, 0
  %v5992 = vsel %vm125, %v5828, 0
  %v5995 = vsel %vm125, %v5829, 0
  %v5998 = vsel %vm125, %v5830, 0
  %v6001 = vsel %vm125, %v5831, 0
  %v6004 = vsel %vm125, %v5832, 0
  %v6007 = vsel %vm125, %v5833, 0
  %v6010 = vsel %vm125, %v5834, 0
  %v6013 = vsel %vm125, %v5835, 0
  %v6016 = vsel %vm125, %v5836, 0
  %v6019 = vsel %vm125, %v5837, 0
  %v6022 = vsel %vm125, %v5838, 0
  %v6025 = vsel %vm125, %v5839, 0
  %v6028 = vsel %vm125, %v5840, 0
  %v6031 = vsel %vm125, %v5841, 0
  %v6034 = vsel %vm125, %v5842, 0
  %v6037 = vsel %vm125, %v5843, 0
  %v6040 = vsel %vm125, %v5844, 0
  %v6043 = vsel %vm125, %v5845, 0
  %v6046 = vsel %vm125, %v5846, 0
  %v6049 = vsel %vm125, %v5847, 0
  %v6052 = vsel %vm125, %v5848, 0
  %v6055 = vsel %vm125, %v5849, 0
  %v6058 = vsel %vm125, %v5850, 0
  %v6061 = vsel %vm125, %v5851, 0
  %v6064 = vsel %vm125, %v5852, 0
  %v6067 = vsel %vm125, %v5853, 0
  %v6070 = vsel %vm125, %v5854, 0
  %v6073 = vsel %vm125, %v5855, 0
  %v6076 = vsel %vm125, %v5856, 0
  %v6079 = vsel %vm125, %v5857, 0
  %v6082 = vsel %vm125, %v5858, 0
  %v6085 = vsel %vm125, %v5859, 0
  %v6088 = vsel %vm125, %v5860, 0
  %v6091 = vsel %vm125, %v5861, 0
  %v6094 = vsel %vm125, %v5862, 0
  %v6097 = vsel %vm125, %v5863, 0
  %v6100 = vsel %vm125, %v5864, 0
  %v6103 = vsel %vm125, %v5865, 0
  %v6106 = vsel %vm125, %v5866, 0
  %v6109 = vsel %vm125, %v5867, 0
  %v6112 = vsel %vm125, %v5868, 0
  %v6115 = vsel %vm369, %v5870, 0
  %6117 = vmatpush.msra.mxu0 0.0
  %6118 = vmatpush.msra.mxu0 0.0
  %6119 = vmatpush.msra.mxu0 0.0
  %6120 = vmatpush.msra.mxu0 0.0
  %6121 = vmatpush.msra.mxu0 0.0
  %6122 = vmatpush.msra.mxu0 0.0
  %6123 = vmatpush.msra.mxu0 0.0
  %6124 = vmatpush.msra.mxu0 0.0
  %6125 = vmatpush.msra.mxu0 0.0
  %6126 = vmatpush.msra.mxu0 0.0
  %6127 = vmatpush.msra.mxu0 0.0
  %6128 = vmatpush.msra.mxu0 0.0
  %6129 = vmatpush.msra.mxu0 0.0
  %6130 = vmatpush.msra.mxu0 0.0
  %6131 = vmatpush.msra.mxu0 0.0
  %6132 = vmatpush.msra.mxu0 %v6115
  %6133 = vmatmul.f32.gmra.mxu0 %v5872
  %v6134 = vpop.f32.mrf.mxu0
  %v6135 = vadd.f32 0.0, %v6134
  %6136 = vmatmul.f32.gmra.mxu0 %v5875
  %v6137 = vpop.f32.mrf.mxu0
  %v6138 = vadd.f32 0.0, %v6137
  %6139 = vmatmul.f32.gmra.mxu0 %v5878
  %v6140 = vpop.f32.mrf.mxu0
  %v6141 = vadd.f32 0.0, %v6140
  %6142 = vmatmul.f32.gmra.mxu0 %v5881
  %v6143 = vpop.f32.mrf.mxu0
  %v6144 = vadd.f32 0.0, %v6143
  %6145 = vmatmul.f32.gmra.mxu0 %v5884
  %v6146 = vpop.f32.mrf.mxu0
  %v6147 = vadd.f32 0.0, %v6146
  %6148 = vmatmul.f32.gmra.mxu0 %v5887
  %v6149 = vpop.f32.mrf.mxu0
  %v6150 = vadd.f32 0.0, %v6149
  %6151 = vmatmul.f32.gmra.mxu0 %v5890
  %v6152 = vpop.f32.mrf.mxu0
  %v6153 = vadd.f32 0.0, %v6152
  %6154 = vmatmul.f32.gmra.mxu0 %v5893
  %v6155 = vpop.f32.mrf.mxu0
  %v6156 = vadd.f32 0.0, %v6155
  %6157 = vmatmul.f32.gmra.mxu0 %v5896
  %v6158 = vpop.f32.mrf.mxu0
  %v6159 = vadd.f32 0.0, %v6158
  %6160 = vmatmul.f32.gmra.mxu0 %v5899
  %v6161 = vpop.f32.mrf.mxu0
  %v6162 = vadd.f32 0.0, %v6161
  %6163 = vmatmul.f32.gmra.mxu0 %v5902
  %v6164 = vpop.f32.mrf.mxu0
  %v6165 = vadd.f32 0.0, %v6164
  %6166 = vmatmul.f32.gmra.mxu0 %v5905
  %v6167 = vpop.f32.mrf.mxu0
  %v6168 = vadd.f32 0.0, %v6167
  %6169 = vmatmul.f32.gmra.mxu0 %v5908
  %v6170 = vpop.f32.mrf.mxu0
  %v6171 = vadd.f32 0.0, %v6170
  %6172 = vmatmul.f32.gmra.mxu0 %v5911
  %v6173 = vpop.f32.mrf.mxu0
  %v6174 = vadd.f32 0.0, %v6173
  %6175 = vmatmul.f32.gmra.mxu0 %v5914
  %v6176 = vpop.f32.mrf.mxu0
  %v6177 = vadd.f32 0.0, %v6176
  %6178 = vmatmul.f32.gmra.mxu0 %v5917
  %v6179 = vpop.f32.mrf.mxu0
  %v6180 = vadd.f32 0.0, %v6179
  %6181 = vmatmul.f32.gmra.mxu0 %v5920
  %v6182 = vpop.f32.mrf.mxu0
  %v6183 = vadd.f32 0.0, %v6182
  %6184 = vmatmul.f32.gmra.mxu0 %v5923
  %v6185 = vpop.f32.mrf.mxu0
  %v6186 = vadd.f32 0.0, %v6185
  %6187 = vmatmul.f32.gmra.mxu0 %v5926
  %v6188 = vpop.f32.mrf.mxu0
  %v6189 = vadd.f32 0.0, %v6188
  %6190 = vmatmul.f32.gmra.mxu0 %v5929
  %v6191 = vpop.f32.mrf.mxu0
  %v6192 = vadd.f32 0.0, %v6191
  %6193 = vmatmul.f32.gmra.mxu0 %v5932
  %v6194 = vpop.f32.mrf.mxu0
  %v6195 = vadd.f32 0.0, %v6194
  %6196 = vmatmul.f32.gmra.mxu0 %v5935
  %v6197 = vpop.f32.mrf.mxu0
  %v6198 = vadd.f32 0.0, %v6197
  %6199 = vmatmul.f32.gmra.mxu0 %v5938
  %v6200 = vpop.f32.mrf.mxu0
  %v6201 = vadd.f32 0.0, %v6200
  %6202 = vmatmul.f32.gmra.mxu0 %v5941
  %v6203 = vpop.f32.mrf.mxu0
  %v6204 = vadd.f32 0.0, %v6203
  %6205 = vmatmul.f32.gmra.mxu0 %v5944
  %v6206 = vpop.f32.mrf.mxu0
  %v6207 = vadd.f32 0.0, %v6206
  %6208 = vmatmul.f32.gmra.mxu0 %v5947
  %v6209 = vpop.f32.mrf.mxu0
  %v6210 = vadd.f32 0.0, %v6209
  %6211 = vmatmul.f32.gmra.mxu0 %v5950
  %v6212 = vpop.f32.mrf.mxu0
  %v6213 = vadd.f32 0.0, %v6212
  %6214 = vmatmul.f32.gmra.mxu0 %v5953
  %v6215 = vpop.f32.mrf.mxu0
  %v6216 = vadd.f32 0.0, %v6215
  %6217 = vmatmul.f32.gmra.mxu0 %v5956
  %v6218 = vpop.f32.mrf.mxu0
  %v6219 = vadd.f32 0.0, %v6218
  %6220 = vmatmul.f32.gmra.mxu0 %v5959
  %v6221 = vpop.f32.mrf.mxu0
  %v6222 = vadd.f32 0.0, %v6221
  %6223 = vmatmul.f32.gmra.mxu0 %v5962
  %v6224 = vpop.f32.mrf.mxu0
  %v6225 = vadd.f32 0.0, %v6224
  %6226 = vmatmul.f32.gmra.mxu0 %v5965
  %v6227 = vpop.f32.mrf.mxu0
  %v6228 = vadd.f32 0.0, %v6227
  %6229 = vmatmul.f32.gmra.mxu0 %v5968
  %v6230 = vpop.f32.mrf.mxu0
  %v6231 = vadd.f32 0.0, %v6230
  %6232 = vmatmul.f32.gmra.mxu0 %v5971
  %v6233 = vpop.f32.mrf.mxu0
  %v6234 = vadd.f32 0.0, %v6233
  %6235 = vmatmul.f32.gmra.mxu0 %v5974
  %v6236 = vpop.f32.mrf.mxu0
  %v6237 = vadd.f32 0.0, %v6236
  %6238 = vmatmul.f32.gmra.mxu0 %v5977
  %v6239 = vpop.f32.mrf.mxu0
  %v6240 = vadd.f32 0.0, %v6239
  %6241 = vmatmul.f32.gmra.mxu0 %v5980
  %v6242 = vpop.f32.mrf.mxu0
  %v6243 = vadd.f32 0.0, %v6242
  %6244 = vmatmul.f32.gmra.mxu0 %v5983
  %v6245 = vpop.f32.mrf.mxu0
  %v6246 = vadd.f32 0.0, %v6245
  %6247 = vmatmul.f32.gmra.mxu0 %v5986
  %v6248 = vpop.f32.mrf.mxu0
  %v6249 = vadd.f32 0.0, %v6248
  %6250 = vmatmul.f32.gmra.mxu0 %v5989
  %v6251 = vpop.f32.mrf.mxu0
  %v6252 = vadd.f32 0.0, %v6251
  %6253 = vmatmul.f32.gmra.mxu0 %v5992
  %v6254 = vpop.f32.mrf.mxu0
  %v6255 = vadd.f32 0.0, %v6254
  %6256 = vmatmul.f32.gmra.mxu0 %v5995
  %v6257 = vpop.f32.mrf.mxu0
  %v6258 = vadd.f32 0.0, %v6257
  %6259 = vmatmul.f32.gmra.mxu0 %v5998
  %v6260 = vpop.f32.mrf.mxu0
  %v6261 = vadd.f32 0.0, %v6260
  %6262 = vmatmul.f32.gmra.mxu0 %v6001
  %v6263 = vpop.f32.mrf.mxu0
  %v6264 = vadd.f32 0.0, %v6263
  %6265 = vmatmul.f32.gmra.mxu0 %v6004
  %v6266 = vpop.f32.mrf.mxu0
  %v6267 = vadd.f32 0.0, %v6266
  %6268 = vmatmul.f32.gmra.mxu0 %v6007
  %v6269 = vpop.f32.mrf.mxu0
  %v6270 = vadd.f32 0.0, %v6269
  %6271 = vmatmul.f32.gmra.mxu0 %v6010
  %v6272 = vpop.f32.mrf.mxu0
  %v6273 = vadd.f32 0.0, %v6272
  %6274 = vmatmul.f32.gmra.mxu0 %v6013
  %v6275 = vpop.f32.mrf.mxu0
  %v6276 = vadd.f32 0.0, %v6275
  %6277 = vmatmul.f32.gmra.mxu0 %v6016
  %v6278 = vpop.f32.mrf.mxu0
  %v6279 = vadd.f32 0.0, %v6278
  %6280 = vmatmul.f32.gmra.mxu0 %v6019
  %v6281 = vpop.f32.mrf.mxu0
  %v6282 = vadd.f32 0.0, %v6281
  %6283 = vmatmul.f32.gmra.mxu0 %v6022
  %v6284 = vpop.f32.mrf.mxu0
  %v6285 = vadd.f32 0.0, %v6284
  %6286 = vmatmul.f32.gmra.mxu0 %v6025
  %v6287 = vpop.f32.mrf.mxu0
  %v6288 = vadd.f32 0.0, %v6287
  %6289 = vmatmul.f32.gmra.mxu0 %v6028
  %v6290 = vpop.f32.mrf.mxu0
  %v6291 = vadd.f32 0.0, %v6290
  %6292 = vmatmul.f32.gmra.mxu0 %v6031
  %v6293 = vpop.f32.mrf.mxu0
  %v6294 = vadd.f32 0.0, %v6293
  %6295 = vmatmul.f32.gmra.mxu0 %v6034
  %v6296 = vpop.f32.mrf.mxu0
  %v6297 = vadd.f32 0.0, %v6296
  %6298 = vmatmul.f32.gmra.mxu0 %v6037
  %v6299 = vpop.f32.mrf.mxu0
  %v6300 = vadd.f32 0.0, %v6299
  %6301 = vmatmul.f32.gmra.mxu0 %v6040
  %v6302 = vpop.f32.mrf.mxu0
  %v6303 = vadd.f32 0.0, %v6302
  %6304 = vmatmul.f32.gmra.mxu0 %v6043
  %v6305 = vpop.f32.mrf.mxu0
  %v6306 = vadd.f32 0.0, %v6305
  %6307 = vmatmul.f32.gmra.mxu0 %v6046
  %v6308 = vpop.f32.mrf.mxu0
  %v6309 = vadd.f32 0.0, %v6308
  %6310 = vmatmul.f32.gmra.mxu0 %v6049
  %v6311 = vpop.f32.mrf.mxu0
  %v6312 = vadd.f32 0.0, %v6311
  %6313 = vmatmul.f32.gmra.mxu0 %v6052
  %v6314 = vpop.f32.mrf.mxu0
  %v6315 = vadd.f32 0.0, %v6314
  %6316 = vmatmul.f32.gmra.mxu0 %v6055
  %v6317 = vpop.f32.mrf.mxu0
  %v6318 = vadd.f32 0.0, %v6317
  %6319 = vmatmul.f32.gmra.mxu0 %v6058
  %v6320 = vpop.f32.mrf.mxu0
  %v6321 = vadd.f32 0.0, %v6320
  %6322 = vmatmul.f32.gmra.mxu0 %v6061
  %v6323 = vpop.f32.mrf.mxu0
  %v6324 = vadd.f32 0.0, %v6323
  %6325 = vmatmul.f32.gmra.mxu0 %v6064
  %v6326 = vpop.f32.mrf.mxu0
  %v6327 = vadd.f32 0.0, %v6326
  %6328 = vmatmul.f32.gmra.mxu0 %v6067
  %v6329 = vpop.f32.mrf.mxu0
  %v6330 = vadd.f32 0.0, %v6329
  %6331 = vmatmul.f32.gmra.mxu0 %v6070
  %v6332 = vpop.f32.mrf.mxu0
  %v6333 = vadd.f32 0.0, %v6332
  %6334 = vmatmul.f32.gmra.mxu0 %v6073
  %v6335 = vpop.f32.mrf.mxu0
  %v6336 = vadd.f32 0.0, %v6335
  %6337 = vmatmul.f32.gmra.mxu0 %v6076
  %v6338 = vpop.f32.mrf.mxu0
  %v6339 = vadd.f32 0.0, %v6338
  %6340 = vmatmul.f32.gmra.mxu0 %v6079
  %v6341 = vpop.f32.mrf.mxu0
  %v6342 = vadd.f32 0.0, %v6341
  %6343 = vmatmul.f32.gmra.mxu0 %v6082
  %v6344 = vpop.f32.mrf.mxu0
  %v6345 = vadd.f32 0.0, %v6344
  %6346 = vmatmul.f32.gmra.mxu0 %v6085
  %v6347 = vpop.f32.mrf.mxu0
  %v6348 = vadd.f32 0.0, %v6347
  %6349 = vmatmul.f32.gmra.mxu0 %v6088
  %v6350 = vpop.f32.mrf.mxu0
  %v6351 = vadd.f32 0.0, %v6350
  %6352 = vmatmul.f32.gmra.mxu0 %v6091
  %v6353 = vpop.f32.mrf.mxu0
  %v6354 = vadd.f32 0.0, %v6353
  %6355 = vmatmul.f32.gmra.mxu0 %v6094
  %v6356 = vpop.f32.mrf.mxu0
  %v6357 = vadd.f32 0.0, %v6356
  %6358 = vmatmul.f32.gmra.mxu0 %v6097
  %v6359 = vpop.f32.mrf.mxu0
  %v6360 = vadd.f32 0.0, %v6359
  %6361 = vmatmul.f32.gmra.mxu0 %v6100
  %v6362 = vpop.f32.mrf.mxu0
  %v6363 = vadd.f32 0.0, %v6362
  %6364 = vmatmul.f32.gmra.mxu0 %v6103
  %v6365 = vpop.f32.mrf.mxu0
  %v6366 = vadd.f32 0.0, %v6365
  %6367 = vmatmul.f32.gmra.mxu0 %v6106
  %v6368 = vpop.f32.mrf.mxu0
  %v6369 = vadd.f32 0.0, %v6368
  %6370 = vmatmul.f32.gmra.mxu0 %v6109
  %v6371 = vpop.f32.mrf.mxu0
  %v6372 = vadd.f32 0.0, %v6371
  %6373 = vmatmul.f32.gmra.mxu0 %v6112
  %v6374 = vpop.f32.mrf.mxu0
  %v6375 = vadd.f32 0.0, %v6374
  %6376 = vdwg.mxu0
  %v6377 = vadd.f32 %v5707, %v6135
  %v6378 = vadd.f32 %v5708, %v6138
  %v6379 = vadd.f32 %v5709, %v6141
  %v6380 = vadd.f32 %v5710, %v6144
  %v6381 = vadd.f32 %v5711, %v6147
  %v6382 = vadd.f32 %v5712, %v6150
  %v6383 = vadd.f32 %v5713, %v6153
  %v6384 = vadd.f32 %v5714, %v6156
  %v6385 = vadd.f32 %v5715, %v6159
  %v6386 = vadd.f32 %v5716, %v6162
  %v6387 = vadd.f32 %v5717, %v6165
  %v6388 = vadd.f32 %v5718, %v6168
  %v6389 = vadd.f32 %v5719, %v6171
  %v6390 = vadd.f32 %v5720, %v6174
  %v6391 = vadd.f32 %v5721, %v6177
  %v6392 = vadd.f32 %v5722, %v6180
  %v6393 = vadd.f32 %v5723, %v6183
  %v6394 = vadd.f32 %v5724, %v6186
  %v6395 = vadd.f32 %v5725, %v6189
  %v6396 = vadd.f32 %v5726, %v6192
  %v6397 = vadd.f32 %v5727, %v6195
  %v6398 = vadd.f32 %v5728, %v6198
  %v6399 = vadd.f32 %v5729, %v6201
  %v6400 = vadd.f32 %v5730, %v6204
  %v6401 = vadd.f32 %v5731, %v6207
  %v6402 = vadd.f32 %v5732, %v6210
  %v6403 = vadd.f32 %v5733, %v6213
  %v6404 = vadd.f32 %v5734, %v6216
  %v6405 = vadd.f32 %v5735, %v6219
  %v6406 = vadd.f32 %v5736, %v6222
  %v6407 = vadd.f32 %v5737, %v6225
  %v6408 = vadd.f32 %v5738, %v6228
  %v6409 = vadd.f32 %v5739, %v6231
  %v6410 = vadd.f32 %v5740, %v6234
  %v6411 = vadd.f32 %v5741, %v6237
  %v6412 = vadd.f32 %v5742, %v6240
  %v6413 = vadd.f32 %v5743, %v6243
  %v6414 = vadd.f32 %v5744, %v6246
  %v6415 = vadd.f32 %v5745, %v6249
  %v6416 = vadd.f32 %v5746, %v6252
  %v6417 = vadd.f32 %v5747, %v6255
  %v6418 = vadd.f32 %v5748, %v6258
  %v6419 = vadd.f32 %v5749, %v6261
  %v6420 = vadd.f32 %v5750, %v6264
  %v6421 = vadd.f32 %v5751, %v6267
  %v6422 = vadd.f32 %v5752, %v6270
  %v6423 = vadd.f32 %v5753, %v6273
  %v6424 = vadd.f32 %v5754, %v6276
  %v6425 = vadd.f32 %v5755, %v6279
  %v6426 = vadd.f32 %v5756, %v6282
  %v6427 = vadd.f32 %v5757, %v6285
  %v6428 = vadd.f32 %v5758, %v6288
  %v6429 = vadd.f32 %v5759, %v6291
  %v6430 = vadd.f32 %v5760, %v6294
  %v6431 = vadd.f32 %v5761, %v6297
  %v6432 = vadd.f32 %v5762, %v6300
  %v6433 = vadd.f32 %v5763, %v6303
  %v6434 = vadd.f32 %v5764, %v6306
  %v6435 = vadd.f32 %v5765, %v6309
  %v6436 = vadd.f32 %v5766, %v6312
  %v6437 = vadd.f32 %v5767, %v6315
  %v6438 = vadd.f32 %v5768, %v6318
  %v6439 = vadd.f32 %v5769, %v6321
  %v6440 = vadd.f32 %v5770, %v6324
  %v6441 = vadd.f32 %v5771, %v6327
  %v6442 = vadd.f32 %v5772, %v6330
  %v6443 = vadd.f32 %v5773, %v6333
  %v6444 = vadd.f32 %v5774, %v6336
  %v6445 = vadd.f32 %v5775, %v6339
  %v6446 = vadd.f32 %v5776, %v6342
  %v6447 = vadd.f32 %v5777, %v6345
  %v6448 = vadd.f32 %v5778, %v6348
  %v6449 = vadd.f32 %v5779, %v6351
  %v6450 = vadd.f32 %v5780, %v6354
  %v6451 = vadd.f32 %v5781, %v6357
  %v6452 = vadd.f32 %v5782, %v6360
  %v6453 = vadd.f32 %v5783, %v6363
  %v6454 = vadd.f32 %v5784, %v6366
  %v6455 = vadd.f32 %v5785, %v6369
  %v6456 = vadd.f32 %v5786, %v6372
  %v6457 = vadd.f32 %v5787, %v6375
  %6458 = vst.msk [vmem:[#allocation2] sm:$0xff] %vm633, %v6377
  %6459 = vst.msk [vmem:[#allocation2 + $0x8] sm:$0xff] %vm633, %v6378
  %6460 = vst.msk [vmem:[#allocation2 + $0x10] sm:$0xff] %vm633, %v6379
  %6461 = vst.msk [vmem:[#allocation2 + $0x18] sm:$0xff] %vm633, %v6380
  %6462 = vst.msk [vmem:[#allocation2 + $0x20] sm:$0xff] %vm633, %v6381
  %6463 = vst.msk [vmem:[#allocation2 + $0x28] sm:$0xff] %vm633, %v6382
  %6464 = vst.msk [vmem:[#allocation2 + $0x30] sm:$0xff] %vm633, %v6383
  %6465 = vst.msk [vmem:[#allocation2 + $0x38] sm:$0xff] %vm633, %v6384
  %6466 = vst.msk [vmem:[#allocation2 + $0x40] sm:$0xff] %vm633, %v6385
  %6467 = vst.msk [vmem:[#allocation2 + $0x48] sm:$0xff] %vm633, %v6386
  %6468 = vst.msk [vmem:[#allocation2 + $0x50] sm:$0xff] %vm633, %v6387
  %6469 = vst.msk [vmem:[#allocation2 + $0x58] sm:$0xff] %vm633, %v6388
  %6470 = vst.msk [vmem:[#allocation2 + $0x60] sm:$0xff] %vm633, %v6389
  %6471 = vst.msk [vmem:[#allocation2 + $0x68] sm:$0xff] %vm633, %v6390
  %6472 = vst.msk [vmem:[#allocation2 + $0x70] sm:$0xff] %vm633, %v6391
  %6473 = vst.msk [vmem:[#allocation2 + $0x78] sm:$0xff] %vm633, %v6392
  %6474 = vst.msk [vmem:[#allocation2 + $0x80] sm:$0xff] %vm633, %v6393
  %6475 = vst.msk [vmem:[#allocation2 + $0x88] sm:$0xff] %vm633, %v6394
  %6476 = vst.msk [vmem:[#allocation2 + $0x90] sm:$0xff] %vm633, %v6395
  %6477 = vst.msk [vmem:[#allocation2 + $0x98] sm:$0xff] %vm633, %v6396
  %6478 = vst.msk [vmem:[#allocation2 + $0xa0] sm:$0xff] %vm633, %v6397
  %6479 = vst.msk [vmem:[#allocation2 + $0xa8] sm:$0xff] %vm633, %v6398
  %6480 = vst.msk [vmem:[#allocation2 + $0xb0] sm:$0xff] %vm633, %v6399
  %6481 = vst.msk [vmem:[#allocation2 + $0xb8] sm:$0xff] %vm633, %v6400
  %6482 = vst.msk [vmem:[#allocation2 + $0xc0] sm:$0xff] %vm633, %v6401
  %6483 = vst.msk [vmem:[#allocation2 + $0xc8] sm:$0xff] %vm633, %v6402
  %6484 = vst.msk [vmem:[#allocation2 + $0xd0] sm:$0xff] %vm633, %v6403
  %6485 = vst.msk [vmem:[#allocation2 + $0xd8] sm:$0xff] %vm633, %v6404
  %6486 = vst.msk [vmem:[#allocation2 + $0xe0] sm:$0xff] %vm633, %v6405
  %6487 = vst.msk [vmem:[#allocation2 + $0xe8] sm:$0xff] %vm633, %v6406
  %6488 = vst.msk [vmem:[#allocation2 + $0xf0] sm:$0xff] %vm633, %v6407
  %6489 = vst.msk [vmem:[#allocation2 + $0xf8] sm:$0xff] %vm633, %v6408
  %6490 = vst.msk [vmem:[#allocation2 + $0x100] sm:$0xff] %vm633, %v6409
  %6491 = vst.msk [vmem:[#allocation2 + $0x108] sm:$0xff] %vm633, %v6410
  %6492 = vst.msk [vmem:[#allocation2 + $0x110] sm:$0xff] %vm633, %v6411
  %6493 = vst.msk [vmem:[#allocation2 + $0x118] sm:$0xff] %vm633, %v6412
  %6494 = vst.msk [vmem:[#allocation2 + $0x120] sm:$0xff] %vm633, %v6413
  %6495 = vst.msk [vmem:[#allocation2 + $0x128] sm:$0xff] %vm633, %v6414
  %6496 = vst.msk [vmem:[#allocation2 + $0x130] sm:$0xff] %vm633, %v6415
  %6497 = vst.msk [vmem:[#allocation2 + $0x138] sm:$0xff] %vm633, %v6416
  %6498 = vst.msk [vmem:[#allocation2 + $0x140] sm:$0xff] %vm633, %v6417
  %6499 = vst.msk [vmem:[#allocation2 + $0x148] sm:$0xff] %vm633, %v6418
  %6500 = vst.msk [vmem:[#allocation2 + $0x150] sm:$0xff] %vm633, %v6419
  %6501 = vst.msk [vmem:[#allocation2 + $0x158] sm:$0xff] %vm633, %v6420
  %6502 = vst.msk [vmem:[#allocation2 + $0x160] sm:$0xff] %vm633, %v6421
  %6503 = vst.msk [vmem:[#allocation2 + $0x168] sm:$0xff] %vm633, %v6422
  %6504 = vst.msk [vmem:[#allocation2 + $0x170] sm:$0xff] %vm633, %v6423
  %6505 = vst.msk [vmem:[#allocation2 + $0x178] sm:$0xff] %vm633, %v6424
  %6506 = vst.msk [vmem:[#allocation2 + $0x180] sm:$0xff] %vm633, %v6425
  %6507 = vst.msk [vmem:[#allocation2 + $0x188] sm:$0xff] %vm633, %v6426
  %6508 = vst.msk [vmem:[#allocation2 + $0x190] sm:$0xff] %vm633, %v6427
  %6509 = vst.msk [vmem:[#allocation2 + $0x198] sm:$0xff] %vm633, %v6428
  %6510 = vst.msk [vmem:[#allocation2 + $0x1a0] sm:$0xff] %vm633, %v6429
  %6511 = vst.msk [vmem:[#allocation2 + $0x1a8] sm:$0xff] %vm633, %v6430
  %6512 = vst.msk [vmem:[#allocation2 + $0x1b0] sm:$0xff] %vm633, %v6431
  %6513 = vst.msk [vmem:[#allocation2 + $0x1b8] sm:$0xff] %vm633, %v6432
  %6514 = vst.msk [vmem:[#allocation2 + $0x1c0] sm:$0xff] %vm633, %v6433
  %6515 = vst.msk [vmem:[#allocation2 + $0x1c8] sm:$0xff] %vm633, %v6434
  %6516 = vst.msk [vmem:[#allocation2 + $0x1d0] sm:$0xff] %vm633, %v6435
  %6517 = vst.msk [vmem:[#allocation2 + $0x1d8] sm:$0xff] %vm633, %v6436
  %6518 = vst.msk [vmem:[#allocation2 + $0x1e0] sm:$0xff] %vm633, %v6437
  %6519 = vst.msk [vmem:[#allocation2 + $0x1e8] sm:$0xff] %vm633, %v6438
  %6520 = vst.msk [vmem:[#allocation2 + $0x1f0] sm:$0xff] %vm633, %v6439
  %6521 = vst.msk [vmem:[#allocation2 + $0x1f8] sm:$0xff] %vm633, %v6440
  %6522 = vst.msk [vmem:[#allocation2 + $0x200] sm:$0xff] %vm633, %v6441
  %6523 = vst.msk [vmem:[#allocation2 + $0x208] sm:$0xff] %vm633, %v6442
  %6524 = vst.msk [vmem:[#allocation2 + $0x210] sm:$0xff] %vm633, %v6443
  %6525 = vst.msk [vmem:[#allocation2 + $0x218] sm:$0xff] %vm633, %v6444
  %6526 = vst.msk [vmem:[#allocation2 + $0x220] sm:$0xff] %vm633, %v6445
  %6527 = vst.msk [vmem:[#allocation2 + $0x228] sm:$0xff] %vm633, %v6446
  %6528 = vst.msk [vmem:[#allocation2 + $0x230] sm:$0xff] %vm633, %v6447
  %6529 = vst.msk [vmem:[#allocation2 + $0x238] sm:$0xff] %vm633, %v6448
  %6530 = vst.msk [vmem:[#allocation2 + $0x240] sm:$0xff] %vm633, %v6449
  %6531 = vst.msk [vmem:[#allocation2 + $0x248] sm:$0xff] %vm633, %v6450
  %6532 = vst.msk [vmem:[#allocation2 + $0x250] sm:$0xff] %vm633, %v6451
  %6533 = vst.msk [vmem:[#allocation2 + $0x258] sm:$0xff] %vm633, %v6452
  %6534 = vst.msk [vmem:[#allocation2 + $0x260] sm:$0xff] %vm633, %v6453
  %6535 = vst.msk [vmem:[#allocation2 + $0x268] sm:$0xff] %vm633, %v6454
  %6536 = vst.msk [vmem:[#allocation2 + $0x270] sm:$0xff] %vm633, %v6455
  %6537 = vst.msk [vmem:[#allocation2 + $0x278] sm:$0xff] %vm633, %v6456
  %6538 = vst.msk [vmem:[#allocation2 + $0x280] sm:$0xff] %vm633, %v6457
  %v6539 = vld [vmem:[#allocation2] sm:$0xff]
  %v6540 = vld [vmem:[#allocation2 + $0x8] sm:$0xff]
  %v6541 = vld [vmem:[#allocation2 + $0x10] sm:$0xff]
  %v6542 = vld [vmem:[#allocation2 + $0x18] sm:$0xff]
  %v6543 = vld [vmem:[#allocation2 + $0x20] sm:$0xff]
  %v6544 = vld [vmem:[#allocation2 + $0x28] sm:$0xff]
  %v6545 = vld [vmem:[#allocation2 + $0x30] sm:$0xff]
  %v6546 = vld [vmem:[#allocation2 + $0x38] sm:$0xff]
  %v6547 = vld [vmem:[#allocation2 + $0x40] sm:$0xff]
  %v6548 = vld [vmem:[#allocation2 + $0x48] sm:$0xff]
  %v6549 = vld [vmem:[#allocation2 + $0x50] sm:$0xff]
  %v6550 = vld [vmem:[#allocation2 + $0x58] sm:$0xff]
  %v6551 = vld [vmem:[#allocation2 + $0x60] sm:$0xff]
  %v6552 = vld [vmem:[#allocation2 + $0x68] sm:$0xff]
  %v6553 = vld [vmem:[#allocation2 + $0x70] sm:$0xff]
  %v6554 = vld [vmem:[#allocation2 + $0x78] sm:$0xff]
  %v6555 = vld [vmem:[#allocation2 + $0x80] sm:$0xff]
  %v6556 = vld [vmem:[#allocation2 + $0x88] sm:$0xff]
  %v6557 = vld [vmem:[#allocation2 + $0x90] sm:$0xff]
  %v6558 = vld [vmem:[#allocation2 + $0x98] sm:$0xff]
  %v6559 = vld [vmem:[#allocation2 + $0xa0] sm:$0xff]
  %v6560 = vld [vmem:[#allocation2 + $0xa8] sm:$0xff]
  %v6561 = vld [vmem:[#allocation2 + $0xb0] sm:$0xff]
  %v6562 = vld [vmem:[#allocation2 + $0xb8] sm:$0xff]
  %v6563 = vld [vmem:[#allocation2 + $0xc0] sm:$0xff]
  %v6564 = vld [vmem:[#allocation2 + $0xc8] sm:$0xff]
  %v6565 = vld [vmem:[#allocation2 + $0xd0] sm:$0xff]
  %v6566 = vld [vmem:[#allocation2 + $0xd8] sm:$0xff]
  %v6567 = vld [vmem:[#allocation2 + $0xe0] sm:$0xff]
  %v6568 = vld [vmem:[#allocation2 + $0xe8] sm:$0xff]
  %v6569 = vld [vmem:[#allocation2 + $0xf0] sm:$0xff]
  %v6570 = vld [vmem:[#allocation2 + $0xf8] sm:$0xff]
  %v6571 = vld [vmem:[#allocation2 + $0x100] sm:$0xff]
  %v6572 = vld [vmem:[#allocation2 + $0x108] sm:$0xff]
  %v6573 = vld [vmem:[#allocation2 + $0x110] sm:$0xff]
  %v6574 = vld [vmem:[#allocation2 + $0x118] sm:$0xff]
  %v6575 = vld [vmem:[#allocation2 + $0x120] sm:$0xff]
  %v6576 = vld [vmem:[#allocation2 + $0x128] sm:$0xff]
  %v6577 = vld [vmem:[#allocation2 + $0x130] sm:$0xff]
  %v6578 = vld [vmem:[#allocation2 + $0x138] sm:$0xff]
  %v6579 = vld [vmem:[#allocation2 + $0x140] sm:$0xff]
  %v6580 = vld [vmem:[#allocation2 + $0x148] sm:$0xff]
  %v6581 = vld [vmem:[#allocation2 + $0x150] sm:$0xff]
  %v6582 = vld [vmem:[#allocation2 + $0x158] sm:$0xff]
  %v6583 = vld [vmem:[#allocation2 + $0x160] sm:$0xff]
  %v6584 = vld [vmem:[#allocation2 + $0x168] sm:$0xff]
  %v6585 = vld [vmem:[#allocation2 + $0x170] sm:$0xff]
  %v6586 = vld [vmem:[#allocation2 + $0x178] sm:$0xff]
  %v6587 = vld [vmem:[#allocation2 + $0x180] sm:$0xff]
  %v6588 = vld [vmem:[#allocation2 + $0x188] sm:$0xff]
  %v6589 = vld [vmem:[#allocation2 + $0x190] sm:$0xff]
  %v6590 = vld [vmem:[#allocation2 + $0x198] sm:$0xff]
  %v6591 = vld [vmem:[#allocation2 + $0x1a0] sm:$0xff]
  %v6592 = vld [vmem:[#allocation2 + $0x1a8] sm:$0xff]
  %v6593 = vld [vmem:[#allocation2 + $0x1b0] sm:$0xff]
  %v6594 = vld [vmem:[#allocation2 + $0x1b8] sm:$0xff]
  %v6595 = vld [vmem:[#allocation2 + $0x1c0] sm:$0xff]
  %v6596 = vld [vmem:[#allocation2 + $0x1c8] sm:$0xff]
  %v6597 = vld [vmem:[#allocation2 + $0x1d0] sm:$0xff]
  %v6598 = vld [vmem:[#allocation2 + $0x1d8] sm:$0xff]
  %v6599 = vld [vmem:[#allocation2 + $0x1e0] sm:$0xff]
  %v6600 = vld [vmem:[#allocation2 + $0x1e8] sm:$0xff]
  %v6601 = vld [vmem:[#allocation2 + $0x1f0] sm:$0xff]
  %v6602 = vld [vmem:[#allocation2 + $0x1f8] sm:$0xff]
  %v6603 = vld [vmem:[#allocation2 + $0x200] sm:$0xff]
  %v6604 = vld [vmem:[#allocation2 + $0x208] sm:$0xff]
  %v6605 = vld [vmem:[#allocation2 + $0x210] sm:$0xff]
  %v6606 = vld [vmem:[#allocation2 + $0x218] sm:$0xff]
  %v6607 = vld [vmem:[#allocation2 + $0x220] sm:$0xff]
  %v6608 = vld [vmem:[#allocation2 + $0x228] sm:$0xff]
  %v6609 = vld [vmem:[#allocation2 + $0x230] sm:$0xff]
  %v6610 = vld [vmem:[#allocation2 + $0x238] sm:$0xff]
  %v6611 = vld [vmem:[#allocation2 + $0x240] sm:$0xff]
  %v6612 = vld [vmem:[#allocation2 + $0x248] sm:$0xff]
  %v6613 = vld [vmem:[#allocation2 + $0x250] sm:$0xff]
  %v6614 = vld [vmem:[#allocation2 + $0x258] sm:$0xff]
  %v6615 = vld [vmem:[#allocation2 + $0x260] sm:$0xff]
  %v6616 = vld [vmem:[#allocation2 + $0x268] sm:$0xff]
  %v6617 = vld [vmem:[#allocation2 + $0x270] sm:$0xff]
  %v6618 = vld [vmem:[#allocation2 + $0x278] sm:$0xff]
  %v6619 = vld [vmem:[#allocation2 + $0x280] sm:$0xff]
  %v6620 = vld [vmem:[%s0 + $0x26] sm:$0xff]
  %v6621 = vld [vmem:[%s0 + $0x2e] sm:$0xff]
  %v6622 = vld [vmem:[%s0 + $0x36] sm:$0xff]
  %v6623 = vld [vmem:[%s0 + $0x3e] sm:$0xff]
  %v6624 = vld [vmem:[%s0 + $0x46] sm:$0xff]
  %v6625 = vld [vmem:[%s0 + $0x4e] sm:$0xff]
  %v6626 = vld [vmem:[%s0 + $0x56] sm:$0xff]
  %v6627 = vld [vmem:[%s0 + $0x5e] sm:$0xff]
  %v6628 = vld [vmem:[%s0 + $0x66] sm:$0xff]
  %v6629 = vld [vmem:[%s0 + $0x6e] sm:$0xff]
  %v6630 = vld [vmem:[%s0 + $0x76] sm:$0xff]
  %v6631 = vld [vmem:[%s0 + $0x7e] sm:$0xff]
  %v6632 = vld [vmem:[%s0 + $0x86] sm:$0xff]
  %v6633 = vld [vmem:[%s0 + $0x8e] sm:$0xff]
  %v6634 = vld [vmem:[%s0 + $0x96] sm:$0xff]
  %v6635 = vld [vmem:[%s0 + $0x9e] sm:$0xff]
  %v6636 = vld [vmem:[%s0 + $0xa6] sm:$0xff]
  %v6637 = vld [vmem:[%s0 + $0xae] sm:$0xff]
  %v6638 = vld [vmem:[%s0 + $0xb6] sm:$0xff]
  %v6639 = vld [vmem:[%s0 + $0xbe] sm:$0xff]
  %v6640 = vld [vmem:[%s0 + $0xc6] sm:$0xff]
  %v6641 = vld [vmem:[%s0 + $0xce] sm:$0xff]
  %v6642 = vld [vmem:[%s0 + $0xd6] sm:$0xff]
  %v6643 = vld [vmem:[%s0 + $0xde] sm:$0xff]
  %v6644 = vld [vmem:[%s0 + $0xe6] sm:$0xff]
  %v6645 = vld [vmem:[%s0 + $0xee] sm:$0xff]
  %v6646 = vld [vmem:[%s0 + $0xf6] sm:$0xff]
  %v6647 = vld [vmem:[%s0 + $0xfe] sm:$0xff]
  %v6648 = vld [vmem:[%s0 + $0x106] sm:$0xff]
  %v6649 = vld [vmem:[%s0 + $0x10e] sm:$0xff]
  %v6650 = vld [vmem:[%s0 + $0x116] sm:$0xff]
  %v6651 = vld [vmem:[%s0 + $0x11e] sm:$0xff]
  %v6652 = vld [vmem:[%s0 + $0x126] sm:$0xff]
  %v6653 = vld [vmem:[%s0 + $0x12e] sm:$0xff]
  %v6654 = vld [vmem:[%s0 + $0x136] sm:$0xff]
  %v6655 = vld [vmem:[%s0 + $0x13e] sm:$0xff]
  %v6656 = vld [vmem:[%s0 + $0x146] sm:$0xff]
  %v6657 = vld [vmem:[%s0 + $0x14e] sm:$0xff]
  %v6658 = vld [vmem:[%s0 + $0x156] sm:$0xff]
  %v6659 = vld [vmem:[%s0 + $0x15e] sm:$0xff]
  %v6660 = vld [vmem:[%s0 + $0x166] sm:$0xff]
  %v6661 = vld [vmem:[%s0 + $0x16e] sm:$0xff]
  %v6662 = vld [vmem:[%s0 + $0x176] sm:$0xff]
  %v6663 = vld [vmem:[%s0 + $0x17e] sm:$0xff]
  %v6664 = vld [vmem:[%s0 + $0x186] sm:$0xff]
  %v6665 = vld [vmem:[%s0 + $0x18e] sm:$0xff]
  %v6666 = vld [vmem:[%s0 + $0x196] sm:$0xff]
  %v6667 = vld [vmem:[%s0 + $0x19e] sm:$0xff]
  %v6668 = vld [vmem:[%s0 + $0x1a6] sm:$0xff]
  %v6669 = vld [vmem:[%s0 + $0x1ae] sm:$0xff]
  %v6670 = vld [vmem:[%s0 + $0x1b6] sm:$0xff]
  %v6671 = vld [vmem:[%s0 + $0x1be] sm:$0xff]
  %v6672 = vld [vmem:[%s0 + $0x1c6] sm:$0xff]
  %v6673 = vld [vmem:[%s0 + $0x1ce] sm:$0xff]
  %v6674 = vld [vmem:[%s0 + $0x1d6] sm:$0xff]
  %v6675 = vld [vmem:[%s0 + $0x1de] sm:$0xff]
  %v6676 = vld [vmem:[%s0 + $0x1e6] sm:$0xff]
  %v6677 = vld [vmem:[%s0 + $0x1ee] sm:$0xff]
  %v6678 = vld [vmem:[%s0 + $0x1f6] sm:$0xff]
  %v6679 = vld [vmem:[%s0 + $0x1fe] sm:$0xff]
  %v6680 = vld [vmem:[%s0 + $0x206] sm:$0xff]
  %v6681 = vld [vmem:[%s0 + $0x20e] sm:$0xff]
  %v6682 = vld [vmem:[%s0 + $0x216] sm:$0xff]
  %v6683 = vld [vmem:[%s0 + $0x21e] sm:$0xff]
  %v6684 = vld [vmem:[%s0 + $0x226] sm:$0xff]
  %v6685 = vld [vmem:[%s0 + $0x22e] sm:$0xff]
  %v6686 = vld [vmem:[%s0 + $0x236] sm:$0xff]
  %v6687 = vld [vmem:[%s0 + $0x23e] sm:$0xff]
  %v6688 = vld [vmem:[%s0 + $0x246] sm:$0xff]
  %v6689 = vld [vmem:[%s0 + $0x24e] sm:$0xff]
  %v6690 = vld [vmem:[%s0 + $0x256] sm:$0xff]
  %v6691 = vld [vmem:[%s0 + $0x25e] sm:$0xff]
  %v6692 = vld [vmem:[%s0 + $0x266] sm:$0xff]
  %v6693 = vld [vmem:[%s0 + $0x26e] sm:$0xff]
  %v6694 = vld [vmem:[%s0 + $0x276] sm:$0xff]
  %v6695 = vld [vmem:[%s0 + $0x27e] sm:$0xff]
  %v6696 = vld [vmem:[%s0 + $0x286] sm:$0xff]
  %v6697 = vld [vmem:[%s0 + $0x28e] sm:$0xff]
  %v6698 = vld [vmem:[%s0 + $0x296] sm:$0xff]
  %v6699 = vld [vmem:[%s0 + $0x29e] sm:$0xff]
  %v6700 = vld [vmem:[%s0 + $0x2a6] sm:$0xff]
  %s6701 = scalar_lea.vmem %s1, 32
  %v6702 = vld [vmem:[%s6701] sm:$0xf]
  %v6704 = vsel %vm125, %v6620, 0
  %v6707 = vsel %vm125, %v6621, 0
  %v6710 = vsel %vm125, %v6622, 0
  %v6713 = vsel %vm125, %v6623, 0
  %v6716 = vsel %vm125, %v6624, 0
  %v6719 = vsel %vm125, %v6625, 0
  %v6722 = vsel %vm125, %v6626, 0
  %v6725 = vsel %vm125, %v6627, 0
  %v6728 = vsel %vm125, %v6628, 0
  %v6731 = vsel %vm125, %v6629, 0
  %v6734 = vsel %vm125, %v6630, 0
  %v6737 = vsel %vm125, %v6631, 0
  %v6740 = vsel %vm125, %v6632, 0
  %v6743 = vsel %vm125, %v6633, 0
  %v6746 = vsel %vm125, %v6634, 0
  %v6749 = vsel %vm125, %v6635, 0
  %v6752 = vsel %vm125, %v6636, 0
  %v6755 = vsel %vm125, %v6637, 0
  %v6758 = vsel %vm125, %v6638, 0
  %v6761 = vsel %vm125, %v6639, 0
  %v6764 = vsel %vm125, %v6640, 0
  %v6767 = vsel %vm125, %v6641, 0
  %v6770 = vsel %vm125, %v6642, 0
  %v6773 = vsel %vm125, %v6643, 0
  %v6776 = vsel %vm125, %v6644, 0
  %v6779 = vsel %vm125, %v6645, 0
  %v6782 = vsel %vm125, %v6646, 0
  %v6785 = vsel %vm125, %v6647, 0
  %v6788 = vsel %vm125, %v6648, 0
  %v6791 = vsel %vm125, %v6649, 0
  %v6794 = vsel %vm125, %v6650, 0
  %v6797 = vsel %vm125, %v6651, 0
  %v6800 = vsel %vm125, %v6652, 0
  %v6803 = vsel %vm125, %v6653, 0
  %v6806 = vsel %vm125, %v6654, 0
  %v6809 = vsel %vm125, %v6655, 0
  %v6812 = vsel %vm125, %v6656, 0
  %v6815 = vsel %vm125, %v6657, 0
  %v6818 = vsel %vm125, %v6658, 0
  %v6821 = vsel %vm125, %v6659, 0
  %v6824 = vsel %vm125, %v6660, 0
  %v6827 = vsel %vm125, %v6661, 0
  %v6830 = vsel %vm125, %v6662, 0
  %v6833 = vsel %vm125, %v6663, 0
  %v6836 = vsel %vm125, %v6664, 0
  %v6839 = vsel %vm125, %v6665, 0
  %v6842 = vsel %vm125, %v6666, 0
  %v6845 = vsel %vm125, %v6667, 0
  %v6848 = vsel %vm125, %v6668, 0
  %v6851 = vsel %vm125, %v6669, 0
  %v6854 = vsel %vm125, %v6670, 0
  %v6857 = vsel %vm125, %v6671, 0
  %v6860 = vsel %vm125, %v6672, 0
  %v6863 = vsel %vm125, %v6673, 0
  %v6866 = vsel %vm125, %v6674, 0
  %v6869 = vsel %vm125, %v6675, 0
  %v6872 = vsel %vm125, %v6676, 0
  %v6875 = vsel %vm125, %v6677, 0
  %v6878 = vsel %vm125, %v6678, 0
  %v6881 = vsel %vm125, %v6679, 0
  %v6884 = vsel %vm125, %v6680, 0
  %v6887 = vsel %vm125, %v6681, 0
  %v6890 = vsel %vm125, %v6682, 0
  %v6893 = vsel %vm125, %v6683, 0
  %v6896 = vsel %vm125, %v6684, 0
  %v6899 = vsel %vm125, %v6685, 0
  %v6902 = vsel %vm125, %v6686, 0
  %v6905 = vsel %vm125, %v6687, 0
  %v6908 = vsel %vm125, %v6688, 0
  %v6911 = vsel %vm125, %v6689, 0
  %v6914 = vsel %vm125, %v6690, 0
  %v6917 = vsel %vm125, %v6691, 0
  %v6920 = vsel %vm125, %v6692, 0
  %v6923 = vsel %vm125, %v6693, 0
  %v6926 = vsel %vm125, %v6694, 0
  %v6929 = vsel %vm125, %v6695, 0
  %v6932 = vsel %vm125, %v6696, 0
  %v6935 = vsel %vm125, %v6697, 0
  %v6938 = vsel %vm125, %v6698, 0
  %v6941 = vsel %vm125, %v6699, 0
  %v6944 = vsel %vm125, %v6700, 0
  %v6947 = vsel %vm369, %v6702, 0
  %6949 = vmatpush.msra.mxu0 0.0
  %6950 = vmatpush.msra.mxu0 0.0
  %6951 = vmatpush.msra.mxu0 0.0
  %6952 = vmatpush.msra.mxu0 0.0
  %6953 = vmatpush.msra.mxu0 0.0
  %6954 = vmatpush.msra.mxu0 0.0
  %6955 = vmatpush.msra.mxu0 0.0
  %6956 = vmatpush.msra.mxu0 0.0
  %6957 = vmatpush.msra.mxu0 0.0
  %6958 = vmatpush.msra.mxu0 0.0
  %6959 = vmatpush.msra.mxu0 0.0
  %6960 = vmatpush.msra.mxu0 0.0
  %6961 = vmatpush.msra.mxu0 0.0
  %6962 = vmatpush.msra.mxu0 0.0
  %6963 = vmatpush.msra.mxu0 0.0
  %6964 = vmatpush.msra.mxu0 %v6947
  %6965 = vmatmul.f32.gmra.mxu0 %v6704
  %v6966 = vpop.f32.mrf.mxu0
  %v6967 = vadd.f32 0.0, %v6966
  %6968 = vmatmul.f32.gmra.mxu0 %v6707
  %v6969 = vpop.f32.mrf.mxu0
  %v6970 = vadd.f32 0.0, %v6969
  %6971 = vmatmul.f32.gmra.mxu0 %v6710
  %v6972 = vpop.f32.mrf.mxu0
  %v6973 = vadd.f32 0.0, %v6972
  %6974 = vmatmul.f32.gmra.mxu0 %v6713
  %v6975 = vpop.f32.mrf.mxu0
  %v6976 = vadd.f32 0.0, %v6975
  %6977 = vmatmul.f32.gmra.mxu0 %v6716
  %v6978 = vpop.f32.mrf.mxu0
  %v6979 = vadd.f32 0.0, %v6978
  %6980 = vmatmul.f32.gmra.mxu0 %v6719
  %v6981 = vpop.f32.mrf.mxu0
  %v6982 = vadd.f32 0.0, %v6981
  %6983 = vmatmul.f32.gmra.mxu0 %v6722
  %v6984 = vpop.f32.mrf.mxu0
  %v6985 = vadd.f32 0.0, %v6984
  %6986 = vmatmul.f32.gmra.mxu0 %v6725
  %v6987 = vpop.f32.mrf.mxu0
  %v6988 = vadd.f32 0.0, %v6987
  %6989 = vmatmul.f32.gmra.mxu0 %v6728
  %v6990 = vpop.f32.mrf.mxu0
  %v6991 = vadd.f32 0.0, %v6990
  %6992 = vmatmul.f32.gmra.mxu0 %v6731
  %v6993 = vpop.f32.mrf.mxu0
  %v6994 = vadd.f32 0.0, %v6993
  %6995 = vmatmul.f32.gmra.mxu0 %v6734
  %v6996 = vpop.f32.mrf.mxu0
  %v6997 = vadd.f32 0.0, %v6996
  %6998 = vmatmul.f32.gmra.mxu0 %v6737
  %v6999 = vpop.f32.mrf.mxu0
  %v7000 = vadd.f32 0.0, %v6999
  %7001 = vmatmul.f32.gmra.mxu0 %v6740
  %v7002 = vpop.f32.mrf.mxu0
  %v7003 = vadd.f32 0.0, %v7002
  %7004 = vmatmul.f32.gmra.mxu0 %v6743
  %v7005 = vpop.f32.mrf.mxu0
  %v7006 = vadd.f32 0.0, %v7005
  %7007 = vmatmul.f32.gmra.mxu0 %v6746
  %v7008 = vpop.f32.mrf.mxu0
  %v7009 = vadd.f32 0.0, %v7008
  %7010 = vmatmul.f32.gmra.mxu0 %v6749
  %v7011 = vpop.f32.mrf.mxu0
  %v7012 = vadd.f32 0.0, %v7011
  %7013 = vmatmul.f32.gmra.mxu0 %v6752
  %v7014 = vpop.f32.mrf.mxu0
  %v7015 = vadd.f32 0.0, %v7014
  %7016 = vmatmul.f32.gmra.mxu0 %v6755
  %v7017 = vpop.f32.mrf.mxu0
  %v7018 = vadd.f32 0.0, %v7017
  %7019 = vmatmul.f32.gmra.mxu0 %v6758
  %v7020 = vpop.f32.mrf.mxu0
  %v7021 = vadd.f32 0.0, %v7020
  %7022 = vmatmul.f32.gmra.mxu0 %v6761
  %v7023 = vpop.f32.mrf.mxu0
  %v7024 = vadd.f32 0.0, %v7023
  %7025 = vmatmul.f32.gmra.mxu0 %v6764
  %v7026 = vpop.f32.mrf.mxu0
  %v7027 = vadd.f32 0.0, %v7026
  %7028 = vmatmul.f32.gmra.mxu0 %v6767
  %v7029 = vpop.f32.mrf.mxu0
  %v7030 = vadd.f32 0.0, %v7029
  %7031 = vmatmul.f32.gmra.mxu0 %v6770
  %v7032 = vpop.f32.mrf.mxu0
  %v7033 = vadd.f32 0.0, %v7032
  %7034 = vmatmul.f32.gmra.mxu0 %v6773
  %v7035 = vpop.f32.mrf.mxu0
  %v7036 = vadd.f32 0.0, %v7035
  %7037 = vmatmul.f32.gmra.mxu0 %v6776
  %v7038 = vpop.f32.mrf.mxu0
  %v7039 = vadd.f32 0.0, %v7038
  %7040 = vmatmul.f32.gmra.mxu0 %v6779
  %v7041 = vpop.f32.mrf.mxu0
  %v7042 = vadd.f32 0.0, %v7041
  %7043 = vmatmul.f32.gmra.mxu0 %v6782
  %v7044 = vpop.f32.mrf.mxu0
  %v7045 = vadd.f32 0.0, %v7044
  %7046 = vmatmul.f32.gmra.mxu0 %v6785
  %v7047 = vpop.f32.mrf.mxu0
  %v7048 = vadd.f32 0.0, %v7047
  %7049 = vmatmul.f32.gmra.mxu0 %v6788
  %v7050 = vpop.f32.mrf.mxu0
  %v7051 = vadd.f32 0.0, %v7050
  %7052 = vmatmul.f32.gmra.mxu0 %v6791
  %v7053 = vpop.f32.mrf.mxu0
  %v7054 = vadd.f32 0.0, %v7053
  %7055 = vmatmul.f32.gmra.mxu0 %v6794
  %v7056 = vpop.f32.mrf.mxu0
  %v7057 = vadd.f32 0.0, %v7056
  %7058 = vmatmul.f32.gmra.mxu0 %v6797
  %v7059 = vpop.f32.mrf.mxu0
  %v7060 = vadd.f32 0.0, %v7059
  %7061 = vmatmul.f32.gmra.mxu0 %v6800
  %v7062 = vpop.f32.mrf.mxu0
  %v7063 = vadd.f32 0.0, %v7062
  %7064 = vmatmul.f32.gmra.mxu0 %v6803
  %v7065 = vpop.f32.mrf.mxu0
  %v7066 = vadd.f32 0.0, %v7065
  %7067 = vmatmul.f32.gmra.mxu0 %v6806
  %v7068 = vpop.f32.mrf.mxu0
  %v7069 = vadd.f32 0.0, %v7068
  %7070 = vmatmul.f32.gmra.mxu0 %v6809
  %v7071 = vpop.f32.mrf.mxu0
  %v7072 = vadd.f32 0.0, %v7071
  %7073 = vmatmul.f32.gmra.mxu0 %v6812
  %v7074 = vpop.f32.mrf.mxu0
  %v7075 = vadd.f32 0.0, %v7074
  %7076 = vmatmul.f32.gmra.mxu0 %v6815
  %v7077 = vpop.f32.mrf.mxu0
  %v7078 = vadd.f32 0.0, %v7077
  %7079 = vmatmul.f32.gmra.mxu0 %v6818
  %v7080 = vpop.f32.mrf.mxu0
  %v7081 = vadd.f32 0.0, %v7080
  %7082 = vmatmul.f32.gmra.mxu0 %v6821
  %v7083 = vpop.f32.mrf.mxu0
  %v7084 = vadd.f32 0.0, %v7083
  %7085 = vmatmul.f32.gmra.mxu0 %v6824
  %v7086 = vpop.f32.mrf.mxu0
  %v7087 = vadd.f32 0.0, %v7086
  %7088 = vmatmul.f32.gmra.mxu0 %v6827
  %v7089 = vpop.f32.mrf.mxu0
  %v7090 = vadd.f32 0.0, %v7089
  %7091 = vmatmul.f32.gmra.mxu0 %v6830
  %v7092 = vpop.f32.mrf.mxu0
  %v7093 = vadd.f32 0.0, %v7092
  %7094 = vmatmul.f32.gmra.mxu0 %v6833
  %v7095 = vpop.f32.mrf.mxu0
  %v7096 = vadd.f32 0.0, %v7095
  %7097 = vmatmul.f32.gmra.mxu0 %v6836
  %v7098 = vpop.f32.mrf.mxu0
  %v7099 = vadd.f32 0.0, %v7098
  %7100 = vmatmul.f32.gmra.mxu0 %v6839
  %v7101 = vpop.f32.mrf.mxu0
  %v7102 = vadd.f32 0.0, %v7101
  %7103 = vmatmul.f32.gmra.mxu0 %v6842
  %v7104 = vpop.f32.mrf.mxu0
  %v7105 = vadd.f32 0.0, %v7104
  %7106 = vmatmul.f32.gmra.mxu0 %v6845
  %v7107 = vpop.f32.mrf.mxu0
  %v7108 = vadd.f32 0.0, %v7107
  %7109 = vmatmul.f32.gmra.mxu0 %v6848
  %v7110 = vpop.f32.mrf.mxu0
  %v7111 = vadd.f32 0.0, %v7110
  %7112 = vmatmul.f32.gmra.mxu0 %v6851
  %v7113 = vpop.f32.mrf.mxu0
  %v7114 = vadd.f32 0.0, %v7113
  %7115 = vmatmul.f32.gmra.mxu0 %v6854
  %v7116 = vpop.f32.mrf.mxu0
  %v7117 = vadd.f32 0.0, %v7116
  %7118 = vmatmul.f32.gmra.mxu0 %v6857
  %v7119 = vpop.f32.mrf.mxu0
  %v7120 = vadd.f32 0.0, %v7119
  %7121 = vmatmul.f32.gmra.mxu0 %v6860
  %v7122 = vpop.f32.mrf.mxu0
  %v7123 = vadd.f32 0.0, %v7122
  %7124 = vmatmul.f32.gmra.mxu0 %v6863
  %v7125 = vpop.f32.mrf.mxu0
  %v7126 = vadd.f32 0.0, %v7125
  %7127 = vmatmul.f32.gmra.mxu0 %v6866
  %v7128 = vpop.f32.mrf.mxu0
  %v7129 = vadd.f32 0.0, %v7128
  %7130 = vmatmul.f32.gmra.mxu0 %v6869
  %v7131 = vpop.f32.mrf.mxu0
  %v7132 = vadd.f32 0.0, %v7131
  %7133 = vmatmul.f32.gmra.mxu0 %v6872
  %v7134 = vpop.f32.mrf.mxu0
  %v7135 = vadd.f32 0.0, %v7134
  %7136 = vmatmul.f32.gmra.mxu0 %v6875
  %v7137 = vpop.f32.mrf.mxu0
  %v7138 = vadd.f32 0.0, %v7137
  %7139 = vmatmul.f32.gmra.mxu0 %v6878
  %v7140 = vpop.f32.mrf.mxu0
  %v7141 = vadd.f32 0.0, %v7140
  %7142 = vmatmul.f32.gmra.mxu0 %v6881
  %v7143 = vpop.f32.mrf.mxu0
  %v7144 = vadd.f32 0.0, %v7143
  %7145 = vmatmul.f32.gmra.mxu0 %v6884
  %v7146 = vpop.f32.mrf.mxu0
  %v7147 = vadd.f32 0.0, %v7146
  %7148 = vmatmul.f32.gmra.mxu0 %v6887
  %v7149 = vpop.f32.mrf.mxu0
  %v7150 = vadd.f32 0.0, %v7149
  %7151 = vmatmul.f32.gmra.mxu0 %v6890
  %v7152 = vpop.f32.mrf.mxu0
  %v7153 = vadd.f32 0.0, %v7152
  %7154 = vmatmul.f32.gmra.mxu0 %v6893
  %v7155 = vpop.f32.mrf.mxu0
  %v7156 = vadd.f32 0.0, %v7155
  %7157 = vmatmul.f32.gmra.mxu0 %v6896
  %v7158 = vpop.f32.mrf.mxu0
  %v7159 = vadd.f32 0.0, %v7158
  %7160 = vmatmul.f32.gmra.mxu0 %v6899
  %v7161 = vpop.f32.mrf.mxu0
  %v7162 = vadd.f32 0.0, %v7161
  %7163 = vmatmul.f32.gmra.mxu0 %v6902
  %v7164 = vpop.f32.mrf.mxu0
  %v7165 = vadd.f32 0.0, %v7164
  %7166 = vmatmul.f32.gmra.mxu0 %v6905
  %v7167 = vpop.f32.mrf.mxu0
  %v7168 = vadd.f32 0.0, %v7167
  %7169 = vmatmul.f32.gmra.mxu0 %v6908
  %v7170 = vpop.f32.mrf.mxu0
  %v7171 = vadd.f32 0.0, %v7170
  %7172 = vmatmul.f32.gmra.mxu0 %v6911
  %v7173 = vpop.f32.mrf.mxu0
  %v7174 = vadd.f32 0.0, %v7173
  %7175 = vmatmul.f32.gmra.mxu0 %v6914
  %v7176 = vpop.f32.mrf.mxu0
  %v7177 = vadd.f32 0.0, %v7176
  %7178 = vmatmul.f32.gmra.mxu0 %v6917
  %v7179 = vpop.f32.mrf.mxu0
  %v7180 = vadd.f32 0.0, %v7179
  %7181 = vmatmul.f32.gmra.mxu0 %v6920
  %v7182 = vpop.f32.mrf.mxu0
  %v7183 = vadd.f32 0.0, %v7182
  %7184 = vmatmul.f32.gmra.mxu0 %v6923
  %v7185 = vpop.f32.mrf.mxu0
  %v7186 = vadd.f32 0.0, %v7185
  %7187 = vmatmul.f32.gmra.mxu0 %v6926
  %v7188 = vpop.f32.mrf.mxu0
  %v7189 = vadd.f32 0.0, %v7188
  %7190 = vmatmul.f32.gmra.mxu0 %v6929
  %v7191 = vpop.f32.mrf.mxu0
  %v7192 = vadd.f32 0.0, %v7191
  %7193 = vmatmul.f32.gmra.mxu0 %v6932
  %v7194 = vpop.f32.mrf.mxu0
  %v7195 = vadd.f32 0.0, %v7194
  %7196 = vmatmul.f32.gmra.mxu0 %v6935
  %v7197 = vpop.f32.mrf.mxu0
  %v7198 = vadd.f32 0.0, %v7197
  %7199 = vmatmul.f32.gmra.mxu0 %v6938
  %v7200 = vpop.f32.mrf.mxu0
  %v7201 = vadd.f32 0.0, %v7200
  %7202 = vmatmul.f32.gmra.mxu0 %v6941
  %v7203 = vpop.f32.mrf.mxu0
  %v7204 = vadd.f32 0.0, %v7203
  %7205 = vmatmul.f32.gmra.mxu0 %v6944
  %v7206 = vpop.f32.mrf.mxu0
  %v7207 = vadd.f32 0.0, %v7206
  %7208 = vdwg.mxu0
  %v7209 = vadd.f32 %v6539, %v6967
  %v7210 = vadd.f32 %v6540, %v6970
  %v7211 = vadd.f32 %v6541, %v6973
  %v7212 = vadd.f32 %v6542, %v6976
  %v7213 = vadd.f32 %v6543, %v6979
  %v7214 = vadd.f32 %v6544, %v6982
  %v7215 = vadd.f32 %v6545, %v6985
  %v7216 = vadd.f32 %v6546, %v6988
  %v7217 = vadd.f32 %v6547, %v6991
  %v7218 = vadd.f32 %v6548, %v6994
  %v7219 = vadd.f32 %v6549, %v6997
  %v7220 = vadd.f32 %v6550, %v7000
  %v7221 = vadd.f32 %v6551, %v7003
  %v7222 = vadd.f32 %v6552, %v7006
  %v7223 = vadd.f32 %v6553, %v7009
  %v7224 = vadd.f32 %v6554, %v7012
  %v7225 = vadd.f32 %v6555, %v7015
  %v7226 = vadd.f32 %v6556, %v7018
  %v7227 = vadd.f32 %v6557, %v7021
  %v7228 = vadd.f32 %v6558, %v7024
  %v7229 = vadd.f32 %v6559, %v7027
  %v7230 = vadd.f32 %v6560, %v7030
  %v7231 = vadd.f32 %v6561, %v7033
  %v7232 = vadd.f32 %v6562, %v7036
  %v7233 = vadd.f32 %v6563, %v7039
  %v7234 = vadd.f32 %v6564, %v7042
  %v7235 = vadd.f32 %v6565, %v7045
  %v7236 = vadd.f32 %v6566, %v7048
  %v7237 = vadd.f32 %v6567, %v7051
  %v7238 = vadd.f32 %v6568, %v7054
  %v7239 = vadd.f32 %v6569, %v7057
  %v7240 = vadd.f32 %v6570, %v7060
  %v7241 = vadd.f32 %v6571, %v7063
  %v7242 = vadd.f32 %v6572, %v7066
  %v7243 = vadd.f32 %v6573, %v7069
  %v7244 = vadd.f32 %v6574, %v7072
  %v7245 = vadd.f32 %v6575, %v7075
  %v7246 = vadd.f32 %v6576, %v7078
  %v7247 = vadd.f32 %v6577, %v7081
  %v7248 = vadd.f32 %v6578, %v7084
  %v7249 = vadd.f32 %v6579, %v7087
  %v7250 = vadd.f32 %v6580, %v7090
  %v7251 = vadd.f32 %v6581, %v7093
  %v7252 = vadd.f32 %v6582, %v7096
  %v7253 = vadd.f32 %v6583, %v7099
  %v7254 = vadd.f32 %v6584, %v7102
  %v7255 = vadd.f32 %v6585, %v7105
  %v7256 = vadd.f32 %v6586, %v7108
  %v7257 = vadd.f32 %v6587, %v7111
  %v7258 = vadd.f32 %v6588, %v7114
  %v7259 = vadd.f32 %v6589, %v7117
  %v7260 = vadd.f32 %v6590, %v7120
  %v7261 = vadd.f32 %v6591, %v7123
  %v7262 = vadd.f32 %v6592, %v7126
  %v7263 = vadd.f32 %v6593, %v7129
  %v7264 = vadd.f32 %v6594, %v7132
  %v7265 = vadd.f32 %v6595, %v7135
  %v7266 = vadd.f32 %v6596, %v7138
  %v7267 = vadd.f32 %v6597, %v7141
  %v7268 = vadd.f32 %v6598, %v7144
  %v7269 = vadd.f32 %v6599, %v7147
  %v7270 = vadd.f32 %v6600, %v7150
  %v7271 = vadd.f32 %v6601, %v7153
  %v7272 = vadd.f32 %v6602, %v7156
  %v7273 = vadd.f32 %v6603, %v7159
  %v7274 = vadd.f32 %v6604, %v7162
  %v7275 = vadd.f32 %v6605, %v7165
  %v7276 = vadd.f32 %v6606, %v7168
  %v7277 = vadd.f32 %v6607, %v7171
  %v7278 = vadd.f32 %v6608, %v7174
  %v7279 = vadd.f32 %v6609, %v7177
  %v7280 = vadd.f32 %v6610, %v7180
  %v7281 = vadd.f32 %v6611, %v7183
  %v7282 = vadd.f32 %v6612, %v7186
  %v7283 = vadd.f32 %v6613, %v7189
  %v7284 = vadd.f32 %v6614, %v7192
  %v7285 = vadd.f32 %v6615, %v7195
  %v7286 = vadd.f32 %v6616, %v7198
  %v7287 = vadd.f32 %v6617, %v7201
  %v7288 = vadd.f32 %v6618, %v7204
  %v7289 = vadd.f32 %v6619, %v7207
  %7290 = vst.msk [vmem:[#allocation2] sm:$0xff] %vm633, %v7209
  %7291 = vst.msk [vmem:[#allocation2 + $0x8] sm:$0xff] %vm633, %v7210
  %7292 = vst.msk [vmem:[#allocation2 + $0x10] sm:$0xff] %vm633, %v7211
  %7293 = vst.msk [vmem:[#allocation2 + $0x18] sm:$0xff] %vm633, %v7212
  %7294 = vst.msk [vmem:[#allocation2 + $0x20] sm:$0xff] %vm633, %v7213
  %7295 = vst.msk [vmem:[#allocation2 + $0x28] sm:$0xff] %vm633, %v7214
  %7296 = vst.msk [vmem:[#allocation2 + $0x30] sm:$0xff] %vm633, %v7215
  %7297 = vst.msk [vmem:[#allocation2 + $0x38] sm:$0xff] %vm633, %v7216
  %7298 = vst.msk [vmem:[#allocation2 + $0x40] sm:$0xff] %vm633, %v7217
  %7299 = vst.msk [vmem:[#allocation2 + $0x48] sm:$0xff] %vm633, %v7218
  %7300 = vst.msk [vmem:[#allocation2 + $0x50] sm:$0xff] %vm633, %v7219
  %7301 = vst.msk [vmem:[#allocation2 + $0x58] sm:$0xff] %vm633, %v7220
  %7302 = vst.msk [vmem:[#allocation2 + $0x60] sm:$0xff] %vm633, %v7221
  %7303 = vst.msk [vmem:[#allocation2 + $0x68] sm:$0xff] %vm633, %v7222
  %7304 = vst.msk [vmem:[#allocation2 + $0x70] sm:$0xff] %vm633, %v7223
  %7305 = vst.msk [vmem:[#allocation2 + $0x78] sm:$0xff] %vm633, %v7224
  %7306 = vst.msk [vmem:[#allocation2 + $0x80] sm:$0xff] %vm633, %v7225
  %7307 = vst.msk [vmem:[#allocation2 + $0x88] sm:$0xff] %vm633, %v7226
  %7308 = vst.msk [vmem:[#allocation2 + $0x90] sm:$0xff] %vm633, %v7227
  %7309 = vst.msk [vmem:[#allocation2 + $0x98] sm:$0xff] %vm633, %v7228
  %7310 = vst.msk [vmem:[#allocation2 + $0xa0] sm:$0xff] %vm633, %v7229
  %7311 = vst.msk [vmem:[#allocation2 + $0xa8] sm:$0xff] %vm633, %v7230
  %7312 = vst.msk [vmem:[#allocation2 + $0xb0] sm:$0xff] %vm633, %v7231
  %7313 = vst.msk [vmem:[#allocation2 + $0xb8] sm:$0xff] %vm633, %v7232
  %7314 = vst.msk [vmem:[#allocation2 + $0xc0] sm:$0xff] %vm633, %v7233
  %7315 = vst.msk [vmem:[#allocation2 + $0xc8] sm:$0xff] %vm633, %v7234
  %7316 = vst.msk [vmem:[#allocation2 + $0xd0] sm:$0xff] %vm633, %v7235
  %7317 = vst.msk [vmem:[#allocation2 + $0xd8] sm:$0xff] %vm633, %v7236
  %7318 = vst.msk [vmem:[#allocation2 + $0xe0] sm:$0xff] %vm633, %v7237
  %7319 = vst.msk [vmem:[#allocation2 + $0xe8] sm:$0xff] %vm633, %v7238
  %7320 = vst.msk [vmem:[#allocation2 + $0xf0] sm:$0xff] %vm633, %v7239
  %7321 = vst.msk [vmem:[#allocation2 + $0xf8] sm:$0xff] %vm633, %v7240
  %7322 = vst.msk [vmem:[#allocation2 + $0x100] sm:$0xff] %vm633, %v7241
  %7323 = vst.msk [vmem:[#allocation2 + $0x108] sm:$0xff] %vm633, %v7242
  %7324 = vst.msk [vmem:[#allocation2 + $0x110] sm:$0xff] %vm633, %v7243
  %7325 = vst.msk [vmem:[#allocation2 + $0x118] sm:$0xff] %vm633, %v7244
  %7326 = vst.msk [vmem:[#allocation2 + $0x120] sm:$0xff] %vm633, %v7245
  %7327 = vst.msk [vmem:[#allocation2 + $0x128] sm:$0xff] %vm633, %v7246
  %7328 = vst.msk [vmem:[#allocation2 + $0x130] sm:$0xff] %vm633, %v7247
  %7329 = vst.msk [vmem:[#allocation2 + $0x138] sm:$0xff] %vm633, %v7248
  %7330 = vst.msk [vmem:[#allocation2 + $0x140] sm:$0xff] %vm633, %v7249
  %7331 = vst.msk [vmem:[#allocation2 + $0x148] sm:$0xff] %vm633, %v7250
  %7332 = vst.msk [vmem:[#allocation2 + $0x150] sm:$0xff] %vm633, %v7251
  %7333 = vst.msk [vmem:[#allocation2 + $0x158] sm:$0xff] %vm633, %v7252
  %7334 = vst.msk [vmem:[#allocation2 + $0x160] sm:$0xff] %vm633, %v7253
  %7335 = vst.msk [vmem:[#allocation2 + $0x168] sm:$0xff] %vm633, %v7254
  %7336 = vst.msk [vmem:[#allocation2 + $0x170] sm:$0xff] %vm633, %v7255
  %7337 = vst.msk [vmem:[#allocation2 + $0x178] sm:$0xff] %vm633, %v7256
  %7338 = vst.msk [vmem:[#allocation2 + $0x180] sm:$0xff] %vm633, %v7257
  %7339 = vst.msk [vmem:[#allocation2 + $0x188] sm:$0xff] %vm633, %v7258
  %7340 = vst.msk [vmem:[#allocation2 + $0x190] sm:$0xff] %vm633, %v7259
  %7341 = vst.msk [vmem:[#allocation2 + $0x198] sm:$0xff] %vm633, %v7260
  %7342 = vst.msk [vmem:[#allocation2 + $0x1a0] sm:$0xff] %vm633, %v7261
  %7343 = vst.msk [vmem:[#allocation2 + $0x1a8] sm:$0xff] %vm633, %v7262
  %7344 = vst.msk [vmem:[#allocation2 + $0x1b0] sm:$0xff] %vm633, %v7263
  %7345 = vst.msk [vmem:[#allocation2 + $0x1b8] sm:$0xff] %vm633, %v7264
  %7346 = vst.msk [vmem:[#allocation2 + $0x1c0] sm:$0xff] %vm633, %v7265
  %7347 = vst.msk [vmem:[#allocation2 + $0x1c8] sm:$0xff] %vm633, %v7266
  %7348 = vst.msk [vmem:[#allocation2 + $0x1d0] sm:$0xff] %vm633, %v7267
  %7349 = vst.msk [vmem:[#allocation2 + $0x1d8] sm:$0xff] %vm633, %v7268
  %7350 = vst.msk [vmem:[#allocation2 + $0x1e0] sm:$0xff] %vm633, %v7269
  %7351 = vst.msk [vmem:[#allocation2 + $0x1e8] sm:$0xff] %vm633, %v7270
  %7352 = vst.msk [vmem:[#allocation2 + $0x1f0] sm:$0xff] %vm633, %v7271
  %7353 = vst.msk [vmem:[#allocation2 + $0x1f8] sm:$0xff] %vm633, %v7272
  %7354 = vst.msk [vmem:[#allocation2 + $0x200] sm:$0xff] %vm633, %v7273
  %7355 = vst.msk [vmem:[#allocation2 + $0x208] sm:$0xff] %vm633, %v7274
  %7356 = vst.msk [vmem:[#allocation2 + $0x210] sm:$0xff] %vm633, %v7275
  %7357 = vst.msk [vmem:[#allocation2 + $0x218] sm:$0xff] %vm633, %v7276
  %7358 = vst.msk [vmem:[#allocation2 + $0x220] sm:$0xff] %vm633, %v7277
  %7359 = vst.msk [vmem:[#allocation2 + $0x228] sm:$0xff] %vm633, %v7278
  %7360 = vst.msk [vmem:[#allocation2 + $0x230] sm:$0xff] %vm633, %v7279
  %7361 = vst.msk [vmem:[#allocation2 + $0x238] sm:$0xff] %vm633, %v7280
  %7362 = vst.msk [vmem:[#allocation2 + $0x240] sm:$0xff] %vm633, %v7281
  %7363 = vst.msk [vmem:[#allocation2 + $0x248] sm:$0xff] %vm633, %v7282
  %7364 = vst.msk [vmem:[#allocation2 + $0x250] sm:$0xff] %vm633, %v7283
  %7365 = vst.msk [vmem:[#allocation2 + $0x258] sm:$0xff] %vm633, %v7284
  %7366 = vst.msk [vmem:[#allocation2 + $0x260] sm:$0xff] %vm633, %v7285
  %7367 = vst.msk [vmem:[#allocation2 + $0x268] sm:$0xff] %vm633, %v7286
  %7368 = vst.msk [vmem:[#allocation2 + $0x270] sm:$0xff] %vm633, %v7287
  %7369 = vst.msk [vmem:[#allocation2 + $0x278] sm:$0xff] %vm633, %v7288
  %7370 = vst.msk [vmem:[#allocation2 + $0x280] sm:$0xff] %vm633, %v7289
  %v7371 = vld [vmem:[#allocation2] sm:$0xff]
  %v7372 = vld [vmem:[#allocation2 + $0x8] sm:$0xff]
  %v7373 = vld [vmem:[#allocation2 + $0x10] sm:$0xff]
  %v7374 = vld [vmem:[#allocation2 + $0x18] sm:$0xff]
  %v7375 = vld [vmem:[#allocation2 + $0x20] sm:$0xff]
  %v7376 = vld [vmem:[#allocation2 + $0x28] sm:$0xff]
  %v7377 = vld [vmem:[#allocation2 + $0x30] sm:$0xff]
  %v7378 = vld [vmem:[#allocation2 + $0x38] sm:$0xff]
  %v7379 = vld [vmem:[#allocation2 + $0x40] sm:$0xff]
  %v7380 = vld [vmem:[#allocation2 + $0x48] sm:$0xff]
  %v7381 = vld [vmem:[#allocation2 + $0x50] sm:$0xff]
  %v7382 = vld [vmem:[#allocation2 + $0x58] sm:$0xff]
  %v7383 = vld [vmem:[#allocation2 + $0x60] sm:$0xff]
  %v7384 = vld [vmem:[#allocation2 + $0x68] sm:$0xff]
  %v7385 = vld [vmem:[#allocation2 + $0x70] sm:$0xff]
  %v7386 = vld [vmem:[#allocation2 + $0x78] sm:$0xff]
  %v7387 = vld [vmem:[#allocation2 + $0x80] sm:$0xff]
  %v7388 = vld [vmem:[#allocation2 + $0x88] sm:$0xff]
  %v7389 = vld [vmem:[#allocation2 + $0x90] sm:$0xff]
  %v7390 = vld [vmem:[#allocation2 + $0x98] sm:$0xff]
  %v7391 = vld [vmem:[#allocation2 + $0xa0] sm:$0xff]
  %v7392 = vld [vmem:[#allocation2 + $0xa8] sm:$0xff]
  %v7393 = vld [vmem:[#allocation2 + $0xb0] sm:$0xff]
  %v7394 = vld [vmem:[#allocation2 + $0xb8] sm:$0xff]
  %v7395 = vld [vmem:[#allocation2 + $0xc0] sm:$0xff]
  %v7396 = vld [vmem:[#allocation2 + $0xc8] sm:$0xff]
  %v7397 = vld [vmem:[#allocation2 + $0xd0] sm:$0xff]
  %v7398 = vld [vmem:[#allocation2 + $0xd8] sm:$0xff]
  %v7399 = vld [vmem:[#allocation2 + $0xe0] sm:$0xff]
  %v7400 = vld [vmem:[#allocation2 + $0xe8] sm:$0xff]
  %v7401 = vld [vmem:[#allocation2 + $0xf0] sm:$0xff]
  %v7402 = vld [vmem:[#allocation2 + $0xf8] sm:$0xff]
  %v7403 = vld [vmem:[#allocation2 + $0x100] sm:$0xff]
  %v7404 = vld [vmem:[#allocation2 + $0x108] sm:$0xff]
  %v7405 = vld [vmem:[#allocation2 + $0x110] sm:$0xff]
  %v7406 = vld [vmem:[#allocation2 + $0x118] sm:$0xff]
  %v7407 = vld [vmem:[#allocation2 + $0x120] sm:$0xff]
  %v7408 = vld [vmem:[#allocation2 + $0x128] sm:$0xff]
  %v7409 = vld [vmem:[#allocation2 + $0x130] sm:$0xff]
  %v7410 = vld [vmem:[#allocation2 + $0x138] sm:$0xff]
  %v7411 = vld [vmem:[#allocation2 + $0x140] sm:$0xff]
  %v7412 = vld [vmem:[#allocation2 + $0x148] sm:$0xff]
  %v7413 = vld [vmem:[#allocation2 + $0x150] sm:$0xff]
  %v7414 = vld [vmem:[#allocation2 + $0x158] sm:$0xff]
  %v7415 = vld [vmem:[#allocation2 + $0x160] sm:$0xff]
  %v7416 = vld [vmem:[#allocation2 + $0x168] sm:$0xff]
  %v7417 = vld [vmem:[#allocation2 + $0x170] sm:$0xff]
  %v7418 = vld [vmem:[#allocation2 + $0x178] sm:$0xff]
  %v7419 = vld [vmem:[#allocation2 + $0x180] sm:$0xff]
  %v7420 = vld [vmem:[#allocation2 + $0x188] sm:$0xff]
  %v7421 = vld [vmem:[#allocation2 + $0x190] sm:$0xff]
  %v7422 = vld [vmem:[#allocation2 + $0x198] sm:$0xff]
  %v7423 = vld [vmem:[#allocation2 + $0x1a0] sm:$0xff]
  %v7424 = vld [vmem:[#allocation2 + $0x1a8] sm:$0xff]
  %v7425 = vld [vmem:[#allocation2 + $0x1b0] sm:$0xff]
  %v7426 = vld [vmem:[#allocation2 + $0x1b8] sm:$0xff]
  %v7427 = vld [vmem:[#allocation2 + $0x1c0] sm:$0xff]
  %v7428 = vld [vmem:[#allocation2 + $0x1c8] sm:$0xff]
  %v7429 = vld [vmem:[#allocation2 + $0x1d0] sm:$0xff]
  %v7430 = vld [vmem:[#allocation2 + $0x1d8] sm:$0xff]
  %v7431 = vld [vmem:[#allocation2 + $0x1e0] sm:$0xff]
  %v7432 = vld [vmem:[#allocation2 + $0x1e8] sm:$0xff]
  %v7433 = vld [vmem:[#allocation2 + $0x1f0] sm:$0xff]
  %v7434 = vld [vmem:[#allocation2 + $0x1f8] sm:$0xff]
  %v7435 = vld [vmem:[#allocation2 + $0x200] sm:$0xff]
  %v7436 = vld [vmem:[#allocation2 + $0x208] sm:$0xff]
  %v7437 = vld [vmem:[#allocation2 + $0x210] sm:$0xff]
  %v7438 = vld [vmem:[#allocation2 + $0x218] sm:$0xff]
  %v7439 = vld [vmem:[#allocation2 + $0x220] sm:$0xff]
  %v7440 = vld [vmem:[#allocation2 + $0x228] sm:$0xff]
  %v7441 = vld [vmem:[#allocation2 + $0x230] sm:$0xff]
  %v7442 = vld [vmem:[#allocation2 + $0x238] sm:$0xff]
  %v7443 = vld [vmem:[#allocation2 + $0x240] sm:$0xff]
  %v7444 = vld [vmem:[#allocation2 + $0x248] sm:$0xff]
  %v7445 = vld [vmem:[#allocation2 + $0x250] sm:$0xff]
  %v7446 = vld [vmem:[#allocation2 + $0x258] sm:$0xff]
  %v7447 = vld [vmem:[#allocation2 + $0x260] sm:$0xff]
  %v7448 = vld [vmem:[#allocation2 + $0x268] sm:$0xff]
  %v7449 = vld [vmem:[#allocation2 + $0x270] sm:$0xff]
  %v7450 = vld [vmem:[#allocation2 + $0x278] sm:$0xff]
  %v7451 = vld [vmem:[#allocation2 + $0x280] sm:$0xff]
  %v7452 = vld [vmem:[%s2] sm:$0x1]
  %v7454 = vperm.slane %v7452, 0
  %v7456 = vadd.f32 %v7371, %v7454
  %v7457 = vadd.f32 %v7372, %v7454
  %v7458 = vadd.f32 %v7373, %v7454
  %v7459 = vadd.f32 %v7374, %v7454
  %v7460 = vadd.f32 %v7375, %v7454
  %v7461 = vadd.f32 %v7376, %v7454
  %v7462 = vadd.f32 %v7377, %v7454
  %v7463 = vadd.f32 %v7378, %v7454
  %v7464 = vadd.f32 %v7379, %v7454
  %v7465 = vadd.f32 %v7380, %v7454
  %v7466 = vadd.f32 %v7381, %v7454
  %v7467 = vadd.f32 %v7382, %v7454
  %v7468 = vadd.f32 %v7383, %v7454
  %v7469 = vadd.f32 %v7384, %v7454
  %v7470 = vadd.f32 %v7385, %v7454
  %v7471 = vadd.f32 %v7386, %v7454
  %v7472 = vadd.f32 %v7387, %v7454
  %v7473 = vadd.f32 %v7388, %v7454
  %v7474 = vadd.f32 %v7389, %v7454
  %v7475 = vadd.f32 %v7390, %v7454
  %v7476 = vadd.f32 %v7391, %v7454
  %v7477 = vadd.f32 %v7392, %v7454
  %v7478 = vadd.f32 %v7393, %v7454
  %v7479 = vadd.f32 %v7394, %v7454
  %v7480 = vadd.f32 %v7395, %v7454
  %v7481 = vadd.f32 %v7396, %v7454
  %v7482 = vadd.f32 %v7397, %v7454
  %v7483 = vadd.f32 %v7398, %v7454
  %v7484 = vadd.f32 %v7399, %v7454
  %v7485 = vadd.f32 %v7400, %v7454
  %v7486 = vadd.f32 %v7401, %v7454
  %v7487 = vadd.f32 %v7402, %v7454
  %v7488 = vadd.f32 %v7403, %v7454
  %v7489 = vadd.f32 %v7404, %v7454
  %v7490 = vadd.f32 %v7405, %v7454
  %v7491 = vadd.f32 %v7406, %v7454
  %v7492 = vadd.f32 %v7407, %v7454
  %v7493 = vadd.f32 %v7408, %v7454
  %v7494 = vadd.f32 %v7409, %v7454
  %v7495 = vadd.f32 %v7410, %v7454
  %v7496 = vadd.f32 %v7411, %v7454
  %v7497 = vadd.f32 %v7412, %v7454
  %v7498 = vadd.f32 %v7413, %v7454
  %v7499 = vadd.f32 %v7414, %v7454
  %v7500 = vadd.f32 %v7415, %v7454
  %v7501 = vadd.f32 %v7416, %v7454
  %v7502 = vadd.f32 %v7417, %v7454
  %v7503 = vadd.f32 %v7418, %v7454
  %v7504 = vadd.f32 %v7419, %v7454
  %v7505 = vadd.f32 %v7420, %v7454
  %v7506 = vadd.f32 %v7421, %v7454
  %v7507 = vadd.f32 %v7422, %v7454
  %v7508 = vadd.f32 %v7423, %v7454
  %v7509 = vadd.f32 %v7424, %v7454
  %v7510 = vadd.f32 %v7425, %v7454
  %v7511 = vadd.f32 %v7426, %v7454
  %v7512 = vadd.f32 %v7427, %v7454
  %v7513 = vadd.f32 %v7428, %v7454
  %v7514 = vadd.f32 %v7429, %v7454
  %v7515 = vadd.f32 %v7430, %v7454
  %v7516 = vadd.f32 %v7431, %v7454
  %v7517 = vadd.f32 %v7432, %v7454
  %v7518 = vadd.f32 %v7433, %v7454
  %v7519 = vadd.f32 %v7434, %v7454
  %v7520 = vadd.f32 %v7435, %v7454
  %v7521 = vadd.f32 %v7436, %v7454
  %v7522 = vadd.f32 %v7437, %v7454
  %v7523 = vadd.f32 %v7438, %v7454
  %v7524 = vadd.f32 %v7439, %v7454
  %v7525 = vadd.f32 %v7440, %v7454
  %v7526 = vadd.f32 %v7441, %v7454
  %v7527 = vadd.f32 %v7442, %v7454
  %v7528 = vadd.f32 %v7443, %v7454
  %v7529 = vadd.f32 %v7444, %v7454
  %v7530 = vadd.f32 %v7445, %v7454
  %v7531 = vadd.f32 %v7446, %v7454
  %v7532 = vadd.f32 %v7447, %v7454
  %v7533 = vadd.f32 %v7448, %v7454
  %v7534 = vadd.f32 %v7449, %v7454
  %v7535 = vadd.f32 %v7450, %v7454
  %v7536 = vadd.f32 %v7451, %v7454
  %v7537 = vmax.f32 %v7456, 0.0
  %v7538 = vmax.f32 %v7457, 0.0
  %v7539 = vmax.f32 %v7458, 0.0
  %v7540 = vmax.f32 %v7459, 0.0
  %v7541 = vmax.f32 %v7460, 0.0
  %v7542 = vmax.f32 %v7461, 0.0
  %v7543 = vmax.f32 %v7462, 0.0
  %v7544 = vmax.f32 %v7463, 0.0
  %v7545 = vmax.f32 %v7464, 0.0
  %v7546 = vmax.f32 %v7465, 0.0
  %v7547 = vmax.f32 %v7466, 0.0
  %v7548 = vmax.f32 %v7467, 0.0
  %v7549 = vmax.f32 %v7468, 0.0
  %v7550 = vmax.f32 %v7469, 0.0
  %v7551 = vmax.f32 %v7470, 0.0
  %v7552 = vmax.f32 %v7471, 0.0
  %v7553 = vmax.f32 %v7472, 0.0
  %v7554 = vmax.f32 %v7473, 0.0
  %v7555 = vmax.f32 %v7474, 0.0
  %v7556 = vmax.f32 %v7475, 0.0
  %v7557 = vmax.f32 %v7476, 0.0
  %v7558 = vmax.f32 %v7477, 0.0
  %v7559 = vmax.f32 %v7478, 0.0
  %v7560 = vmax.f32 %v7479, 0.0
  %v7561 = vmax.f32 %v7480, 0.0
  %v7562 = vmax.f32 %v7481, 0.0
  %v7563 = vmax.f32 %v7482, 0.0
  %v7564 = vmax.f32 %v7483, 0.0
  %v7565 = vmax.f32 %v7484, 0.0
  %v7566 = vmax.f32 %v7485, 0.0
  %v7567 = vmax.f32 %v7486, 0.0
  %v7568 = vmax.f32 %v7487, 0.0
  %v7569 = vmax.f32 %v7488, 0.0
  %v7570 = vmax.f32 %v7489, 0.0
  %v7571 = vmax.f32 %v7490, 0.0
  %v7572 = vmax.f32 %v7491, 0.0
  %v7573 = vmax.f32 %v7492, 0.0
  %v7574 = vmax.f32 %v7493, 0.0
  %v7575 = vmax.f32 %v7494, 0.0
  %v7576 = vmax.f32 %v7495, 0.0
  %v7577 = vmax.f32 %v7496, 0.0
  %v7578 = vmax.f32 %v7497, 0.0
  %v7579 = vmax.f32 %v7498, 0.0
  %v7580 = vmax.f32 %v7499, 0.0
  %v7581 = vmax.f32 %v7500, 0.0
  %v7582 = vmax.f32 %v7501, 0.0
  %v7583 = vmax.f32 %v7502, 0.0
  %v7584 = vmax.f32 %v7503, 0.0
  %v7585 = vmax.f32 %v7504, 0.0
  %v7586 = vmax.f32 %v7505, 0.0
  %v7587 = vmax.f32 %v7506, 0.0
  %v7588 = vmax.f32 %v7507, 0.0
  %v7589 = vmax.f32 %v7508, 0.0
  %v7590 = vmax.f32 %v7509, 0.0
  %v7591 = vmax.f32 %v7510, 0.0
  %v7592 = vmax.f32 %v7511, 0.0
  %v7593 = vmax.f32 %v7512, 0.0
  %v7594 = vmax.f32 %v7513, 0.0
  %v7595 = vmax.f32 %v7514, 0.0
  %v7596 = vmax.f32 %v7515, 0.0
  %v7597 = vmax.f32 %v7516, 0.0
  %v7598 = vmax.f32 %v7517, 0.0
  %v7599 = vmax.f32 %v7518, 0.0
  %v7600 = vmax.f32 %v7519, 0.0
  %v7601 = vmax.f32 %v7520, 0.0
  %v7602 = vmax.f32 %v7521, 0.0
  %v7603 = vmax.f32 %v7522, 0.0
  %v7604 = vmax.f32 %v7523, 0.0
  %v7605 = vmax.f32 %v7524, 0.0
  %v7606 = vmax.f32 %v7525, 0.0
  %v7607 = vmax.f32 %v7526, 0.0
  %v7608 = vmax.f32 %v7527, 0.0
  %v7609 = vmax.f32 %v7528, 0.0
  %v7610 = vmax.f32 %v7529, 0.0
  %v7611 = vmax.f32 %v7530, 0.0
  %v7612 = vmax.f32 %v7531, 0.0
  %v7613 = vmax.f32 %v7532, 0.0
  %v7614 = vmax.f32 %v7533, 0.0
  %v7615 = vmax.f32 %v7534, 0.0
  %v7616 = vmax.f32 %v7535, 0.0
  %v7617 = vmax.f32 %v7536, 0.0
  %v7618 = vld [vmem:[%s3] sm:$0xff]
  %v7619 = vld [vmem:[%s3 + $0x8] sm:$0xf]
  %7622 = vst [vmem:[#allocation1] ss:$4 sm:$0xff] %v7618
  %s7623 = scalar_lea.vmem [#allocation1], 32
  %7624 = vst [vmem:[%s7623] ss:$4 sm:$0xff] %v7619
  %v7625 = vld.sshfl [vmem:[#allocation1] sm:$0xff pattern:$0x73625140]
  %v7626 = vld.sshfl [vmem:[#allocation1 + $0x8] sm:$0xff pattern:$0x73625140]
  %v7627 = vld.sshfl [vmem:[#allocation1 + $0x10] sm:$0xff pattern:$0x73625140]
  %v7628 = vld.sshfl [vmem:[#allocation1 + $0x18] sm:$0xff pattern:$0x73625140]
  %v7629 = vld.sshfl [vmem:[#allocation1 + $0x20] sm:$0xff pattern:$0x73625140]
  %v7630 = vld.sshfl [vmem:[#allocation1 + $0x28] sm:$0xff pattern:$0x73625140]
  %vm7636 = vcmask 64512
  %v7637 = vsel %vm7636, %v7630, 0
  %7639 = vmatpush.msra.mxu0 %v7552
  %7640 = vmatpush.msra.mxu0 %v7551
  %7641 = vmatpush.msra.mxu0 %v7550
  %7642 = vmatpush.msra.mxu0 %v7549
  %7643 = vmatpush.msra.mxu0 %v7548
  %7644 = vmatpush.msra.mxu0 %v7547
  %7645 = vmatpush.msra.mxu0 %v7546
  %7646 = vmatpush.msra.mxu0 %v7545
  %7647 = vmatpush.msra.mxu0 %v7544
  %7648 = vmatpush.msra.mxu0 %v7543
  %7649 = vmatpush.msra.mxu0 %v7542
  %7650 = vmatpush.msra.mxu0 %v7541
  %7651 = vmatpush.msra.mxu0 %v7540
  %7652 = vmatpush.msra.mxu0 %v7539
  %7653 = vmatpush.msra.mxu0 %v7538
  %7654 = vmatpush.msra.mxu0 %v7537
  %7655 = vmatmul.f32.gmra.mxu0 %v7625
  %v7656 = vpop.f32.mrf.mxu0
  %v7657 = vadd.f32 0.0, %v7656
  %7658 = vdwg.mxu0
  %7659 = vmatpush.msra.mxu0 %v7568
  %7660 = vmatpush.msra.mxu0 %v7567
  %7661 = vmatpush.msra.mxu0 %v7566
  %7662 = vmatpush.msra.mxu0 %v7565
  %7663 = vmatpush.msra.mxu0 %v7564
  %7664 = vmatpush.msra.mxu0 %v7563
  %7665 = vmatpush.msra.mxu0 %v7562
  %7666 = vmatpush.msra.mxu0 %v7561
  %7667 = vmatpush.msra.mxu0 %v7560
  %7668 = vmatpush.msra.mxu0 %v7559
  %7669 = vmatpush.msra.mxu0 %v7558
  %7670 = vmatpush.msra.mxu0 %v7557
  %7671 = vmatpush.msra.mxu0 %v7556
  %7672 = vmatpush.msra.mxu0 %v7555
  %7673 = vmatpush.msra.mxu0 %v7554
  %7674 = vmatpush.msra.mxu0 %v7553
  %7675 = vmatmul.f32.gmra.mxu0 %v7626
  %v7676 = vpop.f32.mrf.mxu0
  %v7677 = vadd.f32 %v7657, %v7676
  %7678 = vdwg.mxu0
  %7679 = vmatpush.msra.mxu0 %v7584
  %7680 = vmatpush.msra.mxu0 %v7583
  %7681 = vmatpush.msra.mxu0 %v7582
  %7682 = vmatpush.msra.mxu0 %v7581
  %7683 = vmatpush.msra.mxu0 %v7580
  %7684 = vmatpush.msra.mxu0 %v7579
  %7685 = vmatpush.msra.mxu0 %v7578
  %7686 = vmatpush.msra.mxu0 %v7577
  %7687 = vmatpush.msra.mxu0 %v7576
  %7688 = vmatpush.msra.mxu0 %v7575
  %7689 = vmatpush.msra.mxu0 %v7574
  %7690 = vmatpush.msra.mxu0 %v7573
  %7691 = vmatpush.msra.mxu0 %v7572
  %7692 = vmatpush.msra.mxu0 %v7571
  %7693 = vmatpush.msra.mxu0 %v7570
  %7694 = vmatpush.msra.mxu0 %v7569
  %7695 = vmatmul.f32.gmra.mxu0 %v7627
  %v7696 = vpop.f32.mrf.mxu0
  %v7697 = vadd.f32 %v7677, %v7696
  %7698 = vdwg.mxu0
  %7699 = vmatpush.msra.mxu0 %v7600
  %7700 = vmatpush.msra.mxu0 %v7599
  %7701 = vmatpush.msra.mxu0 %v7598
  %7702 = vmatpush.msra.mxu0 %v7597
  %7703 = vmatpush.msra.mxu0 %v7596
  %7704 = vmatpush.msra.mxu0 %v7595
  %7705 = vmatpush.msra.mxu0 %v7594
  %7706 = vmatpush.msra.mxu0 %v7593
  %7707 = vmatpush.msra.mxu0 %v7592
  %7708 = vmatpush.msra.mxu0 %v7591
  %7709 = vmatpush.msra.mxu0 %v7590
  %7710 = vmatpush.msra.mxu0 %v7589
  %7711 = vmatpush.msra.mxu0 %v7588
  %7712 = vmatpush.msra.mxu0 %v7587
  %7713 = vmatpush.msra.mxu0 %v7586
  %7714 = vmatpush.msra.mxu0 %v7585
  %7715 = vmatmul.f32.gmra.mxu0 %v7628
  %v7716 = vpop.f32.mrf.mxu0
  %v7717 = vadd.f32 %v7697, %v7716
  %7718 = vdwg.mxu0
  %7719 = vmatpush.msra.mxu0 %v7616
  %7720 = vmatpush.msra.mxu0 %v7615
  %7721 = vmatpush.msra.mxu0 %v7614
  %7722 = vmatpush.msra.mxu0 %v7613
  %7723 = vmatpush.msra.mxu0 %v7612
  %7724 = vmatpush.msra.mxu0 %v7611
  %7725 = vmatpush.msra.mxu0 %v7610
  %7726 = vmatpush.msra.mxu0 %v7609
  %7727 = vmatpush.msra.mxu0 %v7608
  %7728 = vmatpush.msra.mxu0 %v7607
  %7729 = vmatpush.msra.mxu0 %v7606
  %7730 = vmatpush.msra.mxu0 %v7605
  %7731 = vmatpush.msra.mxu0 %v7604
  %7732 = vmatpush.msra.mxu0 %v7603
  %7733 = vmatpush.msra.mxu0 %v7602
  %7734 = vmatpush.msra.mxu0 %v7601
  %7735 = vmatmul.f32.gmra.mxu0 %v7629
  %v7736 = vpop.f32.mrf.mxu0
  %v7737 = vadd.f32 %v7717, %v7736
  %7738 = vdwg.mxu0
  %7739 = vmatpush.msra.mxu0 0.0
  %7740 = vmatpush.msra.mxu0 0.0
  %7741 = vmatpush.msra.mxu0 0.0
  %7742 = vmatpush.msra.mxu0 0.0
  %7743 = vmatpush.msra.mxu0 0.0
  %7744 = vmatpush.msra.mxu0 0.0
  %7745 = vmatpush.msra.mxu0 0.0
  %7746 = vmatpush.msra.mxu0 0.0
  %7747 = vmatpush.msra.mxu0 0.0
  %7748 = vmatpush.msra.mxu0 0.0
  %7749 = vmatpush.msra.mxu0 0.0
  %7750 = vmatpush.msra.mxu0 0.0
  %7751 = vmatpush.msra.mxu0 0.0
  %7752 = vmatpush.msra.mxu0 0.0
  %7753 = vmatpush.msra.mxu0 0.0
  %7754 = vmatpush.msra.mxu0 %v7617
  %7755 = vmatmul.f32.gmra.mxu0 %v7637
  %v7756 = vpop.f32.mrf.mxu0
  %v7757 = vadd.f32 %v7737, %v7756
  %7758 = vdwg.mxu0
  %v7759 = vld [vmem:[%s4] sm:$0xff]
  %v7760 = vld [vmem:[%s4 + $0x8] sm:$0xff]
  %v7761 = vld [vmem:[%s4 + $0x10] sm:$0xff]
  %v7762 = vld [vmem:[%s4 + $0x18] sm:$0xff]
  %v7763 = vld [vmem:[%s5] sm:$0x1]
  %v7765 = vperm.slane %v7763, 0
  %v7768 = vsel %vm633, %v7757, 0
  %7770 = vmatpush.msra.mxu0 0.0
  %7771 = vmatpush.msra.mxu0 0.0
  %7772 = vmatpush.msra.mxu0 0.0
  %7773 = vmatpush.msra.mxu0 0.0
  %7774 = vmatpush.msra.mxu0 0.0
  %7775 = vmatpush.msra.mxu0 0.0
  %7776 = vmatpush.msra.mxu0 0.0
  %7777 = vmatpush.msra.mxu0 0.0
  %7778 = vmatpush.msra.mxu0 0.0
  %7779 = vmatpush.msra.mxu0 0.0
  %7780 = vmatpush.msra.mxu0 0.0
  %7781 = vmatpush.msra.mxu0 0.0
  %7782 = vmatpush.msra.mxu0 %v7762
  %7783 = vmatpush.msra.mxu0 %v7761
  %7784 = vmatpush.msra.mxu0 %v7760
  %7785 = vmatpush.msra.mxu0 %v7759
  %7786 = vmatmul.f32.gmra.mxu0 %v7768
  %v7787 = vpop.f32.mrf.mxu0
  %v7788 = vadd.f32 %v7765, %v7787
  %7789 = vdwg.mxu0
  %v7790 = vmax.f32 %v7788, 0.0
  %v7791 = vld [vmem:[%s6] sm:$0xff]
  %v7792 = vld [vmem:[%s6 + $0x8] sm:$0xff]
  %v7793 = vld [vmem:[%s6 + $0x10] sm:$0xff]
  %v7794 = vld [vmem:[%s6 + $0x18] sm:$0xff]
  %v7795 = vld [vmem:[%s7] sm:$0x1]
  %v7797 = vperm.slane %v7795, 0
  %v7800 = vsel %vm633, %v7790, 0
  %7802 = vmatpush.msra.mxu0 0.0
  %7803 = vmatpush.msra.mxu0 0.0
  %7804 = vmatpush.msra.mxu0 0.0
  %7805 = vmatpush.msra.mxu0 0.0
  %7806 = vmatpush.msra.mxu0 0.0
  %7807 = vmatpush.msra.mxu0 0.0
  %7808 = vmatpush.msra.mxu0 0.0
  %7809 = vmatpush.msra.mxu0 0.0
  %7810 = vmatpush.msra.mxu0 0.0
  %7811 = vmatpush.msra.mxu0 0.0
  %7812 = vmatpush.msra.mxu0 0.0
  %7813 = vmatpush.msra.mxu0 0.0
  %7814 = vmatpush.msra.mxu0 %v7794
  %7815 = vmatpush.msra.mxu0 %v7793
  %7816 = vmatpush.msra.mxu0 %v7792
  %7817 = vmatpush.msra.mxu0 %v7791
  %7818 = vmatmul.f32.gmra.mxu0 %v7800
  %v7819 = vpop.f32.mrf.mxu0
  %v7820 = vadd.f32 %v7797, %v7819
  %7821 = vdwg.mxu0
  %v7822 = vmax.f32 %v7820, 0.0
  %v7823 = vld [vmem:[%s8] sm:$0xff]
  %v7824 = vld [vmem:[%s8 + $0x8] sm:$0xff]
  %v7825 = vld [vmem:[%s8 + $0x10] sm:$0xff]
  %v7826 = vld [vmem:[%s8 + $0x18] sm:$0xff]
  %v7827 = vld [vmem:[%s8 + $0x20] sm:$0xff]
  %v7828 = vld [vmem:[%s8 + $0x28] sm:$0xff]
  %v7829 = vld [vmem:[%s8 + $0x30] sm:$0xff]
  %v7830 = vld [vmem:[%s8 + $0x38] sm:$0xff]
  %v7831 = vld [vmem:[%s9] sm:$0x1]
  %v7833 = vperm.slane %v7831, 0
  %vm7835 = vcmask 523264
  %v7837 = vsel %vm7835, %v7822, 0
  %7839 = vmatpush.msra.mxu0 0.0
  %7840 = vmatpush.msra.mxu0 0.0
  %7841 = vmatpush.msra.mxu0 0.0
  %7842 = vmatpush.msra.mxu0 0.0
  %7843 = vmatpush.msra.mxu0 0.0
  %7844 = vmatpush.msra.mxu0 0.0
  %7845 = vmatpush.msra.mxu0 0.0
  %7846 = vmatpush.msra.mxu0 0.0
  %7847 = vmatpush.msra.mxu0 %v7830
  %7848 = vmatpush.msra.mxu0 %v7829
  %7849 = vmatpush.msra.mxu0 %v7828
  %7850 = vmatpush.msra.mxu0 %v7827
  %7851 = vmatpush.msra.mxu0 %v7826
  %7852 = vmatpush.msra.mxu0 %v7825
  %7853 = vmatpush.msra.mxu0 %v7824
  %7854 = vmatpush.msra.mxu0 %v7823
  %7855 = vmatmul.f32.gmra.mxu0 %v7837
  %v7856 = vpop.f32.mrf.mxu0
  %v7857 = vadd.f32 %v7833, %v7856
  %7858 = vdwg.mxu0
  %v7859 = vmax.f32 %v7857, 0.0
  %v7860 = vld [vmem:[%s10] sm:$0x1]
  %v7862 = vperm.slane %v7860, 0
  %v7864 = vmul.f32 %v7859, %v7862
  %vm7865 = vcmask 517120
  %v7866 = vsel %vm7865, %v7864, 0.0
  %7867 = vadd.xlane.f32.xlu0 %v7866
  %v7868 = vpop.xlane.xlu0 %7867
  %v7869 = vld [vmem:[#allocation3] sm:$0x1]
  %v7871 = vperm.slane %v7869, 0
  %v7873 = vadd.f32 %v7868, %v7871
  %7875 = vset.pattern.permute.xlu0 0
  %7876 = vperm.xlu0 %7875, %v7873
  %v7877 = vpop.permute.xlu0 %7876
  %7879 = vst [vmem:[%s12] sm:$0x3] %v7877
  // Predicated region
  $region50: #{binary_classifier_forward.1} parent=0 // pred_check
    _
  $region51: #{binary_classifier_forward.1} parent=0 // pred_check_branch
    %7881 = sbr.rel (0) target = $region53
  $region52: #{binary_classifier_forward.1} parent=0 // pred_region
    _
  $region53: #{binary_classifier_forward.1} parent=0 // pred_fallthru
    _
  // Predicated region
  $region54: #{binary_classifier_forward.1} parent=0 // pred_check
    _
  $region55: #{binary_classifier_forward.1} parent=0 // pred_check_branch
    %7883 = sbr.rel (0) target = $region57
  $region56: #{binary_classifier_forward.1} parent=0 // pred_region
    _
  $region57: #{binary_classifier_forward.1} parent=0 // pred_fallthru
    _

</llo_original>
